<compile_context>
chip_gen: v7x
topology: tpu7x:2x2x1
jax: 0.10.0
libtpu: 0.0.40
codegen_flags: <defaults>
</compile_context>

<pallas_src>
import jax
import jax.numpy as jnp
from jax.experimental import pallas as pl
from jax.experimental.pallas import tpu as pltpu

IN_DIM = 256
HID = 1200          # logical hidden width (PyTorch M)
HID_PAD = 1280      # padded to a multiple of 256 for MXU / lane alignment
OUT_DIM = 256
NEG_SLOPE = 0.1


def _round_up(n, m):
    return ((n + m - 1) // m) * m


def _leaky_relu(x, slope=NEG_SLOPE):
    return jnp.where(x > 0, x, slope * x)


def fcn_qnet_kernel(x_ref, w1_ref, b1_ref, w2_ref, b2_ref, w3_ref, b3_ref, o_ref):
    # Three fused matmuls.  Weights/biases are VMEM-resident across batch tiles
    # (constant index_map, single-buffered).  MXU runs bf16 x bf16 with f32
    # accumulation; bias add + LeakyReLU run in f32 on the VPU.
    x = x_ref[...].astype(jnp.bfloat16)

    h = jnp.dot(x, w1_ref[...], preferred_element_type=jnp.float32) + b1_ref[...]
    h = _leaky_relu(h)

    h = jnp.dot(h.astype(jnp.bfloat16), w2_ref[...],
                preferred_element_type=jnp.float32) + b2_ref[...]
    h = _leaky_relu(h)

    out = jnp.dot(h.astype(jnp.bfloat16), w3_ref[...],
                  preferred_element_type=jnp.float32) + b3_ref[...]
    o_ref[...] = out.astype(o_ref.dtype)


def _default_batch_tile(B):
    """Pick a batch tile: multiple of 16, large enough to fill the MXU M dim,
    and (for B >= 32) small enough to give >= 2 grid steps for v7x dual-TC."""
    if B >= 1024:
        tile = 512
    else:
        tile = min(256, _round_up(B, 16))
    if B >= 32 and _round_up(B, tile) // tile < 2:
        # Split into (at least) two steps so both v7x TensorCores get work.
        tile = _round_up((B + 1) // 2, 16)
    return tile


def fcn_qnet_forward(x, params, *, batch_tile=None):
    """x: [B, 256] float32. params: packed (see pack_params). Returns [B, 256] f32."""
    w1, b1, w2, b2, w3, b3 = params
    B = x.shape[0]

    if batch_tile is None:
        batch_tile = _default_batch_tile(B)
    assert batch_tile % 16 == 0, "batch_tile must be a multiple of 16 (bf16 packing)"

    Bp = _round_up(B, batch_tile)
    if Bp != B:
        x = jnp.pad(x, ((0, Bp - B), (0, 0)))

    grid = (Bp // batch_tile,)

    # Resident (constant-index) weight/bias specs: single-buffered since the block
    # never changes -- saves VMEM without any re-DMA.
    resident = dict(pipeline_mode=pl.Buffered(1))
    in_specs = [
        pl.BlockSpec((batch_tile, IN_DIM), lambda i: (i, 0)),              # x (tiled)
        pl.BlockSpec((IN_DIM, HID_PAD), lambda i: (0, 0), **resident),     # w1_t
        pl.BlockSpec((1, HID_PAD), lambda i: (0, 0), **resident),          # b1
        pl.BlockSpec((HID_PAD, HID_PAD), lambda i: (0, 0), **resident),    # w2_t
        pl.BlockSpec((1, HID_PAD), lambda i: (0, 0), **resident),          # b2
        pl.BlockSpec((HID_PAD, OUT_DIM), lambda i: (0, 0), **resident),    # w3_t
        pl.BlockSpec((1, OUT_DIM), lambda i: (0, 0), **resident),          # b3
    ]
    out_specs = pl.BlockSpec((batch_tile, OUT_DIM), lambda i: (i, 0))

    out = pl.pallas_call(
        fcn_qnet_kernel,
        out_shape=jax.ShapeDtypeStruct((Bp, OUT_DIM), jnp.float32),
        grid_spec=pl.GridSpec(grid=grid, in_specs=in_specs, out_specs=out_specs),
        compiler_params=pltpu.CompilerParams(
            dimension_semantics=("parallel",),
            # Actual footprint is ~5-15 MiB (bf16 weights single-buffered ~4.4 MiB
            # + activation tiles); 48 MiB leaves headroom and stays below v7x's
            # 64 MiB/TC physical VMEM.
            vmem_limit_bytes=48 << 20,
        ),
    )(x, w1, b1, w2, b2, w3, b3)

    return out[:B] if Bp != B else out


def pack_params(w1_t, b1, w2_t, b2, w3_t, b3):
    """Zero-pad hidden dim 1200 -> 1280 and cast weights to bf16 (exact padding)."""
    ph = HID_PAD - HID
    w1p = jnp.pad(w1_t, ((0, 0), (0, ph))).astype(jnp.bfloat16)
    b1p = jnp.pad(b1, ((0, 0), (0, ph))).astype(jnp.float32)
    w2p = jnp.pad(w2_t, ((0, ph), (0, ph))).astype(jnp.bfloat16)
    b2p = jnp.pad(b2, ((0, 0), (0, ph))).astype(jnp.float32)
    w3p = jnp.pad(w3_t, ((0, ph), (0, 0))).astype(jnp.bfloat16)
    b3p = b3.astype(jnp.float32)
    return (w1p, b1p, w2p, b2p, w3p, b3p)


def init_raw_params(key):
    """Deterministic synthetic f32 parameters, logical (unpadded, [in, out]) shapes.

    Note: in the reference module, init_params(self) runs *before* fc1/fc2/fc3 are
    constructed, so those layers keep PyTorch's default init; forward semantics do
    not depend on the particular values, so small Gaussians are used here.
    """
    k1, k2, k3 = jax.random.split(key, 3)
    w1_t = jax.random.normal(k1, (IN_DIM, HID), jnp.float32) * (1.0 / jnp.sqrt(IN_DIM))
    b1 = jnp.zeros((1, HID), jnp.float32)
    w2_t = jax.random.normal(k2, (HID, HID), jnp.float32) * (1.0 / jnp.sqrt(HID))
    b2 = jnp.zeros((1, HID), jnp.float32)
    w3_t = jax.random.normal(k3, (HID, OUT_DIM), jnp.float32) * (1.0 / jnp.sqrt(HID))
    b3 = jnp.zeros((1, OUT_DIM), jnp.float32)
    return (w1_t, b1, w2_t, b2, w3_t, b3)


def _reference_forward_f32(x, raw_params):
    """Pure-JAX f32 reference from the ORIGINAL (unpadded, f32) parameters.

    This mirrors the PyTorch forward exactly and catches any transpose / padding
    / packing bug in the kernel path.
    """
    w1_t, b1, w2_t, b2, w3_t, b3 = raw_params
    h = x @ w1_t + b1
    h = jnp.where(h > 0, h, NEG_SLOPE * h)
    h = h @ w2_t + b2
    h = jnp.where(h > 0, h, NEG_SLOPE * h)
    return h @ w3_t + b3


def _reference_forward_packed(x, packed_params):
    """Pure-JAX reference using the same padded/bf16 weights as the kernel
    (isolates kernel bugs from quantization error)."""
    w1, b1, w2, b2, w3, b3 = packed_params
    w1 = w1.astype(jnp.float32)
    w2 = w2.astype(jnp.float32)
    w3 = w3.astype(jnp.float32)
    h = x @ w1 + b1
    h = jnp.where(h > 0, h, NEG_SLOPE * h)
    h = h @ w2 + b2
    h = jnp.where(h > 0, h, NEG_SLOPE * h)
    return h @ w3 + b3


if __name__ == "__main__":
    key = jax.random.PRNGKey(0)
    kx, kp = jax.random.split(key)

    B = 8
    x = jax.random.normal(kx, (B, IN_DIM), jnp.float32)  # obs: [B, 256]

    raw_params = init_raw_params(kp)
    params = pack_params(*raw_params)

    out = jax.block_until_ready(fcn_qnet_forward(x, params))
    assert out.shape == (B, OUT_DIM)

    # Check 1: against the packed (bf16, padded) weights -- catches kernel bugs
    # independent of quantization; only the bf16 activation truncation differs.
    ref_packed = _reference_forward_packed(x, params)
    assert jnp.allclose(out, ref_packed, atol=5e-2, rtol=5e-2), \
        "mismatch vs packed-weight reference"

    # Check 2: against the original f32 parameters (true PyTorch semantics) --
    # catches transpose/padding/packing errors; tolerance covers the deliberate
    # bf16 weight + activation quantization of the kernel path.
    ref_f32 = _reference_forward_f32(x, raw_params)
    assert jnp.allclose(out, ref_f32, atol=1e-1, rtol=1e-1), \
        "mismatch vs f32 reference"

    print("KERNEL_OK")
</pallas_src>

<mosaic_0001>
module attributes {stable_mosaic.version = 11 : i64} {
  func.func @fcn_qnet_kernel(%arg0: i32, %arg1: memref<16x256xf32, #tpu.memory_space<vmem>>, %arg2: memref<256x1280xbf16, #tpu.memory_space<vmem>>, %arg3: memref<1x1280xf32, #tpu.memory_space<vmem>>, %arg4: memref<1280x1280xbf16, #tpu.memory_space<vmem>>, %arg5: memref<1x1280xf32, #tpu.memory_space<vmem>>, %arg6: memref<1280x256xbf16, #tpu.memory_space<vmem>>, %arg7: memref<1x256xf32, #tpu.memory_space<vmem>>, %arg8: memref<16x256xf32, #tpu.memory_space<vmem>>) attributes {dimension_semantics = [#tpu.dimension_semantics<parallel>], iteration_bounds = array<i64: 1>, scalar_prefetch = 0 : i64, scratch_operands = 0 : i64, tpu.core_type = #tpu.core_type<tc>, window_params = [{transform_indices = @transform_0, window_bounds = array<i64: 16, 256>}, {pipeline_mode = #tpu.pipeline_mode<synchronous>, transform_indices = @transform_1, window_bounds = array<i64: 256, 1280>}, {pipeline_mode = #tpu.pipeline_mode<synchronous>, transform_indices = @transform_2, window_bounds = array<i64: 1, 1280>}, {pipeline_mode = #tpu.pipeline_mode<synchronous>, transform_indices = @transform_3, window_bounds = array<i64: 1280, 1280>}, {pipeline_mode = #tpu.pipeline_mode<synchronous>, transform_indices = @transform_4, window_bounds = array<i64: 1, 1280>}, {pipeline_mode = #tpu.pipeline_mode<synchronous>, transform_indices = @transform_5, window_bounds = array<i64: 1280, 256>}, {pipeline_mode = #tpu.pipeline_mode<synchronous>, transform_indices = @transform_6, window_bounds = array<i64: 1, 256>}, {transform_indices = @transform_7, window_bounds = array<i64: 16, 256>}]} {
    %c0 = arith.constant 0 : index
    %c0_0 = arith.constant 0 : index
    %0 = vector.load %arg1[%c0, %c0_0] : memref<16x256xf32, #tpu.memory_space<vmem>>, vector<16x256xf32>
    %1 = arith.truncf %0 : vector<16x256xf32> to vector<16x256xbf16>
    %c0_1 = arith.constant 0 : index
    %c0_2 = arith.constant 0 : index
    %2 = vector.load %arg2[%c0_1, %c0_2] : memref<256x1280xbf16, #tpu.memory_space<vmem>>, vector<256x1280xbf16>
    %cst = arith.constant dense<0.000000e+00> : vector<16x1280xf32>
    %3 = tpu.matmul %1, %2, %cst {dimension_numbers = #tpu.dot_dimension_numbers<[1], [0], [0], [1], [0, 0, 1, 1], [], []>} : vector<16x256xbf16>, vector<256x1280xbf16>, vector<16x1280xf32> -> vector<16x1280xf32>
    %c0_3 = arith.constant 0 : index
    %c0_4 = arith.constant 0 : index
    %4 = vector.load %arg3[%c0_3, %c0_4] : memref<1x1280xf32, #tpu.memory_space<vmem>>, vector<1x1280xf32>
    %5 = vector.broadcast %4 : vector<1x1280xf32> to vector<16x1280xf32>
    %6 = arith.addf %3, %5 : vector<16x1280xf32>
    %cst_5 = arith.constant 0.000000e+00 : f32
    %7 = vector.broadcast %cst_5 : f32 to vector<16x1280xf32>
    %8 = arith.cmpf ogt, %6, %7 : vector<16x1280xf32>
    %cst_6 = arith.constant 1.000000e-01 : f32
    %9 = vector.broadcast %cst_6 : f32 to vector<16x1280xf32>
    %10 = arith.mulf %9, %6 : vector<16x1280xf32>
    %11 = arith.select %8, %6, %10 : vector<16x1280xi1>, vector<16x1280xf32>
    %12 = arith.truncf %11 : vector<16x1280xf32> to vector<16x1280xbf16>
    %c0_7 = arith.constant 0 : index
    %c0_8 = arith.constant 0 : index
    %13 = vector.load %arg4[%c0_7, %c0_8] : memref<1280x1280xbf16, #tpu.memory_space<vmem>>, vector<1280x1280xbf16>
    %cst_9 = arith.constant dense<0.000000e+00> : vector<16x1280xf32>
    %14 = tpu.matmul %12, %13, %cst_9 {dimension_numbers = #tpu.dot_dimension_numbers<[1], [0], [0], [1], [0, 0, 1, 1], [], []>} : vector<16x1280xbf16>, vector<1280x1280xbf16>, vector<16x1280xf32> -> vector<16x1280xf32>
    %c0_10 = arith.constant 0 : index
    %c0_11 = arith.constant 0 : index
    %15 = vector.load %arg5[%c0_10, %c0_11] : memref<1x1280xf32, #tpu.memory_space<vmem>>, vector<1x1280xf32>
    %16 = vector.broadcast %15 : vector<1x1280xf32> to vector<16x1280xf32>
    %17 = arith.addf %14, %16 : vector<16x1280xf32>
    %cst_12 = arith.constant 0.000000e+00 : f32
    %18 = vector.broadcast %cst_12 : f32 to vector<16x1280xf32>
    %19 = arith.cmpf ogt, %17, %18 : vector<16x1280xf32>
    %cst_13 = arith.constant 1.000000e-01 : f32
    %20 = vector.broadcast %cst_13 : f32 to vector<16x1280xf32>
    %21 = arith.mulf %20, %17 : vector<16x1280xf32>
    %22 = arith.select %19, %17, %21 : vector<16x1280xi1>, vector<16x1280xf32>
    %23 = arith.truncf %22 : vector<16x1280xf32> to vector<16x1280xbf16>
    %c0_14 = arith.constant 0 : index
    %c0_15 = arith.constant 0 : index
    %24 = vector.load %arg6[%c0_14, %c0_15] : memref<1280x256xbf16, #tpu.memory_space<vmem>>, vector<1280x256xbf16>
    %cst_16 = arith.constant dense<0.000000e+00> : vector<16x256xf32>
    %25 = tpu.matmul %23, %24, %cst_16 {dimension_numbers = #tpu.dot_dimension_numbers<[1], [0], [0], [1], [0, 0, 1, 1], [], []>} : vector<16x1280xbf16>, vector<1280x256xbf16>, vector<16x256xf32> -> vector<16x256xf32>
    %c0_17 = arith.constant 0 : index
    %c0_18 = arith.constant 0 : index
    %26 = vector.load %arg7[%c0_17, %c0_18] : memref<1x256xf32, #tpu.memory_space<vmem>>, vector<1x256xf32>
    %27 = vector.broadcast %26 : vector<1x256xf32> to vector<16x256xf32>
    %28 = arith.addf %25, %27 : vector<16x256xf32>
    %c0_19 = arith.constant 0 : index
    %c0_20 = arith.constant 0 : index
    %29 = vector.load %arg8[%c0_19, %c0_20] : memref<16x256xf32, #tpu.memory_space<vmem>>, vector<16x256xf32>
    tpu.vector_store %arg8[%c0_19, %c0_20], %28 {strides = array<i32>} : memref<16x256xf32, #tpu.memory_space<vmem>>, vector<16x256xf32>,
    return
  }
  func.func @transform_0(%arg0: i32) -> (i32, i32) {
    %c0_i32 = arith.constant 0 : i32
    %c0_i32_0 = arith.constant 0 : i32
    return %arg0, %c0_i32 : i32, i32
  }
  func.func @transform_1(%arg0: i32) -> (i32, i32) {
    %c0_i32 = arith.constant 0 : i32
    %c0_i32_0 = arith.constant 0 : i32
    %c0_i32_1 = arith.constant 0 : i32
    return %c0_i32, %c0_i32_0 : i32, i32
  }
  func.func @transform_2(%arg0: i32) -> (i32, i32) {
    %c0_i32 = arith.constant 0 : i32
    %c0_i32_0 = arith.constant 0 : i32
    %c0_i32_1 = arith.constant 0 : i32
    return %c0_i32, %c0_i32_0 : i32, i32
  }
  func.func @transform_3(%arg0: i32) -> (i32, i32) {
    %c0_i32 = arith.constant 0 : i32
    %c0_i32_0 = arith.constant 0 : i32
    %c0_i32_1 = arith.constant 0 : i32
    return %c0_i32, %c0_i32_0 : i32, i32
  }
  func.func @transform_4(%arg0: i32) -> (i32, i32) {
    %c0_i32 = arith.constant 0 : i32
    %c0_i32_0 = arith.constant 0 : i32
    %c0_i32_1 = arith.constant 0 : i32
    return %c0_i32, %c0_i32_0 : i32, i32
  }
  func.func @transform_5(%arg0: i32) -> (i32, i32) {
    %c0_i32 = arith.constant 0 : i32
    %c0_i32_0 = arith.constant 0 : i32
    %c0_i32_1 = arith.constant 0 : i32
    return %c0_i32, %c0_i32_0 : i32, i32
  }
  func.func @transform_6(%arg0: i32) -> (i32, i32) {
    %c0_i32 = arith.constant 0 : i32
    %c0_i32_0 = arith.constant 0 : i32
    %c0_i32_1 = arith.constant 0 : i32
    return %c0_i32, %c0_i32_0 : i32, i32
  }
  func.func @transform_7(%arg0: i32) -> (i32, i32) {
    %c0_i32 = arith.constant 0 : i32
    %c0_i32_0 = arith.constant 0 : i32
    return %arg0, %c0_i32 : i32, i32
  }
}

</mosaic_0001>

<llo_original>
// kernel: tpu_custom_call.1
$region0: #{tpu_custom_call.1}
  #allocation0 [shape = 'u32[]', space=smem, size = 0x4, offset = 0x4, fixed_abs, tag = 'smem constant byte address 0x4 - core index']
  #allocation1 [shape = 'u32[144,128]{1,0:T(1,128)}', space=vmem, size = 0x12000, scoped, tag = 'internal scratch']
  %s0 = inlined_call_operand.hbm [shape: f32[16,256], index: 0, kind: input, shape index: {}]
  %s1 = inlined_call_operand.hbm [shape: bf16[256,1280], index: 1, kind: input, shape index: {}]
  %s2 = inlined_call_operand.hbm [shape: f32[1,1280], index: 2, kind: input, shape index: {}]
  %s3 = inlined_call_operand.hbm [shape: bf16[1280,1280], index: 3, kind: input, shape index: {}]
  %s4 = inlined_call_operand.hbm [shape: f32[1,1280], index: 4, kind: input, shape index: {}]
  %s5 = inlined_call_operand.hbm [shape: bf16[1280,256], index: 5, kind: input, shape index: {}]
  %s6 = inlined_call_operand.hbm [shape: f32[1,256], index: 6, kind: input, shape index: {}]
  %s7 = inlined_call_operand.hbm [shape: f32[16,256], index: 7, kind: output, shape index: {}]
  %s8 = sld [smem:[#allocation0]]
  $region66: #{tpu_custom_call.1} parent=0
    _
  %s10 = ssub.s32 1, %s8
  %s11 = scalar_select 0, %s10, %s8
  $region1: #{tpu_custom_call.1} parent=0
    #allocation2 [shape = 'u8[16384]{0}', space=vmem, size = 0x4000, scoped, tag = 'input window, operand 0, single buffered']
    #allocation3 [shape = 's32[1]{0}', space=sflag, size = 0x4, scoped, tag = 'scoped memory for tpu_custom_call.1']
    #allocation4 [shape = 's32[1]{0}', space=sflag, size = 0x4, scoped, tag = 'scoped memory for tpu_custom_call.1']
    #allocation5 [shape = 'u8[655360]{0}', space=vmem, size = 0xa0000, scoped, tag = 'input window, operand 1, single buffered']
    #allocation6 [shape = 's32[1]{0}', space=sflag, size = 0x4, scoped, tag = 'scoped memory for tpu_custom_call.1']
    #allocation7 [shape = 'u8[5120]{0}', space=vmem, size = 0x1400, scoped, tag = 'input window, operand 2, single buffered']
    #allocation8 [shape = 'u8[3276800]{0}', space=vmem, size = 0x320000, scoped, tag = 'input window, operand 3, single buffered']
    #allocation9 [shape = 's32[1]{0}', space=sflag, size = 0x4, scoped, tag = 'scoped memory for tpu_custom_call.1']
    #allocation10 [shape = 'u8[5120]{0}', space=vmem, size = 0x1400, scoped, tag = 'input window, operand 4, single buffered']
    #allocation11 [shape = 'u8[655360]{0}', space=vmem, size = 0xa0000, scoped, tag = 'input window, operand 5, single buffered']
    #allocation12 [shape = 's32[1]{0}', space=sflag, size = 0x4, scoped, tag = 'scoped memory for tpu_custom_call.1']
    #allocation13 [shape = 'u8[1024]{0}', space=vmem, size = 0x400, scoped, tag = 'input window, operand 6, single buffered']
    #allocation14 [shape = 'u8[16384]{0}', space=vmem, size = 0x4000, scoped, tag = 'output window, operand 0, single buffered']
    %12 = vsyncpa [#allocation3], 0
    %13 = vsyncpa [#allocation6], 0
    %14 = vsyncpa [#allocation9], 0
    %15 = vsyncpa [#allocation12], 0
    %16 = vsyncpa [#allocation4], 0
    // Predicated region
    $region2: #{tpu_custom_call.1} parent=1 // pred_check
      _
    $region3: #{tpu_custom_call.1} parent=1 // pred_check_branch
      %18 = sbr.rel (0) target = $region5
    $region4: #{tpu_custom_call.1} parent=1 // pred_region
      %s20 = ssub.s32 512, 512
      %21 = vsyncadd [#allocation3], %s20
      %s22 = sshll.u32 [#allocation2], 4
      %s23 = int_to_ptr.vmem [resolvable:$true] %s22
      %28 = dma.hbm_to_vmem [thread:$0]  %s0, 512, %s23, [#allocation3], 256, 256, 16
    $region5: #{tpu_custom_call.1} parent=1 // pred_fallthru
      _
    // Predicated region
    $region6: #{tpu_custom_call.1} parent=1 // pred_check
      _
    $region7: #{tpu_custom_call.1} parent=1 // pred_check_branch
      %30 = sbr.rel (0) target = $region9
    $region8: #{tpu_custom_call.1} parent=1 // pred_region
      %s32 = ssub.s32 20480, 20480
      %33 = vsyncadd [#allocation6], %s32
      %s34 = sshll.u32 [#allocation5], 4
      %s35 = int_to_ptr.vmem [resolvable:$true] %s34
      %40 = dma.hbm_to_vmem [thread:$0]  %s1, 20480, %s35, [#allocation6], 640, 640, 40
    $region9: #{tpu_custom_call.1} parent=1 // pred_fallthru
      _
    // Predicated region
    $region10: #{tpu_custom_call.1} parent=1 // pred_check
      _
    $region11: #{tpu_custom_call.1} parent=1 // pred_check_branch
      %42 = sbr.rel (0) target = $region13
    $region12: #{tpu_custom_call.1} parent=1 // pred_region
      %s44 = ssub.s32 160, 160
      %45 = vsyncadd [#allocation6], %s44
      %s47 = sshll.u32 [#allocation7], 4
      %s48 = int_to_ptr.vmem [resolvable:$true] %s47
      %50 = dma.hbm_to_vmem [thread:$0]  %s2, 160, %s48, [#allocation6]
    $region13: #{tpu_custom_call.1} parent=1 // pred_fallthru
      _
    // Predicated region
    $region14: #{tpu_custom_call.1} parent=1 // pred_check
      _
    $region15: #{tpu_custom_call.1} parent=1 // pred_check_branch
      %52 = sbr.rel (0) target = $region17
    $region16: #{tpu_custom_call.1} parent=1 // pred_region
      %s54 = ssub.s32 102400, 102400
      %55 = vsyncadd [#allocation9], %s54
      %s56 = sshll.u32 [#allocation8], 4
      %s57 = int_to_ptr.vmem [resolvable:$true] %s56
      %62 = dma.hbm_to_vmem [thread:$0]  %s3, 102400, %s57, [#allocation9], 640, 640, 40
    $region17: #{tpu_custom_call.1} parent=1 // pred_fallthru
      _
    // Predicated region
    $region18: #{tpu_custom_call.1} parent=1 // pred_check
      _
    $region19: #{tpu_custom_call.1} parent=1 // pred_check_branch
      %64 = sbr.rel (0) target = $region21
    $region20: #{tpu_custom_call.1} parent=1 // pred_region
      %s66 = ssub.s32 160, 160
      %67 = vsyncadd [#allocation9], %s66
      %s69 = sshll.u32 [#allocation10], 4
      %s70 = int_to_ptr.vmem [resolvable:$true] %s69
      %72 = dma.hbm_to_vmem [thread:$0]  %s4, 160, %s70, [#allocation9]
    $region21: #{tpu_custom_call.1} parent=1 // pred_fallthru
      _
    // Predicated region
    $region22: #{tpu_custom_call.1} parent=1 // pred_check
      _
    $region23: #{tpu_custom_call.1} parent=1 // pred_check_branch
      %74 = sbr.rel (0) target = $region25
    $region24: #{tpu_custom_call.1} parent=1 // pred_region
      %s76 = ssub.s32 20480, 20480
      %77 = vsyncadd [#allocation12], %s76
      %s78 = sshll.u32 [#allocation11], 4
      %s79 = int_to_ptr.vmem [resolvable:$true] %s78
      %84 = dma.hbm_to_vmem [thread:$0]  %s5, 20480, %s79, [#allocation12], 128, 128, 8
    $region25: #{tpu_custom_call.1} parent=1 // pred_fallthru
      _
    // Predicated region
    $region26: #{tpu_custom_call.1} parent=1 // pred_check
      _
    $region27: #{tpu_custom_call.1} parent=1 // pred_check_branch
      %86 = sbr.rel (0) target = $region29
    $region28: #{tpu_custom_call.1} parent=1 // pred_region
      %s88 = ssub.s32 32, 32
      %89 = vsyncadd [#allocation12], %s88
      %s91 = sshll.u32 [#allocation13], 4
      %s92 = int_to_ptr.vmem [resolvable:$true] %s91
      %94 = dma.hbm_to_vmem [thread:$0]  %s6, 32, %s92, [#allocation12]
    $region29: #{tpu_custom_call.1} parent=1 // pred_fallthru
      _
    // Predicated region
    $region30: #{tpu_custom_call.1} parent=1 // pred_check
      _
    $region31: #{tpu_custom_call.1} parent=1 // pred_check_branch
      %96 = sbr.rel (0) target = $region33
    $region32: #{tpu_custom_call.1} parent=1 // pred_region
      %97 = dma.done [#allocation3], 512
    $region33: #{tpu_custom_call.1} parent=1 // pred_fallthru
      _
    // Predicated region
    $region34: #{tpu_custom_call.1} parent=1 // pred_check
      _
    $region35: #{tpu_custom_call.1} parent=1 // pred_check_branch
      %99 = sbr.rel (0) target = $region37
    $region36: #{tpu_custom_call.1} parent=1 // pred_region
      %100 = dma.done [#allocation6], 20480
    $region37: #{tpu_custom_call.1} parent=1 // pred_fallthru
      _
    // Predicated region
    $region38: #{tpu_custom_call.1} parent=1 // pred_check
      _
    $region39: #{tpu_custom_call.1} parent=1 // pred_check_branch
      %102 = sbr.rel (0) target = $region41
    $region40: #{tpu_custom_call.1} parent=1 // pred_region
      %103 = dma.done [#allocation6], 160
    $region41: #{tpu_custom_call.1} parent=1 // pred_fallthru
      _
    // Predicated region
    $region42: #{tpu_custom_call.1} parent=1 // pred_check
      _
    $region43: #{tpu_custom_call.1} parent=1 // pred_check_branch
      %105 = sbr.rel (0) target = $region45
    $region44: #{tpu_custom_call.1} parent=1 // pred_region
      %106 = dma.done [#allocation9], 102400
    $region45: #{tpu_custom_call.1} parent=1 // pred_fallthru
      _
    // Predicated region
    $region46: #{tpu_custom_call.1} parent=1 // pred_check
      _
    $region47: #{tpu_custom_call.1} parent=1 // pred_check_branch
      %108 = sbr.rel (0) target = $region49
    $region48: #{tpu_custom_call.1} parent=1 // pred_region
      %109 = dma.done [#allocation9], 160
    $region49: #{tpu_custom_call.1} parent=1 // pred_fallthru
      _
    // Predicated region
    $region50: #{tpu_custom_call.1} parent=1 // pred_check
      _
    $region51: #{tpu_custom_call.1} parent=1 // pred_check_branch
      %111 = sbr.rel (0) target = $region53
    $region52: #{tpu_custom_call.1} parent=1 // pred_region
      %112 = dma.done [#allocation12], 20480
    $region53: #{tpu_custom_call.1} parent=1 // pred_fallthru
      _
    // Predicated region
    $region54: #{tpu_custom_call.1} parent=1 // pred_check
      _
    $region55: #{tpu_custom_call.1} parent=1 // pred_check_branch
      %114 = sbr.rel (0) target = $region57
    $region56: #{tpu_custom_call.1} parent=1 // pred_region
      %115 = dma.done [#allocation12], 32
    $region57: #{tpu_custom_call.1} parent=1 // pred_fallthru
      _
    %v116 = vld [vmem:[#allocation2] sm:$0xff]
    %v117 = vld [vmem:[#allocation2 + $0x8] sm:$0xff]
    %v118 = vld [vmem:[#allocation2 + $0x10] sm:$0xff]
    %v119 = vld [vmem:[#allocation2 + $0x18] sm:$0xff]
    %v120 = vpack.c.bf16 %v118, %v116
    %v121 = vpack.c.bf16 %v119, %v117
    %v122 = vld [vmem:[#allocation5] sm:$0xff]
    %v123 = vld [vmem:[#allocation5 + $0x8] sm:$0xff]
    %v124 = vld [vmem:[#allocation5 + $0x10] sm:$0xff]
    %v125 = vld [vmem:[#allocation5 + $0x18] sm:$0xff]
    %v126 = vld [vmem:[#allocation5 + $0x20] sm:$0xff]
    %v127 = vld [vmem:[#allocation5 + $0x28] sm:$0xff]
    %v128 = vld [vmem:[#allocation5 + $0x30] sm:$0xff]
    %v129 = vld [vmem:[#allocation5 + $0x38] sm:$0xff]
    %v130 = vld [vmem:[#allocation5 + $0x40] sm:$0xff]
    %v131 = vld [vmem:[#allocation5 + $0x48] sm:$0xff]
    %v132 = vld [vmem:[#allocation5 + $0x50] sm:$0xff]
    %v133 = vld [vmem:[#allocation5 + $0x58] sm:$0xff]
    %v134 = vld [vmem:[#allocation5 + $0x60] sm:$0xff]
    %v135 = vld [vmem:[#allocation5 + $0x68] sm:$0xff]
    %v136 = vld [vmem:[#allocation5 + $0x70] sm:$0xff]
    %v137 = vld [vmem:[#allocation5 + $0x78] sm:$0xff]
    %v138 = vld [vmem:[#allocation5 + $0x80] sm:$0xff]
    %v139 = vld [vmem:[#allocation5 + $0x88] sm:$0xff]
    %v140 = vld [vmem:[#allocation5 + $0x90] sm:$0xff]
    %v141 = vld [vmem:[#allocation5 + $0x98] sm:$0xff]
    %v142 = vld [vmem:[#allocation5 + $0xa0] sm:$0xff]
    %v143 = vld [vmem:[#allocation5 + $0xa8] sm:$0xff]
    %v144 = vld [vmem:[#allocation5 + $0xb0] sm:$0xff]
    %v145 = vld [vmem:[#allocation5 + $0xb8] sm:$0xff]
    %v146 = vld [vmem:[#allocation5 + $0xc0] sm:$0xff]
    %v147 = vld [vmem:[#allocation5 + $0xc8] sm:$0xff]
    %v148 = vld [vmem:[#allocation5 + $0xd0] sm:$0xff]
    %v149 = vld [vmem:[#allocation5 + $0xd8] sm:$0xff]
    %v150 = vld [vmem:[#allocation5 + $0xe0] sm:$0xff]
    %v151 = vld [vmem:[#allocation5 + $0xe8] sm:$0xff]
    %v152 = vld [vmem:[#allocation5 + $0xf0] sm:$0xff]
    %v153 = vld [vmem:[#allocation5 + $0xf8] sm:$0xff]
    %v154 = vld [vmem:[#allocation5 + $0x100] sm:$0xff]
    %v155 = vld [vmem:[#allocation5 + $0x108] sm:$0xff]
    %v156 = vld [vmem:[#allocation5 + $0x110] sm:$0xff]
    %v157 = vld [vmem:[#allocation5 + $0x118] sm:$0xff]
    %v158 = vld [vmem:[#allocation5 + $0x120] sm:$0xff]
    %v159 = vld [vmem:[#allocation5 + $0x128] sm:$0xff]
    %v160 = vld [vmem:[#allocation5 + $0x130] sm:$0xff]
    %v161 = vld [vmem:[#allocation5 + $0x138] sm:$0xff]
    %v162 = vld [vmem:[#allocation5 + $0x140] sm:$0xff]
    %v163 = vld [vmem:[#allocation5 + $0x148] sm:$0xff]
    %v164 = vld [vmem:[#allocation5 + $0x150] sm:$0xff]
    %v165 = vld [vmem:[#allocation5 + $0x158] sm:$0xff]
    %v166 = vld [vmem:[#allocation5 + $0x160] sm:$0xff]
    %v167 = vld [vmem:[#allocation5 + $0x168] sm:$0xff]
    %v168 = vld [vmem:[#allocation5 + $0x170] sm:$0xff]
    %v169 = vld [vmem:[#allocation5 + $0x178] sm:$0xff]
    %v170 = vld [vmem:[#allocation5 + $0x180] sm:$0xff]
    %v171 = vld [vmem:[#allocation5 + $0x188] sm:$0xff]
    %v172 = vld [vmem:[#allocation5 + $0x190] sm:$0xff]
    %v173 = vld [vmem:[#allocation5 + $0x198] sm:$0xff]
    %v174 = vld [vmem:[#allocation5 + $0x1a0] sm:$0xff]
    %v175 = vld [vmem:[#allocation5 + $0x1a8] sm:$0xff]
    %v176 = vld [vmem:[#allocation5 + $0x1b0] sm:$0xff]
    %v177 = vld [vmem:[#allocation5 + $0x1b8] sm:$0xff]
    %v178 = vld [vmem:[#allocation5 + $0x1c0] sm:$0xff]
    %v179 = vld [vmem:[#allocation5 + $0x1c8] sm:$0xff]
    %v180 = vld [vmem:[#allocation5 + $0x1d0] sm:$0xff]
    %v181 = vld [vmem:[#allocation5 + $0x1d8] sm:$0xff]
    %v182 = vld [vmem:[#allocation5 + $0x1e0] sm:$0xff]
    %v183 = vld [vmem:[#allocation5 + $0x1e8] sm:$0xff]
    %v184 = vld [vmem:[#allocation5 + $0x1f0] sm:$0xff]
    %v185 = vld [vmem:[#allocation5 + $0x1f8] sm:$0xff]
    %v186 = vld [vmem:[#allocation5 + $0x200] sm:$0xff]
    %v187 = vld [vmem:[#allocation5 + $0x208] sm:$0xff]
    %v188 = vld [vmem:[#allocation5 + $0x210] sm:$0xff]
    %v189 = vld [vmem:[#allocation5 + $0x218] sm:$0xff]
    %v190 = vld [vmem:[#allocation5 + $0x220] sm:$0xff]
    %v191 = vld [vmem:[#allocation5 + $0x228] sm:$0xff]
    %v192 = vld [vmem:[#allocation5 + $0x230] sm:$0xff]
    %v193 = vld [vmem:[#allocation5 + $0x238] sm:$0xff]
    %v194 = vld [vmem:[#allocation5 + $0x240] sm:$0xff]
    %v195 = vld [vmem:[#allocation5 + $0x248] sm:$0xff]
    %v196 = vld [vmem:[#allocation5 + $0x250] sm:$0xff]
    %v197 = vld [vmem:[#allocation5 + $0x258] sm:$0xff]
    %v198 = vld [vmem:[#allocation5 + $0x260] sm:$0xff]
    %v199 = vld [vmem:[#allocation5 + $0x268] sm:$0xff]
    %v200 = vld [vmem:[#allocation5 + $0x270] sm:$0xff]
    %v201 = vld [vmem:[#allocation5 + $0x278] sm:$0xff]
    %v202 = vld [vmem:[#allocation5 + $0x280] sm:$0xff]
    %v203 = vld [vmem:[#allocation5 + $0x288] sm:$0xff]
    %v204 = vld [vmem:[#allocation5 + $0x290] sm:$0xff]
    %v205 = vld [vmem:[#allocation5 + $0x298] sm:$0xff]
    %v206 = vld [vmem:[#allocation5 + $0x2a0] sm:$0xff]
    %v207 = vld [vmem:[#allocation5 + $0x2a8] sm:$0xff]
    %v208 = vld [vmem:[#allocation5 + $0x2b0] sm:$0xff]
    %v209 = vld [vmem:[#allocation5 + $0x2b8] sm:$0xff]
    %v210 = vld [vmem:[#allocation5 + $0x2c0] sm:$0xff]
    %v211 = vld [vmem:[#allocation5 + $0x2c8] sm:$0xff]
    %v212 = vld [vmem:[#allocation5 + $0x2d0] sm:$0xff]
    %v213 = vld [vmem:[#allocation5 + $0x2d8] sm:$0xff]
    %v214 = vld [vmem:[#allocation5 + $0x2e0] sm:$0xff]
    %v215 = vld [vmem:[#allocation5 + $0x2e8] sm:$0xff]
    %v216 = vld [vmem:[#allocation5 + $0x2f0] sm:$0xff]
    %v217 = vld [vmem:[#allocation5 + $0x2f8] sm:$0xff]
    %v218 = vld [vmem:[#allocation5 + $0x300] sm:$0xff]
    %v219 = vld [vmem:[#allocation5 + $0x308] sm:$0xff]
    %v220 = vld [vmem:[#allocation5 + $0x310] sm:$0xff]
    %v221 = vld [vmem:[#allocation5 + $0x318] sm:$0xff]
    %v222 = vld [vmem:[#allocation5 + $0x320] sm:$0xff]
    %v223 = vld [vmem:[#allocation5 + $0x328] sm:$0xff]
    %v224 = vld [vmem:[#allocation5 + $0x330] sm:$0xff]
    %v225 = vld [vmem:[#allocation5 + $0x338] sm:$0xff]
    %v226 = vld [vmem:[#allocation5 + $0x340] sm:$0xff]
    %v227 = vld [vmem:[#allocation5 + $0x348] sm:$0xff]
    %v228 = vld [vmem:[#allocation5 + $0x350] sm:$0xff]
    %v229 = vld [vmem:[#allocation5 + $0x358] sm:$0xff]
    %v230 = vld [vmem:[#allocation5 + $0x360] sm:$0xff]
    %v231 = vld [vmem:[#allocation5 + $0x368] sm:$0xff]
    %v232 = vld [vmem:[#allocation5 + $0x370] sm:$0xff]
    %v233 = vld [vmem:[#allocation5 + $0x378] sm:$0xff]
    %v234 = vld [vmem:[#allocation5 + $0x380] sm:$0xff]
    %v235 = vld [vmem:[#allocation5 + $0x388] sm:$0xff]
    %v236 = vld [vmem:[#allocation5 + $0x390] sm:$0xff]
    %v237 = vld [vmem:[#allocation5 + $0x398] sm:$0xff]
    %v238 = vld [vmem:[#allocation5 + $0x3a0] sm:$0xff]
    %v239 = vld [vmem:[#allocation5 + $0x3a8] sm:$0xff]
    %v240 = vld [vmem:[#allocation5 + $0x3b0] sm:$0xff]
    %v241 = vld [vmem:[#allocation5 + $0x3b8] sm:$0xff]
    %v242 = vld [vmem:[#allocation5 + $0x3c0] sm:$0xff]
    %v243 = vld [vmem:[#allocation5 + $0x3c8] sm:$0xff]
    %v244 = vld [vmem:[#allocation5 + $0x3d0] sm:$0xff]
    %v245 = vld [vmem:[#allocation5 + $0x3d8] sm:$0xff]
    %v246 = vld [vmem:[#allocation5 + $0x3e0] sm:$0xff]
    %v247 = vld [vmem:[#allocation5 + $0x3e8] sm:$0xff]
    %v248 = vld [vmem:[#allocation5 + $0x3f0] sm:$0xff]
    %v249 = vld [vmem:[#allocation5 + $0x3f8] sm:$0xff]
    %v250 = vld [vmem:[#allocation5 + $0x400] sm:$0xff]
    %v251 = vld [vmem:[#allocation5 + $0x408] sm:$0xff]
    %v252 = vld [vmem:[#allocation5 + $0x410] sm:$0xff]
    %v253 = vld [vmem:[#allocation5 + $0x418] sm:$0xff]
    %v254 = vld [vmem:[#allocation5 + $0x420] sm:$0xff]
    %v255 = vld [vmem:[#allocation5 + $0x428] sm:$0xff]
    %v256 = vld [vmem:[#allocation5 + $0x430] sm:$0xff]
    %v257 = vld [vmem:[#allocation5 + $0x438] sm:$0xff]
    %v258 = vld [vmem:[#allocation5 + $0x440] sm:$0xff]
    %v259 = vld [vmem:[#allocation5 + $0x448] sm:$0xff]
    %v260 = vld [vmem:[#allocation5 + $0x450] sm:$0xff]
    %v261 = vld [vmem:[#allocation5 + $0x458] sm:$0xff]
    %v262 = vld [vmem:[#allocation5 + $0x460] sm:$0xff]
    %v263 = vld [vmem:[#allocation5 + $0x468] sm:$0xff]
    %v264 = vld [vmem:[#allocation5 + $0x470] sm:$0xff]
    %v265 = vld [vmem:[#allocation5 + $0x478] sm:$0xff]
    %v266 = vld [vmem:[#allocation5 + $0x480] sm:$0xff]
    %v267 = vld [vmem:[#allocation5 + $0x488] sm:$0xff]
    %v268 = vld [vmem:[#allocation5 + $0x490] sm:$0xff]
    %v269 = vld [vmem:[#allocation5 + $0x498] sm:$0xff]
    %v270 = vld [vmem:[#allocation5 + $0x4a0] sm:$0xff]
    %v271 = vld [vmem:[#allocation5 + $0x4a8] sm:$0xff]
    %v272 = vld [vmem:[#allocation5 + $0x4b0] sm:$0xff]
    %v273 = vld [vmem:[#allocation5 + $0x4b8] sm:$0xff]
    %v274 = vld [vmem:[#allocation5 + $0x4c0] sm:$0xff]
    %v275 = vld [vmem:[#allocation5 + $0x4c8] sm:$0xff]
    %v276 = vld [vmem:[#allocation5 + $0x4d0] sm:$0xff]
    %v277 = vld [vmem:[#allocation5 + $0x4d8] sm:$0xff]
    %v278 = vld [vmem:[#allocation5 + $0x4e0] sm:$0xff]
    %v279 = vld [vmem:[#allocation5 + $0x4e8] sm:$0xff]
    %v280 = vld [vmem:[#allocation5 + $0x4f0] sm:$0xff]
    %v281 = vld [vmem:[#allocation5 + $0x4f8] sm:$0xff]
    %v282 = vld [vmem:[#allocation7] sm:$0xff]
    %v283 = vld [vmem:[#allocation7 + $0x8] sm:$0x3]
    %v286 = vlaneseq
    %v287 = vshrl.u32 %v286, 7
    %v288 = vsub.s32 0, %v287
    %v289 = vrot.slane %v282, %v288
    %v290 = vlaneseq
    %v291 = vshrl.u32 %v290, 7
    %v292 = vsub.s32 1, %v291
    %v293 = vrot.slane %v282, %v292
    %v294 = vlaneseq
    %v295 = vshrl.u32 %v294, 7
    %v296 = vsub.s32 2, %v295
    %v297 = vrot.slane %v282, %v296
    %v298 = vlaneseq
    %v299 = vshrl.u32 %v298, 7
    %v300 = vsub.s32 3, %v299
    %v301 = vrot.slane %v282, %v300
    %v302 = vlaneseq
    %v303 = vshrl.u32 %v302, 7
    %v304 = vsub.s32 4, %v303
    %v305 = vrot.slane %v282, %v304
    %v306 = vlaneseq
    %v307 = vshrl.u32 %v306, 7
    %v308 = vsub.s32 5, %v307
    %v309 = vrot.slane %v282, %v308
    %v310 = vlaneseq
    %v311 = vshrl.u32 %v310, 7
    %v312 = vsub.s32 6, %v311
    %v313 = vrot.slane %v282, %v312
    %v314 = vlaneseq
    %v315 = vshrl.u32 %v314, 7
    %v316 = vsub.s32 7, %v315
    %v317 = vrot.slane %v282, %v316
    %v318 = vlaneseq
    %v319 = vshrl.u32 %v318, 7
    %v320 = vsub.s32 0, %v319
    %v321 = vrot.slane %v283, %v320
    %v322 = vlaneseq
    %v323 = vshrl.u32 %v322, 7
    %v324 = vsub.s32 1, %v323
    %v325 = vrot.slane %v283, %v324
    %v496 = vunpack.c.l.b16 %v122
    %v497 = vunpack.c.h.b16 %v122
    %v498 = vunpack.c.l.b16 %v123
    %v499 = vunpack.c.h.b16 %v123
    %v500 = vunpack.c.l.b16 %v124
    %v501 = vunpack.c.h.b16 %v124
    %v502 = vunpack.c.l.b16 %v125
    %v503 = vunpack.c.h.b16 %v125
    %v504 = vunpack.c.l.b16 %v126
    %v505 = vunpack.c.h.b16 %v126
    %v506 = vunpack.c.l.b16 %v127
    %v507 = vunpack.c.h.b16 %v127
    %v508 = vunpack.c.l.b16 %v128
    %v509 = vunpack.c.h.b16 %v128
    %v510 = vunpack.c.l.b16 %v129
    %v511 = vunpack.c.h.b16 %v129
    %v512 = vunpack.c.l.b16 %v130
    %v513 = vunpack.c.h.b16 %v130
    %v514 = vunpack.c.l.b16 %v131
    %v515 = vunpack.c.h.b16 %v131
    %v516 = vunpack.c.l.b16 %v132
    %v517 = vunpack.c.h.b16 %v132
    %v518 = vunpack.c.l.b16 %v133
    %v519 = vunpack.c.h.b16 %v133
    %v520 = vunpack.c.l.b16 %v134
    %v521 = vunpack.c.h.b16 %v134
    %v522 = vunpack.c.l.b16 %v135
    %v523 = vunpack.c.h.b16 %v135
    %v524 = vunpack.c.l.b16 %v136
    %v525 = vunpack.c.h.b16 %v136
    %v526 = vunpack.c.l.b16 %v137
    %v527 = vunpack.c.h.b16 %v137
    %v528 = vunpack.c.l.b16 %v138
    %v529 = vunpack.c.h.b16 %v138
    %v530 = vunpack.c.l.b16 %v139
    %v531 = vunpack.c.h.b16 %v139
    %v532 = vunpack.c.l.b16 %v140
    %v533 = vunpack.c.h.b16 %v140
    %v534 = vunpack.c.l.b16 %v141
    %v535 = vunpack.c.h.b16 %v141
    %v536 = vunpack.c.l.b16 %v142
    %v537 = vunpack.c.h.b16 %v142
    %v538 = vunpack.c.l.b16 %v143
    %v539 = vunpack.c.h.b16 %v143
    %v540 = vunpack.c.l.b16 %v144
    %v541 = vunpack.c.h.b16 %v144
    %v542 = vunpack.c.l.b16 %v145
    %v543 = vunpack.c.h.b16 %v145
    %v544 = vunpack.c.l.b16 %v146
    %v545 = vunpack.c.h.b16 %v146
    %v546 = vunpack.c.l.b16 %v147
    %v547 = vunpack.c.h.b16 %v147
    %v548 = vunpack.c.l.b16 %v148
    %v549 = vunpack.c.h.b16 %v148
    %v550 = vunpack.c.l.b16 %v149
    %v551 = vunpack.c.h.b16 %v149
    %v552 = vunpack.c.l.b16 %v150
    %v553 = vunpack.c.h.b16 %v150
    %v554 = vunpack.c.l.b16 %v151
    %v555 = vunpack.c.h.b16 %v151
    %v556 = vunpack.c.l.b16 %v152
    %v557 = vunpack.c.h.b16 %v152
    %v558 = vunpack.c.l.b16 %v153
    %v559 = vunpack.c.h.b16 %v153
    %v560 = vunpack.c.l.b16 %v154
    %v561 = vunpack.c.h.b16 %v154
    %v562 = vunpack.c.l.b16 %v155
    %v563 = vunpack.c.h.b16 %v155
    %v564 = vunpack.c.l.b16 %v156
    %v565 = vunpack.c.h.b16 %v156
    %v566 = vunpack.c.l.b16 %v157
    %v567 = vunpack.c.h.b16 %v157
    %v568 = vunpack.c.l.b16 %v158
    %v569 = vunpack.c.h.b16 %v158
    %v570 = vunpack.c.l.b16 %v159
    %v571 = vunpack.c.h.b16 %v159
    %v572 = vunpack.c.l.b16 %v160
    %v573 = vunpack.c.h.b16 %v160
    %v574 = vunpack.c.l.b16 %v161
    %v575 = vunpack.c.h.b16 %v161
    %v576 = vunpack.c.l.b16 %v162
    %v577 = vunpack.c.h.b16 %v162
    %v578 = vunpack.c.l.b16 %v163
    %v579 = vunpack.c.h.b16 %v163
    %v580 = vunpack.c.l.b16 %v164
    %v581 = vunpack.c.h.b16 %v164
    %v582 = vunpack.c.l.b16 %v165
    %v583 = vunpack.c.h.b16 %v165
    %v584 = vunpack.c.l.b16 %v166
    %v585 = vunpack.c.h.b16 %v166
    %v586 = vunpack.c.l.b16 %v167
    %v587 = vunpack.c.h.b16 %v167
    %v588 = vunpack.c.l.b16 %v168
    %v589 = vunpack.c.h.b16 %v168
    %v590 = vunpack.c.l.b16 %v169
    %v591 = vunpack.c.h.b16 %v169
    %v592 = vunpack.c.l.b16 %v170
    %v593 = vunpack.c.h.b16 %v170
    %v594 = vunpack.c.l.b16 %v171
    %v595 = vunpack.c.h.b16 %v171
    %v596 = vunpack.c.l.b16 %v172
    %v597 = vunpack.c.h.b16 %v172
    %v598 = vunpack.c.l.b16 %v173
    %v599 = vunpack.c.h.b16 %v173
    %v600 = vunpack.c.l.b16 %v174
    %v601 = vunpack.c.h.b16 %v174
    %v602 = vunpack.c.l.b16 %v175
    %v603 = vunpack.c.h.b16 %v175
    %v604 = vunpack.c.l.b16 %v176
    %v605 = vunpack.c.h.b16 %v176
    %v606 = vunpack.c.l.b16 %v177
    %v607 = vunpack.c.h.b16 %v177
    %v608 = vunpack.c.l.b16 %v178
    %v609 = vunpack.c.h.b16 %v178
    %v610 = vunpack.c.l.b16 %v179
    %v611 = vunpack.c.h.b16 %v179
    %v612 = vunpack.c.l.b16 %v180
    %v613 = vunpack.c.h.b16 %v180
    %v614 = vunpack.c.l.b16 %v181
    %v615 = vunpack.c.h.b16 %v181
    %v616 = vunpack.c.l.b16 %v182
    %v617 = vunpack.c.h.b16 %v182
    %v618 = vunpack.c.l.b16 %v183
    %v619 = vunpack.c.h.b16 %v183
    %v620 = vunpack.c.l.b16 %v184
    %v621 = vunpack.c.h.b16 %v184
    %v622 = vunpack.c.l.b16 %v185
    %v623 = vunpack.c.h.b16 %v185
    %v624 = vunpack.c.l.b16 %v186
    %v625 = vunpack.c.h.b16 %v186
    %v626 = vunpack.c.l.b16 %v187
    %v627 = vunpack.c.h.b16 %v187
    %v628 = vunpack.c.l.b16 %v188
    %v629 = vunpack.c.h.b16 %v188
    %v630 = vunpack.c.l.b16 %v189
    %v631 = vunpack.c.h.b16 %v189
    %v632 = vunpack.c.l.b16 %v190
    %v633 = vunpack.c.h.b16 %v190
    %v634 = vunpack.c.l.b16 %v191
    %v635 = vunpack.c.h.b16 %v191
    %v636 = vunpack.c.l.b16 %v192
    %v637 = vunpack.c.h.b16 %v192
    %v638 = vunpack.c.l.b16 %v193
    %v639 = vunpack.c.h.b16 %v193
    %v640 = vunpack.c.l.b16 %v194
    %v641 = vunpack.c.h.b16 %v194
    %v642 = vunpack.c.l.b16 %v195
    %v643 = vunpack.c.h.b16 %v195
    %v644 = vunpack.c.l.b16 %v196
    %v645 = vunpack.c.h.b16 %v196
    %v646 = vunpack.c.l.b16 %v197
    %v647 = vunpack.c.h.b16 %v197
    %v648 = vunpack.c.l.b16 %v198
    %v649 = vunpack.c.h.b16 %v198
    %v650 = vunpack.c.l.b16 %v199
    %v651 = vunpack.c.h.b16 %v199
    %v652 = vunpack.c.l.b16 %v200
    %v653 = vunpack.c.h.b16 %v200
    %v654 = vunpack.c.l.b16 %v201
    %v655 = vunpack.c.h.b16 %v201
    %v656 = vunpack.c.l.b16 %v202
    %v657 = vunpack.c.h.b16 %v202
    %v658 = vunpack.c.l.b16 %v203
    %v659 = vunpack.c.h.b16 %v203
    %v660 = vunpack.c.l.b16 %v204
    %v661 = vunpack.c.h.b16 %v204
    %v662 = vunpack.c.l.b16 %v205
    %v663 = vunpack.c.h.b16 %v205
    %v664 = vunpack.c.l.b16 %v206
    %v665 = vunpack.c.h.b16 %v206
    %v666 = vunpack.c.l.b16 %v207
    %v667 = vunpack.c.h.b16 %v207
    %v668 = vunpack.c.l.b16 %v208
    %v669 = vunpack.c.h.b16 %v208
    %v670 = vunpack.c.l.b16 %v209
    %v671 = vunpack.c.h.b16 %v209
    %v672 = vunpack.c.l.b16 %v210
    %v673 = vunpack.c.h.b16 %v210
    %v674 = vunpack.c.l.b16 %v211
    %v675 = vunpack.c.h.b16 %v211
    %v676 = vunpack.c.l.b16 %v212
    %v677 = vunpack.c.h.b16 %v212
    %v678 = vunpack.c.l.b16 %v213
    %v679 = vunpack.c.h.b16 %v213
    %v680 = vunpack.c.l.b16 %v214
    %v681 = vunpack.c.h.b16 %v214
    %v682 = vunpack.c.l.b16 %v215
    %v683 = vunpack.c.h.b16 %v215
    %v684 = vunpack.c.l.b16 %v216
    %v685 = vunpack.c.h.b16 %v216
    %v686 = vunpack.c.l.b16 %v217
    %v687 = vunpack.c.h.b16 %v217
    %v688 = vunpack.c.l.b16 %v218
    %v689 = vunpack.c.h.b16 %v218
    %v690 = vunpack.c.l.b16 %v219
    %v691 = vunpack.c.h.b16 %v219
    %v692 = vunpack.c.l.b16 %v220
    %v693 = vunpack.c.h.b16 %v220
    %v694 = vunpack.c.l.b16 %v221
    %v695 = vunpack.c.h.b16 %v221
    %v696 = vunpack.c.l.b16 %v222
    %v697 = vunpack.c.h.b16 %v222
    %v698 = vunpack.c.l.b16 %v223
    %v699 = vunpack.c.h.b16 %v223
    %v700 = vunpack.c.l.b16 %v224
    %v701 = vunpack.c.h.b16 %v224
    %v702 = vunpack.c.l.b16 %v225
    %v703 = vunpack.c.h.b16 %v225
    %v704 = vunpack.c.l.b16 %v226
    %v705 = vunpack.c.h.b16 %v226
    %v706 = vunpack.c.l.b16 %v227
    %v707 = vunpack.c.h.b16 %v227
    %v708 = vunpack.c.l.b16 %v228
    %v709 = vunpack.c.h.b16 %v228
    %v710 = vunpack.c.l.b16 %v229
    %v711 = vunpack.c.h.b16 %v229
    %v712 = vunpack.c.l.b16 %v230
    %v713 = vunpack.c.h.b16 %v230
    %v714 = vunpack.c.l.b16 %v231
    %v715 = vunpack.c.h.b16 %v231
    %v716 = vunpack.c.l.b16 %v232
    %v717 = vunpack.c.h.b16 %v232
    %v718 = vunpack.c.l.b16 %v233
    %v719 = vunpack.c.h.b16 %v233
    %v720 = vunpack.c.l.b16 %v234
    %v721 = vunpack.c.h.b16 %v234
    %v722 = vunpack.c.l.b16 %v235
    %v723 = vunpack.c.h.b16 %v235
    %v724 = vunpack.c.l.b16 %v236
    %v725 = vunpack.c.h.b16 %v236
    %v726 = vunpack.c.l.b16 %v237
    %v727 = vunpack.c.h.b16 %v237
    %v728 = vunpack.c.l.b16 %v238
    %v729 = vunpack.c.h.b16 %v238
    %v730 = vunpack.c.l.b16 %v239
    %v731 = vunpack.c.h.b16 %v239
    %v732 = vunpack.c.l.b16 %v240
    %v733 = vunpack.c.h.b16 %v240
    %v734 = vunpack.c.l.b16 %v241
    %v735 = vunpack.c.h.b16 %v241
    %v736 = vunpack.c.l.b16 %v242
    %v737 = vunpack.c.h.b16 %v242
    %v738 = vunpack.c.l.b16 %v243
    %v739 = vunpack.c.h.b16 %v243
    %v740 = vunpack.c.l.b16 %v244
    %v741 = vunpack.c.h.b16 %v244
    %v742 = vunpack.c.l.b16 %v245
    %v743 = vunpack.c.h.b16 %v245
    %v744 = vunpack.c.l.b16 %v246
    %v745 = vunpack.c.h.b16 %v246
    %v746 = vunpack.c.l.b16 %v247
    %v747 = vunpack.c.h.b16 %v247
    %v748 = vunpack.c.l.b16 %v248
    %v749 = vunpack.c.h.b16 %v248
    %v750 = vunpack.c.l.b16 %v249
    %v751 = vunpack.c.h.b16 %v249
    %v752 = vunpack.c.l.b16 %v250
    %v753 = vunpack.c.h.b16 %v250
    %v754 = vunpack.c.l.b16 %v251
    %v755 = vunpack.c.h.b16 %v251
    %v756 = vunpack.c.l.b16 %v252
    %v757 = vunpack.c.h.b16 %v252
    %v758 = vunpack.c.l.b16 %v253
    %v759 = vunpack.c.h.b16 %v253
    %v760 = vunpack.c.l.b16 %v254
    %v761 = vunpack.c.h.b16 %v254
    %v762 = vunpack.c.l.b16 %v255
    %v763 = vunpack.c.h.b16 %v255
    %v764 = vunpack.c.l.b16 %v256
    %v765 = vunpack.c.h.b16 %v256
    %v766 = vunpack.c.l.b16 %v257
    %v767 = vunpack.c.h.b16 %v257
    %v768 = vunpack.c.l.b16 %v258
    %v769 = vunpack.c.h.b16 %v258
    %v770 = vunpack.c.l.b16 %v259
    %v771 = vunpack.c.h.b16 %v259
    %v772 = vunpack.c.l.b16 %v260
    %v773 = vunpack.c.h.b16 %v260
    %v774 = vunpack.c.l.b16 %v261
    %v775 = vunpack.c.h.b16 %v261
    %v776 = vunpack.c.l.b16 %v262
    %v777 = vunpack.c.h.b16 %v262
    %v778 = vunpack.c.l.b16 %v263
    %v779 = vunpack.c.h.b16 %v263
    %v780 = vunpack.c.l.b16 %v264
    %v781 = vunpack.c.h.b16 %v264
    %v782 = vunpack.c.l.b16 %v265
    %v783 = vunpack.c.h.b16 %v265
    %v784 = vunpack.c.l.b16 %v266
    %v785 = vunpack.c.h.b16 %v266
    %v786 = vunpack.c.l.b16 %v267
    %v787 = vunpack.c.h.b16 %v267
    %v788 = vunpack.c.l.b16 %v268
    %v789 = vunpack.c.h.b16 %v268
    %v790 = vunpack.c.l.b16 %v269
    %v791 = vunpack.c.h.b16 %v269
    %v792 = vunpack.c.l.b16 %v270
    %v793 = vunpack.c.h.b16 %v270
    %v794 = vunpack.c.l.b16 %v271
    %v795 = vunpack.c.h.b16 %v271
    %v796 = vunpack.c.l.b16 %v272
    %v797 = vunpack.c.h.b16 %v272
    %v798 = vunpack.c.l.b16 %v273
    %v799 = vunpack.c.h.b16 %v273
    %v800 = vunpack.c.l.b16 %v274
    %v801 = vunpack.c.h.b16 %v274
    %v802 = vunpack.c.l.b16 %v275
    %v803 = vunpack.c.h.b16 %v275
    %v804 = vunpack.c.l.b16 %v276
    %v805 = vunpack.c.h.b16 %v276
    %v806 = vunpack.c.l.b16 %v277
    %v807 = vunpack.c.h.b16 %v277
    %v808 = vunpack.c.l.b16 %v278
    %v809 = vunpack.c.h.b16 %v278
    %v810 = vunpack.c.l.b16 %v279
    %v811 = vunpack.c.h.b16 %v279
    %v812 = vunpack.c.l.b16 %v280
    %v813 = vunpack.c.h.b16 %v280
    %v814 = vunpack.c.l.b16 %v281
    %v815 = vunpack.c.h.b16 %v281
    %v816 = vpack.c.b16 %v506, %v496
    %v817 = vpack.c.b16 %v507, %v497
    %v818 = vpack.c.b16 %v508, %v498
    %v819 = vpack.c.b16 %v509, %v499
    %v820 = vpack.c.b16 %v510, %v500
    %v821 = vpack.c.b16 %v511, %v501
    %v822 = vpack.c.b16 %v512, %v502
    %v823 = vpack.c.b16 %v513, %v503
    %v824 = vpack.c.b16 %v514, %v504
    %v825 = vpack.c.b16 %v515, %v505
    %v826 = vpack.c.b16 %v526, %v516
    %v827 = vpack.c.b16 %v527, %v517
    %v828 = vpack.c.b16 %v528, %v518
    %v829 = vpack.c.b16 %v529, %v519
    %v830 = vpack.c.b16 %v530, %v520
    %v831 = vpack.c.b16 %v531, %v521
    %v832 = vpack.c.b16 %v532, %v522
    %v833 = vpack.c.b16 %v533, %v523
    %v834 = vpack.c.b16 %v534, %v524
    %v835 = vpack.c.b16 %v535, %v525
    %v836 = vpack.c.b16 %v546, %v536
    %v837 = vpack.c.b16 %v547, %v537
    %v838 = vpack.c.b16 %v548, %v538
    %v839 = vpack.c.b16 %v549, %v539
    %v840 = vpack.c.b16 %v550, %v540
    %v841 = vpack.c.b16 %v551, %v541
    %v842 = vpack.c.b16 %v552, %v542
    %v843 = vpack.c.b16 %v553, %v543
    %v844 = vpack.c.b16 %v554, %v544
    %v845 = vpack.c.b16 %v555, %v545
    %v846 = vpack.c.b16 %v566, %v556
    %v847 = vpack.c.b16 %v567, %v557
    %v848 = vpack.c.b16 %v568, %v558
    %v849 = vpack.c.b16 %v569, %v559
    %v850 = vpack.c.b16 %v570, %v560
    %v851 = vpack.c.b16 %v571, %v561
    %v852 = vpack.c.b16 %v572, %v562
    %v853 = vpack.c.b16 %v573, %v563
    %v854 = vpack.c.b16 %v574, %v564
    %v855 = vpack.c.b16 %v575, %v565
    %v856 = vpack.c.b16 %v586, %v576
    %v857 = vpack.c.b16 %v587, %v577
    %v858 = vpack.c.b16 %v588, %v578
    %v859 = vpack.c.b16 %v589, %v579
    %v860 = vpack.c.b16 %v590, %v580
    %v861 = vpack.c.b16 %v591, %v581
    %v862 = vpack.c.b16 %v592, %v582
    %v863 = vpack.c.b16 %v593, %v583
    %v864 = vpack.c.b16 %v594, %v584
    %v865 = vpack.c.b16 %v595, %v585
    %v866 = vpack.c.b16 %v606, %v596
    %v867 = vpack.c.b16 %v607, %v597
    %v868 = vpack.c.b16 %v608, %v598
    %v869 = vpack.c.b16 %v609, %v599
    %v870 = vpack.c.b16 %v610, %v600
    %v871 = vpack.c.b16 %v611, %v601
    %v872 = vpack.c.b16 %v612, %v602
    %v873 = vpack.c.b16 %v613, %v603
    %v874 = vpack.c.b16 %v614, %v604
    %v875 = vpack.c.b16 %v615, %v605
    %v876 = vpack.c.b16 %v626, %v616
    %v877 = vpack.c.b16 %v627, %v617
    %v878 = vpack.c.b16 %v628, %v618
    %v879 = vpack.c.b16 %v629, %v619
    %v880 = vpack.c.b16 %v630, %v620
    %v881 = vpack.c.b16 %v631, %v621
    %v882 = vpack.c.b16 %v632, %v622
    %v883 = vpack.c.b16 %v633, %v623
    %v884 = vpack.c.b16 %v634, %v624
    %v885 = vpack.c.b16 %v635, %v625
    %v886 = vpack.c.b16 %v646, %v636
    %v887 = vpack.c.b16 %v647, %v637
    %v888 = vpack.c.b16 %v648, %v638
    %v889 = vpack.c.b16 %v649, %v639
    %v890 = vpack.c.b16 %v650, %v640
    %v891 = vpack.c.b16 %v651, %v641
    %v892 = vpack.c.b16 %v652, %v642
    %v893 = vpack.c.b16 %v653, %v643
    %v894 = vpack.c.b16 %v654, %v644
    %v895 = vpack.c.b16 %v655, %v645
    %v896 = vpack.c.b16 %v666, %v656
    %v897 = vpack.c.b16 %v667, %v657
    %v898 = vpack.c.b16 %v668, %v658
    %v899 = vpack.c.b16 %v669, %v659
    %v900 = vpack.c.b16 %v670, %v660
    %v901 = vpack.c.b16 %v671, %v661
    %v902 = vpack.c.b16 %v672, %v662
    %v903 = vpack.c.b16 %v673, %v663
    %v904 = vpack.c.b16 %v674, %v664
    %v905 = vpack.c.b16 %v675, %v665
    %v906 = vpack.c.b16 %v686, %v676
    %v907 = vpack.c.b16 %v687, %v677
    %v908 = vpack.c.b16 %v688, %v678
    %v909 = vpack.c.b16 %v689, %v679
    %v910 = vpack.c.b16 %v690, %v680
    %v911 = vpack.c.b16 %v691, %v681
    %v912 = vpack.c.b16 %v692, %v682
    %v913 = vpack.c.b16 %v693, %v683
    %v914 = vpack.c.b16 %v694, %v684
    %v915 = vpack.c.b16 %v695, %v685
    %v916 = vpack.c.b16 %v706, %v696
    %v917 = vpack.c.b16 %v707, %v697
    %v918 = vpack.c.b16 %v708, %v698
    %v919 = vpack.c.b16 %v709, %v699
    %v920 = vpack.c.b16 %v710, %v700
    %v921 = vpack.c.b16 %v711, %v701
    %v922 = vpack.c.b16 %v712, %v702
    %v923 = vpack.c.b16 %v713, %v703
    %v924 = vpack.c.b16 %v714, %v704
    %v925 = vpack.c.b16 %v715, %v705
    %v926 = vpack.c.b16 %v726, %v716
    %v927 = vpack.c.b16 %v727, %v717
    %v928 = vpack.c.b16 %v728, %v718
    %v929 = vpack.c.b16 %v729, %v719
    %v930 = vpack.c.b16 %v730, %v720
    %v931 = vpack.c.b16 %v731, %v721
    %v932 = vpack.c.b16 %v732, %v722
    %v933 = vpack.c.b16 %v733, %v723
    %v934 = vpack.c.b16 %v734, %v724
    %v935 = vpack.c.b16 %v735, %v725
    %v936 = vpack.c.b16 %v746, %v736
    %v937 = vpack.c.b16 %v747, %v737
    %v938 = vpack.c.b16 %v748, %v738
    %v939 = vpack.c.b16 %v749, %v739
    %v940 = vpack.c.b16 %v750, %v740
    %v941 = vpack.c.b16 %v751, %v741
    %v942 = vpack.c.b16 %v752, %v742
    %v943 = vpack.c.b16 %v753, %v743
    %v944 = vpack.c.b16 %v754, %v744
    %v945 = vpack.c.b16 %v755, %v745
    %v946 = vpack.c.b16 %v766, %v756
    %v947 = vpack.c.b16 %v767, %v757
    %v948 = vpack.c.b16 %v768, %v758
    %v949 = vpack.c.b16 %v769, %v759
    %v950 = vpack.c.b16 %v770, %v760
    %v951 = vpack.c.b16 %v771, %v761
    %v952 = vpack.c.b16 %v772, %v762
    %v953 = vpack.c.b16 %v773, %v763
    %v954 = vpack.c.b16 %v774, %v764
    %v955 = vpack.c.b16 %v775, %v765
    %v956 = vpack.c.b16 %v786, %v776
    %v957 = vpack.c.b16 %v787, %v777
    %v958 = vpack.c.b16 %v788, %v778
    %v959 = vpack.c.b16 %v789, %v779
    %v960 = vpack.c.b16 %v790, %v780
    %v961 = vpack.c.b16 %v791, %v781
    %v962 = vpack.c.b16 %v792, %v782
    %v963 = vpack.c.b16 %v793, %v783
    %v964 = vpack.c.b16 %v794, %v784
    %v965 = vpack.c.b16 %v795, %v785
    %v966 = vpack.c.b16 %v806, %v796
    %v967 = vpack.c.b16 %v807, %v797
    %v968 = vpack.c.b16 %v808, %v798
    %v969 = vpack.c.b16 %v809, %v799
    %v970 = vpack.c.b16 %v810, %v800
    %v971 = vpack.c.b16 %v811, %v801
    %v972 = vpack.c.b16 %v812, %v802
    %v973 = vpack.c.b16 %v813, %v803
    %v974 = vpack.c.b16 %v814, %v804
    %v975 = vpack.c.b16 %v815, %v805
    %1136 = vmatprep.subr.bf16.mxu0 %v817
    %1137 = vmatpush1.bf16.msra.mxu0 %v816
    %1138 = vmatprep.subr.bf16.mxu0 %v827
    %1139 = vmatpush1.bf16.msra.mxu0 %v826
    %1140 = vmatprep.subr.bf16.mxu0 %v837
    %1141 = vmatpush1.bf16.msra.mxu0 %v836
    %1142 = vmatprep.subr.bf16.mxu0 %v847
    %1143 = vmatpush1.bf16.msra.mxu0 %v846
    %1144 = vmatprep.subr.bf16.mxu0 %v857
    %1145 = vmatpush1.bf16.msra.mxu0 %v856
    %1146 = vmatprep.subr.bf16.mxu0 %v867
    %1147 = vmatpush1.bf16.msra.mxu0 %v866
    %1148 = vmatprep.subr.bf16.mxu0 %v877
    %1149 = vmatpush1.bf16.msra.mxu0 %v876
    %1150 = vmatprep.subr.bf16.mxu0 %v887
    %1151 = vmatpush1.bf16.msra.mxu0 %v886
    %1152 = vmatprep.subr.bf16.mxu0 %v897
    %1153 = vmatpush1.bf16.msra.mxu0 %v896
    %1154 = vmatprep.subr.bf16.mxu0 %v907
    %1155 = vmatpush1.bf16.msra.mxu0 %v906
    %1156 = vmatprep.subr.bf16.mxu0 %v917
    %1157 = vmatpush1.bf16.msra.mxu0 %v916
    %1158 = vmatprep.subr.bf16.mxu0 %v927
    %1159 = vmatpush1.bf16.msra.mxu0 %v926
    %1160 = vmatprep.subr.bf16.mxu0 %v937
    %1161 = vmatpush1.bf16.msra.mxu0 %v936
    %1162 = vmatprep.subr.bf16.mxu0 %v947
    %1163 = vmatpush1.bf16.msra.mxu0 %v946
    %1164 = vmatprep.subr.bf16.mxu0 %v957
    %1165 = vmatpush1.bf16.msra.mxu0 %v956
    %1166 = vmatprep.subr.bf16.mxu0 %v967
    %1167 = vmatpush1.bf16.msra.mxu0 %v966
    %1168 = vmatprep.mubr.bf16.mxu0 %v121
    %1169 = vmatmul.mubr.bf16.gmra.mrb[0].mxu0 %v120
    %v1170 = vpop.f32.mrb[0].mxu0
    %v1171 = vadd.f32 %v289, %v1170
    %v1172 = vpop.f32.mrb[0].mxu0
    %v1173 = vadd.f32 %v293, %v1172
    %v1174 = vpop.f32.mrb[0].mxu0
    %v1175 = vadd.f32 %v289, %v1174
    %v1176 = vpop.f32.mrb[0].mxu0
    %v1177 = vadd.f32 %v293, %v1176
    %1178 = vdwg.mxu0
    %1179 = vmatprep.subr.bf16.mxu0 %v819
    %1180 = vmatpush1.bf16.msra.mxu0 %v818
    %1181 = vmatprep.subr.bf16.mxu0 %v829
    %1182 = vmatpush1.bf16.msra.mxu0 %v828
    %1183 = vmatprep.subr.bf16.mxu0 %v839
    %1184 = vmatpush1.bf16.msra.mxu0 %v838
    %1185 = vmatprep.subr.bf16.mxu0 %v849
    %1186 = vmatpush1.bf16.msra.mxu0 %v848
    %1187 = vmatprep.subr.bf16.mxu0 %v859
    %1188 = vmatpush1.bf16.msra.mxu0 %v858
    %1189 = vmatprep.subr.bf16.mxu0 %v869
    %1190 = vmatpush1.bf16.msra.mxu0 %v868
    %1191 = vmatprep.subr.bf16.mxu0 %v879
    %1192 = vmatpush1.bf16.msra.mxu0 %v878
    %1193 = vmatprep.subr.bf16.mxu0 %v889
    %1194 = vmatpush1.bf16.msra.mxu0 %v888
    %1195 = vmatprep.subr.bf16.mxu0 %v899
    %1196 = vmatpush1.bf16.msra.mxu0 %v898
    %1197 = vmatprep.subr.bf16.mxu0 %v909
    %1198 = vmatpush1.bf16.msra.mxu0 %v908
    %1199 = vmatprep.subr.bf16.mxu0 %v919
    %1200 = vmatpush1.bf16.msra.mxu0 %v918
    %1201 = vmatprep.subr.bf16.mxu0 %v929
    %1202 = vmatpush1.bf16.msra.mxu0 %v928
    %1203 = vmatprep.subr.bf16.mxu0 %v939
    %1204 = vmatpush1.bf16.msra.mxu0 %v938
    %1205 = vmatprep.subr.bf16.mxu0 %v949
    %1206 = vmatpush1.bf16.msra.mxu0 %v948
    %1207 = vmatprep.subr.bf16.mxu0 %v959
    %1208 = vmatpush1.bf16.msra.mxu0 %v958
    %1209 = vmatprep.subr.bf16.mxu0 %v969
    %1210 = vmatpush1.bf16.msra.mxu0 %v968
    %1211 = vmatprep.mubr.bf16.mxu0 %v121
    %1212 = vmatmul.mubr.bf16.gmra.mrb[0].mxu0 %v120
    %v1213 = vpop.f32.mrb[0].mxu0
    %v1214 = vadd.f32 %v297, %v1213
    %v1215 = vpop.f32.mrb[0].mxu0
    %v1216 = vadd.f32 %v301, %v1215
    %v1217 = vpop.f32.mrb[0].mxu0
    %v1218 = vadd.f32 %v297, %v1217
    %v1219 = vpop.f32.mrb[0].mxu0
    %v1220 = vadd.f32 %v301, %v1219
    %1221 = vdwg.mxu0
    %1222 = vmatprep.subr.bf16.mxu0 %v821
    %1223 = vmatpush1.bf16.msra.mxu0 %v820
    %1224 = vmatprep.subr.bf16.mxu0 %v831
    %1225 = vmatpush1.bf16.msra.mxu0 %v830
    %1226 = vmatprep.subr.bf16.mxu0 %v841
    %1227 = vmatpush1.bf16.msra.mxu0 %v840
    %1228 = vmatprep.subr.bf16.mxu0 %v851
    %1229 = vmatpush1.bf16.msra.mxu0 %v850
    %1230 = vmatprep.subr.bf16.mxu0 %v861
    %1231 = vmatpush1.bf16.msra.mxu0 %v860
    %1232 = vmatprep.subr.bf16.mxu0 %v871
    %1233 = vmatpush1.bf16.msra.mxu0 %v870
    %1234 = vmatprep.subr.bf16.mxu0 %v881
    %1235 = vmatpush1.bf16.msra.mxu0 %v880
    %1236 = vmatprep.subr.bf16.mxu0 %v891
    %1237 = vmatpush1.bf16.msra.mxu0 %v890
    %1238 = vmatprep.subr.bf16.mxu0 %v901
    %1239 = vmatpush1.bf16.msra.mxu0 %v900
    %1240 = vmatprep.subr.bf16.mxu0 %v911
    %1241 = vmatpush1.bf16.msra.mxu0 %v910
    %1242 = vmatprep.subr.bf16.mxu0 %v921
    %1243 = vmatpush1.bf16.msra.mxu0 %v920
    %1244 = vmatprep.subr.bf16.mxu0 %v931
    %1245 = vmatpush1.bf16.msra.mxu0 %v930
    %1246 = vmatprep.subr.bf16.mxu0 %v941
    %1247 = vmatpush1.bf16.msra.mxu0 %v940
    %1248 = vmatprep.subr.bf16.mxu0 %v951
    %1249 = vmatpush1.bf16.msra.mxu0 %v950
    %1250 = vmatprep.subr.bf16.mxu0 %v961
    %1251 = vmatpush1.bf16.msra.mxu0 %v960
    %1252 = vmatprep.subr.bf16.mxu0 %v971
    %1253 = vmatpush1.bf16.msra.mxu0 %v970
    %1254 = vmatprep.mubr.bf16.mxu0 %v121
    %1255 = vmatmul.mubr.bf16.gmra.mrb[0].mxu0 %v120
    %v1256 = vpop.f32.mrb[0].mxu0
    %v1257 = vadd.f32 %v305, %v1256
    %v1258 = vpop.f32.mrb[0].mxu0
    %v1259 = vadd.f32 %v309, %v1258
    %v1260 = vpop.f32.mrb[0].mxu0
    %v1261 = vadd.f32 %v305, %v1260
    %v1262 = vpop.f32.mrb[0].mxu0
    %v1263 = vadd.f32 %v309, %v1262
    %1264 = vdwg.mxu0
    %1265 = vmatprep.subr.bf16.mxu0 %v823
    %1266 = vmatpush1.bf16.msra.mxu0 %v822
    %1267 = vmatprep.subr.bf16.mxu0 %v833
    %1268 = vmatpush1.bf16.msra.mxu0 %v832
    %1269 = vmatprep.subr.bf16.mxu0 %v843
    %1270 = vmatpush1.bf16.msra.mxu0 %v842
    %1271 = vmatprep.subr.bf16.mxu0 %v853
    %1272 = vmatpush1.bf16.msra.mxu0 %v852
    %1273 = vmatprep.subr.bf16.mxu0 %v863
    %1274 = vmatpush1.bf16.msra.mxu0 %v862
    %1275 = vmatprep.subr.bf16.mxu0 %v873
    %1276 = vmatpush1.bf16.msra.mxu0 %v872
    %1277 = vmatprep.subr.bf16.mxu0 %v883
    %1278 = vmatpush1.bf16.msra.mxu0 %v882
    %1279 = vmatprep.subr.bf16.mxu0 %v893
    %1280 = vmatpush1.bf16.msra.mxu0 %v892
    %1281 = vmatprep.subr.bf16.mxu0 %v903
    %1282 = vmatpush1.bf16.msra.mxu0 %v902
    %1283 = vmatprep.subr.bf16.mxu0 %v913
    %1284 = vmatpush1.bf16.msra.mxu0 %v912
    %1285 = vmatprep.subr.bf16.mxu0 %v923
    %1286 = vmatpush1.bf16.msra.mxu0 %v922
    %1287 = vmatprep.subr.bf16.mxu0 %v933
    %1288 = vmatpush1.bf16.msra.mxu0 %v932
    %1289 = vmatprep.subr.bf16.mxu0 %v943
    %1290 = vmatpush1.bf16.msra.mxu0 %v942
    %1291 = vmatprep.subr.bf16.mxu0 %v953
    %1292 = vmatpush1.bf16.msra.mxu0 %v952
    %1293 = vmatprep.subr.bf16.mxu0 %v963
    %1294 = vmatpush1.bf16.msra.mxu0 %v962
    %1295 = vmatprep.subr.bf16.mxu0 %v973
    %1296 = vmatpush1.bf16.msra.mxu0 %v972
    %1297 = vmatprep.mubr.bf16.mxu0 %v121
    %1298 = vmatmul.mubr.bf16.gmra.mrb[0].mxu0 %v120
    %v1299 = vpop.f32.mrb[0].mxu0
    %v1300 = vadd.f32 %v313, %v1299
    %v1301 = vpop.f32.mrb[0].mxu0
    %v1302 = vadd.f32 %v317, %v1301
    %v1303 = vpop.f32.mrb[0].mxu0
    %v1304 = vadd.f32 %v313, %v1303
    %v1305 = vpop.f32.mrb[0].mxu0
    %v1306 = vadd.f32 %v317, %v1305
    %1307 = vdwg.mxu0
    %1308 = vmatprep.subr.bf16.mxu0 %v825
    %1309 = vmatpush1.bf16.msra.mxu0 %v824
    %1310 = vmatprep.subr.bf16.mxu0 %v835
    %1311 = vmatpush1.bf16.msra.mxu0 %v834
    %1312 = vmatprep.subr.bf16.mxu0 %v845
    %1313 = vmatpush1.bf16.msra.mxu0 %v844
    %1314 = vmatprep.subr.bf16.mxu0 %v855
    %1315 = vmatpush1.bf16.msra.mxu0 %v854
    %1316 = vmatprep.subr.bf16.mxu0 %v865
    %1317 = vmatpush1.bf16.msra.mxu0 %v864
    %1318 = vmatprep.subr.bf16.mxu0 %v875
    %1319 = vmatpush1.bf16.msra.mxu0 %v874
    %1320 = vmatprep.subr.bf16.mxu0 %v885
    %1321 = vmatpush1.bf16.msra.mxu0 %v884
    %1322 = vmatprep.subr.bf16.mxu0 %v895
    %1323 = vmatpush1.bf16.msra.mxu0 %v894
    %1324 = vmatprep.subr.bf16.mxu0 %v905
    %1325 = vmatpush1.bf16.msra.mxu0 %v904
    %1326 = vmatprep.subr.bf16.mxu0 %v915
    %1327 = vmatpush1.bf16.msra.mxu0 %v914
    %1328 = vmatprep.subr.bf16.mxu0 %v925
    %1329 = vmatpush1.bf16.msra.mxu0 %v924
    %1330 = vmatprep.subr.bf16.mxu0 %v935
    %1331 = vmatpush1.bf16.msra.mxu0 %v934
    %1332 = vmatprep.subr.bf16.mxu0 %v945
    %1333 = vmatpush1.bf16.msra.mxu0 %v944
    %1334 = vmatprep.subr.bf16.mxu0 %v955
    %1335 = vmatpush1.bf16.msra.mxu0 %v954
    %1336 = vmatprep.subr.bf16.mxu0 %v965
    %1337 = vmatpush1.bf16.msra.mxu0 %v964
    %1338 = vmatprep.subr.bf16.mxu0 %v975
    %1339 = vmatpush1.bf16.msra.mxu0 %v974
    %1340 = vmatprep.mubr.bf16.mxu0 %v121
    %1341 = vmatmul.mubr.bf16.gmra.mrb[0].mxu0 %v120
    %v1342 = vpop.f32.mrb[0].mxu0
    %v1343 = vadd.f32 %v321, %v1342
    %v1344 = vpop.f32.mrb[0].mxu0
    %v1345 = vadd.f32 %v325, %v1344
    %v1346 = vpop.f32.mrb[0].mxu0
    %v1347 = vadd.f32 %v321, %v1346
    %v1348 = vpop.f32.mrb[0].mxu0
    %v1349 = vadd.f32 %v325, %v1348
    %1350 = vdwg.mxu0
    %vm1351 = vcmp.gt.f32.partialorder %v1171, 0.0
    %vm1352 = vcmp.gt.f32.partialorder %v1173, 0.0
    %vm1353 = vcmp.gt.f32.partialorder %v1214, 0.0
    %vm1354 = vcmp.gt.f32.partialorder %v1216, 0.0
    %vm1355 = vcmp.gt.f32.partialorder %v1257, 0.0
    %vm1356 = vcmp.gt.f32.partialorder %v1259, 0.0
    %vm1357 = vcmp.gt.f32.partialorder %v1300, 0.0
    %vm1358 = vcmp.gt.f32.partialorder %v1302, 0.0
    %vm1359 = vcmp.gt.f32.partialorder %v1343, 0.0
    %vm1360 = vcmp.gt.f32.partialorder %v1345, 0.0
    %vm1361 = vcmp.gt.f32.partialorder %v1175, 0.0
    %vm1362 = vcmp.gt.f32.partialorder %v1177, 0.0
    %vm1363 = vcmp.gt.f32.partialorder %v1218, 0.0
    %vm1364 = vcmp.gt.f32.partialorder %v1220, 0.0
    %vm1365 = vcmp.gt.f32.partialorder %v1261, 0.0
    %vm1366 = vcmp.gt.f32.partialorder %v1263, 0.0
    %vm1367 = vcmp.gt.f32.partialorder %v1304, 0.0
    %vm1368 = vcmp.gt.f32.partialorder %v1306, 0.0
    %vm1369 = vcmp.gt.f32.partialorder %v1347, 0.0
    %vm1370 = vcmp.gt.f32.partialorder %v1349, 0.0
    %v1371 = vmul.f32 %v1171, 0.1
    %v1372 = vmul.f32 %v1173, 0.1
    %v1373 = vmul.f32 %v1214, 0.1
    %v1374 = vmul.f32 %v1216, 0.1
    %v1375 = vmul.f32 %v1257, 0.1
    %v1376 = vmul.f32 %v1259, 0.1
    %v1377 = vmul.f32 %v1300, 0.1
    %v1378 = vmul.f32 %v1302, 0.1
    %v1379 = vmul.f32 %v1343, 0.1
    %v1380 = vmul.f32 %v1345, 0.1
    %v1381 = vmul.f32 %v1175, 0.1
    %v1382 = vmul.f32 %v1177, 0.1
    %v1383 = vmul.f32 %v1218, 0.1
    %v1384 = vmul.f32 %v1220, 0.1
    %v1385 = vmul.f32 %v1261, 0.1
    %v1386 = vmul.f32 %v1263, 0.1
    %v1387 = vmul.f32 %v1304, 0.1
    %v1388 = vmul.f32 %v1306, 0.1
    %v1389 = vmul.f32 %v1347, 0.1
    %v1390 = vmul.f32 %v1349, 0.1
    %v1391 = vsel %vm1351, %v1171, %v1371
    %v1392 = vsel %vm1352, %v1173, %v1372
    %v1393 = vsel %vm1353, %v1214, %v1373
    %v1394 = vsel %vm1354, %v1216, %v1374
    %v1395 = vsel %vm1355, %v1257, %v1375
    %v1396 = vsel %vm1356, %v1259, %v1376
    %v1397 = vsel %vm1357, %v1300, %v1377
    %v1398 = vsel %vm1358, %v1302, %v1378
    %v1399 = vsel %vm1359, %v1343, %v1379
    %v1400 = vsel %vm1360, %v1345, %v1380
    %v1401 = vsel %vm1361, %v1175, %v1381
    %v1402 = vsel %vm1362, %v1177, %v1382
    %v1403 = vsel %vm1363, %v1218, %v1383
    %v1404 = vsel %vm1364, %v1220, %v1384
    %v1405 = vsel %vm1365, %v1261, %v1385
    %v1406 = vsel %vm1366, %v1263, %v1386
    %v1407 = vsel %vm1367, %v1304, %v1387
    %v1408 = vsel %vm1368, %v1306, %v1388
    %v1409 = vsel %vm1369, %v1347, %v1389
    %v1410 = vsel %vm1370, %v1349, %v1390
    %v1411 = vpack.c.bf16 %v1401, %v1391
    %v1412 = vpack.c.bf16 %v1402, %v1392
    %v1413 = vpack.c.bf16 %v1403, %v1393
    %v1414 = vpack.c.bf16 %v1404, %v1394
    %v1415 = vpack.c.bf16 %v1405, %v1395
    %v1416 = vpack.c.bf16 %v1406, %v1396
    %v1417 = vpack.c.bf16 %v1407, %v1397
    %v1418 = vpack.c.bf16 %v1408, %v1398
    %v1419 = vpack.c.bf16 %v1409, %v1399
    %v1420 = vpack.c.bf16 %v1410, %v1400
    %v1421 = vld [vmem:[#allocation8] sm:$0xff]
    %v1422 = vld [vmem:[#allocation8 + $0x8] sm:$0xff]
    %v1423 = vld [vmem:[#allocation8 + $0x10] sm:$0xff]
    %v1424 = vld [vmem:[#allocation8 + $0x18] sm:$0xff]
    %v1425 = vld [vmem:[#allocation8 + $0x20] sm:$0xff]
    %v1426 = vld [vmem:[#allocation8 + $0x28] sm:$0xff]
    %v1427 = vld [vmem:[#allocation8 + $0x30] sm:$0xff]
    %v1428 = vld [vmem:[#allocation8 + $0x38] sm:$0xff]
    %v1429 = vld [vmem:[#allocation8 + $0x40] sm:$0xff]
    %v1430 = vld [vmem:[#allocation8 + $0x48] sm:$0xff]
    %v1431 = vld [vmem:[#allocation8 + $0x50] sm:$0xff]
    %v1432 = vld [vmem:[#allocation8 + $0x58] sm:$0xff]
    %v1433 = vld [vmem:[#allocation8 + $0x60] sm:$0xff]
    %v1434 = vld [vmem:[#allocation8 + $0x68] sm:$0xff]
    %v1435 = vld [vmem:[#allocation8 + $0x70] sm:$0xff]
    %v1436 = vld [vmem:[#allocation8 + $0x78] sm:$0xff]
    %v1437 = vld [vmem:[#allocation8 + $0x80] sm:$0xff]
    %v1438 = vld [vmem:[#allocation8 + $0x88] sm:$0xff]
    %v1439 = vld [vmem:[#allocation8 + $0x90] sm:$0xff]
    %v1440 = vld [vmem:[#allocation8 + $0x98] sm:$0xff]
    %v1441 = vld [vmem:[#allocation8 + $0xa0] sm:$0xff]
    %v1442 = vld [vmem:[#allocation8 + $0xa8] sm:$0xff]
    %v1443 = vld [vmem:[#allocation8 + $0xb0] sm:$0xff]
    %v1444 = vld [vmem:[#allocation8 + $0xb8] sm:$0xff]
    %v1445 = vld [vmem:[#allocation8 + $0xc0] sm:$0xff]
    %v1446 = vld [vmem:[#allocation8 + $0xc8] sm:$0xff]
    %v1447 = vld [vmem:[#allocation8 + $0xd0] sm:$0xff]
    %v1448 = vld [vmem:[#allocation8 + $0xd8] sm:$0xff]
    %v1449 = vld [vmem:[#allocation8 + $0xe0] sm:$0xff]
    %v1450 = vld [vmem:[#allocation8 + $0xe8] sm:$0xff]
    %v1451 = vld [vmem:[#allocation8 + $0xf0] sm:$0xff]
    %v1452 = vld [vmem:[#allocation8 + $0xf8] sm:$0xff]
    %v1453 = vld [vmem:[#allocation8 + $0x100] sm:$0xff]
    %v1454 = vld [vmem:[#allocation8 + $0x108] sm:$0xff]
    %v1455 = vld [vmem:[#allocation8 + $0x110] sm:$0xff]
    %v1456 = vld [vmem:[#allocation8 + $0x118] sm:$0xff]
    %v1457 = vld [vmem:[#allocation8 + $0x120] sm:$0xff]
    %v1458 = vld [vmem:[#allocation8 + $0x128] sm:$0xff]
    %v1459 = vld [vmem:[#allocation8 + $0x130] sm:$0xff]
    %v1460 = vld [vmem:[#allocation8 + $0x138] sm:$0xff]
    %v1461 = vld [vmem:[#allocation8 + $0x140] sm:$0xff]
    %v1462 = vld [vmem:[#allocation8 + $0x148] sm:$0xff]
    %v1463 = vld [vmem:[#allocation8 + $0x150] sm:$0xff]
    %v1464 = vld [vmem:[#allocation8 + $0x158] sm:$0xff]
    %v1465 = vld [vmem:[#allocation8 + $0x160] sm:$0xff]
    %v1466 = vld [vmem:[#allocation8 + $0x168] sm:$0xff]
    %v1467 = vld [vmem:[#allocation8 + $0x170] sm:$0xff]
    %v1468 = vld [vmem:[#allocation8 + $0x178] sm:$0xff]
    %v1469 = vld [vmem:[#allocation8 + $0x180] sm:$0xff]
    %v1470 = vld [vmem:[#allocation8 + $0x188] sm:$0xff]
    %v1471 = vld [vmem:[#allocation8 + $0x190] sm:$0xff]
    %v1472 = vld [vmem:[#allocation8 + $0x198] sm:$0xff]
    %v1473 = vld [vmem:[#allocation8 + $0x1a0] sm:$0xff]
    %v1474 = vld [vmem:[#allocation8 + $0x1a8] sm:$0xff]
    %v1475 = vld [vmem:[#allocation8 + $0x1b0] sm:$0xff]
    %v1476 = vld [vmem:[#allocation8 + $0x1b8] sm:$0xff]
    %v1477 = vld [vmem:[#allocation8 + $0x1c0] sm:$0xff]
    %v1478 = vld [vmem:[#allocation8 + $0x1c8] sm:$0xff]
    %v1479 = vld [vmem:[#allocation8 + $0x1d0] sm:$0xff]
    %v1480 = vld [vmem:[#allocation8 + $0x1d8] sm:$0xff]
    %v1481 = vld [vmem:[#allocation8 + $0x1e0] sm:$0xff]
    %v1482 = vld [vmem:[#allocation8 + $0x1e8] sm:$0xff]
    %v1483 = vld [vmem:[#allocation8 + $0x1f0] sm:$0xff]
    %v1484 = vld [vmem:[#allocation8 + $0x1f8] sm:$0xff]
    %v1485 = vld [vmem:[#allocation8 + $0x200] sm:$0xff]
    %v1486 = vld [vmem:[#allocation8 + $0x208] sm:$0xff]
    %v1487 = vld [vmem:[#allocation8 + $0x210] sm:$0xff]
    %v1488 = vld [vmem:[#allocation8 + $0x218] sm:$0xff]
    %v1489 = vld [vmem:[#allocation8 + $0x220] sm:$0xff]
    %v1490 = vld [vmem:[#allocation8 + $0x228] sm:$0xff]
    %v1491 = vld [vmem:[#allocation8 + $0x230] sm:$0xff]
    %v1492 = vld [vmem:[#allocation8 + $0x238] sm:$0xff]
    %v1493 = vld [vmem:[#allocation8 + $0x240] sm:$0xff]
    %v1494 = vld [vmem:[#allocation8 + $0x248] sm:$0xff]
    %v1495 = vld [vmem:[#allocation8 + $0x250] sm:$0xff]
    %v1496 = vld [vmem:[#allocation8 + $0x258] sm:$0xff]
    %v1497 = vld [vmem:[#allocation8 + $0x260] sm:$0xff]
    %v1498 = vld [vmem:[#allocation8 + $0x268] sm:$0xff]
    %v1499 = vld [vmem:[#allocation8 + $0x270] sm:$0xff]
    %v1500 = vld [vmem:[#allocation8 + $0x278] sm:$0xff]
    %v1501 = vld [vmem:[#allocation8 + $0x280] sm:$0xff]
    %v1502 = vld [vmem:[#allocation8 + $0x288] sm:$0xff]
    %v1503 = vld [vmem:[#allocation8 + $0x290] sm:$0xff]
    %v1504 = vld [vmem:[#allocation8 + $0x298] sm:$0xff]
    %v1505 = vld [vmem:[#allocation8 + $0x2a0] sm:$0xff]
    %v1506 = vld [vmem:[#allocation8 + $0x2a8] sm:$0xff]
    %v1507 = vld [vmem:[#allocation8 + $0x2b0] sm:$0xff]
    %v1508 = vld [vmem:[#allocation8 + $0x2b8] sm:$0xff]
    %v1509 = vld [vmem:[#allocation8 + $0x2c0] sm:$0xff]
    %v1510 = vld [vmem:[#allocation8 + $0x2c8] sm:$0xff]
    %v1511 = vld [vmem:[#allocation8 + $0x2d0] sm:$0xff]
    %v1512 = vld [vmem:[#allocation8 + $0x2d8] sm:$0xff]
    %v1513 = vld [vmem:[#allocation8 + $0x2e0] sm:$0xff]
    %v1514 = vld [vmem:[#allocation8 + $0x2e8] sm:$0xff]
    %v1515 = vld [vmem:[#allocation8 + $0x2f0] sm:$0xff]
    %v1516 = vld [vmem:[#allocation8 + $0x2f8] sm:$0xff]
    %v1517 = vld [vmem:[#allocation8 + $0x300] sm:$0xff]
    %v1518 = vld [vmem:[#allocation8 + $0x308] sm:$0xff]
    %v1519 = vld [vmem:[#allocation8 + $0x310] sm:$0xff]
    %v1520 = vld [vmem:[#allocation8 + $0x318] sm:$0xff]
    %v1521 = vld [vmem:[#allocation8 + $0x320] sm:$0xff]
    %v1522 = vld [vmem:[#allocation8 + $0x328] sm:$0xff]
    %v1523 = vld [vmem:[#allocation8 + $0x330] sm:$0xff]
    %v1524 = vld [vmem:[#allocation8 + $0x338] sm:$0xff]
    %v1525 = vld [vmem:[#allocation8 + $0x340] sm:$0xff]
    %v1526 = vld [vmem:[#allocation8 + $0x348] sm:$0xff]
    %v1527 = vld [vmem:[#allocation8 + $0x350] sm:$0xff]
    %v1528 = vld [vmem:[#allocation8 + $0x358] sm:$0xff]
    %v1529 = vld [vmem:[#allocation8 + $0x360] sm:$0xff]
    %v1530 = vld [vmem:[#allocation8 + $0x368] sm:$0xff]
    %v1531 = vld [vmem:[#allocation8 + $0x370] sm:$0xff]
    %v1532 = vld [vmem:[#allocation8 + $0x378] sm:$0xff]
    %v1533 = vld [vmem:[#allocation8 + $0x380] sm:$0xff]
    %v1534 = vld [vmem:[#allocation8 + $0x388] sm:$0xff]
    %v1535 = vld [vmem:[#allocation8 + $0x390] sm:$0xff]
    %v1536 = vld [vmem:[#allocation8 + $0x398] sm:$0xff]
    %v1537 = vld [vmem:[#allocation8 + $0x3a0] sm:$0xff]
    %v1538 = vld [vmem:[#allocation8 + $0x3a8] sm:$0xff]
    %v1539 = vld [vmem:[#allocation8 + $0x3b0] sm:$0xff]
    %v1540 = vld [vmem:[#allocation8 + $0x3b8] sm:$0xff]
    %v1541 = vld [vmem:[#allocation8 + $0x3c0] sm:$0xff]
    %v1542 = vld [vmem:[#allocation8 + $0x3c8] sm:$0xff]
    %v1543 = vld [vmem:[#allocation8 + $0x3d0] sm:$0xff]
    %v1544 = vld [vmem:[#allocation8 + $0x3d8] sm:$0xff]
    %v1545 = vld [vmem:[#allocation8 + $0x3e0] sm:$0xff]
    %v1546 = vld [vmem:[#allocation8 + $0x3e8] sm:$0xff]
    %v1547 = vld [vmem:[#allocation8 + $0x3f0] sm:$0xff]
    %v1548 = vld [vmem:[#allocation8 + $0x3f8] sm:$0xff]
    %v1549 = vld [vmem:[#allocation8 + $0x400] sm:$0xff]
    %v1550 = vld [vmem:[#allocation8 + $0x408] sm:$0xff]
    %v1551 = vld [vmem:[#allocation8 + $0x410] sm:$0xff]
    %v1552 = vld [vmem:[#allocation8 + $0x418] sm:$0xff]
    %v1553 = vld [vmem:[#allocation8 + $0x420] sm:$0xff]
    %v1554 = vld [vmem:[#allocation8 + $0x428] sm:$0xff]
    %v1555 = vld [vmem:[#allocation8 + $0x430] sm:$0xff]
    %v1556 = vld [vmem:[#allocation8 + $0x438] sm:$0xff]
    %v1557 = vld [vmem:[#allocation8 + $0x440] sm:$0xff]
    %v1558 = vld [vmem:[#allocation8 + $0x448] sm:$0xff]
    %v1559 = vld [vmem:[#allocation8 + $0x450] sm:$0xff]
    %v1560 = vld [vmem:[#allocation8 + $0x458] sm:$0xff]
    %v1561 = vld [vmem:[#allocation8 + $0x460] sm:$0xff]
    %v1562 = vld [vmem:[#allocation8 + $0x468] sm:$0xff]
    %v1563 = vld [vmem:[#allocation8 + $0x470] sm:$0xff]
    %v1564 = vld [vmem:[#allocation8 + $0x478] sm:$0xff]
    %v1565 = vld [vmem:[#allocation8 + $0x480] sm:$0xff]
    %v1566 = vld [vmem:[#allocation8 + $0x488] sm:$0xff]
    %v1567 = vld [vmem:[#allocation8 + $0x490] sm:$0xff]
    %v1568 = vld [vmem:[#allocation8 + $0x498] sm:$0xff]
    %v1569 = vld [vmem:[#allocation8 + $0x4a0] sm:$0xff]
    %v1570 = vld [vmem:[#allocation8 + $0x4a8] sm:$0xff]
    %v1571 = vld [vmem:[#allocation8 + $0x4b0] sm:$0xff]
    %v1572 = vld [vmem:[#allocation8 + $0x4b8] sm:$0xff]
    %v1573 = vld [vmem:[#allocation8 + $0x4c0] sm:$0xff]
    %v1574 = vld [vmem:[#allocation8 + $0x4c8] sm:$0xff]
    %v1575 = vld [vmem:[#allocation8 + $0x4d0] sm:$0xff]
    %v1576 = vld [vmem:[#allocation8 + $0x4d8] sm:$0xff]
    %v1577 = vld [vmem:[#allocation8 + $0x4e0] sm:$0xff]
    %v1578 = vld [vmem:[#allocation8 + $0x4e8] sm:$0xff]
    %v1579 = vld [vmem:[#allocation8 + $0x4f0] sm:$0xff]
    %v1580 = vld [vmem:[#allocation8 + $0x4f8] sm:$0xff]
    %v1581 = vld [vmem:[#allocation8 + $0x500] sm:$0xff]
    %v1582 = vld [vmem:[#allocation8 + $0x508] sm:$0xff]
    %v1583 = vld [vmem:[#allocation8 + $0x510] sm:$0xff]
    %v1584 = vld [vmem:[#allocation8 + $0x518] sm:$0xff]
    %v1585 = vld [vmem:[#allocation8 + $0x520] sm:$0xff]
    %v1586 = vld [vmem:[#allocation8 + $0x528] sm:$0xff]
    %v1587 = vld [vmem:[#allocation8 + $0x530] sm:$0xff]
    %v1588 = vld [vmem:[#allocation8 + $0x538] sm:$0xff]
    %v1589 = vld [vmem:[#allocation8 + $0x540] sm:$0xff]
    %v1590 = vld [vmem:[#allocation8 + $0x548] sm:$0xff]
    %v1591 = vld [vmem:[#allocation8 + $0x550] sm:$0xff]
    %v1592 = vld [vmem:[#allocation8 + $0x558] sm:$0xff]
    %v1593 = vld [vmem:[#allocation8 + $0x560] sm:$0xff]
    %v1594 = vld [vmem:[#allocation8 + $0x568] sm:$0xff]
    %v1595 = vld [vmem:[#allocation8 + $0x570] sm:$0xff]
    %v1596 = vld [vmem:[#allocation8 + $0x578] sm:$0xff]
    %v1597 = vld [vmem:[#allocation8 + $0x580] sm:$0xff]
    %v1598 = vld [vmem:[#allocation8 + $0x588] sm:$0xff]
    %v1599 = vld [vmem:[#allocation8 + $0x590] sm:$0xff]
    %v1600 = vld [vmem:[#allocation8 + $0x598] sm:$0xff]
    %v1601 = vld [vmem:[#allocation8 + $0x5a0] sm:$0xff]
    %v1602 = vld [vmem:[#allocation8 + $0x5a8] sm:$0xff]
    %v1603 = vld [vmem:[#allocation8 + $0x5b0] sm:$0xff]
    %v1604 = vld [vmem:[#allocation8 + $0x5b8] sm:$0xff]
    %v1605 = vld [vmem:[#allocation8 + $0x5c0] sm:$0xff]
    %v1606 = vld [vmem:[#allocation8 + $0x5c8] sm:$0xff]
    %v1607 = vld [vmem:[#allocation8 + $0x5d0] sm:$0xff]
    %v1608 = vld [vmem:[#allocation8 + $0x5d8] sm:$0xff]
    %v1609 = vld [vmem:[#allocation8 + $0x5e0] sm:$0xff]
    %v1610 = vld [vmem:[#allocation8 + $0x5e8] sm:$0xff]
    %v1611 = vld [vmem:[#allocation8 + $0x5f0] sm:$0xff]
    %v1612 = vld [vmem:[#allocation8 + $0x5f8] sm:$0xff]
    %v1613 = vld [vmem:[#allocation8 + $0x600] sm:$0xff]
    %v1614 = vld [vmem:[#allocation8 + $0x608] sm:$0xff]
    %v1615 = vld [vmem:[#allocation8 + $0x610] sm:$0xff]
    %v1616 = vld [vmem:[#allocation8 + $0x618] sm:$0xff]
    %v1617 = vld [vmem:[#allocation8 + $0x620] sm:$0xff]
    %v1618 = vld [vmem:[#allocation8 + $0x628] sm:$0xff]
    %v1619 = vld [vmem:[#allocation8 + $0x630] sm:$0xff]
    %v1620 = vld [vmem:[#allocation8 + $0x638] sm:$0xff]
    %v1621 = vld [vmem:[#allocation8 + $0x640] sm:$0xff]
    %v1622 = vld [vmem:[#allocation8 + $0x648] sm:$0xff]
    %v1623 = vld [vmem:[#allocation8 + $0x650] sm:$0xff]
    %v1624 = vld [vmem:[#allocation8 + $0x658] sm:$0xff]
    %v1625 = vld [vmem:[#allocation8 + $0x660] sm:$0xff]
    %v1626 = vld [vmem:[#allocation8 + $0x668] sm:$0xff]
    %v1627 = vld [vmem:[#allocation8 + $0x670] sm:$0xff]
    %v1628 = vld [vmem:[#allocation8 + $0x678] sm:$0xff]
    %v1629 = vld [vmem:[#allocation8 + $0x680] sm:$0xff]
    %v1630 = vld [vmem:[#allocation8 + $0x688] sm:$0xff]
    %v1631 = vld [vmem:[#allocation8 + $0x690] sm:$0xff]
    %v1632 = vld [vmem:[#allocation8 + $0x698] sm:$0xff]
    %v1633 = vld [vmem:[#allocation8 + $0x6a0] sm:$0xff]
    %v1634 = vld [vmem:[#allocation8 + $0x6a8] sm:$0xff]
    %v1635 = vld [vmem:[#allocation8 + $0x6b0] sm:$0xff]
    %v1636 = vld [vmem:[#allocation8 + $0x6b8] sm:$0xff]
    %v1637 = vld [vmem:[#allocation8 + $0x6c0] sm:$0xff]
    %v1638 = vld [vmem:[#allocation8 + $0x6c8] sm:$0xff]
    %v1639 = vld [vmem:[#allocation8 + $0x6d0] sm:$0xff]
    %v1640 = vld [vmem:[#allocation8 + $0x6d8] sm:$0xff]
    %v1641 = vld [vmem:[#allocation8 + $0x6e0] sm:$0xff]
    %v1642 = vld [vmem:[#allocation8 + $0x6e8] sm:$0xff]
    %v1643 = vld [vmem:[#allocation8 + $0x6f0] sm:$0xff]
    %v1644 = vld [vmem:[#allocation8 + $0x6f8] sm:$0xff]
    %v1645 = vld [vmem:[#allocation8 + $0x700] sm:$0xff]
    %v1646 = vld [vmem:[#allocation8 + $0x708] sm:$0xff]
    %v1647 = vld [vmem:[#allocation8 + $0x710] sm:$0xff]
    %v1648 = vld [vmem:[#allocation8 + $0x718] sm:$0xff]
    %v1649 = vld [vmem:[#allocation8 + $0x720] sm:$0xff]
    %v1650 = vld [vmem:[#allocation8 + $0x728] sm:$0xff]
    %v1651 = vld [vmem:[#allocation8 + $0x730] sm:$0xff]
    %v1652 = vld [vmem:[#allocation8 + $0x738] sm:$0xff]
    %v1653 = vld [vmem:[#allocation8 + $0x740] sm:$0xff]
    %v1654 = vld [vmem:[#allocation8 + $0x748] sm:$0xff]
    %v1655 = vld [vmem:[#allocation8 + $0x750] sm:$0xff]
    %v1656 = vld [vmem:[#allocation8 + $0x758] sm:$0xff]
    %v1657 = vld [vmem:[#allocation8 + $0x760] sm:$0xff]
    %v1658 = vld [vmem:[#allocation8 + $0x768] sm:$0xff]
    %v1659 = vld [vmem:[#allocation8 + $0x770] sm:$0xff]
    %v1660 = vld [vmem:[#allocation8 + $0x778] sm:$0xff]
    %v1661 = vld [vmem:[#allocation8 + $0x780] sm:$0xff]
    %v1662 = vld [vmem:[#allocation8 + $0x788] sm:$0xff]
    %v1663 = vld [vmem:[#allocation8 + $0x790] sm:$0xff]
    %v1664 = vld [vmem:[#allocation8 + $0x798] sm:$0xff]
    %v1665 = vld [vmem:[#allocation8 + $0x7a0] sm:$0xff]
    %v1666 = vld [vmem:[#allocation8 + $0x7a8] sm:$0xff]
    %v1667 = vld [vmem:[#allocation8 + $0x7b0] sm:$0xff]
    %v1668 = vld [vmem:[#allocation8 + $0x7b8] sm:$0xff]
    %v1669 = vld [vmem:[#allocation8 + $0x7c0] sm:$0xff]
    %v1670 = vld [vmem:[#allocation8 + $0x7c8] sm:$0xff]
    %v1671 = vld [vmem:[#allocation8 + $0x7d0] sm:$0xff]
    %v1672 = vld [vmem:[#allocation8 + $0x7d8] sm:$0xff]
    %v1673 = vld [vmem:[#allocation8 + $0x7e0] sm:$0xff]
    %v1674 = vld [vmem:[#allocation8 + $0x7e8] sm:$0xff]
    %v1675 = vld [vmem:[#allocation8 + $0x7f0] sm:$0xff]
    %v1676 = vld [vmem:[#allocation8 + $0x7f8] sm:$0xff]
    %v1677 = vld [vmem:[#allocation8 + $0x800] sm:$0xff]
    %v1678 = vld [vmem:[#allocation8 + $0x808] sm:$0xff]
    %v1679 = vld [vmem:[#allocation8 + $0x810] sm:$0xff]
    %v1680 = vld [vmem:[#allocation8 + $0x818] sm:$0xff]
    %v1681 = vld [vmem:[#allocation8 + $0x820] sm:$0xff]
    %v1682 = vld [vmem:[#allocation8 + $0x828] sm:$0xff]
    %v1683 = vld [vmem:[#allocation8 + $0x830] sm:$0xff]
    %v1684 = vld [vmem:[#allocation8 + $0x838] sm:$0xff]
    %v1685 = vld [vmem:[#allocation8 + $0x840] sm:$0xff]
    %v1686 = vld [vmem:[#allocation8 + $0x848] sm:$0xff]
    %v1687 = vld [vmem:[#allocation8 + $0x850] sm:$0xff]
    %v1688 = vld [vmem:[#allocation8 + $0x858] sm:$0xff]
    %v1689 = vld [vmem:[#allocation8 + $0x860] sm:$0xff]
    %v1690 = vld [vmem:[#allocation8 + $0x868] sm:$0xff]
    %v1691 = vld [vmem:[#allocation8 + $0x870] sm:$0xff]
    %v1692 = vld [vmem:[#allocation8 + $0x878] sm:$0xff]
    %v1693 = vld [vmem:[#allocation8 + $0x880] sm:$0xff]
    %v1694 = vld [vmem:[#allocation8 + $0x888] sm:$0xff]
    %v1695 = vld [vmem:[#allocation8 + $0x890] sm:$0xff]
    %v1696 = vld [vmem:[#allocation8 + $0x898] sm:$0xff]
    %v1697 = vld [vmem:[#allocation8 + $0x8a0] sm:$0xff]
    %v1698 = vld [vmem:[#allocation8 + $0x8a8] sm:$0xff]
    %v1699 = vld [vmem:[#allocation8 + $0x8b0] sm:$0xff]
    %v1700 = vld [vmem:[#allocation8 + $0x8b8] sm:$0xff]
    %v1701 = vld [vmem:[#allocation8 + $0x8c0] sm:$0xff]
    %v1702 = vld [vmem:[#allocation8 + $0x8c8] sm:$0xff]
    %v1703 = vld [vmem:[#allocation8 + $0x8d0] sm:$0xff]
    %v1704 = vld [vmem:[#allocation8 + $0x8d8] sm:$0xff]
    %v1705 = vld [vmem:[#allocation8 + $0x8e0] sm:$0xff]
    %v1706 = vld [vmem:[#allocation8 + $0x8e8] sm:$0xff]
    %v1707 = vld [vmem:[#allocation8 + $0x8f0] sm:$0xff]
    %v1708 = vld [vmem:[#allocation8 + $0x8f8] sm:$0xff]
    %v1709 = vld [vmem:[#allocation8 + $0x900] sm:$0xff]
    %v1710 = vld [vmem:[#allocation8 + $0x908] sm:$0xff]
    %v1711 = vld [vmem:[#allocation8 + $0x910] sm:$0xff]
    %v1712 = vld [vmem:[#allocation8 + $0x918] sm:$0xff]
    %v1713 = vld [vmem:[#allocation8 + $0x920] sm:$0xff]
    %v1714 = vld [vmem:[#allocation8 + $0x928] sm:$0xff]
    %v1715 = vld [vmem:[#allocation8 + $0x930] sm:$0xff]
    %v1716 = vld [vmem:[#allocation8 + $0x938] sm:$0xff]
    %v1717 = vld [vmem:[#allocation8 + $0x940] sm:$0xff]
    %v1718 = vld [vmem:[#allocation8 + $0x948] sm:$0xff]
    %v1719 = vld [vmem:[#allocation8 + $0x950] sm:$0xff]
    %v1720 = vld [vmem:[#allocation8 + $0x958] sm:$0xff]
    %v1721 = vld [vmem:[#allocation8 + $0x960] sm:$0xff]
    %v1722 = vld [vmem:[#allocation8 + $0x968] sm:$0xff]
    %v1723 = vld [vmem:[#allocation8 + $0x970] sm:$0xff]
    %v1724 = vld [vmem:[#allocation8 + $0x978] sm:$0xff]
    %v1725 = vld [vmem:[#allocation8 + $0x980] sm:$0xff]
    %v1726 = vld [vmem:[#allocation8 + $0x988] sm:$0xff]
    %v1727 = vld [vmem:[#allocation8 + $0x990] sm:$0xff]
    %v1728 = vld [vmem:[#allocation8 + $0x998] sm:$0xff]
    %v1729 = vld [vmem:[#allocation8 + $0x9a0] sm:$0xff]
    %v1730 = vld [vmem:[#allocation8 + $0x9a8] sm:$0xff]
    %v1731 = vld [vmem:[#allocation8 + $0x9b0] sm:$0xff]
    %v1732 = vld [vmem:[#allocation8 + $0x9b8] sm:$0xff]
    %v1733 = vld [vmem:[#allocation8 + $0x9c0] sm:$0xff]
    %v1734 = vld [vmem:[#allocation8 + $0x9c8] sm:$0xff]
    %v1735 = vld [vmem:[#allocation8 + $0x9d0] sm:$0xff]
    %v1736 = vld [vmem:[#allocation8 + $0x9d8] sm:$0xff]
    %v1737 = vld [vmem:[#allocation8 + $0x9e0] sm:$0xff]
    %v1738 = vld [vmem:[#allocation8 + $0x9e8] sm:$0xff]
    %v1739 = vld [vmem:[#allocation8 + $0x9f0] sm:$0xff]
    %v1740 = vld [vmem:[#allocation8 + $0x9f8] sm:$0xff]
    %v1741 = vld [vmem:[#allocation8 + $0xa00] sm:$0xff]
    %v1742 = vld [vmem:[#allocation8 + $0xa08] sm:$0xff]
    %v1743 = vld [vmem:[#allocation8 + $0xa10] sm:$0xff]
    %v1744 = vld [vmem:[#allocation8 + $0xa18] sm:$0xff]
    %v1745 = vld [vmem:[#allocation8 + $0xa20] sm:$0xff]
    %v1746 = vld [vmem:[#allocation8 + $0xa28] sm:$0xff]
    %v1747 = vld [vmem:[#allocation8 + $0xa30] sm:$0xff]
    %v1748 = vld [vmem:[#allocation8 + $0xa38] sm:$0xff]
    %v1749 = vld [vmem:[#allocation8 + $0xa40] sm:$0xff]
    %v1750 = vld [vmem:[#allocation8 + $0xa48] sm:$0xff]
    %v1751 = vld [vmem:[#allocation8 + $0xa50] sm:$0xff]
    %v1752 = vld [vmem:[#allocation8 + $0xa58] sm:$0xff]
    %v1753 = vld [vmem:[#allocation8 + $0xa60] sm:$0xff]
    %v1754 = vld [vmem:[#allocation8 + $0xa68] sm:$0xff]
    %v1755 = vld [vmem:[#allocation8 + $0xa70] sm:$0xff]
    %v1756 = vld [vmem:[#allocation8 + $0xa78] sm:$0xff]
    %v1757 = vld [vmem:[#allocation8 + $0xa80] sm:$0xff]
    %v1758 = vld [vmem:[#allocation8 + $0xa88] sm:$0xff]
    %v1759 = vld [vmem:[#allocation8 + $0xa90] sm:$0xff]
    %v1760 = vld [vmem:[#allocation8 + $0xa98] sm:$0xff]
    %v1761 = vld [vmem:[#allocation8 + $0xaa0] sm:$0xff]
    %v1762 = vld [vmem:[#allocation8 + $0xaa8] sm:$0xff]
    %v1763 = vld [vmem:[#allocation8 + $0xab0] sm:$0xff]
    %v1764 = vld [vmem:[#allocation8 + $0xab8] sm:$0xff]
    %v1765 = vld [vmem:[#allocation8 + $0xac0] sm:$0xff]
    %v1766 = vld [vmem:[#allocation8 + $0xac8] sm:$0xff]
    %v1767 = vld [vmem:[#allocation8 + $0xad0] sm:$0xff]
    %v1768 = vld [vmem:[#allocation8 + $0xad8] sm:$0xff]
    %v1769 = vld [vmem:[#allocation8 + $0xae0] sm:$0xff]
    %v1770 = vld [vmem:[#allocation8 + $0xae8] sm:$0xff]
    %v1771 = vld [vmem:[#allocation8 + $0xaf0] sm:$0xff]
    %v1772 = vld [vmem:[#allocation8 + $0xaf8] sm:$0xff]
    %v1773 = vld [vmem:[#allocation8 + $0xb00] sm:$0xff]
    %v1774 = vld [vmem:[#allocation8 + $0xb08] sm:$0xff]
    %v1775 = vld [vmem:[#allocation8 + $0xb10] sm:$0xff]
    %v1776 = vld [vmem:[#allocation8 + $0xb18] sm:$0xff]
    %v1777 = vld [vmem:[#allocation8 + $0xb20] sm:$0xff]
    %v1778 = vld [vmem:[#allocation8 + $0xb28] sm:$0xff]
    %v1779 = vld [vmem:[#allocation8 + $0xb30] sm:$0xff]
    %v1780 = vld [vmem:[#allocation8 + $0xb38] sm:$0xff]
    %v1781 = vld [vmem:[#allocation8 + $0xb40] sm:$0xff]
    %v1782 = vld [vmem:[#allocation8 + $0xb48] sm:$0xff]
    %v1783 = vld [vmem:[#allocation8 + $0xb50] sm:$0xff]
    %v1784 = vld [vmem:[#allocation8 + $0xb58] sm:$0xff]
    %v1785 = vld [vmem:[#allocation8 + $0xb60] sm:$0xff]
    %v1786 = vld [vmem:[#allocation8 + $0xb68] sm:$0xff]
    %v1787 = vld [vmem:[#allocation8 + $0xb70] sm:$0xff]
    %v1788 = vld [vmem:[#allocation8 + $0xb78] sm:$0xff]
    %v1789 = vld [vmem:[#allocation8 + $0xb80] sm:$0xff]
    %v1790 = vld [vmem:[#allocation8 + $0xb88] sm:$0xff]
    %v1791 = vld [vmem:[#allocation8 + $0xb90] sm:$0xff]
    %v1792 = vld [vmem:[#allocation8 + $0xb98] sm:$0xff]
    %v1793 = vld [vmem:[#allocation8 + $0xba0] sm:$0xff]
    %v1794 = vld [vmem:[#allocation8 + $0xba8] sm:$0xff]
    %v1795 = vld [vmem:[#allocation8 + $0xbb0] sm:$0xff]
    %v1796 = vld [vmem:[#allocation8 + $0xbb8] sm:$0xff]
    %v1797 = vld [vmem:[#allocation8 + $0xbc0] sm:$0xff]
    %v1798 = vld [vmem:[#allocation8 + $0xbc8] sm:$0xff]
    %v1799 = vld [vmem:[#allocation8 + $0xbd0] sm:$0xff]
    %v1800 = vld [vmem:[#allocation8 + $0xbd8] sm:$0xff]
    %v1801 = vld [vmem:[#allocation8 + $0xbe0] sm:$0xff]
    %v1802 = vld [vmem:[#allocation8 + $0xbe8] sm:$0xff]
    %v1803 = vld [vmem:[#allocation8 + $0xbf0] sm:$0xff]
    %v1804 = vld [vmem:[#allocation8 + $0xbf8] sm:$0xff]
    %v1805 = vld [vmem:[#allocation8 + $0xc00] sm:$0xff]
    %v1806 = vld [vmem:[#allocation8 + $0xc08] sm:$0xff]
    %v1807 = vld [vmem:[#allocation8 + $0xc10] sm:$0xff]
    %v1808 = vld [vmem:[#allocation8 + $0xc18] sm:$0xff]
    %v1809 = vld [vmem:[#allocation8 + $0xc20] sm:$0xff]
    %v1810 = vld [vmem:[#allocation8 + $0xc28] sm:$0xff]
    %v1811 = vld [vmem:[#allocation8 + $0xc30] sm:$0xff]
    %v1812 = vld [vmem:[#allocation8 + $0xc38] sm:$0xff]
    %v1813 = vld [vmem:[#allocation8 + $0xc40] sm:$0xff]
    %v1814 = vld [vmem:[#allocation8 + $0xc48] sm:$0xff]
    %v1815 = vld [vmem:[#allocation8 + $0xc50] sm:$0xff]
    %v1816 = vld [vmem:[#allocation8 + $0xc58] sm:$0xff]
    %v1817 = vld [vmem:[#allocation8 + $0xc60] sm:$0xff]
    %v1818 = vld [vmem:[#allocation8 + $0xc68] sm:$0xff]
    %v1819 = vld [vmem:[#allocation8 + $0xc70] sm:$0xff]
    %v1820 = vld [vmem:[#allocation8 + $0xc78] sm:$0xff]
    %v1821 = vld [vmem:[#allocation8 + $0xc80] sm:$0xff]
    %v1822 = vld [vmem:[#allocation8 + $0xc88] sm:$0xff]
    %v1823 = vld [vmem:[#allocation8 + $0xc90] sm:$0xff]
    %v1824 = vld [vmem:[#allocation8 + $0xc98] sm:$0xff]
    %v1825 = vld [vmem:[#allocation8 + $0xca0] sm:$0xff]
    %v1826 = vld [vmem:[#allocation8 + $0xca8] sm:$0xff]
    %v1827 = vld [vmem:[#allocation8 + $0xcb0] sm:$0xff]
    %v1828 = vld [vmem:[#allocation8 + $0xcb8] sm:$0xff]
    %v1829 = vld [vmem:[#allocation8 + $0xcc0] sm:$0xff]
    %v1830 = vld [vmem:[#allocation8 + $0xcc8] sm:$0xff]
    %v1831 = vld [vmem:[#allocation8 + $0xcd0] sm:$0xff]
    %v1832 = vld [vmem:[#allocation8 + $0xcd8] sm:$0xff]
    %v1833 = vld [vmem:[#allocation8 + $0xce0] sm:$0xff]
    %v1834 = vld [vmem:[#allocation8 + $0xce8] sm:$0xff]
    %v1835 = vld [vmem:[#allocation8 + $0xcf0] sm:$0xff]
    %v1836 = vld [vmem:[#allocation8 + $0xcf8] sm:$0xff]
    %v1837 = vld [vmem:[#allocation8 + $0xd00] sm:$0xff]
    %v1838 = vld [vmem:[#allocation8 + $0xd08] sm:$0xff]
    %v1839 = vld [vmem:[#allocation8 + $0xd10] sm:$0xff]
    %v1840 = vld [vmem:[#allocation8 + $0xd18] sm:$0xff]
    %v1841 = vld [vmem:[#allocation8 + $0xd20] sm:$0xff]
    %v1842 = vld [vmem:[#allocation8 + $0xd28] sm:$0xff]
    %v1843 = vld [vmem:[#allocation8 + $0xd30] sm:$0xff]
    %v1844 = vld [vmem:[#allocation8 + $0xd38] sm:$0xff]
    %v1845 = vld [vmem:[#allocation8 + $0xd40] sm:$0xff]
    %v1846 = vld [vmem:[#allocation8 + $0xd48] sm:$0xff]
    %v1847 = vld [vmem:[#allocation8 + $0xd50] sm:$0xff]
    %v1848 = vld [vmem:[#allocation8 + $0xd58] sm:$0xff]
    %v1849 = vld [vmem:[#allocation8 + $0xd60] sm:$0xff]
    %v1850 = vld [vmem:[#allocation8 + $0xd68] sm:$0xff]
    %v1851 = vld [vmem:[#allocation8 + $0xd70] sm:$0xff]
    %v1852 = vld [vmem:[#allocation8 + $0xd78] sm:$0xff]
    %v1853 = vld [vmem:[#allocation8 + $0xd80] sm:$0xff]
    %v1854 = vld [vmem:[#allocation8 + $0xd88] sm:$0xff]
    %v1855 = vld [vmem:[#allocation8 + $0xd90] sm:$0xff]
    %v1856 = vld [vmem:[#allocation8 + $0xd98] sm:$0xff]
    %v1857 = vld [vmem:[#allocation8 + $0xda0] sm:$0xff]
    %v1858 = vld [vmem:[#allocation8 + $0xda8] sm:$0xff]
    %v1859 = vld [vmem:[#allocation8 + $0xdb0] sm:$0xff]
    %v1860 = vld [vmem:[#allocation8 + $0xdb8] sm:$0xff]
    %v1861 = vld [vmem:[#allocation8 + $0xdc0] sm:$0xff]
    %v1862 = vld [vmem:[#allocation8 + $0xdc8] sm:$0xff]
    %v1863 = vld [vmem:[#allocation8 + $0xdd0] sm:$0xff]
    %v1864 = vld [vmem:[#allocation8 + $0xdd8] sm:$0xff]
    %v1865 = vld [vmem:[#allocation8 + $0xde0] sm:$0xff]
    %v1866 = vld [vmem:[#allocation8 + $0xde8] sm:$0xff]
    %v1867 = vld [vmem:[#allocation8 + $0xdf0] sm:$0xff]
    %v1868 = vld [vmem:[#allocation8 + $0xdf8] sm:$0xff]
    %v1869 = vld [vmem:[#allocation8 + $0xe00] sm:$0xff]
    %v1870 = vld [vmem:[#allocation8 + $0xe08] sm:$0xff]
    %v1871 = vld [vmem:[#allocation8 + $0xe10] sm:$0xff]
    %v1872 = vld [vmem:[#allocation8 + $0xe18] sm:$0xff]
    %v1873 = vld [vmem:[#allocation8 + $0xe20] sm:$0xff]
    %v1874 = vld [vmem:[#allocation8 + $0xe28] sm:$0xff]
    %v1875 = vld [vmem:[#allocation8 + $0xe30] sm:$0xff]
    %v1876 = vld [vmem:[#allocation8 + $0xe38] sm:$0xff]
    %v1877 = vld [vmem:[#allocation8 + $0xe40] sm:$0xff]
    %v1878 = vld [vmem:[#allocation8 + $0xe48] sm:$0xff]
    %v1879 = vld [vmem:[#allocation8 + $0xe50] sm:$0xff]
    %v1880 = vld [vmem:[#allocation8 + $0xe58] sm:$0xff]
    %v1881 = vld [vmem:[#allocation8 + $0xe60] sm:$0xff]
    %v1882 = vld [vmem:[#allocation8 + $0xe68] sm:$0xff]
    %v1883 = vld [vmem:[#allocation8 + $0xe70] sm:$0xff]
    %v1884 = vld [vmem:[#allocation8 + $0xe78] sm:$0xff]
    %v1885 = vld [vmem:[#allocation8 + $0xe80] sm:$0xff]
    %v1886 = vld [vmem:[#allocation8 + $0xe88] sm:$0xff]
    %v1887 = vld [vmem:[#allocation8 + $0xe90] sm:$0xff]
    %v1888 = vld [vmem:[#allocation8 + $0xe98] sm:$0xff]
    %v1889 = vld [vmem:[#allocation8 + $0xea0] sm:$0xff]
    %v1890 = vld [vmem:[#allocation8 + $0xea8] sm:$0xff]
    %v1891 = vld [vmem:[#allocation8 + $0xeb0] sm:$0xff]
    %v1892 = vld [vmem:[#allocation8 + $0xeb8] sm:$0xff]
    %v1893 = vld [vmem:[#allocation8 + $0xec0] sm:$0xff]
    %v1894 = vld [vmem:[#allocation8 + $0xec8] sm:$0xff]
    %v1895 = vld [vmem:[#allocation8 + $0xed0] sm:$0xff]
    %v1896 = vld [vmem:[#allocation8 + $0xed8] sm:$0xff]
    %v1897 = vld [vmem:[#allocation8 + $0xee0] sm:$0xff]
    %v1898 = vld [vmem:[#allocation8 + $0xee8] sm:$0xff]
    %v1899 = vld [vmem:[#allocation8 + $0xef0] sm:$0xff]
    %v1900 = vld [vmem:[#allocation8 + $0xef8] sm:$0xff]
    %v1901 = vld [vmem:[#allocation8 + $0xf00] sm:$0xff]
    %v1902 = vld [vmem:[#allocation8 + $0xf08] sm:$0xff]
    %v1903 = vld [vmem:[#allocation8 + $0xf10] sm:$0xff]
    %v1904 = vld [vmem:[#allocation8 + $0xf18] sm:$0xff]
    %v1905 = vld [vmem:[#allocation8 + $0xf20] sm:$0xff]
    %v1906 = vld [vmem:[#allocation8 + $0xf28] sm:$0xff]
    %v1907 = vld [vmem:[#allocation8 + $0xf30] sm:$0xff]
    %v1908 = vld [vmem:[#allocation8 + $0xf38] sm:$0xff]
    %v1909 = vld [vmem:[#allocation8 + $0xf40] sm:$0xff]
    %v1910 = vld [vmem:[#allocation8 + $0xf48] sm:$0xff]
    %v1911 = vld [vmem:[#allocation8 + $0xf50] sm:$0xff]
    %v1912 = vld [vmem:[#allocation8 + $0xf58] sm:$0xff]
    %v1913 = vld [vmem:[#allocation8 + $0xf60] sm:$0xff]
    %v1914 = vld [vmem:[#allocation8 + $0xf68] sm:$0xff]
    %v1915 = vld [vmem:[#allocation8 + $0xf70] sm:$0xff]
    %v1916 = vld [vmem:[#allocation8 + $0xf78] sm:$0xff]
    %v1917 = vld [vmem:[#allocation8 + $0xf80] sm:$0xff]
    %v1918 = vld [vmem:[#allocation8 + $0xf88] sm:$0xff]
    %v1919 = vld [vmem:[#allocation8 + $0xf90] sm:$0xff]
    %v1920 = vld [vmem:[#allocation8 + $0xf98] sm:$0xff]
    %v1921 = vld [vmem:[#allocation8 + $0xfa0] sm:$0xff]
    %v1922 = vld [vmem:[#allocation8 + $0xfa8] sm:$0xff]
    %v1923 = vld [vmem:[#allocation8 + $0xfb0] sm:$0xff]
    %v1924 = vld [vmem:[#allocation8 + $0xfb8] sm:$0xff]
    %v1925 = vld [vmem:[#allocation8 + $0xfc0] sm:$0xff]
    %v1926 = vld [vmem:[#allocation8 + $0xfc8] sm:$0xff]
    %v1927 = vld [vmem:[#allocation8 + $0xfd0] sm:$0xff]
    %v1928 = vld [vmem:[#allocation8 + $0xfd8] sm:$0xff]
    %v1929 = vld [vmem:[#allocation8 + $0xfe0] sm:$0xff]
    %v1930 = vld [vmem:[#allocation8 + $0xfe8] sm:$0xff]
    %v1931 = vld [vmem:[#allocation8 + $0xff0] sm:$0xff]
    %v1932 = vld [vmem:[#allocation8 + $0xff8] sm:$0xff]
    %v1933 = vld [vmem:[#allocation8 + $0x1000] sm:$0xff]
    %v1934 = vld [vmem:[#allocation8 + $0x1008] sm:$0xff]
    %v1935 = vld [vmem:[#allocation8 + $0x1010] sm:$0xff]
    %v1936 = vld [vmem:[#allocation8 + $0x1018] sm:$0xff]
    %v1937 = vld [vmem:[#allocation8 + $0x1020] sm:$0xff]
    %v1938 = vld [vmem:[#allocation8 + $0x1028] sm:$0xff]
    %v1939 = vld [vmem:[#allocation8 + $0x1030] sm:$0xff]
    %v1940 = vld [vmem:[#allocation8 + $0x1038] sm:$0xff]
    %v1941 = vld [vmem:[#allocation8 + $0x1040] sm:$0xff]
    %v1942 = vld [vmem:[#allocation8 + $0x1048] sm:$0xff]
    %v1943 = vld [vmem:[#allocation8 + $0x1050] sm:$0xff]
    %v1944 = vld [vmem:[#allocation8 + $0x1058] sm:$0xff]
    %v1945 = vld [vmem:[#allocation8 + $0x1060] sm:$0xff]
    %v1946 = vld [vmem:[#allocation8 + $0x1068] sm:$0xff]
    %v1947 = vld [vmem:[#allocation8 + $0x1070] sm:$0xff]
    %v1948 = vld [vmem:[#allocation8 + $0x1078] sm:$0xff]
    %v1949 = vld [vmem:[#allocation8 + $0x1080] sm:$0xff]
    %v1950 = vld [vmem:[#allocation8 + $0x1088] sm:$0xff]
    %v1951 = vld [vmem:[#allocation8 + $0x1090] sm:$0xff]
    %v1952 = vld [vmem:[#allocation8 + $0x1098] sm:$0xff]
    %v1953 = vld [vmem:[#allocation8 + $0x10a0] sm:$0xff]
    %v1954 = vld [vmem:[#allocation8 + $0x10a8] sm:$0xff]
    %v1955 = vld [vmem:[#allocation8 + $0x10b0] sm:$0xff]
    %v1956 = vld [vmem:[#allocation8 + $0x10b8] sm:$0xff]
    %v1957 = vld [vmem:[#allocation8 + $0x10c0] sm:$0xff]
    %v1958 = vld [vmem:[#allocation8 + $0x10c8] sm:$0xff]
    %v1959 = vld [vmem:[#allocation8 + $0x10d0] sm:$0xff]
    %v1960 = vld [vmem:[#allocation8 + $0x10d8] sm:$0xff]
    %v1961 = vld [vmem:[#allocation8 + $0x10e0] sm:$0xff]
    %v1962 = vld [vmem:[#allocation8 + $0x10e8] sm:$0xff]
    %v1963 = vld [vmem:[#allocation8 + $0x10f0] sm:$0xff]
    %v1964 = vld [vmem:[#allocation8 + $0x10f8] sm:$0xff]
    %v1965 = vld [vmem:[#allocation8 + $0x1100] sm:$0xff]
    %v1966 = vld [vmem:[#allocation8 + $0x1108] sm:$0xff]
    %v1967 = vld [vmem:[#allocation8 + $0x1110] sm:$0xff]
    %v1968 = vld [vmem:[#allocation8 + $0x1118] sm:$0xff]
    %v1969 = vld [vmem:[#allocation8 + $0x1120] sm:$0xff]
    %v1970 = vld [vmem:[#allocation8 + $0x1128] sm:$0xff]
    %v1971 = vld [vmem:[#allocation8 + $0x1130] sm:$0xff]
    %v1972 = vld [vmem:[#allocation8 + $0x1138] sm:$0xff]
    %v1973 = vld [vmem:[#allocation8 + $0x1140] sm:$0xff]
    %v1974 = vld [vmem:[#allocation8 + $0x1148] sm:$0xff]
    %v1975 = vld [vmem:[#allocation8 + $0x1150] sm:$0xff]
    %v1976 = vld [vmem:[#allocation8 + $0x1158] sm:$0xff]
    %v1977 = vld [vmem:[#allocation8 + $0x1160] sm:$0xff]
    %v1978 = vld [vmem:[#allocation8 + $0x1168] sm:$0xff]
    %v1979 = vld [vmem:[#allocation8 + $0x1170] sm:$0xff]
    %v1980 = vld [vmem:[#allocation8 + $0x1178] sm:$0xff]
    %v1981 = vld [vmem:[#allocation8 + $0x1180] sm:$0xff]
    %v1982 = vld [vmem:[#allocation8 + $0x1188] sm:$0xff]
    %v1983 = vld [vmem:[#allocation8 + $0x1190] sm:$0xff]
    %v1984 = vld [vmem:[#allocation8 + $0x1198] sm:$0xff]
    %v1985 = vld [vmem:[#allocation8 + $0x11a0] sm:$0xff]
    %v1986 = vld [vmem:[#allocation8 + $0x11a8] sm:$0xff]
    %v1987 = vld [vmem:[#allocation8 + $0x11b0] sm:$0xff]
    %v1988 = vld [vmem:[#allocation8 + $0x11b8] sm:$0xff]
    %v1989 = vld [vmem:[#allocation8 + $0x11c0] sm:$0xff]
    %v1990 = vld [vmem:[#allocation8 + $0x11c8] sm:$0xff]
    %v1991 = vld [vmem:[#allocation8 + $0x11d0] sm:$0xff]
    %v1992 = vld [vmem:[#allocation8 + $0x11d8] sm:$0xff]
    %v1993 = vld [vmem:[#allocation8 + $0x11e0] sm:$0xff]
    %v1994 = vld [vmem:[#allocation8 + $0x11e8] sm:$0xff]
    %v1995 = vld [vmem:[#allocation8 + $0x11f0] sm:$0xff]
    %v1996 = vld [vmem:[#allocation8 + $0x11f8] sm:$0xff]
    %v1997 = vld [vmem:[#allocation8 + $0x1200] sm:$0xff]
    %v1998 = vld [vmem:[#allocation8 + $0x1208] sm:$0xff]
    %v1999 = vld [vmem:[#allocation8 + $0x1210] sm:$0xff]
    %v2000 = vld [vmem:[#allocation8 + $0x1218] sm:$0xff]
    %v2001 = vld [vmem:[#allocation8 + $0x1220] sm:$0xff]
    %v2002 = vld [vmem:[#allocation8 + $0x1228] sm:$0xff]
    %v2003 = vld [vmem:[#allocation8 + $0x1230] sm:$0xff]
    %v2004 = vld [vmem:[#allocation8 + $0x1238] sm:$0xff]
    %v2005 = vld [vmem:[#allocation8 + $0x1240] sm:$0xff]
    %v2006 = vld [vmem:[#allocation8 + $0x1248] sm:$0xff]
    %v2007 = vld [vmem:[#allocation8 + $0x1250] sm:$0xff]
    %v2008 = vld [vmem:[#allocation8 + $0x1258] sm:$0xff]
    %v2009 = vld [vmem:[#allocation8 + $0x1260] sm:$0xff]
    %v2010 = vld [vmem:[#allocation8 + $0x1268] sm:$0xff]
    %v2011 = vld [vmem:[#allocation8 + $0x1270] sm:$0xff]
    %v2012 = vld [vmem:[#allocation8 + $0x1278] sm:$0xff]
    %v2013 = vld [vmem:[#allocation8 + $0x1280] sm:$0xff]
    %v2014 = vld [vmem:[#allocation8 + $0x1288] sm:$0xff]
    %v2015 = vld [vmem:[#allocation8 + $0x1290] sm:$0xff]
    %v2016 = vld [vmem:[#allocation8 + $0x1298] sm:$0xff]
    %v2017 = vld [vmem:[#allocation8 + $0x12a0] sm:$0xff]
    %v2018 = vld [vmem:[#allocation8 + $0x12a8] sm:$0xff]
    %v2019 = vld [vmem:[#allocation8 + $0x12b0] sm:$0xff]
    %v2020 = vld [vmem:[#allocation8 + $0x12b8] sm:$0xff]
    %v2021 = vld [vmem:[#allocation8 + $0x12c0] sm:$0xff]
    %v2022 = vld [vmem:[#allocation8 + $0x12c8] sm:$0xff]
    %v2023 = vld [vmem:[#allocation8 + $0x12d0] sm:$0xff]
    %v2024 = vld [vmem:[#allocation8 + $0x12d8] sm:$0xff]
    %v2025 = vld [vmem:[#allocation8 + $0x12e0] sm:$0xff]
    %v2026 = vld [vmem:[#allocation8 + $0x12e8] sm:$0xff]
    %v2027 = vld [vmem:[#allocation8 + $0x12f0] sm:$0xff]
    %v2028 = vld [vmem:[#allocation8 + $0x12f8] sm:$0xff]
    %v2029 = vld [vmem:[#allocation8 + $0x1300] sm:$0xff]
    %v2030 = vld [vmem:[#allocation8 + $0x1308] sm:$0xff]
    %v2031 = vld [vmem:[#allocation8 + $0x1310] sm:$0xff]
    %v2032 = vld [vmem:[#allocation8 + $0x1318] sm:$0xff]
    %v2033 = vld [vmem:[#allocation8 + $0x1320] sm:$0xff]
    %v2034 = vld [vmem:[#allocation8 + $0x1328] sm:$0xff]
    %v2035 = vld [vmem:[#allocation8 + $0x1330] sm:$0xff]
    %v2036 = vld [vmem:[#allocation8 + $0x1338] sm:$0xff]
    %v2037 = vld [vmem:[#allocation8 + $0x1340] sm:$0xff]
    %v2038 = vld [vmem:[#allocation8 + $0x1348] sm:$0xff]
    %v2039 = vld [vmem:[#allocation8 + $0x1350] sm:$0xff]
    %v2040 = vld [vmem:[#allocation8 + $0x1358] sm:$0xff]
    %v2041 = vld [vmem:[#allocation8 + $0x1360] sm:$0xff]
    %v2042 = vld [vmem:[#allocation8 + $0x1368] sm:$0xff]
    %v2043 = vld [vmem:[#allocation8 + $0x1370] sm:$0xff]
    %v2044 = vld [vmem:[#allocation8 + $0x1378] sm:$0xff]
    %v2045 = vld [vmem:[#allocation8 + $0x1380] sm:$0xff]
    %v2046 = vld [vmem:[#allocation8 + $0x1388] sm:$0xff]
    %v2047 = vld [vmem:[#allocation8 + $0x1390] sm:$0xff]
    %v2048 = vld [vmem:[#allocation8 + $0x1398] sm:$0xff]
    %v2049 = vld [vmem:[#allocation8 + $0x13a0] sm:$0xff]
    %v2050 = vld [vmem:[#allocation8 + $0x13a8] sm:$0xff]
    %v2051 = vld [vmem:[#allocation8 + $0x13b0] sm:$0xff]
    %v2052 = vld [vmem:[#allocation8 + $0x13b8] sm:$0xff]
    %v2053 = vld [vmem:[#allocation8 + $0x13c0] sm:$0xff]
    %v2054 = vld [vmem:[#allocation8 + $0x13c8] sm:$0xff]
    %v2055 = vld [vmem:[#allocation8 + $0x13d0] sm:$0xff]
    %v2056 = vld [vmem:[#allocation8 + $0x13d8] sm:$0xff]
    %v2057 = vld [vmem:[#allocation8 + $0x13e0] sm:$0xff]
    %v2058 = vld [vmem:[#allocation8 + $0x13e8] sm:$0xff]
    %v2059 = vld [vmem:[#allocation8 + $0x13f0] sm:$0xff]
    %v2060 = vld [vmem:[#allocation8 + $0x13f8] sm:$0xff]
    %v2061 = vld [vmem:[#allocation8 + $0x1400] sm:$0xff]
    %v2062 = vld [vmem:[#allocation8 + $0x1408] sm:$0xff]
    %v2063 = vld [vmem:[#allocation8 + $0x1410] sm:$0xff]
    %v2064 = vld [vmem:[#allocation8 + $0x1418] sm:$0xff]
    %v2065 = vld [vmem:[#allocation8 + $0x1420] sm:$0xff]
    %v2066 = vld [vmem:[#allocation8 + $0x1428] sm:$0xff]
    %v2067 = vld [vmem:[#allocation8 + $0x1430] sm:$0xff]
    %v2068 = vld [vmem:[#allocation8 + $0x1438] sm:$0xff]
    %v2069 = vld [vmem:[#allocation8 + $0x1440] sm:$0xff]
    %v2070 = vld [vmem:[#allocation8 + $0x1448] sm:$0xff]
    %v2071 = vld [vmem:[#allocation8 + $0x1450] sm:$0xff]
    %v2072 = vld [vmem:[#allocation8 + $0x1458] sm:$0xff]
    %v2073 = vld [vmem:[#allocation8 + $0x1460] sm:$0xff]
    %v2074 = vld [vmem:[#allocation8 + $0x1468] sm:$0xff]
    %v2075 = vld [vmem:[#allocation8 + $0x1470] sm:$0xff]
    %v2076 = vld [vmem:[#allocation8 + $0x1478] sm:$0xff]
    %v2077 = vld [vmem:[#allocation8 + $0x1480] sm:$0xff]
    %v2078 = vld [vmem:[#allocation8 + $0x1488] sm:$0xff]
    %v2079 = vld [vmem:[#allocation8 + $0x1490] sm:$0xff]
    %v2080 = vld [vmem:[#allocation8 + $0x1498] sm:$0xff]
    %v2081 = vld [vmem:[#allocation8 + $0x14a0] sm:$0xff]
    %v2082 = vld [vmem:[#allocation8 + $0x14a8] sm:$0xff]
    %v2083 = vld [vmem:[#allocation8 + $0x14b0] sm:$0xff]
    %v2084 = vld [vmem:[#allocation8 + $0x14b8] sm:$0xff]
    %v2085 = vld [vmem:[#allocation8 + $0x14c0] sm:$0xff]
    %v2086 = vld [vmem:[#allocation8 + $0x14c8] sm:$0xff]
    %v2087 = vld [vmem:[#allocation8 + $0x14d0] sm:$0xff]
    %v2088 = vld [vmem:[#allocation8 + $0x14d8] sm:$0xff]
    %v2089 = vld [vmem:[#allocation8 + $0x14e0] sm:$0xff]
    %v2090 = vld [vmem:[#allocation8 + $0x14e8] sm:$0xff]
    %v2091 = vld [vmem:[#allocation8 + $0x14f0] sm:$0xff]
    %v2092 = vld [vmem:[#allocation8 + $0x14f8] sm:$0xff]
    %v2093 = vld [vmem:[#allocation8 + $0x1500] sm:$0xff]
    %v2094 = vld [vmem:[#allocation8 + $0x1508] sm:$0xff]
    %v2095 = vld [vmem:[#allocation8 + $0x1510] sm:$0xff]
    %v2096 = vld [vmem:[#allocation8 + $0x1518] sm:$0xff]
    %v2097 = vld [vmem:[#allocation8 + $0x1520] sm:$0xff]
    %v2098 = vld [vmem:[#allocation8 + $0x1528] sm:$0xff]
    %v2099 = vld [vmem:[#allocation8 + $0x1530] sm:$0xff]
    %v2100 = vld [vmem:[#allocation8 + $0x1538] sm:$0xff]
    %v2101 = vld [vmem:[#allocation8 + $0x1540] sm:$0xff]
    %v2102 = vld [vmem:[#allocation8 + $0x1548] sm:$0xff]
    %v2103 = vld [vmem:[#allocation8 + $0x1550] sm:$0xff]
    %v2104 = vld [vmem:[#allocation8 + $0x1558] sm:$0xff]
    %v2105 = vld [vmem:[#allocation8 + $0x1560] sm:$0xff]
    %v2106 = vld [vmem:[#allocation8 + $0x1568] sm:$0xff]
    %v2107 = vld [vmem:[#allocation8 + $0x1570] sm:$0xff]
    %v2108 = vld [vmem:[#allocation8 + $0x1578] sm:$0xff]
    %v2109 = vld [vmem:[#allocation8 + $0x1580] sm:$0xff]
    %v2110 = vld [vmem:[#allocation8 + $0x1588] sm:$0xff]
    %v2111 = vld [vmem:[#allocation8 + $0x1590] sm:$0xff]
    %v2112 = vld [vmem:[#allocation8 + $0x1598] sm:$0xff]
    %v2113 = vld [vmem:[#allocation8 + $0x15a0] sm:$0xff]
    %v2114 = vld [vmem:[#allocation8 + $0x15a8] sm:$0xff]
    %v2115 = vld [vmem:[#allocation8 + $0x15b0] sm:$0xff]
    %v2116 = vld [vmem:[#allocation8 + $0x15b8] sm:$0xff]
    %v2117 = vld [vmem:[#allocation8 + $0x15c0] sm:$0xff]
    %v2118 = vld [vmem:[#allocation8 + $0x15c8] sm:$0xff]
    %v2119 = vld [vmem:[#allocation8 + $0x15d0] sm:$0xff]
    %v2120 = vld [vmem:[#allocation8 + $0x15d8] sm:$0xff]
    %v2121 = vld [vmem:[#allocation8 + $0x15e0] sm:$0xff]
    %v2122 = vld [vmem:[#allocation8 + $0x15e8] sm:$0xff]
    %v2123 = vld [vmem:[#allocation8 + $0x15f0] sm:$0xff]
    %v2124 = vld [vmem:[#allocation8 + $0x15f8] sm:$0xff]
    %v2125 = vld [vmem:[#allocation8 + $0x1600] sm:$0xff]
    %v2126 = vld [vmem:[#allocation8 + $0x1608] sm:$0xff]
    %v2127 = vld [vmem:[#allocation8 + $0x1610] sm:$0xff]
    %v2128 = vld [vmem:[#allocation8 + $0x1618] sm:$0xff]
    %v2129 = vld [vmem:[#allocation8 + $0x1620] sm:$0xff]
    %v2130 = vld [vmem:[#allocation8 + $0x1628] sm:$0xff]
    %v2131 = vld [vmem:[#allocation8 + $0x1630] sm:$0xff]
    %v2132 = vld [vmem:[#allocation8 + $0x1638] sm:$0xff]
    %v2133 = vld [vmem:[#allocation8 + $0x1640] sm:$0xff]
    %v2134 = vld [vmem:[#allocation8 + $0x1648] sm:$0xff]
    %v2135 = vld [vmem:[#allocation8 + $0x1650] sm:$0xff]
    %v2136 = vld [vmem:[#allocation8 + $0x1658] sm:$0xff]
    %v2137 = vld [vmem:[#allocation8 + $0x1660] sm:$0xff]
    %v2138 = vld [vmem:[#allocation8 + $0x1668] sm:$0xff]
    %v2139 = vld [vmem:[#allocation8 + $0x1670] sm:$0xff]
    %v2140 = vld [vmem:[#allocation8 + $0x1678] sm:$0xff]
    %v2141 = vld [vmem:[#allocation8 + $0x1680] sm:$0xff]
    %v2142 = vld [vmem:[#allocation8 + $0x1688] sm:$0xff]
    %v2143 = vld [vmem:[#allocation8 + $0x1690] sm:$0xff]
    %v2144 = vld [vmem:[#allocation8 + $0x1698] sm:$0xff]
    %v2145 = vld [vmem:[#allocation8 + $0x16a0] sm:$0xff]
    %v2146 = vld [vmem:[#allocation8 + $0x16a8] sm:$0xff]
    %v2147 = vld [vmem:[#allocation8 + $0x16b0] sm:$0xff]
    %v2148 = vld [vmem:[#allocation8 + $0x16b8] sm:$0xff]
    %v2149 = vld [vmem:[#allocation8 + $0x16c0] sm:$0xff]
    %v2150 = vld [vmem:[#allocation8 + $0x16c8] sm:$0xff]
    %v2151 = vld [vmem:[#allocation8 + $0x16d0] sm:$0xff]
    %v2152 = vld [vmem:[#allocation8 + $0x16d8] sm:$0xff]
    %v2153 = vld [vmem:[#allocation8 + $0x16e0] sm:$0xff]
    %v2154 = vld [vmem:[#allocation8 + $0x16e8] sm:$0xff]
    %v2155 = vld [vmem:[#allocation8 + $0x16f0] sm:$0xff]
    %v2156 = vld [vmem:[#allocation8 + $0x16f8] sm:$0xff]
    %v2157 = vld [vmem:[#allocation8 + $0x1700] sm:$0xff]
    %v2158 = vld [vmem:[#allocation8 + $0x1708] sm:$0xff]
    %v2159 = vld [vmem:[#allocation8 + $0x1710] sm:$0xff]
    %v2160 = vld [vmem:[#allocation8 + $0x1718] sm:$0xff]
    %v2161 = vld [vmem:[#allocation8 + $0x1720] sm:$0xff]
    %v2162 = vld [vmem:[#allocation8 + $0x1728] sm:$0xff]
    %v2163 = vld [vmem:[#allocation8 + $0x1730] sm:$0xff]
    %v2164 = vld [vmem:[#allocation8 + $0x1738] sm:$0xff]
    %v2165 = vld [vmem:[#allocation8 + $0x1740] sm:$0xff]
    %v2166 = vld [vmem:[#allocation8 + $0x1748] sm:$0xff]
    %v2167 = vld [vmem:[#allocation8 + $0x1750] sm:$0xff]
    %v2168 = vld [vmem:[#allocation8 + $0x1758] sm:$0xff]
    %v2169 = vld [vmem:[#allocation8 + $0x1760] sm:$0xff]
    %v2170 = vld [vmem:[#allocation8 + $0x1768] sm:$0xff]
    %v2171 = vld [vmem:[#allocation8 + $0x1770] sm:$0xff]
    %v2172 = vld [vmem:[#allocation8 + $0x1778] sm:$0xff]
    %v2173 = vld [vmem:[#allocation8 + $0x1780] sm:$0xff]
    %v2174 = vld [vmem:[#allocation8 + $0x1788] sm:$0xff]
    %v2175 = vld [vmem:[#allocation8 + $0x1790] sm:$0xff]
    %v2176 = vld [vmem:[#allocation8 + $0x1798] sm:$0xff]
    %v2177 = vld [vmem:[#allocation8 + $0x17a0] sm:$0xff]
    %v2178 = vld [vmem:[#allocation8 + $0x17a8] sm:$0xff]
    %v2179 = vld [vmem:[#allocation8 + $0x17b0] sm:$0xff]
    %v2180 = vld [vmem:[#allocation8 + $0x17b8] sm:$0xff]
    %v2181 = vld [vmem:[#allocation8 + $0x17c0] sm:$0xff]
    %v2182 = vld [vmem:[#allocation8 + $0x17c8] sm:$0xff]
    %v2183 = vld [vmem:[#allocation8 + $0x17d0] sm:$0xff]
    %v2184 = vld [vmem:[#allocation8 + $0x17d8] sm:$0xff]
    %v2185 = vld [vmem:[#allocation8 + $0x17e0] sm:$0xff]
    %v2186 = vld [vmem:[#allocation8 + $0x17e8] sm:$0xff]
    %v2187 = vld [vmem:[#allocation8 + $0x17f0] sm:$0xff]
    %v2188 = vld [vmem:[#allocation8 + $0x17f8] sm:$0xff]
    %v2189 = vld [vmem:[#allocation8 + $0x1800] sm:$0xff]
    %v2190 = vld [vmem:[#allocation8 + $0x1808] sm:$0xff]
    %v2191 = vld [vmem:[#allocation8 + $0x1810] sm:$0xff]
    %v2192 = vld [vmem:[#allocation8 + $0x1818] sm:$0xff]
    %v2193 = vld [vmem:[#allocation8 + $0x1820] sm:$0xff]
    %v2194 = vld [vmem:[#allocation8 + $0x1828] sm:$0xff]
    %v2195 = vld [vmem:[#allocation8 + $0x1830] sm:$0xff]
    %v2196 = vld [vmem:[#allocation8 + $0x1838] sm:$0xff]
    %v2197 = vld [vmem:[#allocation8 + $0x1840] sm:$0xff]
    %v2198 = vld [vmem:[#allocation8 + $0x1848] sm:$0xff]
    %v2199 = vld [vmem:[#allocation8 + $0x1850] sm:$0xff]
    %v2200 = vld [vmem:[#allocation8 + $0x1858] sm:$0xff]
    %v2201 = vld [vmem:[#allocation8 + $0x1860] sm:$0xff]
    %v2202 = vld [vmem:[#allocation8 + $0x1868] sm:$0xff]
    %v2203 = vld [vmem:[#allocation8 + $0x1870] sm:$0xff]
    %v2204 = vld [vmem:[#allocation8 + $0x1878] sm:$0xff]
    %v2205 = vld [vmem:[#allocation8 + $0x1880] sm:$0xff]
    %v2206 = vld [vmem:[#allocation8 + $0x1888] sm:$0xff]
    %v2207 = vld [vmem:[#allocation8 + $0x1890] sm:$0xff]
    %v2208 = vld [vmem:[#allocation8 + $0x1898] sm:$0xff]
    %v2209 = vld [vmem:[#allocation8 + $0x18a0] sm:$0xff]
    %v2210 = vld [vmem:[#allocation8 + $0x18a8] sm:$0xff]
    %v2211 = vld [vmem:[#allocation8 + $0x18b0] sm:$0xff]
    %v2212 = vld [vmem:[#allocation8 + $0x18b8] sm:$0xff]
    %v2213 = vld [vmem:[#allocation8 + $0x18c0] sm:$0xff]
    %v2214 = vld [vmem:[#allocation8 + $0x18c8] sm:$0xff]
    %v2215 = vld [vmem:[#allocation8 + $0x18d0] sm:$0xff]
    %v2216 = vld [vmem:[#allocation8 + $0x18d8] sm:$0xff]
    %v2217 = vld [vmem:[#allocation8 + $0x18e0] sm:$0xff]
    %v2218 = vld [vmem:[#allocation8 + $0x18e8] sm:$0xff]
    %v2219 = vld [vmem:[#allocation8 + $0x18f0] sm:$0xff]
    %v2220 = vld [vmem:[#allocation8 + $0x18f8] sm:$0xff]
    %v2221 = vld [vmem:[#allocation10] sm:$0xff]
    %v2222 = vld [vmem:[#allocation10 + $0x8] sm:$0x3]
    %v2225 = vlaneseq
    %v2226 = vshrl.u32 %v2225, 7
    %v2227 = vsub.s32 0, %v2226
    %v2228 = vrot.slane %v2221, %v2227
    %v2229 = vlaneseq
    %v2230 = vshrl.u32 %v2229, 7
    %v2231 = vsub.s32 1, %v2230
    %v2232 = vrot.slane %v2221, %v2231
    %v2233 = vlaneseq
    %v2234 = vshrl.u32 %v2233, 7
    %v2235 = vsub.s32 2, %v2234
    %v2236 = vrot.slane %v2221, %v2235
    %v2237 = vlaneseq
    %v2238 = vshrl.u32 %v2237, 7
    %v2239 = vsub.s32 3, %v2238
    %v2240 = vrot.slane %v2221, %v2239
    %v2241 = vlaneseq
    %v2242 = vshrl.u32 %v2241, 7
    %v2243 = vsub.s32 4, %v2242
    %v2244 = vrot.slane %v2221, %v2243
    %v2245 = vlaneseq
    %v2246 = vshrl.u32 %v2245, 7
    %v2247 = vsub.s32 5, %v2246
    %v2248 = vrot.slane %v2221, %v2247
    %v2249 = vlaneseq
    %v2250 = vshrl.u32 %v2249, 7
    %v2251 = vsub.s32 6, %v2250
    %v2252 = vrot.slane %v2221, %v2251
    %v2253 = vlaneseq
    %v2254 = vshrl.u32 %v2253, 7
    %v2255 = vsub.s32 7, %v2254
    %v2256 = vrot.slane %v2221, %v2255
    %v2257 = vlaneseq
    %v2258 = vshrl.u32 %v2257, 7
    %v2259 = vsub.s32 0, %v2258
    %v2260 = vrot.slane %v2222, %v2259
    %v2261 = vlaneseq
    %v2262 = vshrl.u32 %v2261, 7
    %v2263 = vsub.s32 1, %v2262
    %v2264 = vrot.slane %v2222, %v2263
    %v3075 = vunpack.c.l.b16 %v1421
    %v3076 = vunpack.c.h.b16 %v1421
    %v3077 = vunpack.c.l.b16 %v1422
    %v3078 = vunpack.c.h.b16 %v1422
    %v3079 = vunpack.c.l.b16 %v1423
    %v3080 = vunpack.c.h.b16 %v1423
    %v3081 = vunpack.c.l.b16 %v1424
    %v3082 = vunpack.c.h.b16 %v1424
    %v3083 = vunpack.c.l.b16 %v1425
    %v3084 = vunpack.c.h.b16 %v1425
    %v3085 = vunpack.c.l.b16 %v1426
    %v3086 = vunpack.c.h.b16 %v1426
    %v3087 = vunpack.c.l.b16 %v1427
    %v3088 = vunpack.c.h.b16 %v1427
    %v3089 = vunpack.c.l.b16 %v1428
    %v3090 = vunpack.c.h.b16 %v1428
    %v3091 = vunpack.c.l.b16 %v1429
    %v3092 = vunpack.c.h.b16 %v1429
    %v3093 = vunpack.c.l.b16 %v1430
    %v3094 = vunpack.c.h.b16 %v1430
    %v3095 = vunpack.c.l.b16 %v1431
    %v3096 = vunpack.c.h.b16 %v1431
    %v3097 = vunpack.c.l.b16 %v1432
    %v3098 = vunpack.c.h.b16 %v1432
    %v3099 = vunpack.c.l.b16 %v1433
    %v3100 = vunpack.c.h.b16 %v1433
    %v3101 = vunpack.c.l.b16 %v1434
    %v3102 = vunpack.c.h.b16 %v1434
    %v3103 = vunpack.c.l.b16 %v1435
    %v3104 = vunpack.c.h.b16 %v1435
    %v3105 = vunpack.c.l.b16 %v1436
    %v3106 = vunpack.c.h.b16 %v1436
    %v3107 = vunpack.c.l.b16 %v1437
    %v3108 = vunpack.c.h.b16 %v1437
    %v3109 = vunpack.c.l.b16 %v1438
    %v3110 = vunpack.c.h.b16 %v1438
    %v3111 = vunpack.c.l.b16 %v1439
    %v3112 = vunpack.c.h.b16 %v1439
    %v3113 = vunpack.c.l.b16 %v1440
    %v3114 = vunpack.c.h.b16 %v1440
    %v3115 = vunpack.c.l.b16 %v1441
    %v3116 = vunpack.c.h.b16 %v1441
    %v3117 = vunpack.c.l.b16 %v1442
    %v3118 = vunpack.c.h.b16 %v1442
    %v3119 = vunpack.c.l.b16 %v1443
    %v3120 = vunpack.c.h.b16 %v1443
    %v3121 = vunpack.c.l.b16 %v1444
    %v3122 = vunpack.c.h.b16 %v1444
    %v3123 = vunpack.c.l.b16 %v1445
    %v3124 = vunpack.c.h.b16 %v1445
    %v3125 = vunpack.c.l.b16 %v1446
    %v3126 = vunpack.c.h.b16 %v1446
    %v3127 = vunpack.c.l.b16 %v1447
    %v3128 = vunpack.c.h.b16 %v1447
    %v3129 = vunpack.c.l.b16 %v1448
    %v3130 = vunpack.c.h.b16 %v1448
    %v3131 = vunpack.c.l.b16 %v1449
    %v3132 = vunpack.c.h.b16 %v1449
    %v3133 = vunpack.c.l.b16 %v1450
    %v3134 = vunpack.c.h.b16 %v1450
    %v3135 = vunpack.c.l.b16 %v1451
    %v3136 = vunpack.c.h.b16 %v1451
    %v3137 = vunpack.c.l.b16 %v1452
    %v3138 = vunpack.c.h.b16 %v1452
    %v3139 = vunpack.c.l.b16 %v1453
    %v3140 = vunpack.c.h.b16 %v1453
    %v3141 = vunpack.c.l.b16 %v1454
    %v3142 = vunpack.c.h.b16 %v1454
    %v3143 = vunpack.c.l.b16 %v1455
    %v3144 = vunpack.c.h.b16 %v1455
    %v3145 = vunpack.c.l.b16 %v1456
    %v3146 = vunpack.c.h.b16 %v1456
    %v3147 = vunpack.c.l.b16 %v1457
    %v3148 = vunpack.c.h.b16 %v1457
    %v3149 = vunpack.c.l.b16 %v1458
    %v3150 = vunpack.c.h.b16 %v1458
    %v3151 = vunpack.c.l.b16 %v1459
    %v3152 = vunpack.c.h.b16 %v1459
    %v3153 = vunpack.c.l.b16 %v1460
    %v3154 = vunpack.c.h.b16 %v1460
    %v3155 = vunpack.c.l.b16 %v1461
    %v3156 = vunpack.c.h.b16 %v1461
    %v3157 = vunpack.c.l.b16 %v1462
    %v3158 = vunpack.c.h.b16 %v1462
    %v3159 = vunpack.c.l.b16 %v1463
    %v3160 = vunpack.c.h.b16 %v1463
    %v3161 = vunpack.c.l.b16 %v1464
    %v3162 = vunpack.c.h.b16 %v1464
    %v3163 = vunpack.c.l.b16 %v1465
    %v3164 = vunpack.c.h.b16 %v1465
    %v3165 = vunpack.c.l.b16 %v1466
    %v3166 = vunpack.c.h.b16 %v1466
    %v3167 = vunpack.c.l.b16 %v1467
    %v3168 = vunpack.c.h.b16 %v1467
    %v3169 = vunpack.c.l.b16 %v1468
    %v3170 = vunpack.c.h.b16 %v1468
    %v3171 = vunpack.c.l.b16 %v1469
    %v3172 = vunpack.c.h.b16 %v1469
    %v3173 = vunpack.c.l.b16 %v1470
    %v3174 = vunpack.c.h.b16 %v1470
    %v3175 = vunpack.c.l.b16 %v1471
    %v3176 = vunpack.c.h.b16 %v1471
    %v3177 = vunpack.c.l.b16 %v1472
    %v3178 = vunpack.c.h.b16 %v1472
    %v3179 = vunpack.c.l.b16 %v1473
    %v3180 = vunpack.c.h.b16 %v1473
    %v3181 = vunpack.c.l.b16 %v1474
    %v3182 = vunpack.c.h.b16 %v1474
    %v3183 = vunpack.c.l.b16 %v1475
    %v3184 = vunpack.c.h.b16 %v1475
    %v3185 = vunpack.c.l.b16 %v1476
    %v3186 = vunpack.c.h.b16 %v1476
    %v3187 = vunpack.c.l.b16 %v1477
    %v3188 = vunpack.c.h.b16 %v1477
    %v3189 = vunpack.c.l.b16 %v1478
    %v3190 = vunpack.c.h.b16 %v1478
    %v3191 = vunpack.c.l.b16 %v1479
    %v3192 = vunpack.c.h.b16 %v1479
    %v3193 = vunpack.c.l.b16 %v1480
    %v3194 = vunpack.c.h.b16 %v1480
    %v3195 = vunpack.c.l.b16 %v1481
    %v3196 = vunpack.c.h.b16 %v1481
    %v3197 = vunpack.c.l.b16 %v1482
    %v3198 = vunpack.c.h.b16 %v1482
    %v3199 = vunpack.c.l.b16 %v1483
    %v3200 = vunpack.c.h.b16 %v1483
    %v3201 = vunpack.c.l.b16 %v1484
    %v3202 = vunpack.c.h.b16 %v1484
    %v3203 = vunpack.c.l.b16 %v1485
    %v3204 = vunpack.c.h.b16 %v1485
    %v3205 = vunpack.c.l.b16 %v1486
    %v3206 = vunpack.c.h.b16 %v1486
    %v3207 = vunpack.c.l.b16 %v1487
    %v3208 = vunpack.c.h.b16 %v1487
    %v3209 = vunpack.c.l.b16 %v1488
    %v3210 = vunpack.c.h.b16 %v1488
    %v3211 = vunpack.c.l.b16 %v1489
    %v3212 = vunpack.c.h.b16 %v1489
    %v3213 = vunpack.c.l.b16 %v1490
    %v3214 = vunpack.c.h.b16 %v1490
    %v3215 = vunpack.c.l.b16 %v1491
    %v3216 = vunpack.c.h.b16 %v1491
    %v3217 = vunpack.c.l.b16 %v1492
    %v3218 = vunpack.c.h.b16 %v1492
    %v3219 = vunpack.c.l.b16 %v1493
    %v3220 = vunpack.c.h.b16 %v1493
    %v3221 = vunpack.c.l.b16 %v1494
    %v3222 = vunpack.c.h.b16 %v1494
    %v3223 = vunpack.c.l.b16 %v1495
    %v3224 = vunpack.c.h.b16 %v1495
    %v3225 = vunpack.c.l.b16 %v1496
    %v3226 = vunpack.c.h.b16 %v1496
    %v3227 = vunpack.c.l.b16 %v1497
    %v3228 = vunpack.c.h.b16 %v1497
    %v3229 = vunpack.c.l.b16 %v1498
    %v3230 = vunpack.c.h.b16 %v1498
    %v3231 = vunpack.c.l.b16 %v1499
    %v3232 = vunpack.c.h.b16 %v1499
    %v3233 = vunpack.c.l.b16 %v1500
    %v3234 = vunpack.c.h.b16 %v1500
    %v3235 = vunpack.c.l.b16 %v1501
    %v3236 = vunpack.c.h.b16 %v1501
    %v3237 = vunpack.c.l.b16 %v1502
    %v3238 = vunpack.c.h.b16 %v1502
    %v3239 = vunpack.c.l.b16 %v1503
    %v3240 = vunpack.c.h.b16 %v1503
    %v3241 = vunpack.c.l.b16 %v1504
    %v3242 = vunpack.c.h.b16 %v1504
    %v3243 = vunpack.c.l.b16 %v1505
    %v3244 = vunpack.c.h.b16 %v1505
    %v3245 = vunpack.c.l.b16 %v1506
    %v3246 = vunpack.c.h.b16 %v1506
    %v3247 = vunpack.c.l.b16 %v1507
    %v3248 = vunpack.c.h.b16 %v1507
    %v3249 = vunpack.c.l.b16 %v1508
    %v3250 = vunpack.c.h.b16 %v1508
    %v3251 = vunpack.c.l.b16 %v1509
    %v3252 = vunpack.c.h.b16 %v1509
    %v3253 = vunpack.c.l.b16 %v1510
    %v3254 = vunpack.c.h.b16 %v1510
    %v3255 = vunpack.c.l.b16 %v1511
    %v3256 = vunpack.c.h.b16 %v1511
    %v3257 = vunpack.c.l.b16 %v1512
    %v3258 = vunpack.c.h.b16 %v1512
    %v3259 = vunpack.c.l.b16 %v1513
    %v3260 = vunpack.c.h.b16 %v1513
    %v3261 = vunpack.c.l.b16 %v1514
    %v3262 = vunpack.c.h.b16 %v1514
    %v3263 = vunpack.c.l.b16 %v1515
    %v3264 = vunpack.c.h.b16 %v1515
    %v3265 = vunpack.c.l.b16 %v1516
    %v3266 = vunpack.c.h.b16 %v1516
    %v3267 = vunpack.c.l.b16 %v1517
    %v3268 = vunpack.c.h.b16 %v1517
    %v3269 = vunpack.c.l.b16 %v1518
    %v3270 = vunpack.c.h.b16 %v1518
    %v3271 = vunpack.c.l.b16 %v1519
    %v3272 = vunpack.c.h.b16 %v1519
    %v3273 = vunpack.c.l.b16 %v1520
    %v3274 = vunpack.c.h.b16 %v1520
    %v3275 = vunpack.c.l.b16 %v1521
    %v3276 = vunpack.c.h.b16 %v1521
    %v3277 = vunpack.c.l.b16 %v1522
    %v3278 = vunpack.c.h.b16 %v1522
    %v3279 = vunpack.c.l.b16 %v1523
    %v3280 = vunpack.c.h.b16 %v1523
    %v3281 = vunpack.c.l.b16 %v1524
    %v3282 = vunpack.c.h.b16 %v1524
    %v3283 = vunpack.c.l.b16 %v1525
    %v3284 = vunpack.c.h.b16 %v1525
    %v3285 = vunpack.c.l.b16 %v1526
    %v3286 = vunpack.c.h.b16 %v1526
    %v3287 = vunpack.c.l.b16 %v1527
    %v3288 = vunpack.c.h.b16 %v1527
    %v3289 = vunpack.c.l.b16 %v1528
    %v3290 = vunpack.c.h.b16 %v1528
    %v3291 = vunpack.c.l.b16 %v1529
    %v3292 = vunpack.c.h.b16 %v1529
    %v3293 = vunpack.c.l.b16 %v1530
    %v3294 = vunpack.c.h.b16 %v1530
    %v3295 = vunpack.c.l.b16 %v1531
    %v3296 = vunpack.c.h.b16 %v1531
    %v3297 = vunpack.c.l.b16 %v1532
    %v3298 = vunpack.c.h.b16 %v1532
    %v3299 = vunpack.c.l.b16 %v1533
    %v3300 = vunpack.c.h.b16 %v1533
    %v3301 = vunpack.c.l.b16 %v1534
    %v3302 = vunpack.c.h.b16 %v1534
    %v3303 = vunpack.c.l.b16 %v1535
    %v3304 = vunpack.c.h.b16 %v1535
    %v3305 = vunpack.c.l.b16 %v1536
    %v3306 = vunpack.c.h.b16 %v1536
    %v3307 = vunpack.c.l.b16 %v1537
    %v3308 = vunpack.c.h.b16 %v1537
    %v3309 = vunpack.c.l.b16 %v1538
    %v3310 = vunpack.c.h.b16 %v1538
    %v3311 = vunpack.c.l.b16 %v1539
    %v3312 = vunpack.c.h.b16 %v1539
    %v3313 = vunpack.c.l.b16 %v1540
    %v3314 = vunpack.c.h.b16 %v1540
    %v3315 = vunpack.c.l.b16 %v1541
    %v3316 = vunpack.c.h.b16 %v1541
    %v3317 = vunpack.c.l.b16 %v1542
    %v3318 = vunpack.c.h.b16 %v1542
    %v3319 = vunpack.c.l.b16 %v1543
    %v3320 = vunpack.c.h.b16 %v1543
    %v3321 = vunpack.c.l.b16 %v1544
    %v3322 = vunpack.c.h.b16 %v1544
    %v3323 = vunpack.c.l.b16 %v1545
    %v3324 = vunpack.c.h.b16 %v1545
    %v3325 = vunpack.c.l.b16 %v1546
    %v3326 = vunpack.c.h.b16 %v1546
    %v3327 = vunpack.c.l.b16 %v1547
    %v3328 = vunpack.c.h.b16 %v1547
    %v3329 = vunpack.c.l.b16 %v1548
    %v3330 = vunpack.c.h.b16 %v1548
    %v3331 = vunpack.c.l.b16 %v1549
    %v3332 = vunpack.c.h.b16 %v1549
    %v3333 = vunpack.c.l.b16 %v1550
    %v3334 = vunpack.c.h.b16 %v1550
    %v3335 = vunpack.c.l.b16 %v1551
    %v3336 = vunpack.c.h.b16 %v1551
    %v3337 = vunpack.c.l.b16 %v1552
    %v3338 = vunpack.c.h.b16 %v1552
    %v3339 = vunpack.c.l.b16 %v1553
    %v3340 = vunpack.c.h.b16 %v1553
    %v3341 = vunpack.c.l.b16 %v1554
    %v3342 = vunpack.c.h.b16 %v1554
    %v3343 = vunpack.c.l.b16 %v1555
    %v3344 = vunpack.c.h.b16 %v1555
    %v3345 = vunpack.c.l.b16 %v1556
    %v3346 = vunpack.c.h.b16 %v1556
    %v3347 = vunpack.c.l.b16 %v1557
    %v3348 = vunpack.c.h.b16 %v1557
    %v3349 = vunpack.c.l.b16 %v1558
    %v3350 = vunpack.c.h.b16 %v1558
    %v3351 = vunpack.c.l.b16 %v1559
    %v3352 = vunpack.c.h.b16 %v1559
    %v3353 = vunpack.c.l.b16 %v1560
    %v3354 = vunpack.c.h.b16 %v1560
    %v3355 = vunpack.c.l.b16 %v1561
    %v3356 = vunpack.c.h.b16 %v1561
    %v3357 = vunpack.c.l.b16 %v1562
    %v3358 = vunpack.c.h.b16 %v1562
    %v3359 = vunpack.c.l.b16 %v1563
    %v3360 = vunpack.c.h.b16 %v1563
    %v3361 = vunpack.c.l.b16 %v1564
    %v3362 = vunpack.c.h.b16 %v1564
    %v3363 = vunpack.c.l.b16 %v1565
    %v3364 = vunpack.c.h.b16 %v1565
    %v3365 = vunpack.c.l.b16 %v1566
    %v3366 = vunpack.c.h.b16 %v1566
    %v3367 = vunpack.c.l.b16 %v1567
    %v3368 = vunpack.c.h.b16 %v1567
    %v3369 = vunpack.c.l.b16 %v1568
    %v3370 = vunpack.c.h.b16 %v1568
    %v3371 = vunpack.c.l.b16 %v1569
    %v3372 = vunpack.c.h.b16 %v1569
    %v3373 = vunpack.c.l.b16 %v1570
    %v3374 = vunpack.c.h.b16 %v1570
    %v3375 = vunpack.c.l.b16 %v1571
    %v3376 = vunpack.c.h.b16 %v1571
    %v3377 = vunpack.c.l.b16 %v1572
    %v3378 = vunpack.c.h.b16 %v1572
    %v3379 = vunpack.c.l.b16 %v1573
    %v3380 = vunpack.c.h.b16 %v1573
    %v3381 = vunpack.c.l.b16 %v1574
    %v3382 = vunpack.c.h.b16 %v1574
    %v3383 = vunpack.c.l.b16 %v1575
    %v3384 = vunpack.c.h.b16 %v1575
    %v3385 = vunpack.c.l.b16 %v1576
    %v3386 = vunpack.c.h.b16 %v1576
    %v3387 = vunpack.c.l.b16 %v1577
    %v3388 = vunpack.c.h.b16 %v1577
    %v3389 = vunpack.c.l.b16 %v1578
    %v3390 = vunpack.c.h.b16 %v1578
    %v3391 = vunpack.c.l.b16 %v1579
    %v3392 = vunpack.c.h.b16 %v1579
    %v3393 = vunpack.c.l.b16 %v1580
    %v3394 = vunpack.c.h.b16 %v1580
    %v3395 = vunpack.c.l.b16 %v1581
    %v3396 = vunpack.c.h.b16 %v1581
    %v3397 = vunpack.c.l.b16 %v1582
    %v3398 = vunpack.c.h.b16 %v1582
    %v3399 = vunpack.c.l.b16 %v1583
    %v3400 = vunpack.c.h.b16 %v1583
    %v3401 = vunpack.c.l.b16 %v1584
    %v3402 = vunpack.c.h.b16 %v1584
    %v3403 = vunpack.c.l.b16 %v1585
    %v3404 = vunpack.c.h.b16 %v1585
    %v3405 = vunpack.c.l.b16 %v1586
    %v3406 = vunpack.c.h.b16 %v1586
    %v3407 = vunpack.c.l.b16 %v1587
    %v3408 = vunpack.c.h.b16 %v1587
    %v3409 = vunpack.c.l.b16 %v1588
    %v3410 = vunpack.c.h.b16 %v1588
    %v3411 = vunpack.c.l.b16 %v1589
    %v3412 = vunpack.c.h.b16 %v1589
    %v3413 = vunpack.c.l.b16 %v1590
    %v3414 = vunpack.c.h.b16 %v1590
    %v3415 = vunpack.c.l.b16 %v1591
    %v3416 = vunpack.c.h.b16 %v1591
    %v3417 = vunpack.c.l.b16 %v1592
    %v3418 = vunpack.c.h.b16 %v1592
    %v3419 = vunpack.c.l.b16 %v1593
    %v3420 = vunpack.c.h.b16 %v1593
    %v3421 = vunpack.c.l.b16 %v1594
    %v3422 = vunpack.c.h.b16 %v1594
    %v3423 = vunpack.c.l.b16 %v1595
    %v3424 = vunpack.c.h.b16 %v1595
    %v3425 = vunpack.c.l.b16 %v1596
    %v3426 = vunpack.c.h.b16 %v1596
    %v3427 = vunpack.c.l.b16 %v1597
    %v3428 = vunpack.c.h.b16 %v1597
    %v3429 = vunpack.c.l.b16 %v1598
    %v3430 = vunpack.c.h.b16 %v1598
    %v3431 = vunpack.c.l.b16 %v1599
    %v3432 = vunpack.c.h.b16 %v1599
    %v3433 = vunpack.c.l.b16 %v1600
    %v3434 = vunpack.c.h.b16 %v1600
    %v3435 = vunpack.c.l.b16 %v1601
    %v3436 = vunpack.c.h.b16 %v1601
    %v3437 = vunpack.c.l.b16 %v1602
    %v3438 = vunpack.c.h.b16 %v1602
    %v3439 = vunpack.c.l.b16 %v1603
    %v3440 = vunpack.c.h.b16 %v1603
    %v3441 = vunpack.c.l.b16 %v1604
    %v3442 = vunpack.c.h.b16 %v1604
    %v3443 = vunpack.c.l.b16 %v1605
    %v3444 = vunpack.c.h.b16 %v1605
    %v3445 = vunpack.c.l.b16 %v1606
    %v3446 = vunpack.c.h.b16 %v1606
    %v3447 = vunpack.c.l.b16 %v1607
    %v3448 = vunpack.c.h.b16 %v1607
    %v3449 = vunpack.c.l.b16 %v1608
    %v3450 = vunpack.c.h.b16 %v1608
    %v3451 = vunpack.c.l.b16 %v1609
    %v3452 = vunpack.c.h.b16 %v1609
    %v3453 = vunpack.c.l.b16 %v1610
    %v3454 = vunpack.c.h.b16 %v1610
    %v3455 = vunpack.c.l.b16 %v1611
    %v3456 = vunpack.c.h.b16 %v1611
    %v3457 = vunpack.c.l.b16 %v1612
    %v3458 = vunpack.c.h.b16 %v1612
    %v3459 = vunpack.c.l.b16 %v1613
    %v3460 = vunpack.c.h.b16 %v1613
    %v3461 = vunpack.c.l.b16 %v1614
    %v3462 = vunpack.c.h.b16 %v1614
    %v3463 = vunpack.c.l.b16 %v1615
    %v3464 = vunpack.c.h.b16 %v1615
    %v3465 = vunpack.c.l.b16 %v1616
    %v3466 = vunpack.c.h.b16 %v1616
    %v3467 = vunpack.c.l.b16 %v1617
    %v3468 = vunpack.c.h.b16 %v1617
    %v3469 = vunpack.c.l.b16 %v1618
    %v3470 = vunpack.c.h.b16 %v1618
    %v3471 = vunpack.c.l.b16 %v1619
    %v3472 = vunpack.c.h.b16 %v1619
    %v3473 = vunpack.c.l.b16 %v1620
    %v3474 = vunpack.c.h.b16 %v1620
    %v3475 = vunpack.c.l.b16 %v1621
    %v3476 = vunpack.c.h.b16 %v1621
    %v3477 = vunpack.c.l.b16 %v1622
    %v3478 = vunpack.c.h.b16 %v1622
    %v3479 = vunpack.c.l.b16 %v1623
    %v3480 = vunpack.c.h.b16 %v1623
    %v3481 = vunpack.c.l.b16 %v1624
    %v3482 = vunpack.c.h.b16 %v1624
    %v3483 = vunpack.c.l.b16 %v1625
    %v3484 = vunpack.c.h.b16 %v1625
    %v3485 = vunpack.c.l.b16 %v1626
    %v3486 = vunpack.c.h.b16 %v1626
    %v3487 = vunpack.c.l.b16 %v1627
    %v3488 = vunpack.c.h.b16 %v1627
    %v3489 = vunpack.c.l.b16 %v1628
    %v3490 = vunpack.c.h.b16 %v1628
    %v3491 = vunpack.c.l.b16 %v1629
    %v3492 = vunpack.c.h.b16 %v1629
    %v3493 = vunpack.c.l.b16 %v1630
    %v3494 = vunpack.c.h.b16 %v1630
    %v3495 = vunpack.c.l.b16 %v1631
    %v3496 = vunpack.c.h.b16 %v1631
    %v3497 = vunpack.c.l.b16 %v1632
    %v3498 = vunpack.c.h.b16 %v1632
    %v3499 = vunpack.c.l.b16 %v1633
    %v3500 = vunpack.c.h.b16 %v1633
    %v3501 = vunpack.c.l.b16 %v1634
    %v3502 = vunpack.c.h.b16 %v1634
    %v3503 = vunpack.c.l.b16 %v1635
    %v3504 = vunpack.c.h.b16 %v1635
    %v3505 = vunpack.c.l.b16 %v1636
    %v3506 = vunpack.c.h.b16 %v1636
    %v3507 = vunpack.c.l.b16 %v1637
    %v3508 = vunpack.c.h.b16 %v1637
    %v3509 = vunpack.c.l.b16 %v1638
    %v3510 = vunpack.c.h.b16 %v1638
    %v3511 = vunpack.c.l.b16 %v1639
    %v3512 = vunpack.c.h.b16 %v1639
    %v3513 = vunpack.c.l.b16 %v1640
    %v3514 = vunpack.c.h.b16 %v1640
    %v3515 = vunpack.c.l.b16 %v1641
    %v3516 = vunpack.c.h.b16 %v1641
    %v3517 = vunpack.c.l.b16 %v1642
    %v3518 = vunpack.c.h.b16 %v1642
    %v3519 = vunpack.c.l.b16 %v1643
    %v3520 = vunpack.c.h.b16 %v1643
    %v3521 = vunpack.c.l.b16 %v1644
    %v3522 = vunpack.c.h.b16 %v1644
    %v3523 = vunpack.c.l.b16 %v1645
    %v3524 = vunpack.c.h.b16 %v1645
    %v3525 = vunpack.c.l.b16 %v1646
    %v3526 = vunpack.c.h.b16 %v1646
    %v3527 = vunpack.c.l.b16 %v1647
    %v3528 = vunpack.c.h.b16 %v1647
    %v3529 = vunpack.c.l.b16 %v1648
    %v3530 = vunpack.c.h.b16 %v1648
    %v3531 = vunpack.c.l.b16 %v1649
    %v3532 = vunpack.c.h.b16 %v1649
    %v3533 = vunpack.c.l.b16 %v1650
    %v3534 = vunpack.c.h.b16 %v1650
    %v3535 = vunpack.c.l.b16 %v1651
    %v3536 = vunpack.c.h.b16 %v1651
    %v3537 = vunpack.c.l.b16 %v1652
    %v3538 = vunpack.c.h.b16 %v1652
    %v3539 = vunpack.c.l.b16 %v1653
    %v3540 = vunpack.c.h.b16 %v1653
    %v3541 = vunpack.c.l.b16 %v1654
    %v3542 = vunpack.c.h.b16 %v1654
    %v3543 = vunpack.c.l.b16 %v1655
    %v3544 = vunpack.c.h.b16 %v1655
    %v3545 = vunpack.c.l.b16 %v1656
    %v3546 = vunpack.c.h.b16 %v1656
    %v3547 = vunpack.c.l.b16 %v1657
    %v3548 = vunpack.c.h.b16 %v1657
    %v3549 = vunpack.c.l.b16 %v1658
    %v3550 = vunpack.c.h.b16 %v1658
    %v3551 = vunpack.c.l.b16 %v1659
    %v3552 = vunpack.c.h.b16 %v1659
    %v3553 = vunpack.c.l.b16 %v1660
    %v3554 = vunpack.c.h.b16 %v1660
    %v3555 = vunpack.c.l.b16 %v1661
    %v3556 = vunpack.c.h.b16 %v1661
    %v3557 = vunpack.c.l.b16 %v1662
    %v3558 = vunpack.c.h.b16 %v1662
    %v3559 = vunpack.c.l.b16 %v1663
    %v3560 = vunpack.c.h.b16 %v1663
    %v3561 = vunpack.c.l.b16 %v1664
    %v3562 = vunpack.c.h.b16 %v1664
    %v3563 = vunpack.c.l.b16 %v1665
    %v3564 = vunpack.c.h.b16 %v1665
    %v3565 = vunpack.c.l.b16 %v1666
    %v3566 = vunpack.c.h.b16 %v1666
    %v3567 = vunpack.c.l.b16 %v1667
    %v3568 = vunpack.c.h.b16 %v1667
    %v3569 = vunpack.c.l.b16 %v1668
    %v3570 = vunpack.c.h.b16 %v1668
    %v3571 = vunpack.c.l.b16 %v1669
    %v3572 = vunpack.c.h.b16 %v1669
    %v3573 = vunpack.c.l.b16 %v1670
    %v3574 = vunpack.c.h.b16 %v1670
    %v3575 = vunpack.c.l.b16 %v1671
    %v3576 = vunpack.c.h.b16 %v1671
    %v3577 = vunpack.c.l.b16 %v1672
    %v3578 = vunpack.c.h.b16 %v1672
    %v3579 = vunpack.c.l.b16 %v1673
    %v3580 = vunpack.c.h.b16 %v1673
    %v3581 = vunpack.c.l.b16 %v1674
    %v3582 = vunpack.c.h.b16 %v1674
    %v3583 = vunpack.c.l.b16 %v1675
    %v3584 = vunpack.c.h.b16 %v1675
    %v3585 = vunpack.c.l.b16 %v1676
    %v3586 = vunpack.c.h.b16 %v1676
    %v3587 = vunpack.c.l.b16 %v1677
    %v3588 = vunpack.c.h.b16 %v1677
    %v3589 = vunpack.c.l.b16 %v1678
    %v3590 = vunpack.c.h.b16 %v1678
    %v3591 = vunpack.c.l.b16 %v1679
    %v3592 = vunpack.c.h.b16 %v1679
    %v3593 = vunpack.c.l.b16 %v1680
    %v3594 = vunpack.c.h.b16 %v1680
    %v3595 = vunpack.c.l.b16 %v1681
    %v3596 = vunpack.c.h.b16 %v1681
    %v3597 = vunpack.c.l.b16 %v1682
    %v3598 = vunpack.c.h.b16 %v1682
    %v3599 = vunpack.c.l.b16 %v1683
    %v3600 = vunpack.c.h.b16 %v1683
    %v3601 = vunpack.c.l.b16 %v1684
    %v3602 = vunpack.c.h.b16 %v1684
    %v3603 = vunpack.c.l.b16 %v1685
    %v3604 = vunpack.c.h.b16 %v1685
    %v3605 = vunpack.c.l.b16 %v1686
    %v3606 = vunpack.c.h.b16 %v1686
    %v3607 = vunpack.c.l.b16 %v1687
    %v3608 = vunpack.c.h.b16 %v1687
    %v3609 = vunpack.c.l.b16 %v1688
    %v3610 = vunpack.c.h.b16 %v1688
    %v3611 = vunpack.c.l.b16 %v1689
    %v3612 = vunpack.c.h.b16 %v1689
    %v3613 = vunpack.c.l.b16 %v1690
    %v3614 = vunpack.c.h.b16 %v1690
    %v3615 = vunpack.c.l.b16 %v1691
    %v3616 = vunpack.c.h.b16 %v1691
    %v3617 = vunpack.c.l.b16 %v1692
    %v3618 = vunpack.c.h.b16 %v1692
    %v3619 = vunpack.c.l.b16 %v1693
    %v3620 = vunpack.c.h.b16 %v1693
    %v3621 = vunpack.c.l.b16 %v1694
    %v3622 = vunpack.c.h.b16 %v1694
    %v3623 = vunpack.c.l.b16 %v1695
    %v3624 = vunpack.c.h.b16 %v1695
    %v3625 = vunpack.c.l.b16 %v1696
    %v3626 = vunpack.c.h.b16 %v1696
    %v3627 = vunpack.c.l.b16 %v1697
    %v3628 = vunpack.c.h.b16 %v1697
    %v3629 = vunpack.c.l.b16 %v1698
    %v3630 = vunpack.c.h.b16 %v1698
    %v3631 = vunpack.c.l.b16 %v1699
    %v3632 = vunpack.c.h.b16 %v1699
    %v3633 = vunpack.c.l.b16 %v1700
    %v3634 = vunpack.c.h.b16 %v1700
    %v3635 = vunpack.c.l.b16 %v1701
    %v3636 = vunpack.c.h.b16 %v1701
    %v3637 = vunpack.c.l.b16 %v1702
    %v3638 = vunpack.c.h.b16 %v1702
    %v3639 = vunpack.c.l.b16 %v1703
    %v3640 = vunpack.c.h.b16 %v1703
    %v3641 = vunpack.c.l.b16 %v1704
    %v3642 = vunpack.c.h.b16 %v1704
    %v3643 = vunpack.c.l.b16 %v1705
    %v3644 = vunpack.c.h.b16 %v1705
    %v3645 = vunpack.c.l.b16 %v1706
    %v3646 = vunpack.c.h.b16 %v1706
    %v3647 = vunpack.c.l.b16 %v1707
    %v3648 = vunpack.c.h.b16 %v1707
    %v3649 = vunpack.c.l.b16 %v1708
    %v3650 = vunpack.c.h.b16 %v1708
    %v3651 = vunpack.c.l.b16 %v1709
    %v3652 = vunpack.c.h.b16 %v1709
    %v3653 = vunpack.c.l.b16 %v1710
    %v3654 = vunpack.c.h.b16 %v1710
    %v3655 = vunpack.c.l.b16 %v1711
    %v3656 = vunpack.c.h.b16 %v1711
    %v3657 = vunpack.c.l.b16 %v1712
    %v3658 = vunpack.c.h.b16 %v1712
    %v3659 = vunpack.c.l.b16 %v1713
    %v3660 = vunpack.c.h.b16 %v1713
    %v3661 = vunpack.c.l.b16 %v1714
    %v3662 = vunpack.c.h.b16 %v1714
    %v3663 = vunpack.c.l.b16 %v1715
    %v3664 = vunpack.c.h.b16 %v1715
    %v3665 = vunpack.c.l.b16 %v1716
    %v3666 = vunpack.c.h.b16 %v1716
    %v3667 = vunpack.c.l.b16 %v1717
    %v3668 = vunpack.c.h.b16 %v1717
    %v3669 = vunpack.c.l.b16 %v1718
    %v3670 = vunpack.c.h.b16 %v1718
    %v3671 = vunpack.c.l.b16 %v1719
    %v3672 = vunpack.c.h.b16 %v1719
    %v3673 = vunpack.c.l.b16 %v1720
    %v3674 = vunpack.c.h.b16 %v1720
    %v3675 = vunpack.c.l.b16 %v1721
    %v3676 = vunpack.c.h.b16 %v1721
    %v3677 = vunpack.c.l.b16 %v1722
    %v3678 = vunpack.c.h.b16 %v1722
    %v3679 = vunpack.c.l.b16 %v1723
    %v3680 = vunpack.c.h.b16 %v1723
    %v3681 = vunpack.c.l.b16 %v1724
    %v3682 = vunpack.c.h.b16 %v1724
    %v3683 = vunpack.c.l.b16 %v1725
    %v3684 = vunpack.c.h.b16 %v1725
    %v3685 = vunpack.c.l.b16 %v1726
    %v3686 = vunpack.c.h.b16 %v1726
    %v3687 = vunpack.c.l.b16 %v1727
    %v3688 = vunpack.c.h.b16 %v1727
    %v3689 = vunpack.c.l.b16 %v1728
    %v3690 = vunpack.c.h.b16 %v1728
    %v3691 = vunpack.c.l.b16 %v1729
    %v3692 = vunpack.c.h.b16 %v1729
    %v3693 = vunpack.c.l.b16 %v1730
    %v3694 = vunpack.c.h.b16 %v1730
    %v3695 = vunpack.c.l.b16 %v1731
    %v3696 = vunpack.c.h.b16 %v1731
    %v3697 = vunpack.c.l.b16 %v1732
    %v3698 = vunpack.c.h.b16 %v1732
    %v3699 = vunpack.c.l.b16 %v1733
    %v3700 = vunpack.c.h.b16 %v1733
    %v3701 = vunpack.c.l.b16 %v1734
    %v3702 = vunpack.c.h.b16 %v1734
    %v3703 = vunpack.c.l.b16 %v1735
    %v3704 = vunpack.c.h.b16 %v1735
    %v3705 = vunpack.c.l.b16 %v1736
    %v3706 = vunpack.c.h.b16 %v1736
    %v3707 = vunpack.c.l.b16 %v1737
    %v3708 = vunpack.c.h.b16 %v1737
    %v3709 = vunpack.c.l.b16 %v1738
    %v3710 = vunpack.c.h.b16 %v1738
    %v3711 = vunpack.c.l.b16 %v1739
    %v3712 = vunpack.c.h.b16 %v1739
    %v3713 = vunpack.c.l.b16 %v1740
    %v3714 = vunpack.c.h.b16 %v1740
    %v3715 = vunpack.c.l.b16 %v1741
    %v3716 = vunpack.c.h.b16 %v1741
    %v3717 = vunpack.c.l.b16 %v1742
    %v3718 = vunpack.c.h.b16 %v1742
    %v3719 = vunpack.c.l.b16 %v1743
    %v3720 = vunpack.c.h.b16 %v1743
    %v3721 = vunpack.c.l.b16 %v1744
    %v3722 = vunpack.c.h.b16 %v1744
    %v3723 = vunpack.c.l.b16 %v1745
    %v3724 = vunpack.c.h.b16 %v1745
    %v3725 = vunpack.c.l.b16 %v1746
    %v3726 = vunpack.c.h.b16 %v1746
    %v3727 = vunpack.c.l.b16 %v1747
    %v3728 = vunpack.c.h.b16 %v1747
    %v3729 = vunpack.c.l.b16 %v1748
    %v3730 = vunpack.c.h.b16 %v1748
    %v3731 = vunpack.c.l.b16 %v1749
    %v3732 = vunpack.c.h.b16 %v1749
    %v3733 = vunpack.c.l.b16 %v1750
    %v3734 = vunpack.c.h.b16 %v1750
    %v3735 = vunpack.c.l.b16 %v1751
    %v3736 = vunpack.c.h.b16 %v1751
    %v3737 = vunpack.c.l.b16 %v1752
    %v3738 = vunpack.c.h.b16 %v1752
    %v3739 = vunpack.c.l.b16 %v1753
    %v3740 = vunpack.c.h.b16 %v1753
    %v3741 = vunpack.c.l.b16 %v1754
    %v3742 = vunpack.c.h.b16 %v1754
    %v3743 = vunpack.c.l.b16 %v1755
    %v3744 = vunpack.c.h.b16 %v1755
    %v3745 = vunpack.c.l.b16 %v1756
    %v3746 = vunpack.c.h.b16 %v1756
    %v3747 = vunpack.c.l.b16 %v1757
    %v3748 = vunpack.c.h.b16 %v1757
    %v3749 = vunpack.c.l.b16 %v1758
    %v3750 = vunpack.c.h.b16 %v1758
    %v3751 = vunpack.c.l.b16 %v1759
    %v3752 = vunpack.c.h.b16 %v1759
    %v3753 = vunpack.c.l.b16 %v1760
    %v3754 = vunpack.c.h.b16 %v1760
    %v3755 = vunpack.c.l.b16 %v1761
    %v3756 = vunpack.c.h.b16 %v1761
    %v3757 = vunpack.c.l.b16 %v1762
    %v3758 = vunpack.c.h.b16 %v1762
    %v3759 = vunpack.c.l.b16 %v1763
    %v3760 = vunpack.c.h.b16 %v1763
    %v3761 = vunpack.c.l.b16 %v1764
    %v3762 = vunpack.c.h.b16 %v1764
    %v3763 = vunpack.c.l.b16 %v1765
    %v3764 = vunpack.c.h.b16 %v1765
    %v3765 = vunpack.c.l.b16 %v1766
    %v3766 = vunpack.c.h.b16 %v1766
    %v3767 = vunpack.c.l.b16 %v1767
    %v3768 = vunpack.c.h.b16 %v1767
    %v3769 = vunpack.c.l.b16 %v1768
    %v3770 = vunpack.c.h.b16 %v1768
    %v3771 = vunpack.c.l.b16 %v1769
    %v3772 = vunpack.c.h.b16 %v1769
    %v3773 = vunpack.c.l.b16 %v1770
    %v3774 = vunpack.c.h.b16 %v1770
    %v3775 = vunpack.c.l.b16 %v1771
    %v3776 = vunpack.c.h.b16 %v1771
    %v3777 = vunpack.c.l.b16 %v1772
    %v3778 = vunpack.c.h.b16 %v1772
    %v3779 = vunpack.c.l.b16 %v1773
    %v3780 = vunpack.c.h.b16 %v1773
    %v3781 = vunpack.c.l.b16 %v1774
    %v3782 = vunpack.c.h.b16 %v1774
    %v3783 = vunpack.c.l.b16 %v1775
    %v3784 = vunpack.c.h.b16 %v1775
    %v3785 = vunpack.c.l.b16 %v1776
    %v3786 = vunpack.c.h.b16 %v1776
    %v3787 = vunpack.c.l.b16 %v1777
    %v3788 = vunpack.c.h.b16 %v1777
    %v3789 = vunpack.c.l.b16 %v1778
    %v3790 = vunpack.c.h.b16 %v1778
    %v3791 = vunpack.c.l.b16 %v1779
    %v3792 = vunpack.c.h.b16 %v1779
    %v3793 = vunpack.c.l.b16 %v1780
    %v3794 = vunpack.c.h.b16 %v1780
    %v3795 = vunpack.c.l.b16 %v1781
    %v3796 = vunpack.c.h.b16 %v1781
    %v3797 = vunpack.c.l.b16 %v1782
    %v3798 = vunpack.c.h.b16 %v1782
    %v3799 = vunpack.c.l.b16 %v1783
    %v3800 = vunpack.c.h.b16 %v1783
    %v3801 = vunpack.c.l.b16 %v1784
    %v3802 = vunpack.c.h.b16 %v1784
    %v3803 = vunpack.c.l.b16 %v1785
    %v3804 = vunpack.c.h.b16 %v1785
    %v3805 = vunpack.c.l.b16 %v1786
    %v3806 = vunpack.c.h.b16 %v1786
    %v3807 = vunpack.c.l.b16 %v1787
    %v3808 = vunpack.c.h.b16 %v1787
    %v3809 = vunpack.c.l.b16 %v1788
    %v3810 = vunpack.c.h.b16 %v1788
    %v3811 = vunpack.c.l.b16 %v1789
    %v3812 = vunpack.c.h.b16 %v1789
    %v3813 = vunpack.c.l.b16 %v1790
    %v3814 = vunpack.c.h.b16 %v1790
    %v3815 = vunpack.c.l.b16 %v1791
    %v3816 = vunpack.c.h.b16 %v1791
    %v3817 = vunpack.c.l.b16 %v1792
    %v3818 = vunpack.c.h.b16 %v1792
    %v3819 = vunpack.c.l.b16 %v1793
    %v3820 = vunpack.c.h.b16 %v1793
    %v3821 = vunpack.c.l.b16 %v1794
    %v3822 = vunpack.c.h.b16 %v1794
    %v3823 = vunpack.c.l.b16 %v1795
    %v3824 = vunpack.c.h.b16 %v1795
    %v3825 = vunpack.c.l.b16 %v1796
    %v3826 = vunpack.c.h.b16 %v1796
    %v3827 = vunpack.c.l.b16 %v1797
    %v3828 = vunpack.c.h.b16 %v1797
    %v3829 = vunpack.c.l.b16 %v1798
    %v3830 = vunpack.c.h.b16 %v1798
    %v3831 = vunpack.c.l.b16 %v1799
    %v3832 = vunpack.c.h.b16 %v1799
    %v3833 = vunpack.c.l.b16 %v1800
    %v3834 = vunpack.c.h.b16 %v1800
    %v3835 = vunpack.c.l.b16 %v1801
    %v3836 = vunpack.c.h.b16 %v1801
    %v3837 = vunpack.c.l.b16 %v1802
    %v3838 = vunpack.c.h.b16 %v1802
    %v3839 = vunpack.c.l.b16 %v1803
    %v3840 = vunpack.c.h.b16 %v1803
    %v3841 = vunpack.c.l.b16 %v1804
    %v3842 = vunpack.c.h.b16 %v1804
    %v3843 = vunpack.c.l.b16 %v1805
    %v3844 = vunpack.c.h.b16 %v1805
    %v3845 = vunpack.c.l.b16 %v1806
    %v3846 = vunpack.c.h.b16 %v1806
    %v3847 = vunpack.c.l.b16 %v1807
    %v3848 = vunpack.c.h.b16 %v1807
    %v3849 = vunpack.c.l.b16 %v1808
    %v3850 = vunpack.c.h.b16 %v1808
    %v3851 = vunpack.c.l.b16 %v1809
    %v3852 = vunpack.c.h.b16 %v1809
    %v3853 = vunpack.c.l.b16 %v1810
    %v3854 = vunpack.c.h.b16 %v1810
    %v3855 = vunpack.c.l.b16 %v1811
    %v3856 = vunpack.c.h.b16 %v1811
    %v3857 = vunpack.c.l.b16 %v1812
    %v3858 = vunpack.c.h.b16 %v1812
    %v3859 = vunpack.c.l.b16 %v1813
    %v3860 = vunpack.c.h.b16 %v1813
    %v3861 = vunpack.c.l.b16 %v1814
    %v3862 = vunpack.c.h.b16 %v1814
    %v3863 = vunpack.c.l.b16 %v1815
    %v3864 = vunpack.c.h.b16 %v1815
    %v3865 = vunpack.c.l.b16 %v1816
    %v3866 = vunpack.c.h.b16 %v1816
    %v3867 = vunpack.c.l.b16 %v1817
    %v3868 = vunpack.c.h.b16 %v1817
    %v3869 = vunpack.c.l.b16 %v1818
    %v3870 = vunpack.c.h.b16 %v1818
    %v3871 = vunpack.c.l.b16 %v1819
    %v3872 = vunpack.c.h.b16 %v1819
    %v3873 = vunpack.c.l.b16 %v1820
    %v3874 = vunpack.c.h.b16 %v1820
    %v3875 = vunpack.c.l.b16 %v1821
    %v3876 = vunpack.c.h.b16 %v1821
    %v3877 = vunpack.c.l.b16 %v1822
    %v3878 = vunpack.c.h.b16 %v1822
    %v3879 = vunpack.c.l.b16 %v1823
    %v3880 = vunpack.c.h.b16 %v1823
    %v3881 = vunpack.c.l.b16 %v1824
    %v3882 = vunpack.c.h.b16 %v1824
    %v3883 = vunpack.c.l.b16 %v1825
    %v3884 = vunpack.c.h.b16 %v1825
    %v3885 = vunpack.c.l.b16 %v1826
    %v3886 = vunpack.c.h.b16 %v1826
    %v3887 = vunpack.c.l.b16 %v1827
    %v3888 = vunpack.c.h.b16 %v1827
    %v3889 = vunpack.c.l.b16 %v1828
    %v3890 = vunpack.c.h.b16 %v1828
    %v3891 = vunpack.c.l.b16 %v1829
    %v3892 = vunpack.c.h.b16 %v1829
    %v3893 = vunpack.c.l.b16 %v1830
    %v3894 = vunpack.c.h.b16 %v1830
    %v3895 = vunpack.c.l.b16 %v1831
    %v3896 = vunpack.c.h.b16 %v1831
    %v3897 = vunpack.c.l.b16 %v1832
    %v3898 = vunpack.c.h.b16 %v1832
    %v3899 = vunpack.c.l.b16 %v1833
    %v3900 = vunpack.c.h.b16 %v1833
    %v3901 = vunpack.c.l.b16 %v1834
    %v3902 = vunpack.c.h.b16 %v1834
    %v3903 = vunpack.c.l.b16 %v1835
    %v3904 = vunpack.c.h.b16 %v1835
    %v3905 = vunpack.c.l.b16 %v1836
    %v3906 = vunpack.c.h.b16 %v1836
    %v3907 = vunpack.c.l.b16 %v1837
    %v3908 = vunpack.c.h.b16 %v1837
    %v3909 = vunpack.c.l.b16 %v1838
    %v3910 = vunpack.c.h.b16 %v1838
    %v3911 = vunpack.c.l.b16 %v1839
    %v3912 = vunpack.c.h.b16 %v1839
    %v3913 = vunpack.c.l.b16 %v1840
    %v3914 = vunpack.c.h.b16 %v1840
    %v3915 = vunpack.c.l.b16 %v1841
    %v3916 = vunpack.c.h.b16 %v1841
    %v3917 = vunpack.c.l.b16 %v1842
    %v3918 = vunpack.c.h.b16 %v1842
    %v3919 = vunpack.c.l.b16 %v1843
    %v3920 = vunpack.c.h.b16 %v1843
    %v3921 = vunpack.c.l.b16 %v1844
    %v3922 = vunpack.c.h.b16 %v1844
    %v3923 = vunpack.c.l.b16 %v1845
    %v3924 = vunpack.c.h.b16 %v1845
    %v3925 = vunpack.c.l.b16 %v1846
    %v3926 = vunpack.c.h.b16 %v1846
    %v3927 = vunpack.c.l.b16 %v1847
    %v3928 = vunpack.c.h.b16 %v1847
    %v3929 = vunpack.c.l.b16 %v1848
    %v3930 = vunpack.c.h.b16 %v1848
    %v3931 = vunpack.c.l.b16 %v1849
    %v3932 = vunpack.c.h.b16 %v1849
    %v3933 = vunpack.c.l.b16 %v1850
    %v3934 = vunpack.c.h.b16 %v1850
    %v3935 = vunpack.c.l.b16 %v1851
    %v3936 = vunpack.c.h.b16 %v1851
    %v3937 = vunpack.c.l.b16 %v1852
    %v3938 = vunpack.c.h.b16 %v1852
    %v3939 = vunpack.c.l.b16 %v1853
    %v3940 = vunpack.c.h.b16 %v1853
    %v3941 = vunpack.c.l.b16 %v1854
    %v3942 = vunpack.c.h.b16 %v1854
    %v3943 = vunpack.c.l.b16 %v1855
    %v3944 = vunpack.c.h.b16 %v1855
    %v3945 = vunpack.c.l.b16 %v1856
    %v3946 = vunpack.c.h.b16 %v1856
    %v3947 = vunpack.c.l.b16 %v1857
    %v3948 = vunpack.c.h.b16 %v1857
    %v3949 = vunpack.c.l.b16 %v1858
    %v3950 = vunpack.c.h.b16 %v1858
    %v3951 = vunpack.c.l.b16 %v1859
    %v3952 = vunpack.c.h.b16 %v1859
    %v3953 = vunpack.c.l.b16 %v1860
    %v3954 = vunpack.c.h.b16 %v1860
    %v3955 = vunpack.c.l.b16 %v1861
    %v3956 = vunpack.c.h.b16 %v1861
    %v3957 = vunpack.c.l.b16 %v1862
    %v3958 = vunpack.c.h.b16 %v1862
    %v3959 = vunpack.c.l.b16 %v1863
    %v3960 = vunpack.c.h.b16 %v1863
    %v3961 = vunpack.c.l.b16 %v1864
    %v3962 = vunpack.c.h.b16 %v1864
    %v3963 = vunpack.c.l.b16 %v1865
    %v3964 = vunpack.c.h.b16 %v1865
    %v3965 = vunpack.c.l.b16 %v1866
    %v3966 = vunpack.c.h.b16 %v1866
    %v3967 = vunpack.c.l.b16 %v1867
    %v3968 = vunpack.c.h.b16 %v1867
    %v3969 = vunpack.c.l.b16 %v1868
    %v3970 = vunpack.c.h.b16 %v1868
    %v3971 = vunpack.c.l.b16 %v1869
    %v3972 = vunpack.c.h.b16 %v1869
    %v3973 = vunpack.c.l.b16 %v1870
    %v3974 = vunpack.c.h.b16 %v1870
    %v3975 = vunpack.c.l.b16 %v1871
    %v3976 = vunpack.c.h.b16 %v1871
    %v3977 = vunpack.c.l.b16 %v1872
    %v3978 = vunpack.c.h.b16 %v1872
    %v3979 = vunpack.c.l.b16 %v1873
    %v3980 = vunpack.c.h.b16 %v1873
    %v3981 = vunpack.c.l.b16 %v1874
    %v3982 = vunpack.c.h.b16 %v1874
    %v3983 = vunpack.c.l.b16 %v1875
    %v3984 = vunpack.c.h.b16 %v1875
    %v3985 = vunpack.c.l.b16 %v1876
    %v3986 = vunpack.c.h.b16 %v1876
    %v3987 = vunpack.c.l.b16 %v1877
    %v3988 = vunpack.c.h.b16 %v1877
    %v3989 = vunpack.c.l.b16 %v1878
    %v3990 = vunpack.c.h.b16 %v1878
    %v3991 = vunpack.c.l.b16 %v1879
    %v3992 = vunpack.c.h.b16 %v1879
    %v3993 = vunpack.c.l.b16 %v1880
    %v3994 = vunpack.c.h.b16 %v1880
    %v3995 = vunpack.c.l.b16 %v1881
    %v3996 = vunpack.c.h.b16 %v1881
    %v3997 = vunpack.c.l.b16 %v1882
    %v3998 = vunpack.c.h.b16 %v1882
    %v3999 = vunpack.c.l.b16 %v1883
    %v4000 = vunpack.c.h.b16 %v1883
    %v4001 = vunpack.c.l.b16 %v1884
    %v4002 = vunpack.c.h.b16 %v1884
    %v4003 = vunpack.c.l.b16 %v1885
    %v4004 = vunpack.c.h.b16 %v1885
    %v4005 = vunpack.c.l.b16 %v1886
    %v4006 = vunpack.c.h.b16 %v1886
    %v4007 = vunpack.c.l.b16 %v1887
    %v4008 = vunpack.c.h.b16 %v1887
    %v4009 = vunpack.c.l.b16 %v1888
    %v4010 = vunpack.c.h.b16 %v1888
    %v4011 = vunpack.c.l.b16 %v1889
    %v4012 = vunpack.c.h.b16 %v1889
    %v4013 = vunpack.c.l.b16 %v1890
    %v4014 = vunpack.c.h.b16 %v1890
    %v4015 = vunpack.c.l.b16 %v1891
    %v4016 = vunpack.c.h.b16 %v1891
    %v4017 = vunpack.c.l.b16 %v1892
    %v4018 = vunpack.c.h.b16 %v1892
    %v4019 = vunpack.c.l.b16 %v1893
    %v4020 = vunpack.c.h.b16 %v1893
    %v4021 = vunpack.c.l.b16 %v1894
    %v4022 = vunpack.c.h.b16 %v1894
    %v4023 = vunpack.c.l.b16 %v1895
    %v4024 = vunpack.c.h.b16 %v1895
    %v4025 = vunpack.c.l.b16 %v1896
    %v4026 = vunpack.c.h.b16 %v1896
    %v4027 = vunpack.c.l.b16 %v1897
    %v4028 = vunpack.c.h.b16 %v1897
    %v4029 = vunpack.c.l.b16 %v1898
    %v4030 = vunpack.c.h.b16 %v1898
    %v4031 = vunpack.c.l.b16 %v1899
    %v4032 = vunpack.c.h.b16 %v1899
    %v4033 = vunpack.c.l.b16 %v1900
    %v4034 = vunpack.c.h.b16 %v1900
    %v4035 = vunpack.c.l.b16 %v1901
    %v4036 = vunpack.c.h.b16 %v1901
    %v4037 = vunpack.c.l.b16 %v1902
    %v4038 = vunpack.c.h.b16 %v1902
    %v4039 = vunpack.c.l.b16 %v1903
    %v4040 = vunpack.c.h.b16 %v1903
    %v4041 = vunpack.c.l.b16 %v1904
    %v4042 = vunpack.c.h.b16 %v1904
    %v4043 = vunpack.c.l.b16 %v1905
    %v4044 = vunpack.c.h.b16 %v1905
    %v4045 = vunpack.c.l.b16 %v1906
    %v4046 = vunpack.c.h.b16 %v1906
    %v4047 = vunpack.c.l.b16 %v1907
    %v4048 = vunpack.c.h.b16 %v1907
    %v4049 = vunpack.c.l.b16 %v1908
    %v4050 = vunpack.c.h.b16 %v1908
    %v4051 = vunpack.c.l.b16 %v1909
    %v4052 = vunpack.c.h.b16 %v1909
    %v4053 = vunpack.c.l.b16 %v1910
    %v4054 = vunpack.c.h.b16 %v1910
    %v4055 = vunpack.c.l.b16 %v1911
    %v4056 = vunpack.c.h.b16 %v1911
    %v4057 = vunpack.c.l.b16 %v1912
    %v4058 = vunpack.c.h.b16 %v1912
    %v4059 = vunpack.c.l.b16 %v1913
    %v4060 = vunpack.c.h.b16 %v1913
    %v4061 = vunpack.c.l.b16 %v1914
    %v4062 = vunpack.c.h.b16 %v1914
    %v4063 = vunpack.c.l.b16 %v1915
    %v4064 = vunpack.c.h.b16 %v1915
    %v4065 = vunpack.c.l.b16 %v1916
    %v4066 = vunpack.c.h.b16 %v1916
    %v4067 = vunpack.c.l.b16 %v1917
    %v4068 = vunpack.c.h.b16 %v1917
    %v4069 = vunpack.c.l.b16 %v1918
    %v4070 = vunpack.c.h.b16 %v1918
    %v4071 = vunpack.c.l.b16 %v1919
    %v4072 = vunpack.c.h.b16 %v1919
    %v4073 = vunpack.c.l.b16 %v1920
    %v4074 = vunpack.c.h.b16 %v1920
    %v4075 = vunpack.c.l.b16 %v1921
    %v4076 = vunpack.c.h.b16 %v1921
    %v4077 = vunpack.c.l.b16 %v1922
    %v4078 = vunpack.c.h.b16 %v1922
    %v4079 = vunpack.c.l.b16 %v1923
    %v4080 = vunpack.c.h.b16 %v1923
    %v4081 = vunpack.c.l.b16 %v1924
    %v4082 = vunpack.c.h.b16 %v1924
    %v4083 = vunpack.c.l.b16 %v1925
    %v4084 = vunpack.c.h.b16 %v1925
    %v4085 = vunpack.c.l.b16 %v1926
    %v4086 = vunpack.c.h.b16 %v1926
    %v4087 = vunpack.c.l.b16 %v1927
    %v4088 = vunpack.c.h.b16 %v1927
    %v4089 = vunpack.c.l.b16 %v1928
    %v4090 = vunpack.c.h.b16 %v1928
    %v4091 = vunpack.c.l.b16 %v1929
    %v4092 = vunpack.c.h.b16 %v1929
    %v4093 = vunpack.c.l.b16 %v1930
    %v4094 = vunpack.c.h.b16 %v1930
    %v4095 = vunpack.c.l.b16 %v1931
    %v4096 = vunpack.c.h.b16 %v1931
    %v4097 = vunpack.c.l.b16 %v1932
    %v4098 = vunpack.c.h.b16 %v1932
    %v4099 = vunpack.c.l.b16 %v1933
    %v4100 = vunpack.c.h.b16 %v1933
    %v4101 = vunpack.c.l.b16 %v1934
    %v4102 = vunpack.c.h.b16 %v1934
    %v4103 = vunpack.c.l.b16 %v1935
    %v4104 = vunpack.c.h.b16 %v1935
    %v4105 = vunpack.c.l.b16 %v1936
    %v4106 = vunpack.c.h.b16 %v1936
    %v4107 = vunpack.c.l.b16 %v1937
    %v4108 = vunpack.c.h.b16 %v1937
    %v4109 = vunpack.c.l.b16 %v1938
    %v4110 = vunpack.c.h.b16 %v1938
    %v4111 = vunpack.c.l.b16 %v1939
    %v4112 = vunpack.c.h.b16 %v1939
    %v4113 = vunpack.c.l.b16 %v1940
    %v4114 = vunpack.c.h.b16 %v1940
    %v4115 = vunpack.c.l.b16 %v1941
    %v4116 = vunpack.c.h.b16 %v1941
    %v4117 = vunpack.c.l.b16 %v1942
    %v4118 = vunpack.c.h.b16 %v1942
    %v4119 = vunpack.c.l.b16 %v1943
    %v4120 = vunpack.c.h.b16 %v1943
    %v4121 = vunpack.c.l.b16 %v1944
    %v4122 = vunpack.c.h.b16 %v1944
    %v4123 = vunpack.c.l.b16 %v1945
    %v4124 = vunpack.c.h.b16 %v1945
    %v4125 = vunpack.c.l.b16 %v1946
    %v4126 = vunpack.c.h.b16 %v1946
    %v4127 = vunpack.c.l.b16 %v1947
    %v4128 = vunpack.c.h.b16 %v1947
    %v4129 = vunpack.c.l.b16 %v1948
    %v4130 = vunpack.c.h.b16 %v1948
    %v4131 = vunpack.c.l.b16 %v1949
    %v4132 = vunpack.c.h.b16 %v1949
    %v4133 = vunpack.c.l.b16 %v1950
    %v4134 = vunpack.c.h.b16 %v1950
    %v4135 = vunpack.c.l.b16 %v1951
    %v4136 = vunpack.c.h.b16 %v1951
    %v4137 = vunpack.c.l.b16 %v1952
    %v4138 = vunpack.c.h.b16 %v1952
    %v4139 = vunpack.c.l.b16 %v1953
    %v4140 = vunpack.c.h.b16 %v1953
    %v4141 = vunpack.c.l.b16 %v1954
    %v4142 = vunpack.c.h.b16 %v1954
    %v4143 = vunpack.c.l.b16 %v1955
    %v4144 = vunpack.c.h.b16 %v1955
    %v4145 = vunpack.c.l.b16 %v1956
    %v4146 = vunpack.c.h.b16 %v1956
    %v4147 = vunpack.c.l.b16 %v1957
    %v4148 = vunpack.c.h.b16 %v1957
    %v4149 = vunpack.c.l.b16 %v1958
    %v4150 = vunpack.c.h.b16 %v1958
    %v4151 = vunpack.c.l.b16 %v1959
    %v4152 = vunpack.c.h.b16 %v1959
    %v4153 = vunpack.c.l.b16 %v1960
    %v4154 = vunpack.c.h.b16 %v1960
    %v4155 = vunpack.c.l.b16 %v1961
    %v4156 = vunpack.c.h.b16 %v1961
    %v4157 = vunpack.c.l.b16 %v1962
    %v4158 = vunpack.c.h.b16 %v1962
    %v4159 = vunpack.c.l.b16 %v1963
    %v4160 = vunpack.c.h.b16 %v1963
    %v4161 = vunpack.c.l.b16 %v1964
    %v4162 = vunpack.c.h.b16 %v1964
    %v4163 = vunpack.c.l.b16 %v1965
    %v4164 = vunpack.c.h.b16 %v1965
    %v4165 = vunpack.c.l.b16 %v1966
    %v4166 = vunpack.c.h.b16 %v1966
    %v4167 = vunpack.c.l.b16 %v1967
    %v4168 = vunpack.c.h.b16 %v1967
    %v4169 = vunpack.c.l.b16 %v1968
    %v4170 = vunpack.c.h.b16 %v1968
    %v4171 = vunpack.c.l.b16 %v1969
    %v4172 = vunpack.c.h.b16 %v1969
    %v4173 = vunpack.c.l.b16 %v1970
    %v4174 = vunpack.c.h.b16 %v1970
    %v4175 = vunpack.c.l.b16 %v1971
    %v4176 = vunpack.c.h.b16 %v1971
    %v4177 = vunpack.c.l.b16 %v1972
    %v4178 = vunpack.c.h.b16 %v1972
    %v4179 = vunpack.c.l.b16 %v1973
    %v4180 = vunpack.c.h.b16 %v1973
    %v4181 = vunpack.c.l.b16 %v1974
    %v4182 = vunpack.c.h.b16 %v1974
    %v4183 = vunpack.c.l.b16 %v1975
    %v4184 = vunpack.c.h.b16 %v1975
    %v4185 = vunpack.c.l.b16 %v1976
    %v4186 = vunpack.c.h.b16 %v1976
    %v4187 = vunpack.c.l.b16 %v1977
    %v4188 = vunpack.c.h.b16 %v1977
    %v4189 = vunpack.c.l.b16 %v1978
    %v4190 = vunpack.c.h.b16 %v1978
    %v4191 = vunpack.c.l.b16 %v1979
    %v4192 = vunpack.c.h.b16 %v1979
    %v4193 = vunpack.c.l.b16 %v1980
    %v4194 = vunpack.c.h.b16 %v1980
    %v4195 = vunpack.c.l.b16 %v1981
    %v4196 = vunpack.c.h.b16 %v1981
    %v4197 = vunpack.c.l.b16 %v1982
    %v4198 = vunpack.c.h.b16 %v1982
    %v4199 = vunpack.c.l.b16 %v1983
    %v4200 = vunpack.c.h.b16 %v1983
    %v4201 = vunpack.c.l.b16 %v1984
    %v4202 = vunpack.c.h.b16 %v1984
    %v4203 = vunpack.c.l.b16 %v1985
    %v4204 = vunpack.c.h.b16 %v1985
    %v4205 = vunpack.c.l.b16 %v1986
    %v4206 = vunpack.c.h.b16 %v1986
    %v4207 = vunpack.c.l.b16 %v1987
    %v4208 = vunpack.c.h.b16 %v1987
    %v4209 = vunpack.c.l.b16 %v1988
    %v4210 = vunpack.c.h.b16 %v1988
    %v4211 = vunpack.c.l.b16 %v1989
    %v4212 = vunpack.c.h.b16 %v1989
    %v4213 = vunpack.c.l.b16 %v1990
    %v4214 = vunpack.c.h.b16 %v1990
    %v4215 = vunpack.c.l.b16 %v1991
    %v4216 = vunpack.c.h.b16 %v1991
    %v4217 = vunpack.c.l.b16 %v1992
    %v4218 = vunpack.c.h.b16 %v1992
    %v4219 = vunpack.c.l.b16 %v1993
    %v4220 = vunpack.c.h.b16 %v1993
    %v4221 = vunpack.c.l.b16 %v1994
    %v4222 = vunpack.c.h.b16 %v1994
    %v4223 = vunpack.c.l.b16 %v1995
    %v4224 = vunpack.c.h.b16 %v1995
    %v4225 = vunpack.c.l.b16 %v1996
    %v4226 = vunpack.c.h.b16 %v1996
    %v4227 = vunpack.c.l.b16 %v1997
    %v4228 = vunpack.c.h.b16 %v1997
    %v4229 = vunpack.c.l.b16 %v1998
    %v4230 = vunpack.c.h.b16 %v1998
    %v4231 = vunpack.c.l.b16 %v1999
    %v4232 = vunpack.c.h.b16 %v1999
    %v4233 = vunpack.c.l.b16 %v2000
    %v4234 = vunpack.c.h.b16 %v2000
    %v4235 = vunpack.c.l.b16 %v2001
    %v4236 = vunpack.c.h.b16 %v2001
    %v4237 = vunpack.c.l.b16 %v2002
    %v4238 = vunpack.c.h.b16 %v2002
    %v4239 = vunpack.c.l.b16 %v2003
    %v4240 = vunpack.c.h.b16 %v2003
    %v4241 = vunpack.c.l.b16 %v2004
    %v4242 = vunpack.c.h.b16 %v2004
    %v4243 = vunpack.c.l.b16 %v2005
    %v4244 = vunpack.c.h.b16 %v2005
    %v4245 = vunpack.c.l.b16 %v2006
    %v4246 = vunpack.c.h.b16 %v2006
    %v4247 = vunpack.c.l.b16 %v2007
    %v4248 = vunpack.c.h.b16 %v2007
    %v4249 = vunpack.c.l.b16 %v2008
    %v4250 = vunpack.c.h.b16 %v2008
    %v4251 = vunpack.c.l.b16 %v2009
    %v4252 = vunpack.c.h.b16 %v2009
    %v4253 = vunpack.c.l.b16 %v2010
    %v4254 = vunpack.c.h.b16 %v2010
    %v4255 = vunpack.c.l.b16 %v2011
    %v4256 = vunpack.c.h.b16 %v2011
    %v4257 = vunpack.c.l.b16 %v2012
    %v4258 = vunpack.c.h.b16 %v2012
    %v4259 = vunpack.c.l.b16 %v2013
    %v4260 = vunpack.c.h.b16 %v2013
    %v4261 = vunpack.c.l.b16 %v2014
    %v4262 = vunpack.c.h.b16 %v2014
    %v4263 = vunpack.c.l.b16 %v2015
    %v4264 = vunpack.c.h.b16 %v2015
    %v4265 = vunpack.c.l.b16 %v2016
    %v4266 = vunpack.c.h.b16 %v2016
    %v4267 = vunpack.c.l.b16 %v2017
    %v4268 = vunpack.c.h.b16 %v2017
    %v4269 = vunpack.c.l.b16 %v2018
    %v4270 = vunpack.c.h.b16 %v2018
    %v4271 = vunpack.c.l.b16 %v2019
    %v4272 = vunpack.c.h.b16 %v2019
    %v4273 = vunpack.c.l.b16 %v2020
    %v4274 = vunpack.c.h.b16 %v2020
    %v4275 = vunpack.c.l.b16 %v2021
    %v4276 = vunpack.c.h.b16 %v2021
    %v4277 = vunpack.c.l.b16 %v2022
    %v4278 = vunpack.c.h.b16 %v2022
    %v4279 = vunpack.c.l.b16 %v2023
    %v4280 = vunpack.c.h.b16 %v2023
    %v4281 = vunpack.c.l.b16 %v2024
    %v4282 = vunpack.c.h.b16 %v2024
    %v4283 = vunpack.c.l.b16 %v2025
    %v4284 = vunpack.c.h.b16 %v2025
    %v4285 = vunpack.c.l.b16 %v2026
    %v4286 = vunpack.c.h.b16 %v2026
    %v4287 = vunpack.c.l.b16 %v2027
    %v4288 = vunpack.c.h.b16 %v2027
    %v4289 = vunpack.c.l.b16 %v2028
    %v4290 = vunpack.c.h.b16 %v2028
    %v4291 = vunpack.c.l.b16 %v2029
    %v4292 = vunpack.c.h.b16 %v2029
    %v4293 = vunpack.c.l.b16 %v2030
    %v4294 = vunpack.c.h.b16 %v2030
    %v4295 = vunpack.c.l.b16 %v2031
    %v4296 = vunpack.c.h.b16 %v2031
    %v4297 = vunpack.c.l.b16 %v2032
    %v4298 = vunpack.c.h.b16 %v2032
    %v4299 = vunpack.c.l.b16 %v2033
    %v4300 = vunpack.c.h.b16 %v2033
    %v4301 = vunpack.c.l.b16 %v2034
    %v4302 = vunpack.c.h.b16 %v2034
    %v4303 = vunpack.c.l.b16 %v2035
    %v4304 = vunpack.c.h.b16 %v2035
    %v4305 = vunpack.c.l.b16 %v2036
    %v4306 = vunpack.c.h.b16 %v2036
    %v4307 = vunpack.c.l.b16 %v2037
    %v4308 = vunpack.c.h.b16 %v2037
    %v4309 = vunpack.c.l.b16 %v2038
    %v4310 = vunpack.c.h.b16 %v2038
    %v4311 = vunpack.c.l.b16 %v2039
    %v4312 = vunpack.c.h.b16 %v2039
    %v4313 = vunpack.c.l.b16 %v2040
    %v4314 = vunpack.c.h.b16 %v2040
    %v4315 = vunpack.c.l.b16 %v2041
    %v4316 = vunpack.c.h.b16 %v2041
    %v4317 = vunpack.c.l.b16 %v2042
    %v4318 = vunpack.c.h.b16 %v2042
    %v4319 = vunpack.c.l.b16 %v2043
    %v4320 = vunpack.c.h.b16 %v2043
    %v4321 = vunpack.c.l.b16 %v2044
    %v4322 = vunpack.c.h.b16 %v2044
    %v4323 = vunpack.c.l.b16 %v2045
    %v4324 = vunpack.c.h.b16 %v2045
    %v4325 = vunpack.c.l.b16 %v2046
    %v4326 = vunpack.c.h.b16 %v2046
    %v4327 = vunpack.c.l.b16 %v2047
    %v4328 = vunpack.c.h.b16 %v2047
    %v4329 = vunpack.c.l.b16 %v2048
    %v4330 = vunpack.c.h.b16 %v2048
    %v4331 = vunpack.c.l.b16 %v2049
    %v4332 = vunpack.c.h.b16 %v2049
    %v4333 = vunpack.c.l.b16 %v2050
    %v4334 = vunpack.c.h.b16 %v2050
    %v4335 = vunpack.c.l.b16 %v2051
    %v4336 = vunpack.c.h.b16 %v2051
    %v4337 = vunpack.c.l.b16 %v2052
    %v4338 = vunpack.c.h.b16 %v2052
    %v4339 = vunpack.c.l.b16 %v2053
    %v4340 = vunpack.c.h.b16 %v2053
    %v4341 = vunpack.c.l.b16 %v2054
    %v4342 = vunpack.c.h.b16 %v2054
    %v4343 = vunpack.c.l.b16 %v2055
    %v4344 = vunpack.c.h.b16 %v2055
    %v4345 = vunpack.c.l.b16 %v2056
    %v4346 = vunpack.c.h.b16 %v2056
    %v4347 = vunpack.c.l.b16 %v2057
    %v4348 = vunpack.c.h.b16 %v2057
    %v4349 = vunpack.c.l.b16 %v2058
    %v4350 = vunpack.c.h.b16 %v2058
    %v4351 = vunpack.c.l.b16 %v2059
    %v4352 = vunpack.c.h.b16 %v2059
    %v4353 = vunpack.c.l.b16 %v2060
    %v4354 = vunpack.c.h.b16 %v2060
    %v4355 = vunpack.c.l.b16 %v2061
    %v4356 = vunpack.c.h.b16 %v2061
    %v4357 = vunpack.c.l.b16 %v2062
    %v4358 = vunpack.c.h.b16 %v2062
    %v4359 = vunpack.c.l.b16 %v2063
    %v4360 = vunpack.c.h.b16 %v2063
    %v4361 = vunpack.c.l.b16 %v2064
    %v4362 = vunpack.c.h.b16 %v2064
    %v4363 = vunpack.c.l.b16 %v2065
    %v4364 = vunpack.c.h.b16 %v2065
    %v4365 = vunpack.c.l.b16 %v2066
    %v4366 = vunpack.c.h.b16 %v2066
    %v4367 = vunpack.c.l.b16 %v2067
    %v4368 = vunpack.c.h.b16 %v2067
    %v4369 = vunpack.c.l.b16 %v2068
    %v4370 = vunpack.c.h.b16 %v2068
    %v4371 = vunpack.c.l.b16 %v2069
    %v4372 = vunpack.c.h.b16 %v2069
    %v4373 = vunpack.c.l.b16 %v2070
    %v4374 = vunpack.c.h.b16 %v2070
    %v4375 = vunpack.c.l.b16 %v2071
    %v4376 = vunpack.c.h.b16 %v2071
    %v4377 = vunpack.c.l.b16 %v2072
    %v4378 = vunpack.c.h.b16 %v2072
    %v4379 = vunpack.c.l.b16 %v2073
    %v4380 = vunpack.c.h.b16 %v2073
    %v4381 = vunpack.c.l.b16 %v2074
    %v4382 = vunpack.c.h.b16 %v2074
    %v4383 = vunpack.c.l.b16 %v2075
    %v4384 = vunpack.c.h.b16 %v2075
    %v4385 = vunpack.c.l.b16 %v2076
    %v4386 = vunpack.c.h.b16 %v2076
    %v4387 = vunpack.c.l.b16 %v2077
    %v4388 = vunpack.c.h.b16 %v2077
    %v4389 = vunpack.c.l.b16 %v2078
    %v4390 = vunpack.c.h.b16 %v2078
    %v4391 = vunpack.c.l.b16 %v2079
    %v4392 = vunpack.c.h.b16 %v2079
    %v4393 = vunpack.c.l.b16 %v2080
    %v4394 = vunpack.c.h.b16 %v2080
    %v4395 = vunpack.c.l.b16 %v2081
    %v4396 = vunpack.c.h.b16 %v2081
    %v4397 = vunpack.c.l.b16 %v2082
    %v4398 = vunpack.c.h.b16 %v2082
    %v4399 = vunpack.c.l.b16 %v2083
    %v4400 = vunpack.c.h.b16 %v2083
    %v4401 = vunpack.c.l.b16 %v2084
    %v4402 = vunpack.c.h.b16 %v2084
    %v4403 = vunpack.c.l.b16 %v2085
    %v4404 = vunpack.c.h.b16 %v2085
    %v4405 = vunpack.c.l.b16 %v2086
    %v4406 = vunpack.c.h.b16 %v2086
    %v4407 = vunpack.c.l.b16 %v2087
    %v4408 = vunpack.c.h.b16 %v2087
    %v4409 = vunpack.c.l.b16 %v2088
    %v4410 = vunpack.c.h.b16 %v2088
    %v4411 = vunpack.c.l.b16 %v2089
    %v4412 = vunpack.c.h.b16 %v2089
    %v4413 = vunpack.c.l.b16 %v2090
    %v4414 = vunpack.c.h.b16 %v2090
    %v4415 = vunpack.c.l.b16 %v2091
    %v4416 = vunpack.c.h.b16 %v2091
    %v4417 = vunpack.c.l.b16 %v2092
    %v4418 = vunpack.c.h.b16 %v2092
    %v4419 = vunpack.c.l.b16 %v2093
    %v4420 = vunpack.c.h.b16 %v2093
    %v4421 = vunpack.c.l.b16 %v2094
    %v4422 = vunpack.c.h.b16 %v2094
    %v4423 = vunpack.c.l.b16 %v2095
    %v4424 = vunpack.c.h.b16 %v2095
    %v4425 = vunpack.c.l.b16 %v2096
    %v4426 = vunpack.c.h.b16 %v2096
    %v4427 = vunpack.c.l.b16 %v2097
    %v4428 = vunpack.c.h.b16 %v2097
    %v4429 = vunpack.c.l.b16 %v2098
    %v4430 = vunpack.c.h.b16 %v2098
    %v4431 = vunpack.c.l.b16 %v2099
    %v4432 = vunpack.c.h.b16 %v2099
    %v4433 = vunpack.c.l.b16 %v2100
    %v4434 = vunpack.c.h.b16 %v2100
    %v4435 = vunpack.c.l.b16 %v2101
    %v4436 = vunpack.c.h.b16 %v2101
    %v4437 = vunpack.c.l.b16 %v2102
    %v4438 = vunpack.c.h.b16 %v2102
    %v4439 = vunpack.c.l.b16 %v2103
    %v4440 = vunpack.c.h.b16 %v2103
    %v4441 = vunpack.c.l.b16 %v2104
    %v4442 = vunpack.c.h.b16 %v2104
    %v4443 = vunpack.c.l.b16 %v2105
    %v4444 = vunpack.c.h.b16 %v2105
    %v4445 = vunpack.c.l.b16 %v2106
    %v4446 = vunpack.c.h.b16 %v2106
    %v4447 = vunpack.c.l.b16 %v2107
    %v4448 = vunpack.c.h.b16 %v2107
    %v4449 = vunpack.c.l.b16 %v2108
    %v4450 = vunpack.c.h.b16 %v2108
    %v4451 = vunpack.c.l.b16 %v2109
    %v4452 = vunpack.c.h.b16 %v2109
    %v4453 = vunpack.c.l.b16 %v2110
    %v4454 = vunpack.c.h.b16 %v2110
    %v4455 = vunpack.c.l.b16 %v2111
    %v4456 = vunpack.c.h.b16 %v2111
    %v4457 = vunpack.c.l.b16 %v2112
    %v4458 = vunpack.c.h.b16 %v2112
    %v4459 = vunpack.c.l.b16 %v2113
    %v4460 = vunpack.c.h.b16 %v2113
    %v4461 = vunpack.c.l.b16 %v2114
    %v4462 = vunpack.c.h.b16 %v2114
    %v4463 = vunpack.c.l.b16 %v2115
    %v4464 = vunpack.c.h.b16 %v2115
    %v4465 = vunpack.c.l.b16 %v2116
    %v4466 = vunpack.c.h.b16 %v2116
    %v4467 = vunpack.c.l.b16 %v2117
    %v4468 = vunpack.c.h.b16 %v2117
    %v4469 = vunpack.c.l.b16 %v2118
    %v4470 = vunpack.c.h.b16 %v2118
    %v4471 = vunpack.c.l.b16 %v2119
    %v4472 = vunpack.c.h.b16 %v2119
    %v4473 = vunpack.c.l.b16 %v2120
    %v4474 = vunpack.c.h.b16 %v2120
    %v4475 = vunpack.c.l.b16 %v2121
    %v4476 = vunpack.c.h.b16 %v2121
    %v4477 = vunpack.c.l.b16 %v2122
    %v4478 = vunpack.c.h.b16 %v2122
    %v4479 = vunpack.c.l.b16 %v2123
    %v4480 = vunpack.c.h.b16 %v2123
    %v4481 = vunpack.c.l.b16 %v2124
    %v4482 = vunpack.c.h.b16 %v2124
    %v4483 = vunpack.c.l.b16 %v2125
    %v4484 = vunpack.c.h.b16 %v2125
    %v4485 = vunpack.c.l.b16 %v2126
    %v4486 = vunpack.c.h.b16 %v2126
    %v4487 = vunpack.c.l.b16 %v2127
    %v4488 = vunpack.c.h.b16 %v2127
    %v4489 = vunpack.c.l.b16 %v2128
    %v4490 = vunpack.c.h.b16 %v2128
    %v4491 = vunpack.c.l.b16 %v2129
    %v4492 = vunpack.c.h.b16 %v2129
    %v4493 = vunpack.c.l.b16 %v2130
    %v4494 = vunpack.c.h.b16 %v2130
    %v4495 = vunpack.c.l.b16 %v2131
    %v4496 = vunpack.c.h.b16 %v2131
    %v4497 = vunpack.c.l.b16 %v2132
    %v4498 = vunpack.c.h.b16 %v2132
    %v4499 = vunpack.c.l.b16 %v2133
    %v4500 = vunpack.c.h.b16 %v2133
    %v4501 = vunpack.c.l.b16 %v2134
    %v4502 = vunpack.c.h.b16 %v2134
    %v4503 = vunpack.c.l.b16 %v2135
    %v4504 = vunpack.c.h.b16 %v2135
    %v4505 = vunpack.c.l.b16 %v2136
    %v4506 = vunpack.c.h.b16 %v2136
    %v4507 = vunpack.c.l.b16 %v2137
    %v4508 = vunpack.c.h.b16 %v2137
    %v4509 = vunpack.c.l.b16 %v2138
    %v4510 = vunpack.c.h.b16 %v2138
    %v4511 = vunpack.c.l.b16 %v2139
    %v4512 = vunpack.c.h.b16 %v2139
    %v4513 = vunpack.c.l.b16 %v2140
    %v4514 = vunpack.c.h.b16 %v2140
    %v4515 = vunpack.c.l.b16 %v2141
    %v4516 = vunpack.c.h.b16 %v2141
    %v4517 = vunpack.c.l.b16 %v2142
    %v4518 = vunpack.c.h.b16 %v2142
    %v4519 = vunpack.c.l.b16 %v2143
    %v4520 = vunpack.c.h.b16 %v2143
    %v4521 = vunpack.c.l.b16 %v2144
    %v4522 = vunpack.c.h.b16 %v2144
    %v4523 = vunpack.c.l.b16 %v2145
    %v4524 = vunpack.c.h.b16 %v2145
    %v4525 = vunpack.c.l.b16 %v2146
    %v4526 = vunpack.c.h.b16 %v2146
    %v4527 = vunpack.c.l.b16 %v2147
    %v4528 = vunpack.c.h.b16 %v2147
    %v4529 = vunpack.c.l.b16 %v2148
    %v4530 = vunpack.c.h.b16 %v2148
    %v4531 = vunpack.c.l.b16 %v2149
    %v4532 = vunpack.c.h.b16 %v2149
    %v4533 = vunpack.c.l.b16 %v2150
    %v4534 = vunpack.c.h.b16 %v2150
    %v4535 = vunpack.c.l.b16 %v2151
    %v4536 = vunpack.c.h.b16 %v2151
    %v4537 = vunpack.c.l.b16 %v2152
    %v4538 = vunpack.c.h.b16 %v2152
    %v4539 = vunpack.c.l.b16 %v2153
    %v4540 = vunpack.c.h.b16 %v2153
    %v4541 = vunpack.c.l.b16 %v2154
    %v4542 = vunpack.c.h.b16 %v2154
    %v4543 = vunpack.c.l.b16 %v2155
    %v4544 = vunpack.c.h.b16 %v2155
    %v4545 = vunpack.c.l.b16 %v2156
    %v4546 = vunpack.c.h.b16 %v2156
    %v4547 = vunpack.c.l.b16 %v2157
    %v4548 = vunpack.c.h.b16 %v2157
    %v4549 = vunpack.c.l.b16 %v2158
    %v4550 = vunpack.c.h.b16 %v2158
    %v4551 = vunpack.c.l.b16 %v2159
    %v4552 = vunpack.c.h.b16 %v2159
    %v4553 = vunpack.c.l.b16 %v2160
    %v4554 = vunpack.c.h.b16 %v2160
    %v4555 = vunpack.c.l.b16 %v2161
    %v4556 = vunpack.c.h.b16 %v2161
    %v4557 = vunpack.c.l.b16 %v2162
    %v4558 = vunpack.c.h.b16 %v2162
    %v4559 = vunpack.c.l.b16 %v2163
    %v4560 = vunpack.c.h.b16 %v2163
    %v4561 = vunpack.c.l.b16 %v2164
    %v4562 = vunpack.c.h.b16 %v2164
    %v4563 = vunpack.c.l.b16 %v2165
    %v4564 = vunpack.c.h.b16 %v2165
    %v4565 = vunpack.c.l.b16 %v2166
    %v4566 = vunpack.c.h.b16 %v2166
    %v4567 = vunpack.c.l.b16 %v2167
    %v4568 = vunpack.c.h.b16 %v2167
    %v4569 = vunpack.c.l.b16 %v2168
    %v4570 = vunpack.c.h.b16 %v2168
    %v4571 = vunpack.c.l.b16 %v2169
    %v4572 = vunpack.c.h.b16 %v2169
    %v4573 = vunpack.c.l.b16 %v2170
    %v4574 = vunpack.c.h.b16 %v2170
    %v4575 = vunpack.c.l.b16 %v2171
    %v4576 = vunpack.c.h.b16 %v2171
    %v4577 = vunpack.c.l.b16 %v2172
    %v4578 = vunpack.c.h.b16 %v2172
    %v4579 = vunpack.c.l.b16 %v2173
    %v4580 = vunpack.c.h.b16 %v2173
    %v4581 = vunpack.c.l.b16 %v2174
    %v4582 = vunpack.c.h.b16 %v2174
    %v4583 = vunpack.c.l.b16 %v2175
    %v4584 = vunpack.c.h.b16 %v2175
    %v4585 = vunpack.c.l.b16 %v2176
    %v4586 = vunpack.c.h.b16 %v2176
    %v4587 = vunpack.c.l.b16 %v2177
    %v4588 = vunpack.c.h.b16 %v2177
    %v4589 = vunpack.c.l.b16 %v2178
    %v4590 = vunpack.c.h.b16 %v2178
    %v4591 = vunpack.c.l.b16 %v2179
    %v4592 = vunpack.c.h.b16 %v2179
    %v4593 = vunpack.c.l.b16 %v2180
    %v4594 = vunpack.c.h.b16 %v2180
    %v4595 = vunpack.c.l.b16 %v2181
    %v4596 = vunpack.c.h.b16 %v2181
    %v4597 = vunpack.c.l.b16 %v2182
    %v4598 = vunpack.c.h.b16 %v2182
    %v4599 = vunpack.c.l.b16 %v2183
    %v4600 = vunpack.c.h.b16 %v2183
    %v4601 = vunpack.c.l.b16 %v2184
    %v4602 = vunpack.c.h.b16 %v2184
    %v4603 = vunpack.c.l.b16 %v2185
    %v4604 = vunpack.c.h.b16 %v2185
    %v4605 = vunpack.c.l.b16 %v2186
    %v4606 = vunpack.c.h.b16 %v2186
    %v4607 = vunpack.c.l.b16 %v2187
    %v4608 = vunpack.c.h.b16 %v2187
    %v4609 = vunpack.c.l.b16 %v2188
    %v4610 = vunpack.c.h.b16 %v2188
    %v4611 = vunpack.c.l.b16 %v2189
    %v4612 = vunpack.c.h.b16 %v2189
    %v4613 = vunpack.c.l.b16 %v2190
    %v4614 = vunpack.c.h.b16 %v2190
    %v4615 = vunpack.c.l.b16 %v2191
    %v4616 = vunpack.c.h.b16 %v2191
    %v4617 = vunpack.c.l.b16 %v2192
    %v4618 = vunpack.c.h.b16 %v2192
    %v4619 = vunpack.c.l.b16 %v2193
    %v4620 = vunpack.c.h.b16 %v2193
    %v4621 = vunpack.c.l.b16 %v2194
    %v4622 = vunpack.c.h.b16 %v2194
    %v4623 = vunpack.c.l.b16 %v2195
    %v4624 = vunpack.c.h.b16 %v2195
    %v4625 = vunpack.c.l.b16 %v2196
    %v4626 = vunpack.c.h.b16 %v2196
    %v4627 = vunpack.c.l.b16 %v2197
    %v4628 = vunpack.c.h.b16 %v2197
    %v4629 = vunpack.c.l.b16 %v2198
    %v4630 = vunpack.c.h.b16 %v2198
    %v4631 = vunpack.c.l.b16 %v2199
    %v4632 = vunpack.c.h.b16 %v2199
    %v4633 = vunpack.c.l.b16 %v2200
    %v4634 = vunpack.c.h.b16 %v2200
    %v4635 = vunpack.c.l.b16 %v2201
    %v4636 = vunpack.c.h.b16 %v2201
    %v4637 = vunpack.c.l.b16 %v2202
    %v4638 = vunpack.c.h.b16 %v2202
    %v4639 = vunpack.c.l.b16 %v2203
    %v4640 = vunpack.c.h.b16 %v2203
    %v4641 = vunpack.c.l.b16 %v2204
    %v4642 = vunpack.c.h.b16 %v2204
    %v4643 = vunpack.c.l.b16 %v2205
    %v4644 = vunpack.c.h.b16 %v2205
    %v4645 = vunpack.c.l.b16 %v2206
    %v4646 = vunpack.c.h.b16 %v2206
    %v4647 = vunpack.c.l.b16 %v2207
    %v4648 = vunpack.c.h.b16 %v2207
    %v4649 = vunpack.c.l.b16 %v2208
    %v4650 = vunpack.c.h.b16 %v2208
    %v4651 = vunpack.c.l.b16 %v2209
    %v4652 = vunpack.c.h.b16 %v2209
    %v4653 = vunpack.c.l.b16 %v2210
    %v4654 = vunpack.c.h.b16 %v2210
    %v4655 = vunpack.c.l.b16 %v2211
    %v4656 = vunpack.c.h.b16 %v2211
    %v4657 = vunpack.c.l.b16 %v2212
    %v4658 = vunpack.c.h.b16 %v2212
    %v4659 = vunpack.c.l.b16 %v2213
    %v4660 = vunpack.c.h.b16 %v2213
    %v4661 = vunpack.c.l.b16 %v2214
    %v4662 = vunpack.c.h.b16 %v2214
    %v4663 = vunpack.c.l.b16 %v2215
    %v4664 = vunpack.c.h.b16 %v2215
    %v4665 = vunpack.c.l.b16 %v2216
    %v4666 = vunpack.c.h.b16 %v2216
    %v4667 = vunpack.c.l.b16 %v2217
    %v4668 = vunpack.c.h.b16 %v2217
    %v4669 = vunpack.c.l.b16 %v2218
    %v4670 = vunpack.c.h.b16 %v2218
    %v4671 = vunpack.c.l.b16 %v2219
    %v4672 = vunpack.c.h.b16 %v2219
    %v4673 = vunpack.c.l.b16 %v2220
    %v4674 = vunpack.c.h.b16 %v2220
    %v4675 = vpack.c.b16 %v3085, %v3075
    %v4676 = vpack.c.b16 %v3086, %v3076
    %v4677 = vpack.c.b16 %v3087, %v3077
    %v4678 = vpack.c.b16 %v3088, %v3078
    %v4679 = vpack.c.b16 %v3089, %v3079
    %v4680 = vpack.c.b16 %v3090, %v3080
    %v4681 = vpack.c.b16 %v3091, %v3081
    %v4682 = vpack.c.b16 %v3092, %v3082
    %v4683 = vpack.c.b16 %v3093, %v3083
    %v4684 = vpack.c.b16 %v3094, %v3084
    %v4685 = vpack.c.b16 %v3105, %v3095
    %v4686 = vpack.c.b16 %v3106, %v3096
    %v4687 = vpack.c.b16 %v3107, %v3097
    %v4688 = vpack.c.b16 %v3108, %v3098
    %v4689 = vpack.c.b16 %v3109, %v3099
    %v4690 = vpack.c.b16 %v3110, %v3100
    %v4691 = vpack.c.b16 %v3111, %v3101
    %v4692 = vpack.c.b16 %v3112, %v3102
    %v4693 = vpack.c.b16 %v3113, %v3103
    %v4694 = vpack.c.b16 %v3114, %v3104
    %v4695 = vpack.c.b16 %v3125, %v3115
    %v4696 = vpack.c.b16 %v3126, %v3116
    %v4697 = vpack.c.b16 %v3127, %v3117
    %v4698 = vpack.c.b16 %v3128, %v3118
    %v4699 = vpack.c.b16 %v3129, %v3119
    %v4700 = vpack.c.b16 %v3130, %v3120
    %v4701 = vpack.c.b16 %v3131, %v3121
    %v4702 = vpack.c.b16 %v3132, %v3122
    %v4703 = vpack.c.b16 %v3133, %v3123
    %v4704 = vpack.c.b16 %v3134, %v3124
    %v4705 = vpack.c.b16 %v3145, %v3135
    %v4706 = vpack.c.b16 %v3146, %v3136
    %v4707 = vpack.c.b16 %v3147, %v3137
    %v4708 = vpack.c.b16 %v3148, %v3138
    %v4709 = vpack.c.b16 %v3149, %v3139
    %v4710 = vpack.c.b16 %v3150, %v3140
    %v4711 = vpack.c.b16 %v3151, %v3141
    %v4712 = vpack.c.b16 %v3152, %v3142
    %v4713 = vpack.c.b16 %v3153, %v3143
    %v4714 = vpack.c.b16 %v3154, %v3144
    %v4715 = vpack.c.b16 %v3165, %v3155
    %v4716 = vpack.c.b16 %v3166, %v3156
    %v4717 = vpack.c.b16 %v3167, %v3157
    %v4718 = vpack.c.b16 %v3168, %v3158
    %v4719 = vpack.c.b16 %v3169, %v3159
    %v4720 = vpack.c.b16 %v3170, %v3160
    %v4721 = vpack.c.b16 %v3171, %v3161
    %v4722 = vpack.c.b16 %v3172, %v3162
    %v4723 = vpack.c.b16 %v3173, %v3163
    %v4724 = vpack.c.b16 %v3174, %v3164
    %v4725 = vpack.c.b16 %v3185, %v3175
    %v4726 = vpack.c.b16 %v3186, %v3176
    %v4727 = vpack.c.b16 %v3187, %v3177
    %v4728 = vpack.c.b16 %v3188, %v3178
    %v4729 = vpack.c.b16 %v3189, %v3179
    %v4730 = vpack.c.b16 %v3190, %v3180
    %v4731 = vpack.c.b16 %v3191, %v3181
    %v4732 = vpack.c.b16 %v3192, %v3182
    %v4733 = vpack.c.b16 %v3193, %v3183
    %v4734 = vpack.c.b16 %v3194, %v3184
    %v4735 = vpack.c.b16 %v3205, %v3195
    %v4736 = vpack.c.b16 %v3206, %v3196
    %v4737 = vpack.c.b16 %v3207, %v3197
    %v4738 = vpack.c.b16 %v3208, %v3198
    %v4739 = vpack.c.b16 %v3209, %v3199
    %v4740 = vpack.c.b16 %v3210, %v3200
    %v4741 = vpack.c.b16 %v3211, %v3201
    %v4742 = vpack.c.b16 %v3212, %v3202
    %v4743 = vpack.c.b16 %v3213, %v3203
    %v4744 = vpack.c.b16 %v3214, %v3204
    %v4745 = vpack.c.b16 %v3225, %v3215
    %v4746 = vpack.c.b16 %v3226, %v3216
    %v4747 = vpack.c.b16 %v3227, %v3217
    %v4748 = vpack.c.b16 %v3228, %v3218
    %v4749 = vpack.c.b16 %v3229, %v3219
    %v4750 = vpack.c.b16 %v3230, %v3220
    %v4751 = vpack.c.b16 %v3231, %v3221
    %v4752 = vpack.c.b16 %v3232, %v3222
    %v4753 = vpack.c.b16 %v3233, %v3223
    %v4754 = vpack.c.b16 %v3234, %v3224
    %v4755 = vpack.c.b16 %v3245, %v3235
    %v4756 = vpack.c.b16 %v3246, %v3236
    %v4757 = vpack.c.b16 %v3247, %v3237
    %v4758 = vpack.c.b16 %v3248, %v3238
    %v4759 = vpack.c.b16 %v3249, %v3239
    %v4760 = vpack.c.b16 %v3250, %v3240
    %v4761 = vpack.c.b16 %v3251, %v3241
    %v4762 = vpack.c.b16 %v3252, %v3242
    %v4763 = vpack.c.b16 %v3253, %v3243
    %v4764 = vpack.c.b16 %v3254, %v3244
    %v4765 = vpack.c.b16 %v3265, %v3255
    %v4766 = vpack.c.b16 %v3266, %v3256
    %v4767 = vpack.c.b16 %v3267, %v3257
    %v4768 = vpack.c.b16 %v3268, %v3258
    %v4769 = vpack.c.b16 %v3269, %v3259
    %v4770 = vpack.c.b16 %v3270, %v3260
    %v4771 = vpack.c.b16 %v3271, %v3261
    %v4772 = vpack.c.b16 %v3272, %v3262
    %v4773 = vpack.c.b16 %v3273, %v3263
    %v4774 = vpack.c.b16 %v3274, %v3264
    %v4775 = vpack.c.b16 %v3285, %v3275
    %v4776 = vpack.c.b16 %v3286, %v3276
    %v4777 = vpack.c.b16 %v3287, %v3277
    %v4778 = vpack.c.b16 %v3288, %v3278
    %v4779 = vpack.c.b16 %v3289, %v3279
    %v4780 = vpack.c.b16 %v3290, %v3280
    %v4781 = vpack.c.b16 %v3291, %v3281
    %v4782 = vpack.c.b16 %v3292, %v3282
    %v4783 = vpack.c.b16 %v3293, %v3283
    %v4784 = vpack.c.b16 %v3294, %v3284
    %v4785 = vpack.c.b16 %v3305, %v3295
    %v4786 = vpack.c.b16 %v3306, %v3296
    %v4787 = vpack.c.b16 %v3307, %v3297
    %v4788 = vpack.c.b16 %v3308, %v3298
    %v4789 = vpack.c.b16 %v3309, %v3299
    %v4790 = vpack.c.b16 %v3310, %v3300
    %v4791 = vpack.c.b16 %v3311, %v3301
    %v4792 = vpack.c.b16 %v3312, %v3302
    %v4793 = vpack.c.b16 %v3313, %v3303
    %v4794 = vpack.c.b16 %v3314, %v3304
    %v4795 = vpack.c.b16 %v3325, %v3315
    %v4796 = vpack.c.b16 %v3326, %v3316
    %v4797 = vpack.c.b16 %v3327, %v3317
    %v4798 = vpack.c.b16 %v3328, %v3318
    %v4799 = vpack.c.b16 %v3329, %v3319
    %v4800 = vpack.c.b16 %v3330, %v3320
    %v4801 = vpack.c.b16 %v3331, %v3321
    %v4802 = vpack.c.b16 %v3332, %v3322
    %v4803 = vpack.c.b16 %v3333, %v3323
    %v4804 = vpack.c.b16 %v3334, %v3324
    %v4805 = vpack.c.b16 %v3345, %v3335
    %v4806 = vpack.c.b16 %v3346, %v3336
    %v4807 = vpack.c.b16 %v3347, %v3337
    %v4808 = vpack.c.b16 %v3348, %v3338
    %v4809 = vpack.c.b16 %v3349, %v3339
    %v4810 = vpack.c.b16 %v3350, %v3340
    %v4811 = vpack.c.b16 %v3351, %v3341
    %v4812 = vpack.c.b16 %v3352, %v3342
    %v4813 = vpack.c.b16 %v3353, %v3343
    %v4814 = vpack.c.b16 %v3354, %v3344
    %v4815 = vpack.c.b16 %v3365, %v3355
    %v4816 = vpack.c.b16 %v3366, %v3356
    %v4817 = vpack.c.b16 %v3367, %v3357
    %v4818 = vpack.c.b16 %v3368, %v3358
    %v4819 = vpack.c.b16 %v3369, %v3359
    %v4820 = vpack.c.b16 %v3370, %v3360
    %v4821 = vpack.c.b16 %v3371, %v3361
    %v4822 = vpack.c.b16 %v3372, %v3362
    %v4823 = vpack.c.b16 %v3373, %v3363
    %v4824 = vpack.c.b16 %v3374, %v3364
    %v4825 = vpack.c.b16 %v3385, %v3375
    %v4826 = vpack.c.b16 %v3386, %v3376
    %v4827 = vpack.c.b16 %v3387, %v3377
    %v4828 = vpack.c.b16 %v3388, %v3378
    %v4829 = vpack.c.b16 %v3389, %v3379
    %v4830 = vpack.c.b16 %v3390, %v3380
    %v4831 = vpack.c.b16 %v3391, %v3381
    %v4832 = vpack.c.b16 %v3392, %v3382
    %v4833 = vpack.c.b16 %v3393, %v3383
    %v4834 = vpack.c.b16 %v3394, %v3384
    %v4835 = vpack.c.b16 %v3405, %v3395
    %v4836 = vpack.c.b16 %v3406, %v3396
    %v4837 = vpack.c.b16 %v3407, %v3397
    %v4838 = vpack.c.b16 %v3408, %v3398
    %v4839 = vpack.c.b16 %v3409, %v3399
    %v4840 = vpack.c.b16 %v3410, %v3400
    %v4841 = vpack.c.b16 %v3411, %v3401
    %v4842 = vpack.c.b16 %v3412, %v3402
    %v4843 = vpack.c.b16 %v3413, %v3403
    %v4844 = vpack.c.b16 %v3414, %v3404
    %v4845 = vpack.c.b16 %v3425, %v3415
    %v4846 = vpack.c.b16 %v3426, %v3416
    %v4847 = vpack.c.b16 %v3427, %v3417
    %v4848 = vpack.c.b16 %v3428, %v3418
    %v4849 = vpack.c.b16 %v3429, %v3419
    %v4850 = vpack.c.b16 %v3430, %v3420
    %v4851 = vpack.c.b16 %v3431, %v3421
    %v4852 = vpack.c.b16 %v3432, %v3422
    %v4853 = vpack.c.b16 %v3433, %v3423
    %v4854 = vpack.c.b16 %v3434, %v3424
    %v4855 = vpack.c.b16 %v3445, %v3435
    %v4856 = vpack.c.b16 %v3446, %v3436
    %v4857 = vpack.c.b16 %v3447, %v3437
    %v4858 = vpack.c.b16 %v3448, %v3438
    %v4859 = vpack.c.b16 %v3449, %v3439
    %v4860 = vpack.c.b16 %v3450, %v3440
    %v4861 = vpack.c.b16 %v3451, %v3441
    %v4862 = vpack.c.b16 %v3452, %v3442
    %v4863 = vpack.c.b16 %v3453, %v3443
    %v4864 = vpack.c.b16 %v3454, %v3444
    %v4865 = vpack.c.b16 %v3465, %v3455
    %v4866 = vpack.c.b16 %v3466, %v3456
    %v4867 = vpack.c.b16 %v3467, %v3457
    %v4868 = vpack.c.b16 %v3468, %v3458
    %v4869 = vpack.c.b16 %v3469, %v3459
    %v4870 = vpack.c.b16 %v3470, %v3460
    %v4871 = vpack.c.b16 %v3471, %v3461
    %v4872 = vpack.c.b16 %v3472, %v3462
    %v4873 = vpack.c.b16 %v3473, %v3463
    %v4874 = vpack.c.b16 %v3474, %v3464
    %v4875 = vpack.c.b16 %v3485, %v3475
    %v4876 = vpack.c.b16 %v3486, %v3476
    %v4877 = vpack.c.b16 %v3487, %v3477
    %v4878 = vpack.c.b16 %v3488, %v3478
    %v4879 = vpack.c.b16 %v3489, %v3479
    %v4880 = vpack.c.b16 %v3490, %v3480
    %v4881 = vpack.c.b16 %v3491, %v3481
    %v4882 = vpack.c.b16 %v3492, %v3482
    %v4883 = vpack.c.b16 %v3493, %v3483
    %v4884 = vpack.c.b16 %v3494, %v3484
    %v4885 = vpack.c.b16 %v3505, %v3495
    %v4886 = vpack.c.b16 %v3506, %v3496
    %v4887 = vpack.c.b16 %v3507, %v3497
    %v4888 = vpack.c.b16 %v3508, %v3498
    %v4889 = vpack.c.b16 %v3509, %v3499
    %v4890 = vpack.c.b16 %v3510, %v3500
    %v4891 = vpack.c.b16 %v3511, %v3501
    %v4892 = vpack.c.b16 %v3512, %v3502
    %v4893 = vpack.c.b16 %v3513, %v3503
    %v4894 = vpack.c.b16 %v3514, %v3504
    %v4895 = vpack.c.b16 %v3525, %v3515
    %v4896 = vpack.c.b16 %v3526, %v3516
    %v4897 = vpack.c.b16 %v3527, %v3517
    %v4898 = vpack.c.b16 %v3528, %v3518
    %v4899 = vpack.c.b16 %v3529, %v3519
    %v4900 = vpack.c.b16 %v3530, %v3520
    %v4901 = vpack.c.b16 %v3531, %v3521
    %v4902 = vpack.c.b16 %v3532, %v3522
    %v4903 = vpack.c.b16 %v3533, %v3523
    %v4904 = vpack.c.b16 %v3534, %v3524
    %v4905 = vpack.c.b16 %v3545, %v3535
    %v4906 = vpack.c.b16 %v3546, %v3536
    %v4907 = vpack.c.b16 %v3547, %v3537
    %v4908 = vpack.c.b16 %v3548, %v3538
    %v4909 = vpack.c.b16 %v3549, %v3539
    %v4910 = vpack.c.b16 %v3550, %v3540
    %v4911 = vpack.c.b16 %v3551, %v3541
    %v4912 = vpack.c.b16 %v3552, %v3542
    %v4913 = vpack.c.b16 %v3553, %v3543
    %v4914 = vpack.c.b16 %v3554, %v3544
    %v4915 = vpack.c.b16 %v3565, %v3555
    %v4916 = vpack.c.b16 %v3566, %v3556
    %v4917 = vpack.c.b16 %v3567, %v3557
    %v4918 = vpack.c.b16 %v3568, %v3558
    %v4919 = vpack.c.b16 %v3569, %v3559
    %v4920 = vpack.c.b16 %v3570, %v3560
    %v4921 = vpack.c.b16 %v3571, %v3561
    %v4922 = vpack.c.b16 %v3572, %v3562
    %v4923 = vpack.c.b16 %v3573, %v3563
    %v4924 = vpack.c.b16 %v3574, %v3564
    %v4925 = vpack.c.b16 %v3585, %v3575
    %v4926 = vpack.c.b16 %v3586, %v3576
    %v4927 = vpack.c.b16 %v3587, %v3577
    %v4928 = vpack.c.b16 %v3588, %v3578
    %v4929 = vpack.c.b16 %v3589, %v3579
    %v4930 = vpack.c.b16 %v3590, %v3580
    %v4931 = vpack.c.b16 %v3591, %v3581
    %v4932 = vpack.c.b16 %v3592, %v3582
    %v4933 = vpack.c.b16 %v3593, %v3583
    %v4934 = vpack.c.b16 %v3594, %v3584
    %v4935 = vpack.c.b16 %v3605, %v3595
    %v4936 = vpack.c.b16 %v3606, %v3596
    %v4937 = vpack.c.b16 %v3607, %v3597
    %v4938 = vpack.c.b16 %v3608, %v3598
    %v4939 = vpack.c.b16 %v3609, %v3599
    %v4940 = vpack.c.b16 %v3610, %v3600
    %v4941 = vpack.c.b16 %v3611, %v3601
    %v4942 = vpack.c.b16 %v3612, %v3602
    %v4943 = vpack.c.b16 %v3613, %v3603
    %v4944 = vpack.c.b16 %v3614, %v3604
    %v4945 = vpack.c.b16 %v3625, %v3615
    %v4946 = vpack.c.b16 %v3626, %v3616
    %v4947 = vpack.c.b16 %v3627, %v3617
    %v4948 = vpack.c.b16 %v3628, %v3618
    %v4949 = vpack.c.b16 %v3629, %v3619
    %v4950 = vpack.c.b16 %v3630, %v3620
    %v4951 = vpack.c.b16 %v3631, %v3621
    %v4952 = vpack.c.b16 %v3632, %v3622
    %v4953 = vpack.c.b16 %v3633, %v3623
    %v4954 = vpack.c.b16 %v3634, %v3624
    %v4955 = vpack.c.b16 %v3645, %v3635
    %v4956 = vpack.c.b16 %v3646, %v3636
    %v4957 = vpack.c.b16 %v3647, %v3637
    %v4958 = vpack.c.b16 %v3648, %v3638
    %v4959 = vpack.c.b16 %v3649, %v3639
    %v4960 = vpack.c.b16 %v3650, %v3640
    %v4961 = vpack.c.b16 %v3651, %v3641
    %v4962 = vpack.c.b16 %v3652, %v3642
    %v4963 = vpack.c.b16 %v3653, %v3643
    %v4964 = vpack.c.b16 %v3654, %v3644
    %v4965 = vpack.c.b16 %v3665, %v3655
    %v4966 = vpack.c.b16 %v3666, %v3656
    %v4967 = vpack.c.b16 %v3667, %v3657
    %v4968 = vpack.c.b16 %v3668, %v3658
    %v4969 = vpack.c.b16 %v3669, %v3659
    %v4970 = vpack.c.b16 %v3670, %v3660
    %v4971 = vpack.c.b16 %v3671, %v3661
    %v4972 = vpack.c.b16 %v3672, %v3662
    %v4973 = vpack.c.b16 %v3673, %v3663
    %v4974 = vpack.c.b16 %v3674, %v3664
    %v4975 = vpack.c.b16 %v3685, %v3675
    %v4976 = vpack.c.b16 %v3686, %v3676
    %v4977 = vpack.c.b16 %v3687, %v3677
    %v4978 = vpack.c.b16 %v3688, %v3678
    %v4979 = vpack.c.b16 %v3689, %v3679
    %v4980 = vpack.c.b16 %v3690, %v3680
    %v4981 = vpack.c.b16 %v3691, %v3681
    %v4982 = vpack.c.b16 %v3692, %v3682
    %v4983 = vpack.c.b16 %v3693, %v3683
    %v4984 = vpack.c.b16 %v3694, %v3684
    %v4985 = vpack.c.b16 %v3705, %v3695
    %v4986 = vpack.c.b16 %v3706, %v3696
    %v4987 = vpack.c.b16 %v3707, %v3697
    %v4988 = vpack.c.b16 %v3708, %v3698
    %v4989 = vpack.c.b16 %v3709, %v3699
    %v4990 = vpack.c.b16 %v3710, %v3700
    %v4991 = vpack.c.b16 %v3711, %v3701
    %v4992 = vpack.c.b16 %v3712, %v3702
    %v4993 = vpack.c.b16 %v3713, %v3703
    %v4994 = vpack.c.b16 %v3714, %v3704
    %v4995 = vpack.c.b16 %v3725, %v3715
    %v4996 = vpack.c.b16 %v3726, %v3716
    %v4997 = vpack.c.b16 %v3727, %v3717
    %v4998 = vpack.c.b16 %v3728, %v3718
    %v4999 = vpack.c.b16 %v3729, %v3719
    %v5000 = vpack.c.b16 %v3730, %v3720
    %v5001 = vpack.c.b16 %v3731, %v3721
    %v5002 = vpack.c.b16 %v3732, %v3722
    %v5003 = vpack.c.b16 %v3733, %v3723
    %v5004 = vpack.c.b16 %v3734, %v3724
    %v5005 = vpack.c.b16 %v3745, %v3735
    %v5006 = vpack.c.b16 %v3746, %v3736
    %v5007 = vpack.c.b16 %v3747, %v3737
    %v5008 = vpack.c.b16 %v3748, %v3738
    %v5009 = vpack.c.b16 %v3749, %v3739
    %v5010 = vpack.c.b16 %v3750, %v3740
    %v5011 = vpack.c.b16 %v3751, %v3741
    %v5012 = vpack.c.b16 %v3752, %v3742
    %v5013 = vpack.c.b16 %v3753, %v3743
    %v5014 = vpack.c.b16 %v3754, %v3744
    %v5015 = vpack.c.b16 %v3765, %v3755
    %v5016 = vpack.c.b16 %v3766, %v3756
    %v5017 = vpack.c.b16 %v3767, %v3757
    %v5018 = vpack.c.b16 %v3768, %v3758
    %v5019 = vpack.c.b16 %v3769, %v3759
    %v5020 = vpack.c.b16 %v3770, %v3760
    %v5021 = vpack.c.b16 %v3771, %v3761
    %v5022 = vpack.c.b16 %v3772, %v3762
    %v5023 = vpack.c.b16 %v3773, %v3763
    %v5024 = vpack.c.b16 %v3774, %v3764
    %v5025 = vpack.c.b16 %v3785, %v3775
    %v5026 = vpack.c.b16 %v3786, %v3776
    %v5027 = vpack.c.b16 %v3787, %v3777
    %v5028 = vpack.c.b16 %v3788, %v3778
    %v5029 = vpack.c.b16 %v3789, %v3779
    %v5030 = vpack.c.b16 %v3790, %v3780
    %v5031 = vpack.c.b16 %v3791, %v3781
    %v5032 = vpack.c.b16 %v3792, %v3782
    %v5033 = vpack.c.b16 %v3793, %v3783
    %v5034 = vpack.c.b16 %v3794, %v3784
    %v5035 = vpack.c.b16 %v3805, %v3795
    %v5036 = vpack.c.b16 %v3806, %v3796
    %v5037 = vpack.c.b16 %v3807, %v3797
    %v5038 = vpack.c.b16 %v3808, %v3798
    %v5039 = vpack.c.b16 %v3809, %v3799
    %v5040 = vpack.c.b16 %v3810, %v3800
    %v5041 = vpack.c.b16 %v3811, %v3801
    %v5042 = vpack.c.b16 %v3812, %v3802
    %v5043 = vpack.c.b16 %v3813, %v3803
    %v5044 = vpack.c.b16 %v3814, %v3804
    %v5045 = vpack.c.b16 %v3825, %v3815
    %v5046 = vpack.c.b16 %v3826, %v3816
    %v5047 = vpack.c.b16 %v3827, %v3817
    %v5048 = vpack.c.b16 %v3828, %v3818
    %v5049 = vpack.c.b16 %v3829, %v3819
    %v5050 = vpack.c.b16 %v3830, %v3820
    %v5051 = vpack.c.b16 %v3831, %v3821
    %v5052 = vpack.c.b16 %v3832, %v3822
    %v5053 = vpack.c.b16 %v3833, %v3823
    %v5054 = vpack.c.b16 %v3834, %v3824
    %v5055 = vpack.c.b16 %v3845, %v3835
    %v5056 = vpack.c.b16 %v3846, %v3836
    %v5057 = vpack.c.b16 %v3847, %v3837
    %v5058 = vpack.c.b16 %v3848, %v3838
    %v5059 = vpack.c.b16 %v3849, %v3839
    %v5060 = vpack.c.b16 %v3850, %v3840
    %v5061 = vpack.c.b16 %v3851, %v3841
    %v5062 = vpack.c.b16 %v3852, %v3842
    %v5063 = vpack.c.b16 %v3853, %v3843
    %v5064 = vpack.c.b16 %v3854, %v3844
    %v5065 = vpack.c.b16 %v3865, %v3855
    %v5066 = vpack.c.b16 %v3866, %v3856
    %v5067 = vpack.c.b16 %v3867, %v3857
    %v5068 = vpack.c.b16 %v3868, %v3858
    %v5069 = vpack.c.b16 %v3869, %v3859
    %v5070 = vpack.c.b16 %v3870, %v3860
    %v5071 = vpack.c.b16 %v3871, %v3861
    %v5072 = vpack.c.b16 %v3872, %v3862
    %v5073 = vpack.c.b16 %v3873, %v3863
    %v5074 = vpack.c.b16 %v3874, %v3864
    %v5075 = vpack.c.b16 %v3885, %v3875
    %v5076 = vpack.c.b16 %v3886, %v3876
    %v5077 = vpack.c.b16 %v3887, %v3877
    %v5078 = vpack.c.b16 %v3888, %v3878
    %v5079 = vpack.c.b16 %v3889, %v3879
    %v5080 = vpack.c.b16 %v3890, %v3880
    %v5081 = vpack.c.b16 %v3891, %v3881
    %v5082 = vpack.c.b16 %v3892, %v3882
    %v5083 = vpack.c.b16 %v3893, %v3883
    %v5084 = vpack.c.b16 %v3894, %v3884
    %v5085 = vpack.c.b16 %v3905, %v3895
    %v5086 = vpack.c.b16 %v3906, %v3896
    %v5087 = vpack.c.b16 %v3907, %v3897
    %v5088 = vpack.c.b16 %v3908, %v3898
    %v5089 = vpack.c.b16 %v3909, %v3899
    %v5090 = vpack.c.b16 %v3910, %v3900
    %v5091 = vpack.c.b16 %v3911, %v3901
    %v5092 = vpack.c.b16 %v3912, %v3902
    %v5093 = vpack.c.b16 %v3913, %v3903
    %v5094 = vpack.c.b16 %v3914, %v3904
    %v5095 = vpack.c.b16 %v3925, %v3915
    %v5096 = vpack.c.b16 %v3926, %v3916
    %v5097 = vpack.c.b16 %v3927, %v3917
    %v5098 = vpack.c.b16 %v3928, %v3918
    %v5099 = vpack.c.b16 %v3929, %v3919
    %v5100 = vpack.c.b16 %v3930, %v3920
    %v5101 = vpack.c.b16 %v3931, %v3921
    %v5102 = vpack.c.b16 %v3932, %v3922
    %v5103 = vpack.c.b16 %v3933, %v3923
    %v5104 = vpack.c.b16 %v3934, %v3924
    %v5105 = vpack.c.b16 %v3945, %v3935
    %v5106 = vpack.c.b16 %v3946, %v3936
    %v5107 = vpack.c.b16 %v3947, %v3937
    %v5108 = vpack.c.b16 %v3948, %v3938
    %v5109 = vpack.c.b16 %v3949, %v3939
    %v5110 = vpack.c.b16 %v3950, %v3940
    %v5111 = vpack.c.b16 %v3951, %v3941
    %v5112 = vpack.c.b16 %v3952, %v3942
    %v5113 = vpack.c.b16 %v3953, %v3943
    %v5114 = vpack.c.b16 %v3954, %v3944
    %v5115 = vpack.c.b16 %v3965, %v3955
    %v5116 = vpack.c.b16 %v3966, %v3956
    %v5117 = vpack.c.b16 %v3967, %v3957
    %v5118 = vpack.c.b16 %v3968, %v3958
    %v5119 = vpack.c.b16 %v3969, %v3959
    %v5120 = vpack.c.b16 %v3970, %v3960
    %v5121 = vpack.c.b16 %v3971, %v3961
    %v5122 = vpack.c.b16 %v3972, %v3962
    %v5123 = vpack.c.b16 %v3973, %v3963
    %v5124 = vpack.c.b16 %v3974, %v3964
    %v5125 = vpack.c.b16 %v3985, %v3975
    %v5126 = vpack.c.b16 %v3986, %v3976
    %v5127 = vpack.c.b16 %v3987, %v3977
    %v5128 = vpack.c.b16 %v3988, %v3978
    %v5129 = vpack.c.b16 %v3989, %v3979
    %v5130 = vpack.c.b16 %v3990, %v3980
    %v5131 = vpack.c.b16 %v3991, %v3981
    %v5132 = vpack.c.b16 %v3992, %v3982
    %v5133 = vpack.c.b16 %v3993, %v3983
    %v5134 = vpack.c.b16 %v3994, %v3984
    %v5135 = vpack.c.b16 %v4005, %v3995
    %v5136 = vpack.c.b16 %v4006, %v3996
    %v5137 = vpack.c.b16 %v4007, %v3997
    %v5138 = vpack.c.b16 %v4008, %v3998
    %v5139 = vpack.c.b16 %v4009, %v3999
    %v5140 = vpack.c.b16 %v4010, %v4000
    %v5141 = vpack.c.b16 %v4011, %v4001
    %v5142 = vpack.c.b16 %v4012, %v4002
    %v5143 = vpack.c.b16 %v4013, %v4003
    %v5144 = vpack.c.b16 %v4014, %v4004
    %v5145 = vpack.c.b16 %v4025, %v4015
    %v5146 = vpack.c.b16 %v4026, %v4016
    %v5147 = vpack.c.b16 %v4027, %v4017
    %v5148 = vpack.c.b16 %v4028, %v4018
    %v5149 = vpack.c.b16 %v4029, %v4019
    %v5150 = vpack.c.b16 %v4030, %v4020
    %v5151 = vpack.c.b16 %v4031, %v4021
    %v5152 = vpack.c.b16 %v4032, %v4022
    %v5153 = vpack.c.b16 %v4033, %v4023
    %v5154 = vpack.c.b16 %v4034, %v4024
    %v5155 = vpack.c.b16 %v4045, %v4035
    %v5156 = vpack.c.b16 %v4046, %v4036
    %v5157 = vpack.c.b16 %v4047, %v4037
    %v5158 = vpack.c.b16 %v4048, %v4038
    %v5159 = vpack.c.b16 %v4049, %v4039
    %v5160 = vpack.c.b16 %v4050, %v4040
    %v5161 = vpack.c.b16 %v4051, %v4041
    %v5162 = vpack.c.b16 %v4052, %v4042
    %v5163 = vpack.c.b16 %v4053, %v4043
    %v5164 = vpack.c.b16 %v4054, %v4044
    %v5165 = vpack.c.b16 %v4065, %v4055
    %v5166 = vpack.c.b16 %v4066, %v4056
    %v5167 = vpack.c.b16 %v4067, %v4057
    %v5168 = vpack.c.b16 %v4068, %v4058
    %v5169 = vpack.c.b16 %v4069, %v4059
    %v5170 = vpack.c.b16 %v4070, %v4060
    %v5171 = vpack.c.b16 %v4071, %v4061
    %v5172 = vpack.c.b16 %v4072, %v4062
    %v5173 = vpack.c.b16 %v4073, %v4063
    %v5174 = vpack.c.b16 %v4074, %v4064
    %v5175 = vpack.c.b16 %v4085, %v4075
    %v5176 = vpack.c.b16 %v4086, %v4076
    %v5177 = vpack.c.b16 %v4087, %v4077
    %v5178 = vpack.c.b16 %v4088, %v4078
    %v5179 = vpack.c.b16 %v4089, %v4079
    %v5180 = vpack.c.b16 %v4090, %v4080
    %v5181 = vpack.c.b16 %v4091, %v4081
    %v5182 = vpack.c.b16 %v4092, %v4082
    %v5183 = vpack.c.b16 %v4093, %v4083
    %v5184 = vpack.c.b16 %v4094, %v4084
    %v5185 = vpack.c.b16 %v4105, %v4095
    %v5186 = vpack.c.b16 %v4106, %v4096
    %v5187 = vpack.c.b16 %v4107, %v4097
    %v5188 = vpack.c.b16 %v4108, %v4098
    %v5189 = vpack.c.b16 %v4109, %v4099
    %v5190 = vpack.c.b16 %v4110, %v4100
    %v5191 = vpack.c.b16 %v4111, %v4101
    %v5192 = vpack.c.b16 %v4112, %v4102
    %v5193 = vpack.c.b16 %v4113, %v4103
    %v5194 = vpack.c.b16 %v4114, %v4104
    %v5195 = vpack.c.b16 %v4125, %v4115
    %v5196 = vpack.c.b16 %v4126, %v4116
    %v5197 = vpack.c.b16 %v4127, %v4117
    %v5198 = vpack.c.b16 %v4128, %v4118
    %v5199 = vpack.c.b16 %v4129, %v4119
    %v5200 = vpack.c.b16 %v4130, %v4120
    %v5201 = vpack.c.b16 %v4131, %v4121
    %v5202 = vpack.c.b16 %v4132, %v4122
    %v5203 = vpack.c.b16 %v4133, %v4123
    %v5204 = vpack.c.b16 %v4134, %v4124
    %v5205 = vpack.c.b16 %v4145, %v4135
    %v5206 = vpack.c.b16 %v4146, %v4136
    %v5207 = vpack.c.b16 %v4147, %v4137
    %v5208 = vpack.c.b16 %v4148, %v4138
    %v5209 = vpack.c.b16 %v4149, %v4139
    %v5210 = vpack.c.b16 %v4150, %v4140
    %v5211 = vpack.c.b16 %v4151, %v4141
    %v5212 = vpack.c.b16 %v4152, %v4142
    %v5213 = vpack.c.b16 %v4153, %v4143
    %v5214 = vpack.c.b16 %v4154, %v4144
    %v5215 = vpack.c.b16 %v4165, %v4155
    %v5216 = vpack.c.b16 %v4166, %v4156
    %v5217 = vpack.c.b16 %v4167, %v4157
    %v5218 = vpack.c.b16 %v4168, %v4158
    %v5219 = vpack.c.b16 %v4169, %v4159
    %v5220 = vpack.c.b16 %v4170, %v4160
    %v5221 = vpack.c.b16 %v4171, %v4161
    %v5222 = vpack.c.b16 %v4172, %v4162
    %v5223 = vpack.c.b16 %v4173, %v4163
    %v5224 = vpack.c.b16 %v4174, %v4164
    %v5225 = vpack.c.b16 %v4185, %v4175
    %v5226 = vpack.c.b16 %v4186, %v4176
    %v5227 = vpack.c.b16 %v4187, %v4177
    %v5228 = vpack.c.b16 %v4188, %v4178
    %v5229 = vpack.c.b16 %v4189, %v4179
    %v5230 = vpack.c.b16 %v4190, %v4180
    %v5231 = vpack.c.b16 %v4191, %v4181
    %v5232 = vpack.c.b16 %v4192, %v4182
    %v5233 = vpack.c.b16 %v4193, %v4183
    %v5234 = vpack.c.b16 %v4194, %v4184
    %v5235 = vpack.c.b16 %v4205, %v4195
    %v5236 = vpack.c.b16 %v4206, %v4196
    %v5237 = vpack.c.b16 %v4207, %v4197
    %v5238 = vpack.c.b16 %v4208, %v4198
    %v5239 = vpack.c.b16 %v4209, %v4199
    %v5240 = vpack.c.b16 %v4210, %v4200
    %v5241 = vpack.c.b16 %v4211, %v4201
    %v5242 = vpack.c.b16 %v4212, %v4202
    %v5243 = vpack.c.b16 %v4213, %v4203
    %v5244 = vpack.c.b16 %v4214, %v4204
    %v5245 = vpack.c.b16 %v4225, %v4215
    %v5246 = vpack.c.b16 %v4226, %v4216
    %v5247 = vpack.c.b16 %v4227, %v4217
    %v5248 = vpack.c.b16 %v4228, %v4218
    %v5249 = vpack.c.b16 %v4229, %v4219
    %v5250 = vpack.c.b16 %v4230, %v4220
    %v5251 = vpack.c.b16 %v4231, %v4221
    %v5252 = vpack.c.b16 %v4232, %v4222
    %v5253 = vpack.c.b16 %v4233, %v4223
    %v5254 = vpack.c.b16 %v4234, %v4224
    %v5255 = vpack.c.b16 %v4245, %v4235
    %v5256 = vpack.c.b16 %v4246, %v4236
    %v5257 = vpack.c.b16 %v4247, %v4237
    %v5258 = vpack.c.b16 %v4248, %v4238
    %v5259 = vpack.c.b16 %v4249, %v4239
    %v5260 = vpack.c.b16 %v4250, %v4240
    %v5261 = vpack.c.b16 %v4251, %v4241
    %v5262 = vpack.c.b16 %v4252, %v4242
    %v5263 = vpack.c.b16 %v4253, %v4243
    %v5264 = vpack.c.b16 %v4254, %v4244
    %v5265 = vpack.c.b16 %v4265, %v4255
    %v5266 = vpack.c.b16 %v4266, %v4256
    %v5267 = vpack.c.b16 %v4267, %v4257
    %v5268 = vpack.c.b16 %v4268, %v4258
    %v5269 = vpack.c.b16 %v4269, %v4259
    %v5270 = vpack.c.b16 %v4270, %v4260
    %v5271 = vpack.c.b16 %v4271, %v4261
    %v5272 = vpack.c.b16 %v4272, %v4262
    %v5273 = vpack.c.b16 %v4273, %v4263
    %v5274 = vpack.c.b16 %v4274, %v4264
    %v5275 = vpack.c.b16 %v4285, %v4275
    %v5276 = vpack.c.b16 %v4286, %v4276
    %v5277 = vpack.c.b16 %v4287, %v4277
    %v5278 = vpack.c.b16 %v4288, %v4278
    %v5279 = vpack.c.b16 %v4289, %v4279
    %v5280 = vpack.c.b16 %v4290, %v4280
    %v5281 = vpack.c.b16 %v4291, %v4281
    %v5282 = vpack.c.b16 %v4292, %v4282
    %v5283 = vpack.c.b16 %v4293, %v4283
    %v5284 = vpack.c.b16 %v4294, %v4284
    %v5285 = vpack.c.b16 %v4305, %v4295
    %v5286 = vpack.c.b16 %v4306, %v4296
    %v5287 = vpack.c.b16 %v4307, %v4297
    %v5288 = vpack.c.b16 %v4308, %v4298
    %v5289 = vpack.c.b16 %v4309, %v4299
    %v5290 = vpack.c.b16 %v4310, %v4300
    %v5291 = vpack.c.b16 %v4311, %v4301
    %v5292 = vpack.c.b16 %v4312, %v4302
    %v5293 = vpack.c.b16 %v4313, %v4303
    %v5294 = vpack.c.b16 %v4314, %v4304
    %v5295 = vpack.c.b16 %v4325, %v4315
    %v5296 = vpack.c.b16 %v4326, %v4316
    %v5297 = vpack.c.b16 %v4327, %v4317
    %v5298 = vpack.c.b16 %v4328, %v4318
    %v5299 = vpack.c.b16 %v4329, %v4319
    %v5300 = vpack.c.b16 %v4330, %v4320
    %v5301 = vpack.c.b16 %v4331, %v4321
    %v5302 = vpack.c.b16 %v4332, %v4322
    %v5303 = vpack.c.b16 %v4333, %v4323
    %v5304 = vpack.c.b16 %v4334, %v4324
    %v5305 = vpack.c.b16 %v4345, %v4335
    %v5306 = vpack.c.b16 %v4346, %v4336
    %v5307 = vpack.c.b16 %v4347, %v4337
    %v5308 = vpack.c.b16 %v4348, %v4338
    %v5309 = vpack.c.b16 %v4349, %v4339
    %v5310 = vpack.c.b16 %v4350, %v4340
    %v5311 = vpack.c.b16 %v4351, %v4341
    %v5312 = vpack.c.b16 %v4352, %v4342
    %v5313 = vpack.c.b16 %v4353, %v4343
    %v5314 = vpack.c.b16 %v4354, %v4344
    %v5315 = vpack.c.b16 %v4365, %v4355
    %v5316 = vpack.c.b16 %v4366, %v4356
    %v5317 = vpack.c.b16 %v4367, %v4357
    %v5318 = vpack.c.b16 %v4368, %v4358
    %v5319 = vpack.c.b16 %v4369, %v4359
    %v5320 = vpack.c.b16 %v4370, %v4360
    %v5321 = vpack.c.b16 %v4371, %v4361
    %v5322 = vpack.c.b16 %v4372, %v4362
    %v5323 = vpack.c.b16 %v4373, %v4363
    %v5324 = vpack.c.b16 %v4374, %v4364
    %v5325 = vpack.c.b16 %v4385, %v4375
    %v5326 = vpack.c.b16 %v4386, %v4376
    %v5327 = vpack.c.b16 %v4387, %v4377
    %v5328 = vpack.c.b16 %v4388, %v4378
    %v5329 = vpack.c.b16 %v4389, %v4379
    %v5330 = vpack.c.b16 %v4390, %v4380
    %v5331 = vpack.c.b16 %v4391, %v4381
    %v5332 = vpack.c.b16 %v4392, %v4382
    %v5333 = vpack.c.b16 %v4393, %v4383
    %v5334 = vpack.c.b16 %v4394, %v4384
    %v5335 = vpack.c.b16 %v4405, %v4395
    %v5336 = vpack.c.b16 %v4406, %v4396
    %v5337 = vpack.c.b16 %v4407, %v4397
    %v5338 = vpack.c.b16 %v4408, %v4398
    %v5339 = vpack.c.b16 %v4409, %v4399
    %v5340 = vpack.c.b16 %v4410, %v4400
    %v5341 = vpack.c.b16 %v4411, %v4401
    %v5342 = vpack.c.b16 %v4412, %v4402
    %v5343 = vpack.c.b16 %v4413, %v4403
    %v5344 = vpack.c.b16 %v4414, %v4404
    %v5345 = vpack.c.b16 %v4425, %v4415
    %v5346 = vpack.c.b16 %v4426, %v4416
    %v5347 = vpack.c.b16 %v4427, %v4417
    %v5348 = vpack.c.b16 %v4428, %v4418
    %v5349 = vpack.c.b16 %v4429, %v4419
    %v5350 = vpack.c.b16 %v4430, %v4420
    %v5351 = vpack.c.b16 %v4431, %v4421
    %v5352 = vpack.c.b16 %v4432, %v4422
    %v5353 = vpack.c.b16 %v4433, %v4423
    %v5354 = vpack.c.b16 %v4434, %v4424
    %v5355 = vpack.c.b16 %v4445, %v4435
    %v5356 = vpack.c.b16 %v4446, %v4436
    %v5357 = vpack.c.b16 %v4447, %v4437
    %v5358 = vpack.c.b16 %v4448, %v4438
    %v5359 = vpack.c.b16 %v4449, %v4439
    %v5360 = vpack.c.b16 %v4450, %v4440
    %v5361 = vpack.c.b16 %v4451, %v4441
    %v5362 = vpack.c.b16 %v4452, %v4442
    %v5363 = vpack.c.b16 %v4453, %v4443
    %v5364 = vpack.c.b16 %v4454, %v4444
    %v5365 = vpack.c.b16 %v4465, %v4455
    %v5366 = vpack.c.b16 %v4466, %v4456
    %v5367 = vpack.c.b16 %v4467, %v4457
    %v5368 = vpack.c.b16 %v4468, %v4458
    %v5369 = vpack.c.b16 %v4469, %v4459
    %v5370 = vpack.c.b16 %v4470, %v4460
    %v5371 = vpack.c.b16 %v4471, %v4461
    %v5372 = vpack.c.b16 %v4472, %v4462
    %v5373 = vpack.c.b16 %v4473, %v4463
    %v5374 = vpack.c.b16 %v4474, %v4464
    %v5375 = vpack.c.b16 %v4485, %v4475
    %v5376 = vpack.c.b16 %v4486, %v4476
    %v5377 = vpack.c.b16 %v4487, %v4477
    %v5378 = vpack.c.b16 %v4488, %v4478
    %v5379 = vpack.c.b16 %v4489, %v4479
    %v5380 = vpack.c.b16 %v4490, %v4480
    %v5381 = vpack.c.b16 %v4491, %v4481
    %v5382 = vpack.c.b16 %v4492, %v4482
    %v5383 = vpack.c.b16 %v4493, %v4483
    %v5384 = vpack.c.b16 %v4494, %v4484
    %v5385 = vpack.c.b16 %v4505, %v4495
    %v5386 = vpack.c.b16 %v4506, %v4496
    %v5387 = vpack.c.b16 %v4507, %v4497
    %v5388 = vpack.c.b16 %v4508, %v4498
    %v5389 = vpack.c.b16 %v4509, %v4499
    %v5390 = vpack.c.b16 %v4510, %v4500
    %v5391 = vpack.c.b16 %v4511, %v4501
    %v5392 = vpack.c.b16 %v4512, %v4502
    %v5393 = vpack.c.b16 %v4513, %v4503
    %v5394 = vpack.c.b16 %v4514, %v4504
    %v5395 = vpack.c.b16 %v4525, %v4515
    %v5396 = vpack.c.b16 %v4526, %v4516
    %v5397 = vpack.c.b16 %v4527, %v4517
    %v5398 = vpack.c.b16 %v4528, %v4518
    %v5399 = vpack.c.b16 %v4529, %v4519
    %v5400 = vpack.c.b16 %v4530, %v4520
    %v5401 = vpack.c.b16 %v4531, %v4521
    %v5402 = vpack.c.b16 %v4532, %v4522
    %v5403 = vpack.c.b16 %v4533, %v4523
    %v5404 = vpack.c.b16 %v4534, %v4524
    %v5405 = vpack.c.b16 %v4545, %v4535
    %v5406 = vpack.c.b16 %v4546, %v4536
    %v5407 = vpack.c.b16 %v4547, %v4537
    %v5408 = vpack.c.b16 %v4548, %v4538
    %v5409 = vpack.c.b16 %v4549, %v4539
    %v5410 = vpack.c.b16 %v4550, %v4540
    %v5411 = vpack.c.b16 %v4551, %v4541
    %v5412 = vpack.c.b16 %v4552, %v4542
    %v5413 = vpack.c.b16 %v4553, %v4543
    %v5414 = vpack.c.b16 %v4554, %v4544
    %v5415 = vpack.c.b16 %v4565, %v4555
    %v5416 = vpack.c.b16 %v4566, %v4556
    %v5417 = vpack.c.b16 %v4567, %v4557
    %v5418 = vpack.c.b16 %v4568, %v4558
    %v5419 = vpack.c.b16 %v4569, %v4559
    %v5420 = vpack.c.b16 %v4570, %v4560
    %v5421 = vpack.c.b16 %v4571, %v4561
    %v5422 = vpack.c.b16 %v4572, %v4562
    %v5423 = vpack.c.b16 %v4573, %v4563
    %v5424 = vpack.c.b16 %v4574, %v4564
    %v5425 = vpack.c.b16 %v4585, %v4575
    %v5426 = vpack.c.b16 %v4586, %v4576
    %v5427 = vpack.c.b16 %v4587, %v4577
    %v5428 = vpack.c.b16 %v4588, %v4578
    %v5429 = vpack.c.b16 %v4589, %v4579
    %v5430 = vpack.c.b16 %v4590, %v4580
    %v5431 = vpack.c.b16 %v4591, %v4581
    %v5432 = vpack.c.b16 %v4592, %v4582
    %v5433 = vpack.c.b16 %v4593, %v4583
    %v5434 = vpack.c.b16 %v4594, %v4584
    %v5435 = vpack.c.b16 %v4605, %v4595
    %v5436 = vpack.c.b16 %v4606, %v4596
    %v5437 = vpack.c.b16 %v4607, %v4597
    %v5438 = vpack.c.b16 %v4608, %v4598
    %v5439 = vpack.c.b16 %v4609, %v4599
    %v5440 = vpack.c.b16 %v4610, %v4600
    %v5441 = vpack.c.b16 %v4611, %v4601
    %v5442 = vpack.c.b16 %v4612, %v4602
    %v5443 = vpack.c.b16 %v4613, %v4603
    %v5444 = vpack.c.b16 %v4614, %v4604
    %v5445 = vpack.c.b16 %v4625, %v4615
    %v5446 = vpack.c.b16 %v4626, %v4616
    %v5447 = vpack.c.b16 %v4627, %v4617
    %v5448 = vpack.c.b16 %v4628, %v4618
    %v5449 = vpack.c.b16 %v4629, %v4619
    %v5450 = vpack.c.b16 %v4630, %v4620
    %v5451 = vpack.c.b16 %v4631, %v4621
    %v5452 = vpack.c.b16 %v4632, %v4622
    %v5453 = vpack.c.b16 %v4633, %v4623
    %v5454 = vpack.c.b16 %v4634, %v4624
    %v5455 = vpack.c.b16 %v4645, %v4635
    %v5456 = vpack.c.b16 %v4646, %v4636
    %v5457 = vpack.c.b16 %v4647, %v4637
    %v5458 = vpack.c.b16 %v4648, %v4638
    %v5459 = vpack.c.b16 %v4649, %v4639
    %v5460 = vpack.c.b16 %v4650, %v4640
    %v5461 = vpack.c.b16 %v4651, %v4641
    %v5462 = vpack.c.b16 %v4652, %v4642
    %v5463 = vpack.c.b16 %v4653, %v4643
    %v5464 = vpack.c.b16 %v4654, %v4644
    %v5465 = vpack.c.b16 %v4665, %v4655
    %v5466 = vpack.c.b16 %v4666, %v4656
    %v5467 = vpack.c.b16 %v4667, %v4657
    %v5468 = vpack.c.b16 %v4668, %v4658
    %v5469 = vpack.c.b16 %v4669, %v4659
    %v5470 = vpack.c.b16 %v4670, %v4660
    %v5471 = vpack.c.b16 %v4671, %v4661
    %v5472 = vpack.c.b16 %v4672, %v4662
    %v5473 = vpack.c.b16 %v4673, %v4663
    %v5474 = vpack.c.b16 %v4674, %v4664
    %6275 = vmatprep.subr.bf16.mxu0 %v4676
    %6276 = vmatpush1.bf16.msra.mxu0 %v4675
    %6277 = vmatprep.subr.bf16.mxu0 %v4686
    %6278 = vmatpush1.bf16.msra.mxu0 %v4685
    %6279 = vmatprep.subr.bf16.mxu0 %v4696
    %6280 = vmatpush1.bf16.msra.mxu0 %v4695
    %6281 = vmatprep.subr.bf16.mxu0 %v4706
    %6282 = vmatpush1.bf16.msra.mxu0 %v4705
    %6283 = vmatprep.subr.bf16.mxu0 %v4716
    %6284 = vmatpush1.bf16.msra.mxu0 %v4715
    %6285 = vmatprep.subr.bf16.mxu0 %v4726
    %6286 = vmatpush1.bf16.msra.mxu0 %v4725
    %6287 = vmatprep.subr.bf16.mxu0 %v4736
    %6288 = vmatpush1.bf16.msra.mxu0 %v4735
    %6289 = vmatprep.subr.bf16.mxu0 %v4746
    %6290 = vmatpush1.bf16.msra.mxu0 %v4745
    %6291 = vmatprep.subr.bf16.mxu0 %v4756
    %6292 = vmatpush1.bf16.msra.mxu0 %v4755
    %6293 = vmatprep.subr.bf16.mxu0 %v4766
    %6294 = vmatpush1.bf16.msra.mxu0 %v4765
    %6295 = vmatprep.subr.bf16.mxu0 %v4776
    %6296 = vmatpush1.bf16.msra.mxu0 %v4775
    %6297 = vmatprep.subr.bf16.mxu0 %v4786
    %6298 = vmatpush1.bf16.msra.mxu0 %v4785
    %6299 = vmatprep.subr.bf16.mxu0 %v4796
    %6300 = vmatpush1.bf16.msra.mxu0 %v4795
    %6301 = vmatprep.subr.bf16.mxu0 %v4806
    %6302 = vmatpush1.bf16.msra.mxu0 %v4805
    %6303 = vmatprep.subr.bf16.mxu0 %v4816
    %6304 = vmatpush1.bf16.msra.mxu0 %v4815
    %6305 = vmatprep.subr.bf16.mxu0 %v4826
    %6306 = vmatpush1.bf16.msra.mxu0 %v4825
    %6307 = vmatprep.mubr.bf16.mxu0 %v1412
    %6308 = vmatmul.mubr.bf16.gmra.mrb[0].mxu0 %v1411
    %v6309 = vpop.f32.mrb[0].mxu0
    %v6310 = vadd.f32 %v2228, %v6309
    %v6311 = vpop.f32.mrb[0].mxu0
    %v6312 = vadd.f32 %v2232, %v6311
    %v6313 = vpop.f32.mrb[0].mxu0
    %v6314 = vadd.f32 %v2228, %v6313
    %v6315 = vpop.f32.mrb[0].mxu0
    %v6316 = vadd.f32 %v2232, %v6315
    %6317 = vdwg.mxu0
    %6318 = vmatprep.subr.bf16.mxu0 %v4836
    %6319 = vmatpush1.bf16.msra.mxu0 %v4835
    %6320 = vmatprep.subr.bf16.mxu0 %v4846
    %6321 = vmatpush1.bf16.msra.mxu0 %v4845
    %6322 = vmatprep.subr.bf16.mxu0 %v4856
    %6323 = vmatpush1.bf16.msra.mxu0 %v4855
    %6324 = vmatprep.subr.bf16.mxu0 %v4866
    %6325 = vmatpush1.bf16.msra.mxu0 %v4865
    %6326 = vmatprep.subr.bf16.mxu0 %v4876
    %6327 = vmatpush1.bf16.msra.mxu0 %v4875
    %6328 = vmatprep.subr.bf16.mxu0 %v4886
    %6329 = vmatpush1.bf16.msra.mxu0 %v4885
    %6330 = vmatprep.subr.bf16.mxu0 %v4896
    %6331 = vmatpush1.bf16.msra.mxu0 %v4895
    %6332 = vmatprep.subr.bf16.mxu0 %v4906
    %6333 = vmatpush1.bf16.msra.mxu0 %v4905
    %6334 = vmatprep.subr.bf16.mxu0 %v4916
    %6335 = vmatpush1.bf16.msra.mxu0 %v4915
    %6336 = vmatprep.subr.bf16.mxu0 %v4926
    %6337 = vmatpush1.bf16.msra.mxu0 %v4925
    %6338 = vmatprep.subr.bf16.mxu0 %v4936
    %6339 = vmatpush1.bf16.msra.mxu0 %v4935
    %6340 = vmatprep.subr.bf16.mxu0 %v4946
    %6341 = vmatpush1.bf16.msra.mxu0 %v4945
    %6342 = vmatprep.subr.bf16.mxu0 %v4956
    %6343 = vmatpush1.bf16.msra.mxu0 %v4955
    %6344 = vmatprep.subr.bf16.mxu0 %v4966
    %6345 = vmatpush1.bf16.msra.mxu0 %v4965
    %6346 = vmatprep.subr.bf16.mxu0 %v4976
    %6347 = vmatpush1.bf16.msra.mxu0 %v4975
    %6348 = vmatprep.subr.bf16.mxu0 %v4986
    %6349 = vmatpush1.bf16.msra.mxu0 %v4985
    %6350 = vmatprep.mubr.bf16.mxu0 %v1414
    %6351 = vmatmul.mubr.bf16.gmra.mrb[0].mxu0 %v1413
    %v6352 = vpop.f32.mrb[0].mxu0
    %v6353 = vadd.f32 %v6310, %v6352
    %v6354 = vpop.f32.mrb[0].mxu0
    %v6355 = vadd.f32 %v6312, %v6354
    %v6356 = vpop.f32.mrb[0].mxu0
    %v6357 = vadd.f32 %v6314, %v6356
    %v6358 = vpop.f32.mrb[0].mxu0
    %v6359 = vadd.f32 %v6316, %v6358
    %6360 = vdwg.mxu0
    %6361 = vmatprep.subr.bf16.mxu0 %v4996
    %6362 = vmatpush1.bf16.msra.mxu0 %v4995
    %6363 = vmatprep.subr.bf16.mxu0 %v5006
    %6364 = vmatpush1.bf16.msra.mxu0 %v5005
    %6365 = vmatprep.subr.bf16.mxu0 %v5016
    %6366 = vmatpush1.bf16.msra.mxu0 %v5015
    %6367 = vmatprep.subr.bf16.mxu0 %v5026
    %6368 = vmatpush1.bf16.msra.mxu0 %v5025
    %6369 = vmatprep.subr.bf16.mxu0 %v5036
    %6370 = vmatpush1.bf16.msra.mxu0 %v5035
    %6371 = vmatprep.subr.bf16.mxu0 %v5046
    %6372 = vmatpush1.bf16.msra.mxu0 %v5045
    %6373 = vmatprep.subr.bf16.mxu0 %v5056
    %6374 = vmatpush1.bf16.msra.mxu0 %v5055
    %6375 = vmatprep.subr.bf16.mxu0 %v5066
    %6376 = vmatpush1.bf16.msra.mxu0 %v5065
    %6377 = vmatprep.subr.bf16.mxu0 %v5076
    %6378 = vmatpush1.bf16.msra.mxu0 %v5075
    %6379 = vmatprep.subr.bf16.mxu0 %v5086
    %6380 = vmatpush1.bf16.msra.mxu0 %v5085
    %6381 = vmatprep.subr.bf16.mxu0 %v5096
    %6382 = vmatpush1.bf16.msra.mxu0 %v5095
    %6383 = vmatprep.subr.bf16.mxu0 %v5106
    %6384 = vmatpush1.bf16.msra.mxu0 %v5105
    %6385 = vmatprep.subr.bf16.mxu0 %v5116
    %6386 = vmatpush1.bf16.msra.mxu0 %v5115
    %6387 = vmatprep.subr.bf16.mxu0 %v5126
    %6388 = vmatpush1.bf16.msra.mxu0 %v5125
    %6389 = vmatprep.subr.bf16.mxu0 %v5136
    %6390 = vmatpush1.bf16.msra.mxu0 %v5135
    %6391 = vmatprep.subr.bf16.mxu0 %v5146
    %6392 = vmatpush1.bf16.msra.mxu0 %v5145
    %6393 = vmatprep.mubr.bf16.mxu0 %v1416
    %6394 = vmatmul.mubr.bf16.gmra.mrb[0].mxu0 %v1415
    %v6395 = vpop.f32.mrb[0].mxu0
    %v6396 = vadd.f32 %v6353, %v6395
    %v6397 = vpop.f32.mrb[0].mxu0
    %v6398 = vadd.f32 %v6355, %v6397
    %v6399 = vpop.f32.mrb[0].mxu0
    %v6400 = vadd.f32 %v6357, %v6399
    %v6401 = vpop.f32.mrb[0].mxu0
    %v6402 = vadd.f32 %v6359, %v6401
    %6403 = vdwg.mxu0
    %6404 = vmatprep.subr.bf16.mxu0 %v5156
    %6405 = vmatpush1.bf16.msra.mxu0 %v5155
    %6406 = vmatprep.subr.bf16.mxu0 %v5166
    %6407 = vmatpush1.bf16.msra.mxu0 %v5165
    %6408 = vmatprep.subr.bf16.mxu0 %v5176
    %6409 = vmatpush1.bf16.msra.mxu0 %v5175
    %6410 = vmatprep.subr.bf16.mxu0 %v5186
    %6411 = vmatpush1.bf16.msra.mxu0 %v5185
    %6412 = vmatprep.subr.bf16.mxu0 %v5196
    %6413 = vmatpush1.bf16.msra.mxu0 %v5195
    %6414 = vmatprep.subr.bf16.mxu0 %v5206
    %6415 = vmatpush1.bf16.msra.mxu0 %v5205
    %6416 = vmatprep.subr.bf16.mxu0 %v5216
    %6417 = vmatpush1.bf16.msra.mxu0 %v5215
    %6418 = vmatprep.subr.bf16.mxu0 %v5226
    %6419 = vmatpush1.bf16.msra.mxu0 %v5225
    %6420 = vmatprep.subr.bf16.mxu0 %v5236
    %6421 = vmatpush1.bf16.msra.mxu0 %v5235
    %6422 = vmatprep.subr.bf16.mxu0 %v5246
    %6423 = vmatpush1.bf16.msra.mxu0 %v5245
    %6424 = vmatprep.subr.bf16.mxu0 %v5256
    %6425 = vmatpush1.bf16.msra.mxu0 %v5255
    %6426 = vmatprep.subr.bf16.mxu0 %v5266
    %6427 = vmatpush1.bf16.msra.mxu0 %v5265
    %6428 = vmatprep.subr.bf16.mxu0 %v5276
    %6429 = vmatpush1.bf16.msra.mxu0 %v5275
    %6430 = vmatprep.subr.bf16.mxu0 %v5286
    %6431 = vmatpush1.bf16.msra.mxu0 %v5285
    %6432 = vmatprep.subr.bf16.mxu0 %v5296
    %6433 = vmatpush1.bf16.msra.mxu0 %v5295
    %6434 = vmatprep.subr.bf16.mxu0 %v5306
    %6435 = vmatpush1.bf16.msra.mxu0 %v5305
    %6436 = vmatprep.mubr.bf16.mxu0 %v1418
    %6437 = vmatmul.mubr.bf16.gmra.mrb[0].mxu0 %v1417
    %v6438 = vpop.f32.mrb[0].mxu0
    %v6439 = vadd.f32 %v6396, %v6438
    %v6440 = vpop.f32.mrb[0].mxu0
    %v6441 = vadd.f32 %v6398, %v6440
    %v6442 = vpop.f32.mrb[0].mxu0
    %v6443 = vadd.f32 %v6400, %v6442
    %v6444 = vpop.f32.mrb[0].mxu0
    %v6445 = vadd.f32 %v6402, %v6444
    %6446 = vdwg.mxu0
    %6447 = vmatprep.subr.bf16.mxu0 %v5316
    %6448 = vmatpush1.bf16.msra.mxu0 %v5315
    %6449 = vmatprep.subr.bf16.mxu0 %v5326
    %6450 = vmatpush1.bf16.msra.mxu0 %v5325
    %6451 = vmatprep.subr.bf16.mxu0 %v5336
    %6452 = vmatpush1.bf16.msra.mxu0 %v5335
    %6453 = vmatprep.subr.bf16.mxu0 %v5346
    %6454 = vmatpush1.bf16.msra.mxu0 %v5345
    %6455 = vmatprep.subr.bf16.mxu0 %v5356
    %6456 = vmatpush1.bf16.msra.mxu0 %v5355
    %6457 = vmatprep.subr.bf16.mxu0 %v5366
    %6458 = vmatpush1.bf16.msra.mxu0 %v5365
    %6459 = vmatprep.subr.bf16.mxu0 %v5376
    %6460 = vmatpush1.bf16.msra.mxu0 %v5375
    %6461 = vmatprep.subr.bf16.mxu0 %v5386
    %6462 = vmatpush1.bf16.msra.mxu0 %v5385
    %6463 = vmatprep.subr.bf16.mxu0 %v5396
    %6464 = vmatpush1.bf16.msra.mxu0 %v5395
    %6465 = vmatprep.subr.bf16.mxu0 %v5406
    %6466 = vmatpush1.bf16.msra.mxu0 %v5405
    %6467 = vmatprep.subr.bf16.mxu0 %v5416
    %6468 = vmatpush1.bf16.msra.mxu0 %v5415
    %6469 = vmatprep.subr.bf16.mxu0 %v5426
    %6470 = vmatpush1.bf16.msra.mxu0 %v5425
    %6471 = vmatprep.subr.bf16.mxu0 %v5436
    %6472 = vmatpush1.bf16.msra.mxu0 %v5435
    %6473 = vmatprep.subr.bf16.mxu0 %v5446
    %6474 = vmatpush1.bf16.msra.mxu0 %v5445
    %6475 = vmatprep.subr.bf16.mxu0 %v5456
    %6476 = vmatpush1.bf16.msra.mxu0 %v5455
    %6477 = vmatprep.subr.bf16.mxu0 %v5466
    %6478 = vmatpush1.bf16.msra.mxu0 %v5465
    %6479 = vmatprep.mubr.bf16.mxu0 %v1420
    %6480 = vmatmul.mubr.bf16.gmra.mrb[0].mxu0 %v1419
    %v6481 = vpop.f32.mrb[0].mxu0
    %v6482 = vadd.f32 %v6439, %v6481
    %v6483 = vpop.f32.mrb[0].mxu0
    %v6484 = vadd.f32 %v6441, %v6483
    %v6485 = vpop.f32.mrb[0].mxu0
    %v6486 = vadd.f32 %v6443, %v6485
    %v6487 = vpop.f32.mrb[0].mxu0
    %v6488 = vadd.f32 %v6445, %v6487
    %6489 = vdwg.mxu0
    %6490 = vmatprep.subr.bf16.mxu0 %v4678
    %6491 = vmatpush1.bf16.msra.mxu0 %v4677
    %6492 = vmatprep.subr.bf16.mxu0 %v4688
    %6493 = vmatpush1.bf16.msra.mxu0 %v4687
    %6494 = vmatprep.subr.bf16.mxu0 %v4698
    %6495 = vmatpush1.bf16.msra.mxu0 %v4697
    %6496 = vmatprep.subr.bf16.mxu0 %v4708
    %6497 = vmatpush1.bf16.msra.mxu0 %v4707
    %6498 = vmatprep.subr.bf16.mxu0 %v4718
    %6499 = vmatpush1.bf16.msra.mxu0 %v4717
    %6500 = vmatprep.subr.bf16.mxu0 %v4728
    %6501 = vmatpush1.bf16.msra.mxu0 %v4727
    %6502 = vmatprep.subr.bf16.mxu0 %v4738
    %6503 = vmatpush1.bf16.msra.mxu0 %v4737
    %6504 = vmatprep.subr.bf16.mxu0 %v4748
    %6505 = vmatpush1.bf16.msra.mxu0 %v4747
    %6506 = vmatprep.subr.bf16.mxu0 %v4758
    %6507 = vmatpush1.bf16.msra.mxu0 %v4757
    %6508 = vmatprep.subr.bf16.mxu0 %v4768
    %6509 = vmatpush1.bf16.msra.mxu0 %v4767
    %6510 = vmatprep.subr.bf16.mxu0 %v4778
    %6511 = vmatpush1.bf16.msra.mxu0 %v4777
    %6512 = vmatprep.subr.bf16.mxu0 %v4788
    %6513 = vmatpush1.bf16.msra.mxu0 %v4787
    %6514 = vmatprep.subr.bf16.mxu0 %v4798
    %6515 = vmatpush1.bf16.msra.mxu0 %v4797
    %6516 = vmatprep.subr.bf16.mxu0 %v4808
    %6517 = vmatpush1.bf16.msra.mxu0 %v4807
    %6518 = vmatprep.subr.bf16.mxu0 %v4818
    %6519 = vmatpush1.bf16.msra.mxu0 %v4817
    %6520 = vmatprep.subr.bf16.mxu0 %v4828
    %6521 = vmatpush1.bf16.msra.mxu0 %v4827
    %6522 = vmatprep.mubr.bf16.mxu0 %v1412
    %6523 = vmatmul.mubr.bf16.gmra.mrb[0].mxu0 %v1411
    %v6524 = vpop.f32.mrb[0].mxu0
    %v6525 = vadd.f32 %v2236, %v6524
    %v6526 = vpop.f32.mrb[0].mxu0
    %v6527 = vadd.f32 %v2240, %v6526
    %v6528 = vpop.f32.mrb[0].mxu0
    %v6529 = vadd.f32 %v2236, %v6528
    %v6530 = vpop.f32.mrb[0].mxu0
    %v6531 = vadd.f32 %v2240, %v6530
    %6532 = vdwg.mxu0
    %6533 = vmatprep.subr.bf16.mxu0 %v4838
    %6534 = vmatpush1.bf16.msra.mxu0 %v4837
    %6535 = vmatprep.subr.bf16.mxu0 %v4848
    %6536 = vmatpush1.bf16.msra.mxu0 %v4847
    %6537 = vmatprep.subr.bf16.mxu0 %v4858
    %6538 = vmatpush1.bf16.msra.mxu0 %v4857
    %6539 = vmatprep.subr.bf16.mxu0 %v4868
    %6540 = vmatpush1.bf16.msra.mxu0 %v4867
    %6541 = vmatprep.subr.bf16.mxu0 %v4878
    %6542 = vmatpush1.bf16.msra.mxu0 %v4877
    %6543 = vmatprep.subr.bf16.mxu0 %v4888
    %6544 = vmatpush1.bf16.msra.mxu0 %v4887
    %6545 = vmatprep.subr.bf16.mxu0 %v4898
    %6546 = vmatpush1.bf16.msra.mxu0 %v4897
    %6547 = vmatprep.subr.bf16.mxu0 %v4908
    %6548 = vmatpush1.bf16.msra.mxu0 %v4907
    %6549 = vmatprep.subr.bf16.mxu0 %v4918
    %6550 = vmatpush1.bf16.msra.mxu0 %v4917
    %6551 = vmatprep.subr.bf16.mxu0 %v4928
    %6552 = vmatpush1.bf16.msra.mxu0 %v4927
    %6553 = vmatprep.subr.bf16.mxu0 %v4938
    %6554 = vmatpush1.bf16.msra.mxu0 %v4937
    %6555 = vmatprep.subr.bf16.mxu0 %v4948
    %6556 = vmatpush1.bf16.msra.mxu0 %v4947
    %6557 = vmatprep.subr.bf16.mxu0 %v4958
    %6558 = vmatpush1.bf16.msra.mxu0 %v4957
    %6559 = vmatprep.subr.bf16.mxu0 %v4968
    %6560 = vmatpush1.bf16.msra.mxu0 %v4967
    %6561 = vmatprep.subr.bf16.mxu0 %v4978
    %6562 = vmatpush1.bf16.msra.mxu0 %v4977
    %6563 = vmatprep.subr.bf16.mxu0 %v4988
    %6564 = vmatpush1.bf16.msra.mxu0 %v4987
    %6565 = vmatprep.mubr.bf16.mxu0 %v1414
    %6566 = vmatmul.mubr.bf16.gmra.mrb[0].mxu0 %v1413
    %v6567 = vpop.f32.mrb[0].mxu0
    %v6568 = vadd.f32 %v6525, %v6567
    %v6569 = vpop.f32.mrb[0].mxu0
    %v6570 = vadd.f32 %v6527, %v6569
    %v6571 = vpop.f32.mrb[0].mxu0
    %v6572 = vadd.f32 %v6529, %v6571
    %v6573 = vpop.f32.mrb[0].mxu0
    %v6574 = vadd.f32 %v6531, %v6573
    %6575 = vdwg.mxu0
    %6576 = vmatprep.subr.bf16.mxu0 %v4998
    %6577 = vmatpush1.bf16.msra.mxu0 %v4997
    %6578 = vmatprep.subr.bf16.mxu0 %v5008
    %6579 = vmatpush1.bf16.msra.mxu0 %v5007
    %6580 = vmatprep.subr.bf16.mxu0 %v5018
    %6581 = vmatpush1.bf16.msra.mxu0 %v5017
    %6582 = vmatprep.subr.bf16.mxu0 %v5028
    %6583 = vmatpush1.bf16.msra.mxu0 %v5027
    %6584 = vmatprep.subr.bf16.mxu0 %v5038
    %6585 = vmatpush1.bf16.msra.mxu0 %v5037
    %6586 = vmatprep.subr.bf16.mxu0 %v5048
    %6587 = vmatpush1.bf16.msra.mxu0 %v5047
    %6588 = vmatprep.subr.bf16.mxu0 %v5058
    %6589 = vmatpush1.bf16.msra.mxu0 %v5057
    %6590 = vmatprep.subr.bf16.mxu0 %v5068
    %6591 = vmatpush1.bf16.msra.mxu0 %v5067
    %6592 = vmatprep.subr.bf16.mxu0 %v5078
    %6593 = vmatpush1.bf16.msra.mxu0 %v5077
    %6594 = vmatprep.subr.bf16.mxu0 %v5088
    %6595 = vmatpush1.bf16.msra.mxu0 %v5087
    %6596 = vmatprep.subr.bf16.mxu0 %v5098
    %6597 = vmatpush1.bf16.msra.mxu0 %v5097
    %6598 = vmatprep.subr.bf16.mxu0 %v5108
    %6599 = vmatpush1.bf16.msra.mxu0 %v5107
    %6600 = vmatprep.subr.bf16.mxu0 %v5118
    %6601 = vmatpush1.bf16.msra.mxu0 %v5117
    %6602 = vmatprep.subr.bf16.mxu0 %v5128
    %6603 = vmatpush1.bf16.msra.mxu0 %v5127
    %6604 = vmatprep.subr.bf16.mxu0 %v5138
    %6605 = vmatpush1.bf16.msra.mxu0 %v5137
    %6606 = vmatprep.subr.bf16.mxu0 %v5148
    %6607 = vmatpush1.bf16.msra.mxu0 %v5147
    %6608 = vmatprep.mubr.bf16.mxu0 %v1416
    %6609 = vmatmul.mubr.bf16.gmra.mrb[0].mxu0 %v1415
    %v6610 = vpop.f32.mrb[0].mxu0
    %v6611 = vadd.f32 %v6568, %v6610
    %v6612 = vpop.f32.mrb[0].mxu0
    %v6613 = vadd.f32 %v6570, %v6612
    %v6614 = vpop.f32.mrb[0].mxu0
    %v6615 = vadd.f32 %v6572, %v6614
    %v6616 = vpop.f32.mrb[0].mxu0
    %v6617 = vadd.f32 %v6574, %v6616
    %6618 = vdwg.mxu0
    %6619 = vmatprep.subr.bf16.mxu0 %v5158
    %6620 = vmatpush1.bf16.msra.mxu0 %v5157
    %6621 = vmatprep.subr.bf16.mxu0 %v5168
    %6622 = vmatpush1.bf16.msra.mxu0 %v5167
    %6623 = vmatprep.subr.bf16.mxu0 %v5178
    %6624 = vmatpush1.bf16.msra.mxu0 %v5177
    %6625 = vmatprep.subr.bf16.mxu0 %v5188
    %6626 = vmatpush1.bf16.msra.mxu0 %v5187
    %6627 = vmatprep.subr.bf16.mxu0 %v5198
    %6628 = vmatpush1.bf16.msra.mxu0 %v5197
    %6629 = vmatprep.subr.bf16.mxu0 %v5208
    %6630 = vmatpush1.bf16.msra.mxu0 %v5207
    %6631 = vmatprep.subr.bf16.mxu0 %v5218
    %6632 = vmatpush1.bf16.msra.mxu0 %v5217
    %6633 = vmatprep.subr.bf16.mxu0 %v5228
    %6634 = vmatpush1.bf16.msra.mxu0 %v5227
    %6635 = vmatprep.subr.bf16.mxu0 %v5238
    %6636 = vmatpush1.bf16.msra.mxu0 %v5237
    %6637 = vmatprep.subr.bf16.mxu0 %v5248
    %6638 = vmatpush1.bf16.msra.mxu0 %v5247
    %6639 = vmatprep.subr.bf16.mxu0 %v5258
    %6640 = vmatpush1.bf16.msra.mxu0 %v5257
    %6641 = vmatprep.subr.bf16.mxu0 %v5268
    %6642 = vmatpush1.bf16.msra.mxu0 %v5267
    %6643 = vmatprep.subr.bf16.mxu0 %v5278
    %6644 = vmatpush1.bf16.msra.mxu0 %v5277
    %6645 = vmatprep.subr.bf16.mxu0 %v5288
    %6646 = vmatpush1.bf16.msra.mxu0 %v5287
    %6647 = vmatprep.subr.bf16.mxu0 %v5298
    %6648 = vmatpush1.bf16.msra.mxu0 %v5297
    %6649 = vmatprep.subr.bf16.mxu0 %v5308
    %6650 = vmatpush1.bf16.msra.mxu0 %v5307
    %6651 = vmatprep.mubr.bf16.mxu0 %v1418
    %6652 = vmatmul.mubr.bf16.gmra.mrb[0].mxu0 %v1417
    %v6653 = vpop.f32.mrb[0].mxu0
    %v6654 = vadd.f32 %v6611, %v6653
    %v6655 = vpop.f32.mrb[0].mxu0
    %v6656 = vadd.f32 %v6613, %v6655
    %v6657 = vpop.f32.mrb[0].mxu0
    %v6658 = vadd.f32 %v6615, %v6657
    %v6659 = vpop.f32.mrb[0].mxu0
    %v6660 = vadd.f32 %v6617, %v6659
    %6661 = vdwg.mxu0
    %6662 = vmatprep.subr.bf16.mxu0 %v5318
    %6663 = vmatpush1.bf16.msra.mxu0 %v5317
    %6664 = vmatprep.subr.bf16.mxu0 %v5328
    %6665 = vmatpush1.bf16.msra.mxu0 %v5327
    %6666 = vmatprep.subr.bf16.mxu0 %v5338
    %6667 = vmatpush1.bf16.msra.mxu0 %v5337
    %6668 = vmatprep.subr.bf16.mxu0 %v5348
    %6669 = vmatpush1.bf16.msra.mxu0 %v5347
    %6670 = vmatprep.subr.bf16.mxu0 %v5358
    %6671 = vmatpush1.bf16.msra.mxu0 %v5357
    %6672 = vmatprep.subr.bf16.mxu0 %v5368
    %6673 = vmatpush1.bf16.msra.mxu0 %v5367
    %6674 = vmatprep.subr.bf16.mxu0 %v5378
    %6675 = vmatpush1.bf16.msra.mxu0 %v5377
    %6676 = vmatprep.subr.bf16.mxu0 %v5388
    %6677 = vmatpush1.bf16.msra.mxu0 %v5387
    %6678 = vmatprep.subr.bf16.mxu0 %v5398
    %6679 = vmatpush1.bf16.msra.mxu0 %v5397
    %6680 = vmatprep.subr.bf16.mxu0 %v5408
    %6681 = vmatpush1.bf16.msra.mxu0 %v5407
    %6682 = vmatprep.subr.bf16.mxu0 %v5418
    %6683 = vmatpush1.bf16.msra.mxu0 %v5417
    %6684 = vmatprep.subr.bf16.mxu0 %v5428
    %6685 = vmatpush1.bf16.msra.mxu0 %v5427
    %6686 = vmatprep.subr.bf16.mxu0 %v5438
    %6687 = vmatpush1.bf16.msra.mxu0 %v5437
    %6688 = vmatprep.subr.bf16.mxu0 %v5448
    %6689 = vmatpush1.bf16.msra.mxu0 %v5447
    %6690 = vmatprep.subr.bf16.mxu0 %v5458
    %6691 = vmatpush1.bf16.msra.mxu0 %v5457
    %6692 = vmatprep.subr.bf16.mxu0 %v5468
    %6693 = vmatpush1.bf16.msra.mxu0 %v5467
    %6694 = vmatprep.mubr.bf16.mxu0 %v1420
    %6695 = vmatmul.mubr.bf16.gmra.mrb[0].mxu0 %v1419
    %v6696 = vpop.f32.mrb[0].mxu0
    %v6697 = vadd.f32 %v6654, %v6696
    %v6698 = vpop.f32.mrb[0].mxu0
    %v6699 = vadd.f32 %v6656, %v6698
    %v6700 = vpop.f32.mrb[0].mxu0
    %v6701 = vadd.f32 %v6658, %v6700
    %v6702 = vpop.f32.mrb[0].mxu0
    %v6703 = vadd.f32 %v6660, %v6702
    %6704 = vdwg.mxu0
    %6705 = vmatprep.subr.bf16.mxu0 %v4680
    %6706 = vmatpush1.bf16.msra.mxu0 %v4679
    %6707 = vmatprep.subr.bf16.mxu0 %v4690
    %6708 = vmatpush1.bf16.msra.mxu0 %v4689
    %6709 = vmatprep.subr.bf16.mxu0 %v4700
    %6710 = vmatpush1.bf16.msra.mxu0 %v4699
    %6711 = vmatprep.subr.bf16.mxu0 %v4710
    %6712 = vmatpush1.bf16.msra.mxu0 %v4709
    %6713 = vmatprep.subr.bf16.mxu0 %v4720
    %6714 = vmatpush1.bf16.msra.mxu0 %v4719
    %6715 = vmatprep.subr.bf16.mxu0 %v4730
    %6716 = vmatpush1.bf16.msra.mxu0 %v4729
    %6717 = vmatprep.subr.bf16.mxu0 %v4740
    %6718 = vmatpush1.bf16.msra.mxu0 %v4739
    %6719 = vmatprep.subr.bf16.mxu0 %v4750
    %6720 = vmatpush1.bf16.msra.mxu0 %v4749
    %6721 = vmatprep.subr.bf16.mxu0 %v4760
    %6722 = vmatpush1.bf16.msra.mxu0 %v4759
    %6723 = vmatprep.subr.bf16.mxu0 %v4770
    %6724 = vmatpush1.bf16.msra.mxu0 %v4769
    %6725 = vmatprep.subr.bf16.mxu0 %v4780
    %6726 = vmatpush1.bf16.msra.mxu0 %v4779
    %6727 = vmatprep.subr.bf16.mxu0 %v4790
    %6728 = vmatpush1.bf16.msra.mxu0 %v4789
    %6729 = vmatprep.subr.bf16.mxu0 %v4800
    %6730 = vmatpush1.bf16.msra.mxu0 %v4799
    %6731 = vmatprep.subr.bf16.mxu0 %v4810
    %6732 = vmatpush1.bf16.msra.mxu0 %v4809
    %6733 = vmatprep.subr.bf16.mxu0 %v4820
    %6734 = vmatpush1.bf16.msra.mxu0 %v4819
    %6735 = vmatprep.subr.bf16.mxu0 %v4830
    %6736 = vmatpush1.bf16.msra.mxu0 %v4829
    %6737 = vmatprep.mubr.bf16.mxu0 %v1412
    %6738 = vmatmul.mubr.bf16.gmra.mrb[0].mxu0 %v1411
    %v6739 = vpop.f32.mrb[0].mxu0
    %v6740 = vadd.f32 %v2244, %v6739
    %v6741 = vpop.f32.mrb[0].mxu0
    %v6742 = vadd.f32 %v2248, %v6741
    %v6743 = vpop.f32.mrb[0].mxu0
    %v6744 = vadd.f32 %v2244, %v6743
    %v6745 = vpop.f32.mrb[0].mxu0
    %v6746 = vadd.f32 %v2248, %v6745
    %6747 = vdwg.mxu0
    %6748 = vmatprep.subr.bf16.mxu0 %v4840
    %6749 = vmatpush1.bf16.msra.mxu0 %v4839
    %6750 = vmatprep.subr.bf16.mxu0 %v4850
    %6751 = vmatpush1.bf16.msra.mxu0 %v4849
    %6752 = vmatprep.subr.bf16.mxu0 %v4860
    %6753 = vmatpush1.bf16.msra.mxu0 %v4859
    %6754 = vmatprep.subr.bf16.mxu0 %v4870
    %6755 = vmatpush1.bf16.msra.mxu0 %v4869
    %6756 = vmatprep.subr.bf16.mxu0 %v4880
    %6757 = vmatpush1.bf16.msra.mxu0 %v4879
    %6758 = vmatprep.subr.bf16.mxu0 %v4890
    %6759 = vmatpush1.bf16.msra.mxu0 %v4889
    %6760 = vmatprep.subr.bf16.mxu0 %v4900
    %6761 = vmatpush1.bf16.msra.mxu0 %v4899
    %6762 = vmatprep.subr.bf16.mxu0 %v4910
    %6763 = vmatpush1.bf16.msra.mxu0 %v4909
    %6764 = vmatprep.subr.bf16.mxu0 %v4920
    %6765 = vmatpush1.bf16.msra.mxu0 %v4919
    %6766 = vmatprep.subr.bf16.mxu0 %v4930
    %6767 = vmatpush1.bf16.msra.mxu0 %v4929
    %6768 = vmatprep.subr.bf16.mxu0 %v4940
    %6769 = vmatpush1.bf16.msra.mxu0 %v4939
    %6770 = vmatprep.subr.bf16.mxu0 %v4950
    %6771 = vmatpush1.bf16.msra.mxu0 %v4949
    %6772 = vmatprep.subr.bf16.mxu0 %v4960
    %6773 = vmatpush1.bf16.msra.mxu0 %v4959
    %6774 = vmatprep.subr.bf16.mxu0 %v4970
    %6775 = vmatpush1.bf16.msra.mxu0 %v4969
    %6776 = vmatprep.subr.bf16.mxu0 %v4980
    %6777 = vmatpush1.bf16.msra.mxu0 %v4979
    %6778 = vmatprep.subr.bf16.mxu0 %v4990
    %6779 = vmatpush1.bf16.msra.mxu0 %v4989
    %6780 = vmatprep.mubr.bf16.mxu0 %v1414
    %6781 = vmatmul.mubr.bf16.gmra.mrb[0].mxu0 %v1413
    %v6782 = vpop.f32.mrb[0].mxu0
    %v6783 = vadd.f32 %v6740, %v6782
    %v6784 = vpop.f32.mrb[0].mxu0
    %v6785 = vadd.f32 %v6742, %v6784
    %v6786 = vpop.f32.mrb[0].mxu0
    %v6787 = vadd.f32 %v6744, %v6786
    %v6788 = vpop.f32.mrb[0].mxu0
    %v6789 = vadd.f32 %v6746, %v6788
    %6790 = vdwg.mxu0
    %6791 = vmatprep.subr.bf16.mxu0 %v5000
    %6792 = vmatpush1.bf16.msra.mxu0 %v4999
    %6793 = vmatprep.subr.bf16.mxu0 %v5010
    %6794 = vmatpush1.bf16.msra.mxu0 %v5009
    %6795 = vmatprep.subr.bf16.mxu0 %v5020
    %6796 = vmatpush1.bf16.msra.mxu0 %v5019
    %6797 = vmatprep.subr.bf16.mxu0 %v5030
    %6798 = vmatpush1.bf16.msra.mxu0 %v5029
    %6799 = vmatprep.subr.bf16.mxu0 %v5040
    %6800 = vmatpush1.bf16.msra.mxu0 %v5039
    %6801 = vmatprep.subr.bf16.mxu0 %v5050
    %6802 = vmatpush1.bf16.msra.mxu0 %v5049
    %6803 = vmatprep.subr.bf16.mxu0 %v5060
    %6804 = vmatpush1.bf16.msra.mxu0 %v5059
    %6805 = vmatprep.subr.bf16.mxu0 %v5070
    %6806 = vmatpush1.bf16.msra.mxu0 %v5069
    %6807 = vmatprep.subr.bf16.mxu0 %v5080
    %6808 = vmatpush1.bf16.msra.mxu0 %v5079
    %6809 = vmatprep.subr.bf16.mxu0 %v5090
    %6810 = vmatpush1.bf16.msra.mxu0 %v5089
    %6811 = vmatprep.subr.bf16.mxu0 %v5100
    %6812 = vmatpush1.bf16.msra.mxu0 %v5099
    %6813 = vmatprep.subr.bf16.mxu0 %v5110
    %6814 = vmatpush1.bf16.msra.mxu0 %v5109
    %6815 = vmatprep.subr.bf16.mxu0 %v5120
    %6816 = vmatpush1.bf16.msra.mxu0 %v5119
    %6817 = vmatprep.subr.bf16.mxu0 %v5130
    %6818 = vmatpush1.bf16.msra.mxu0 %v5129
    %6819 = vmatprep.subr.bf16.mxu0 %v5140
    %6820 = vmatpush1.bf16.msra.mxu0 %v5139
    %6821 = vmatprep.subr.bf16.mxu0 %v5150
    %6822 = vmatpush1.bf16.msra.mxu0 %v5149
    %6823 = vmatprep.mubr.bf16.mxu0 %v1416
    %6824 = vmatmul.mubr.bf16.gmra.mrb[0].mxu0 %v1415
    %v6825 = vpop.f32.mrb[0].mxu0
    %v6826 = vadd.f32 %v6783, %v6825
    %v6827 = vpop.f32.mrb[0].mxu0
    %v6828 = vadd.f32 %v6785, %v6827
    %v6829 = vpop.f32.mrb[0].mxu0
    %v6830 = vadd.f32 %v6787, %v6829
    %v6831 = vpop.f32.mrb[0].mxu0
    %v6832 = vadd.f32 %v6789, %v6831
    %6833 = vdwg.mxu0
    %6834 = vmatprep.subr.bf16.mxu0 %v5160
    %6835 = vmatpush1.bf16.msra.mxu0 %v5159
    %6836 = vmatprep.subr.bf16.mxu0 %v5170
    %6837 = vmatpush1.bf16.msra.mxu0 %v5169
    %6838 = vmatprep.subr.bf16.mxu0 %v5180
    %6839 = vmatpush1.bf16.msra.mxu0 %v5179
    %6840 = vmatprep.subr.bf16.mxu0 %v5190
    %6841 = vmatpush1.bf16.msra.mxu0 %v5189
    %6842 = vmatprep.subr.bf16.mxu0 %v5200
    %6843 = vmatpush1.bf16.msra.mxu0 %v5199
    %6844 = vmatprep.subr.bf16.mxu0 %v5210
    %6845 = vmatpush1.bf16.msra.mxu0 %v5209
    %6846 = vmatprep.subr.bf16.mxu0 %v5220
    %6847 = vmatpush1.bf16.msra.mxu0 %v5219
    %6848 = vmatprep.subr.bf16.mxu0 %v5230
    %6849 = vmatpush1.bf16.msra.mxu0 %v5229
    %6850 = vmatprep.subr.bf16.mxu0 %v5240
    %6851 = vmatpush1.bf16.msra.mxu0 %v5239
    %6852 = vmatprep.subr.bf16.mxu0 %v5250
    %6853 = vmatpush1.bf16.msra.mxu0 %v5249
    %6854 = vmatprep.subr.bf16.mxu0 %v5260
    %6855 = vmatpush1.bf16.msra.mxu0 %v5259
    %6856 = vmatprep.subr.bf16.mxu0 %v5270
    %6857 = vmatpush1.bf16.msra.mxu0 %v5269
    %6858 = vmatprep.subr.bf16.mxu0 %v5280
    %6859 = vmatpush1.bf16.msra.mxu0 %v5279
    %6860 = vmatprep.subr.bf16.mxu0 %v5290
    %6861 = vmatpush1.bf16.msra.mxu0 %v5289
    %6862 = vmatprep.subr.bf16.mxu0 %v5300
    %6863 = vmatpush1.bf16.msra.mxu0 %v5299
    %6864 = vmatprep.subr.bf16.mxu0 %v5310
    %6865 = vmatpush1.bf16.msra.mxu0 %v5309
    %6866 = vmatprep.mubr.bf16.mxu0 %v1418
    %6867 = vmatmul.mubr.bf16.gmra.mrb[0].mxu0 %v1417
    %v6868 = vpop.f32.mrb[0].mxu0
    %v6869 = vadd.f32 %v6826, %v6868
    %v6870 = vpop.f32.mrb[0].mxu0
    %v6871 = vadd.f32 %v6828, %v6870
    %v6872 = vpop.f32.mrb[0].mxu0
    %v6873 = vadd.f32 %v6830, %v6872
    %v6874 = vpop.f32.mrb[0].mxu0
    %v6875 = vadd.f32 %v6832, %v6874
    %6876 = vdwg.mxu0
    %6877 = vmatprep.subr.bf16.mxu0 %v5320
    %6878 = vmatpush1.bf16.msra.mxu0 %v5319
    %6879 = vmatprep.subr.bf16.mxu0 %v5330
    %6880 = vmatpush1.bf16.msra.mxu0 %v5329
    %6881 = vmatprep.subr.bf16.mxu0 %v5340
    %6882 = vmatpush1.bf16.msra.mxu0 %v5339
    %6883 = vmatprep.subr.bf16.mxu0 %v5350
    %6884 = vmatpush1.bf16.msra.mxu0 %v5349
    %6885 = vmatprep.subr.bf16.mxu0 %v5360
    %6886 = vmatpush1.bf16.msra.mxu0 %v5359
    %6887 = vmatprep.subr.bf16.mxu0 %v5370
    %6888 = vmatpush1.bf16.msra.mxu0 %v5369
    %6889 = vmatprep.subr.bf16.mxu0 %v5380
    %6890 = vmatpush1.bf16.msra.mxu0 %v5379
    %6891 = vmatprep.subr.bf16.mxu0 %v5390
    %6892 = vmatpush1.bf16.msra.mxu0 %v5389
    %6893 = vmatprep.subr.bf16.mxu0 %v5400
    %6894 = vmatpush1.bf16.msra.mxu0 %v5399
    %6895 = vmatprep.subr.bf16.mxu0 %v5410
    %6896 = vmatpush1.bf16.msra.mxu0 %v5409
    %6897 = vmatprep.subr.bf16.mxu0 %v5420
    %6898 = vmatpush1.bf16.msra.mxu0 %v5419
    %6899 = vmatprep.subr.bf16.mxu0 %v5430
    %6900 = vmatpush1.bf16.msra.mxu0 %v5429
    %6901 = vmatprep.subr.bf16.mxu0 %v5440
    %6902 = vmatpush1.bf16.msra.mxu0 %v5439
    %6903 = vmatprep.subr.bf16.mxu0 %v5450
    %6904 = vmatpush1.bf16.msra.mxu0 %v5449
    %6905 = vmatprep.subr.bf16.mxu0 %v5460
    %6906 = vmatpush1.bf16.msra.mxu0 %v5459
    %6907 = vmatprep.subr.bf16.mxu0 %v5470
    %6908 = vmatpush1.bf16.msra.mxu0 %v5469
    %6909 = vmatprep.mubr.bf16.mxu0 %v1420
    %6910 = vmatmul.mubr.bf16.gmra.mrb[0].mxu0 %v1419
    %v6911 = vpop.f32.mrb[0].mxu0
    %v6912 = vadd.f32 %v6869, %v6911
    %v6913 = vpop.f32.mrb[0].mxu0
    %v6914 = vadd.f32 %v6871, %v6913
    %v6915 = vpop.f32.mrb[0].mxu0
    %v6916 = vadd.f32 %v6873, %v6915
    %v6917 = vpop.f32.mrb[0].mxu0
    %v6918 = vadd.f32 %v6875, %v6917
    %6919 = vdwg.mxu0
    %6920 = vmatprep.subr.bf16.mxu0 %v4682
    %6921 = vmatpush1.bf16.msra.mxu0 %v4681
    %6922 = vmatprep.subr.bf16.mxu0 %v4692
    %6923 = vmatpush1.bf16.msra.mxu0 %v4691
    %6924 = vmatprep.subr.bf16.mxu0 %v4702
    %6925 = vmatpush1.bf16.msra.mxu0 %v4701
    %6926 = vmatprep.subr.bf16.mxu0 %v4712
    %6927 = vmatpush1.bf16.msra.mxu0 %v4711
    %6928 = vmatprep.subr.bf16.mxu0 %v4722
    %6929 = vmatpush1.bf16.msra.mxu0 %v4721
    %6930 = vmatprep.subr.bf16.mxu0 %v4732
    %6931 = vmatpush1.bf16.msra.mxu0 %v4731
    %6932 = vmatprep.subr.bf16.mxu0 %v4742
    %6933 = vmatpush1.bf16.msra.mxu0 %v4741
    %6934 = vmatprep.subr.bf16.mxu0 %v4752
    %6935 = vmatpush1.bf16.msra.mxu0 %v4751
    %6936 = vmatprep.subr.bf16.mxu0 %v4762
    %6937 = vmatpush1.bf16.msra.mxu0 %v4761
    %6938 = vmatprep.subr.bf16.mxu0 %v4772
    %6939 = vmatpush1.bf16.msra.mxu0 %v4771
    %6940 = vmatprep.subr.bf16.mxu0 %v4782
    %6941 = vmatpush1.bf16.msra.mxu0 %v4781
    %6942 = vmatprep.subr.bf16.mxu0 %v4792
    %6943 = vmatpush1.bf16.msra.mxu0 %v4791
    %6944 = vmatprep.subr.bf16.mxu0 %v4802
    %6945 = vmatpush1.bf16.msra.mxu0 %v4801
    %6946 = vmatprep.subr.bf16.mxu0 %v4812
    %6947 = vmatpush1.bf16.msra.mxu0 %v4811
    %6948 = vmatprep.subr.bf16.mxu0 %v4822
    %6949 = vmatpush1.bf16.msra.mxu0 %v4821
    %6950 = vmatprep.subr.bf16.mxu0 %v4832
    %6951 = vmatpush1.bf16.msra.mxu0 %v4831
    %6952 = vmatprep.mubr.bf16.mxu0 %v1412
    %6953 = vmatmul.mubr.bf16.gmra.mrb[0].mxu0 %v1411
    %v6954 = vpop.f32.mrb[0].mxu0
    %v6955 = vadd.f32 %v2252, %v6954
    %v6956 = vpop.f32.mrb[0].mxu0
    %v6957 = vadd.f32 %v2256, %v6956
    %v6958 = vpop.f32.mrb[0].mxu0
    %v6959 = vadd.f32 %v2252, %v6958
    %v6960 = vpop.f32.mrb[0].mxu0
    %v6961 = vadd.f32 %v2256, %v6960
    %6962 = vdwg.mxu0
    %6963 = vmatprep.subr.bf16.mxu0 %v4842
    %6964 = vmatpush1.bf16.msra.mxu0 %v4841
    %6965 = vmatprep.subr.bf16.mxu0 %v4852
    %6966 = vmatpush1.bf16.msra.mxu0 %v4851
    %6967 = vmatprep.subr.bf16.mxu0 %v4862
    %6968 = vmatpush1.bf16.msra.mxu0 %v4861
    %6969 = vmatprep.subr.bf16.mxu0 %v4872
    %6970 = vmatpush1.bf16.msra.mxu0 %v4871
    %6971 = vmatprep.subr.bf16.mxu0 %v4882
    %6972 = vmatpush1.bf16.msra.mxu0 %v4881
    %6973 = vmatprep.subr.bf16.mxu0 %v4892
    %6974 = vmatpush1.bf16.msra.mxu0 %v4891
    %6975 = vmatprep.subr.bf16.mxu0 %v4902
    %6976 = vmatpush1.bf16.msra.mxu0 %v4901
    %6977 = vmatprep.subr.bf16.mxu0 %v4912
    %6978 = vmatpush1.bf16.msra.mxu0 %v4911
    %6979 = vmatprep.subr.bf16.mxu0 %v4922
    %6980 = vmatpush1.bf16.msra.mxu0 %v4921
    %6981 = vmatprep.subr.bf16.mxu0 %v4932
    %6982 = vmatpush1.bf16.msra.mxu0 %v4931
    %6983 = vmatprep.subr.bf16.mxu0 %v4942
    %6984 = vmatpush1.bf16.msra.mxu0 %v4941
    %6985 = vmatprep.subr.bf16.mxu0 %v4952
    %6986 = vmatpush1.bf16.msra.mxu0 %v4951
    %6987 = vmatprep.subr.bf16.mxu0 %v4962
    %6988 = vmatpush1.bf16.msra.mxu0 %v4961
    %6989 = vmatprep.subr.bf16.mxu0 %v4972
    %6990 = vmatpush1.bf16.msra.mxu0 %v4971
    %6991 = vmatprep.subr.bf16.mxu0 %v4982
    %6992 = vmatpush1.bf16.msra.mxu0 %v4981
    %6993 = vmatprep.subr.bf16.mxu0 %v4992
    %6994 = vmatpush1.bf16.msra.mxu0 %v4991
    %6995 = vmatprep.mubr.bf16.mxu0 %v1414
    %6996 = vmatmul.mubr.bf16.gmra.mrb[0].mxu0 %v1413
    %v6997 = vpop.f32.mrb[0].mxu0
    %v6998 = vadd.f32 %v6955, %v6997
    %v6999 = vpop.f32.mrb[0].mxu0
    %v7000 = vadd.f32 %v6957, %v6999
    %v7001 = vpop.f32.mrb[0].mxu0
    %v7002 = vadd.f32 %v6959, %v7001
    %v7003 = vpop.f32.mrb[0].mxu0
    %v7004 = vadd.f32 %v6961, %v7003
    %7005 = vdwg.mxu0
    %7006 = vmatprep.subr.bf16.mxu0 %v5002
    %7007 = vmatpush1.bf16.msra.mxu0 %v5001
    %7008 = vmatprep.subr.bf16.mxu0 %v5012
    %7009 = vmatpush1.bf16.msra.mxu0 %v5011
    %7010 = vmatprep.subr.bf16.mxu0 %v5022
    %7011 = vmatpush1.bf16.msra.mxu0 %v5021
    %7012 = vmatprep.subr.bf16.mxu0 %v5032
    %7013 = vmatpush1.bf16.msra.mxu0 %v5031
    %7014 = vmatprep.subr.bf16.mxu0 %v5042
    %7015 = vmatpush1.bf16.msra.mxu0 %v5041
    %7016 = vmatprep.subr.bf16.mxu0 %v5052
    %7017 = vmatpush1.bf16.msra.mxu0 %v5051
    %7018 = vmatprep.subr.bf16.mxu0 %v5062
    %7019 = vmatpush1.bf16.msra.mxu0 %v5061
    %7020 = vmatprep.subr.bf16.mxu0 %v5072
    %7021 = vmatpush1.bf16.msra.mxu0 %v5071
    %7022 = vmatprep.subr.bf16.mxu0 %v5082
    %7023 = vmatpush1.bf16.msra.mxu0 %v5081
    %7024 = vmatprep.subr.bf16.mxu0 %v5092
    %7025 = vmatpush1.bf16.msra.mxu0 %v5091
    %7026 = vmatprep.subr.bf16.mxu0 %v5102
    %7027 = vmatpush1.bf16.msra.mxu0 %v5101
    %7028 = vmatprep.subr.bf16.mxu0 %v5112
    %7029 = vmatpush1.bf16.msra.mxu0 %v5111
    %7030 = vmatprep.subr.bf16.mxu0 %v5122
    %7031 = vmatpush1.bf16.msra.mxu0 %v5121
    %7032 = vmatprep.subr.bf16.mxu0 %v5132
    %7033 = vmatpush1.bf16.msra.mxu0 %v5131
    %7034 = vmatprep.subr.bf16.mxu0 %v5142
    %7035 = vmatpush1.bf16.msra.mxu0 %v5141
    %7036 = vmatprep.subr.bf16.mxu0 %v5152
    %7037 = vmatpush1.bf16.msra.mxu0 %v5151
    %7038 = vmatprep.mubr.bf16.mxu0 %v1416
    %7039 = vmatmul.mubr.bf16.gmra.mrb[0].mxu0 %v1415
    %v7040 = vpop.f32.mrb[0].mxu0
    %v7041 = vadd.f32 %v6998, %v7040
    %v7042 = vpop.f32.mrb[0].mxu0
    %v7043 = vadd.f32 %v7000, %v7042
    %v7044 = vpop.f32.mrb[0].mxu0
    %v7045 = vadd.f32 %v7002, %v7044
    %v7046 = vpop.f32.mrb[0].mxu0
    %v7047 = vadd.f32 %v7004, %v7046
    %7048 = vdwg.mxu0
    %7049 = vmatprep.subr.bf16.mxu0 %v5162
    %7050 = vmatpush1.bf16.msra.mxu0 %v5161
    %7051 = vmatprep.subr.bf16.mxu0 %v5172
    %7052 = vmatpush1.bf16.msra.mxu0 %v5171
    %7053 = vmatprep.subr.bf16.mxu0 %v5182
    %7054 = vmatpush1.bf16.msra.mxu0 %v5181
    %7055 = vmatprep.subr.bf16.mxu0 %v5192
    %7056 = vmatpush1.bf16.msra.mxu0 %v5191
    %7057 = vmatprep.subr.bf16.mxu0 %v5202
    %7058 = vmatpush1.bf16.msra.mxu0 %v5201
    %7059 = vmatprep.subr.bf16.mxu0 %v5212
    %7060 = vmatpush1.bf16.msra.mxu0 %v5211
    %7061 = vmatprep.subr.bf16.mxu0 %v5222
    %7062 = vmatpush1.bf16.msra.mxu0 %v5221
    %7063 = vmatprep.subr.bf16.mxu0 %v5232
    %7064 = vmatpush1.bf16.msra.mxu0 %v5231
    %7065 = vmatprep.subr.bf16.mxu0 %v5242
    %7066 = vmatpush1.bf16.msra.mxu0 %v5241
    %7067 = vmatprep.subr.bf16.mxu0 %v5252
    %7068 = vmatpush1.bf16.msra.mxu0 %v5251
    %7069 = vmatprep.subr.bf16.mxu0 %v5262
    %7070 = vmatpush1.bf16.msra.mxu0 %v5261
    %7071 = vmatprep.subr.bf16.mxu0 %v5272
    %7072 = vmatpush1.bf16.msra.mxu0 %v5271
    %7073 = vmatprep.subr.bf16.mxu0 %v5282
    %7074 = vmatpush1.bf16.msra.mxu0 %v5281
    %7075 = vmatprep.subr.bf16.mxu0 %v5292
    %7076 = vmatpush1.bf16.msra.mxu0 %v5291
    %7077 = vmatprep.subr.bf16.mxu0 %v5302
    %7078 = vmatpush1.bf16.msra.mxu0 %v5301
    %7079 = vmatprep.subr.bf16.mxu0 %v5312
    %7080 = vmatpush1.bf16.msra.mxu0 %v5311
    %7081 = vmatprep.mubr.bf16.mxu0 %v1418
    %7082 = vmatmul.mubr.bf16.gmra.mrb[0].mxu0 %v1417
    %v7083 = vpop.f32.mrb[0].mxu0
    %v7084 = vadd.f32 %v7041, %v7083
    %v7085 = vpop.f32.mrb[0].mxu0
    %v7086 = vadd.f32 %v7043, %v7085
    %v7087 = vpop.f32.mrb[0].mxu0
    %v7088 = vadd.f32 %v7045, %v7087
    %v7089 = vpop.f32.mrb[0].mxu0
    %v7090 = vadd.f32 %v7047, %v7089
    %7091 = vdwg.mxu0
    %7092 = vmatprep.subr.bf16.mxu0 %v5322
    %7093 = vmatpush1.bf16.msra.mxu0 %v5321
    %7094 = vmatprep.subr.bf16.mxu0 %v5332
    %7095 = vmatpush1.bf16.msra.mxu0 %v5331
    %7096 = vmatprep.subr.bf16.mxu0 %v5342
    %7097 = vmatpush1.bf16.msra.mxu0 %v5341
    %7098 = vmatprep.subr.bf16.mxu0 %v5352
    %7099 = vmatpush1.bf16.msra.mxu0 %v5351
    %7100 = vmatprep.subr.bf16.mxu0 %v5362
    %7101 = vmatpush1.bf16.msra.mxu0 %v5361
    %7102 = vmatprep.subr.bf16.mxu0 %v5372
    %7103 = vmatpush1.bf16.msra.mxu0 %v5371
    %7104 = vmatprep.subr.bf16.mxu0 %v5382
    %7105 = vmatpush1.bf16.msra.mxu0 %v5381
    %7106 = vmatprep.subr.bf16.mxu0 %v5392
    %7107 = vmatpush1.bf16.msra.mxu0 %v5391
    %7108 = vmatprep.subr.bf16.mxu0 %v5402
    %7109 = vmatpush1.bf16.msra.mxu0 %v5401
    %7110 = vmatprep.subr.bf16.mxu0 %v5412
    %7111 = vmatpush1.bf16.msra.mxu0 %v5411
    %7112 = vmatprep.subr.bf16.mxu0 %v5422
    %7113 = vmatpush1.bf16.msra.mxu0 %v5421
    %7114 = vmatprep.subr.bf16.mxu0 %v5432
    %7115 = vmatpush1.bf16.msra.mxu0 %v5431
    %7116 = vmatprep.subr.bf16.mxu0 %v5442
    %7117 = vmatpush1.bf16.msra.mxu0 %v5441
    %7118 = vmatprep.subr.bf16.mxu0 %v5452
    %7119 = vmatpush1.bf16.msra.mxu0 %v5451
    %7120 = vmatprep.subr.bf16.mxu0 %v5462
    %7121 = vmatpush1.bf16.msra.mxu0 %v5461
    %7122 = vmatprep.subr.bf16.mxu0 %v5472
    %7123 = vmatpush1.bf16.msra.mxu0 %v5471
    %7124 = vmatprep.mubr.bf16.mxu0 %v1420
    %7125 = vmatmul.mubr.bf16.gmra.mrb[0].mxu0 %v1419
    %v7126 = vpop.f32.mrb[0].mxu0
    %v7127 = vadd.f32 %v7084, %v7126
    %v7128 = vpop.f32.mrb[0].mxu0
    %v7129 = vadd.f32 %v7086, %v7128
    %v7130 = vpop.f32.mrb[0].mxu0
    %v7131 = vadd.f32 %v7088, %v7130
    %v7132 = vpop.f32.mrb[0].mxu0
    %v7133 = vadd.f32 %v7090, %v7132
    %7134 = vdwg.mxu0
    %7135 = vmatprep.subr.bf16.mxu0 %v4684
    %7136 = vmatpush1.bf16.msra.mxu0 %v4683
    %7137 = vmatprep.subr.bf16.mxu0 %v4694
    %7138 = vmatpush1.bf16.msra.mxu0 %v4693
    %7139 = vmatprep.subr.bf16.mxu0 %v4704
    %7140 = vmatpush1.bf16.msra.mxu0 %v4703
    %7141 = vmatprep.subr.bf16.mxu0 %v4714
    %7142 = vmatpush1.bf16.msra.mxu0 %v4713
    %7143 = vmatprep.subr.bf16.mxu0 %v4724
    %7144 = vmatpush1.bf16.msra.mxu0 %v4723
    %7145 = vmatprep.subr.bf16.mxu0 %v4734
    %7146 = vmatpush1.bf16.msra.mxu0 %v4733
    %7147 = vmatprep.subr.bf16.mxu0 %v4744
    %7148 = vmatpush1.bf16.msra.mxu0 %v4743
    %7149 = vmatprep.subr.bf16.mxu0 %v4754
    %7150 = vmatpush1.bf16.msra.mxu0 %v4753
    %7151 = vmatprep.subr.bf16.mxu0 %v4764
    %7152 = vmatpush1.bf16.msra.mxu0 %v4763
    %7153 = vmatprep.subr.bf16.mxu0 %v4774
    %7154 = vmatpush1.bf16.msra.mxu0 %v4773
    %7155 = vmatprep.subr.bf16.mxu0 %v4784
    %7156 = vmatpush1.bf16.msra.mxu0 %v4783
    %7157 = vmatprep.subr.bf16.mxu0 %v4794
    %7158 = vmatpush1.bf16.msra.mxu0 %v4793
    %7159 = vmatprep.subr.bf16.mxu0 %v4804
    %7160 = vmatpush1.bf16.msra.mxu0 %v4803
    %7161 = vmatprep.subr.bf16.mxu0 %v4814
    %7162 = vmatpush1.bf16.msra.mxu0 %v4813
    %7163 = vmatprep.subr.bf16.mxu0 %v4824
    %7164 = vmatpush1.bf16.msra.mxu0 %v4823
    %7165 = vmatprep.subr.bf16.mxu0 %v4834
    %7166 = vmatpush1.bf16.msra.mxu0 %v4833
    %7167 = vmatprep.mubr.bf16.mxu0 %v1412
    %7168 = vmatmul.mubr.bf16.gmra.mrb[0].mxu0 %v1411
    %v7169 = vpop.f32.mrb[0].mxu0
    %v7170 = vadd.f32 %v2260, %v7169
    %v7171 = vpop.f32.mrb[0].mxu0
    %v7172 = vadd.f32 %v2264, %v7171
    %v7173 = vpop.f32.mrb[0].mxu0
    %v7174 = vadd.f32 %v2260, %v7173
    %v7175 = vpop.f32.mrb[0].mxu0
    %v7176 = vadd.f32 %v2264, %v7175
    %7177 = vdwg.mxu0
    %7178 = vmatprep.subr.bf16.mxu0 %v4844
    %7179 = vmatpush1.bf16.msra.mxu0 %v4843
    %7180 = vmatprep.subr.bf16.mxu0 %v4854
    %7181 = vmatpush1.bf16.msra.mxu0 %v4853
    %7182 = vmatprep.subr.bf16.mxu0 %v4864
    %7183 = vmatpush1.bf16.msra.mxu0 %v4863
    %7184 = vmatprep.subr.bf16.mxu0 %v4874
    %7185 = vmatpush1.bf16.msra.mxu0 %v4873
    %7186 = vmatprep.subr.bf16.mxu0 %v4884
    %7187 = vmatpush1.bf16.msra.mxu0 %v4883
    %7188 = vmatprep.subr.bf16.mxu0 %v4894
    %7189 = vmatpush1.bf16.msra.mxu0 %v4893
    %7190 = vmatprep.subr.bf16.mxu0 %v4904
    %7191 = vmatpush1.bf16.msra.mxu0 %v4903
    %7192 = vmatprep.subr.bf16.mxu0 %v4914
    %7193 = vmatpush1.bf16.msra.mxu0 %v4913
    %7194 = vmatprep.subr.bf16.mxu0 %v4924
    %7195 = vmatpush1.bf16.msra.mxu0 %v4923
    %7196 = vmatprep.subr.bf16.mxu0 %v4934
    %7197 = vmatpush1.bf16.msra.mxu0 %v4933
    %7198 = vmatprep.subr.bf16.mxu0 %v4944
    %7199 = vmatpush1.bf16.msra.mxu0 %v4943
    %7200 = vmatprep.subr.bf16.mxu0 %v4954
    %7201 = vmatpush1.bf16.msra.mxu0 %v4953
    %7202 = vmatprep.subr.bf16.mxu0 %v4964
    %7203 = vmatpush1.bf16.msra.mxu0 %v4963
    %7204 = vmatprep.subr.bf16.mxu0 %v4974
    %7205 = vmatpush1.bf16.msra.mxu0 %v4973
    %7206 = vmatprep.subr.bf16.mxu0 %v4984
    %7207 = vmatpush1.bf16.msra.mxu0 %v4983
    %7208 = vmatprep.subr.bf16.mxu0 %v4994
    %7209 = vmatpush1.bf16.msra.mxu0 %v4993
    %7210 = vmatprep.mubr.bf16.mxu0 %v1414
    %7211 = vmatmul.mubr.bf16.gmra.mrb[0].mxu0 %v1413
    %v7212 = vpop.f32.mrb[0].mxu0
    %v7213 = vadd.f32 %v7170, %v7212
    %v7214 = vpop.f32.mrb[0].mxu0
    %v7215 = vadd.f32 %v7172, %v7214
    %v7216 = vpop.f32.mrb[0].mxu0
    %v7217 = vadd.f32 %v7174, %v7216
    %v7218 = vpop.f32.mrb[0].mxu0
    %v7219 = vadd.f32 %v7176, %v7218
    %7220 = vdwg.mxu0
    %7221 = vmatprep.subr.bf16.mxu0 %v5004
    %7222 = vmatpush1.bf16.msra.mxu0 %v5003
    %7223 = vmatprep.subr.bf16.mxu0 %v5014
    %7224 = vmatpush1.bf16.msra.mxu0 %v5013
    %7225 = vmatprep.subr.bf16.mxu0 %v5024
    %7226 = vmatpush1.bf16.msra.mxu0 %v5023
    %7227 = vmatprep.subr.bf16.mxu0 %v5034
    %7228 = vmatpush1.bf16.msra.mxu0 %v5033
    %7229 = vmatprep.subr.bf16.mxu0 %v5044
    %7230 = vmatpush1.bf16.msra.mxu0 %v5043
    %7231 = vmatprep.subr.bf16.mxu0 %v5054
    %7232 = vmatpush1.bf16.msra.mxu0 %v5053
    %7233 = vmatprep.subr.bf16.mxu0 %v5064
    %7234 = vmatpush1.bf16.msra.mxu0 %v5063
    %7235 = vmatprep.subr.bf16.mxu0 %v5074
    %7236 = vmatpush1.bf16.msra.mxu0 %v5073
    %7237 = vmatprep.subr.bf16.mxu0 %v5084
    %7238 = vmatpush1.bf16.msra.mxu0 %v5083
    %7239 = vmatprep.subr.bf16.mxu0 %v5094
    %7240 = vmatpush1.bf16.msra.mxu0 %v5093
    %7241 = vmatprep.subr.bf16.mxu0 %v5104
    %7242 = vmatpush1.bf16.msra.mxu0 %v5103
    %7243 = vmatprep.subr.bf16.mxu0 %v5114
    %7244 = vmatpush1.bf16.msra.mxu0 %v5113
    %7245 = vmatprep.subr.bf16.mxu0 %v5124
    %7246 = vmatpush1.bf16.msra.mxu0 %v5123
    %7247 = vmatprep.subr.bf16.mxu0 %v5134
    %7248 = vmatpush1.bf16.msra.mxu0 %v5133
    %7249 = vmatprep.subr.bf16.mxu0 %v5144
    %7250 = vmatpush1.bf16.msra.mxu0 %v5143
    %7251 = vmatprep.subr.bf16.mxu0 %v5154
    %7252 = vmatpush1.bf16.msra.mxu0 %v5153
    %7253 = vmatprep.mubr.bf16.mxu0 %v1416
    %7254 = vmatmul.mubr.bf16.gmra.mrb[0].mxu0 %v1415
    %v7255 = vpop.f32.mrb[0].mxu0
    %v7256 = vadd.f32 %v7213, %v7255
    %v7257 = vpop.f32.mrb[0].mxu0
    %v7258 = vadd.f32 %v7215, %v7257
    %v7259 = vpop.f32.mrb[0].mxu0
    %v7260 = vadd.f32 %v7217, %v7259
    %v7261 = vpop.f32.mrb[0].mxu0
    %v7262 = vadd.f32 %v7219, %v7261
    %7263 = vdwg.mxu0
    %7264 = vmatprep.subr.bf16.mxu0 %v5164
    %7265 = vmatpush1.bf16.msra.mxu0 %v5163
    %7266 = vmatprep.subr.bf16.mxu0 %v5174
    %7267 = vmatpush1.bf16.msra.mxu0 %v5173
    %7268 = vmatprep.subr.bf16.mxu0 %v5184
    %7269 = vmatpush1.bf16.msra.mxu0 %v5183
    %7270 = vmatprep.subr.bf16.mxu0 %v5194
    %7271 = vmatpush1.bf16.msra.mxu0 %v5193
    %7272 = vmatprep.subr.bf16.mxu0 %v5204
    %7273 = vmatpush1.bf16.msra.mxu0 %v5203
    %7274 = vmatprep.subr.bf16.mxu0 %v5214
    %7275 = vmatpush1.bf16.msra.mxu0 %v5213
    %7276 = vmatprep.subr.bf16.mxu0 %v5224
    %7277 = vmatpush1.bf16.msra.mxu0 %v5223
    %7278 = vmatprep.subr.bf16.mxu0 %v5234
    %7279 = vmatpush1.bf16.msra.mxu0 %v5233
    %7280 = vmatprep.subr.bf16.mxu0 %v5244
    %7281 = vmatpush1.bf16.msra.mxu0 %v5243
    %7282 = vmatprep.subr.bf16.mxu0 %v5254
    %7283 = vmatpush1.bf16.msra.mxu0 %v5253
    %7284 = vmatprep.subr.bf16.mxu0 %v5264
    %7285 = vmatpush1.bf16.msra.mxu0 %v5263
    %7286 = vmatprep.subr.bf16.mxu0 %v5274
    %7287 = vmatpush1.bf16.msra.mxu0 %v5273
    %7288 = vmatprep.subr.bf16.mxu0 %v5284
    %7289 = vmatpush1.bf16.msra.mxu0 %v5283
    %7290 = vmatprep.subr.bf16.mxu0 %v5294
    %7291 = vmatpush1.bf16.msra.mxu0 %v5293
    %7292 = vmatprep.subr.bf16.mxu0 %v5304
    %7293 = vmatpush1.bf16.msra.mxu0 %v5303
    %7294 = vmatprep.subr.bf16.mxu0 %v5314
    %7295 = vmatpush1.bf16.msra.mxu0 %v5313
    %7296 = vmatprep.mubr.bf16.mxu0 %v1418
    %7297 = vmatmul.mubr.bf16.gmra.mrb[0].mxu0 %v1417
    %v7298 = vpop.f32.mrb[0].mxu0
    %v7299 = vadd.f32 %v7256, %v7298
    %v7300 = vpop.f32.mrb[0].mxu0
    %v7301 = vadd.f32 %v7258, %v7300
    %v7302 = vpop.f32.mrb[0].mxu0
    %v7303 = vadd.f32 %v7260, %v7302
    %v7304 = vpop.f32.mrb[0].mxu0
    %v7305 = vadd.f32 %v7262, %v7304
    %7306 = vdwg.mxu0
    %7307 = vmatprep.subr.bf16.mxu0 %v5324
    %7308 = vmatpush1.bf16.msra.mxu0 %v5323
    %7309 = vmatprep.subr.bf16.mxu0 %v5334
    %7310 = vmatpush1.bf16.msra.mxu0 %v5333
    %7311 = vmatprep.subr.bf16.mxu0 %v5344
    %7312 = vmatpush1.bf16.msra.mxu0 %v5343
    %7313 = vmatprep.subr.bf16.mxu0 %v5354
    %7314 = vmatpush1.bf16.msra.mxu0 %v5353
    %7315 = vmatprep.subr.bf16.mxu0 %v5364
    %7316 = vmatpush1.bf16.msra.mxu0 %v5363
    %7317 = vmatprep.subr.bf16.mxu0 %v5374
    %7318 = vmatpush1.bf16.msra.mxu0 %v5373
    %7319 = vmatprep.subr.bf16.mxu0 %v5384
    %7320 = vmatpush1.bf16.msra.mxu0 %v5383
    %7321 = vmatprep.subr.bf16.mxu0 %v5394
    %7322 = vmatpush1.bf16.msra.mxu0 %v5393
    %7323 = vmatprep.subr.bf16.mxu0 %v5404
    %7324 = vmatpush1.bf16.msra.mxu0 %v5403
    %7325 = vmatprep.subr.bf16.mxu0 %v5414
    %7326 = vmatpush1.bf16.msra.mxu0 %v5413
    %7327 = vmatprep.subr.bf16.mxu0 %v5424
    %7328 = vmatpush1.bf16.msra.mxu0 %v5423
    %7329 = vmatprep.subr.bf16.mxu0 %v5434
    %7330 = vmatpush1.bf16.msra.mxu0 %v5433
    %7331 = vmatprep.subr.bf16.mxu0 %v5444
    %7332 = vmatpush1.bf16.msra.mxu0 %v5443
    %7333 = vmatprep.subr.bf16.mxu0 %v5454
    %7334 = vmatpush1.bf16.msra.mxu0 %v5453
    %7335 = vmatprep.subr.bf16.mxu0 %v5464
    %7336 = vmatpush1.bf16.msra.mxu0 %v5463
    %7337 = vmatprep.subr.bf16.mxu0 %v5474
    %7338 = vmatpush1.bf16.msra.mxu0 %v5473
    %7339 = vmatprep.mubr.bf16.mxu0 %v1420
    %7340 = vmatmul.mubr.bf16.gmra.mrb[0].mxu0 %v1419
    %v7341 = vpop.f32.mrb[0].mxu0
    %v7342 = vadd.f32 %v7299, %v7341
    %v7343 = vpop.f32.mrb[0].mxu0
    %v7344 = vadd.f32 %v7301, %v7343
    %v7345 = vpop.f32.mrb[0].mxu0
    %v7346 = vadd.f32 %v7303, %v7345
    %v7347 = vpop.f32.mrb[0].mxu0
    %v7348 = vadd.f32 %v7305, %v7347
    %7349 = vdwg.mxu0
    %vm7350 = vcmp.gt.f32.partialorder %v6482, 0.0
    %vm7351 = vcmp.gt.f32.partialorder %v6484, 0.0
    %vm7352 = vcmp.gt.f32.partialorder %v6697, 0.0
    %vm7353 = vcmp.gt.f32.partialorder %v6699, 0.0
    %vm7354 = vcmp.gt.f32.partialorder %v6912, 0.0
    %vm7355 = vcmp.gt.f32.partialorder %v6914, 0.0
    %vm7356 = vcmp.gt.f32.partialorder %v7127, 0.0
    %vm7357 = vcmp.gt.f32.partialorder %v7129, 0.0
    %vm7358 = vcmp.gt.f32.partialorder %v7342, 0.0
    %vm7359 = vcmp.gt.f32.partialorder %v7344, 0.0
    %vm7360 = vcmp.gt.f32.partialorder %v6486, 0.0
    %vm7361 = vcmp.gt.f32.partialorder %v6488, 0.0
    %vm7362 = vcmp.gt.f32.partialorder %v6701, 0.0
    %vm7363 = vcmp.gt.f32.partialorder %v6703, 0.0
    %vm7364 = vcmp.gt.f32.partialorder %v6916, 0.0
    %vm7365 = vcmp.gt.f32.partialorder %v6918, 0.0
    %vm7366 = vcmp.gt.f32.partialorder %v7131, 0.0
    %vm7367 = vcmp.gt.f32.partialorder %v7133, 0.0
    %vm7368 = vcmp.gt.f32.partialorder %v7346, 0.0
    %vm7369 = vcmp.gt.f32.partialorder %v7348, 0.0
    %v7370 = vmul.f32 %v6482, 0.1
    %v7371 = vmul.f32 %v6484, 0.1
    %v7372 = vmul.f32 %v6697, 0.1
    %v7373 = vmul.f32 %v6699, 0.1
    %v7374 = vmul.f32 %v6912, 0.1
    %v7375 = vmul.f32 %v6914, 0.1
    %v7376 = vmul.f32 %v7127, 0.1
    %v7377 = vmul.f32 %v7129, 0.1
    %v7378 = vmul.f32 %v7342, 0.1
    %v7379 = vmul.f32 %v7344, 0.1
    %v7380 = vmul.f32 %v6486, 0.1
    %v7381 = vmul.f32 %v6488, 0.1
    %v7382 = vmul.f32 %v6701, 0.1
    %v7383 = vmul.f32 %v6703, 0.1
    %v7384 = vmul.f32 %v6916, 0.1
    %v7385 = vmul.f32 %v6918, 0.1
    %v7386 = vmul.f32 %v7131, 0.1
    %v7387 = vmul.f32 %v7133, 0.1
    %v7388 = vmul.f32 %v7346, 0.1
    %v7389 = vmul.f32 %v7348, 0.1
    %v7390 = vsel %vm7350, %v6482, %v7370
    %v7391 = vsel %vm7351, %v6484, %v7371
    %v7392 = vsel %vm7352, %v6697, %v7372
    %v7393 = vsel %vm7353, %v6699, %v7373
    %v7394 = vsel %vm7354, %v6912, %v7374
    %v7395 = vsel %vm7355, %v6914, %v7375
    %v7396 = vsel %vm7356, %v7127, %v7376
    %v7397 = vsel %vm7357, %v7129, %v7377
    %v7398 = vsel %vm7358, %v7342, %v7378
    %v7399 = vsel %vm7359, %v7344, %v7379
    %v7400 = vsel %vm7360, %v6486, %v7380
    %v7401 = vsel %vm7361, %v6488, %v7381
    %v7402 = vsel %vm7362, %v6701, %v7382
    %v7403 = vsel %vm7363, %v6703, %v7383
    %v7404 = vsel %vm7364, %v6916, %v7384
    %v7405 = vsel %vm7365, %v6918, %v7385
    %v7406 = vsel %vm7366, %v7131, %v7386
    %v7407 = vsel %vm7367, %v7133, %v7387
    %v7408 = vsel %vm7368, %v7346, %v7388
    %v7409 = vsel %vm7369, %v7348, %v7389
    %v7410 = vpack.c.bf16 %v7400, %v7390
    %v7411 = vpack.c.bf16 %v7401, %v7391
    %v7412 = vpack.c.bf16 %v7402, %v7392
    %v7413 = vpack.c.bf16 %v7403, %v7393
    %v7414 = vpack.c.bf16 %v7404, %v7394
    %v7415 = vpack.c.bf16 %v7405, %v7395
    %v7416 = vpack.c.bf16 %v7406, %v7396
    %v7417 = vpack.c.bf16 %v7407, %v7397
    %v7418 = vpack.c.bf16 %v7408, %v7398
    %v7419 = vpack.c.bf16 %v7409, %v7399
    %v7420 = vld [vmem:[#allocation11] sm:$0xff]
    %v7421 = vld [vmem:[#allocation11 + $0x8] sm:$0xff]
    %v7422 = vld [vmem:[#allocation11 + $0x10] sm:$0xff]
    %v7423 = vld [vmem:[#allocation11 + $0x18] sm:$0xff]
    %v7424 = vld [vmem:[#allocation11 + $0x20] sm:$0xff]
    %v7425 = vld [vmem:[#allocation11 + $0x28] sm:$0xff]
    %v7426 = vld [vmem:[#allocation11 + $0x30] sm:$0xff]
    %v7427 = vld [vmem:[#allocation11 + $0x38] sm:$0xff]
    %v7428 = vld [vmem:[#allocation11 + $0x40] sm:$0xff]
    %v7429 = vld [vmem:[#allocation11 + $0x48] sm:$0xff]
    %v7430 = vld [vmem:[#allocation11 + $0x50] sm:$0xff]
    %v7431 = vld [vmem:[#allocation11 + $0x58] sm:$0xff]
    %v7432 = vld [vmem:[#allocation11 + $0x60] sm:$0xff]
    %v7433 = vld [vmem:[#allocation11 + $0x68] sm:$0xff]
    %v7434 = vld [vmem:[#allocation11 + $0x70] sm:$0xff]
    %v7435 = vld [vmem:[#allocation11 + $0x78] sm:$0xff]
    %v7436 = vld [vmem:[#allocation11 + $0x80] sm:$0xff]
    %v7437 = vld [vmem:[#allocation11 + $0x88] sm:$0xff]
    %v7438 = vld [vmem:[#allocation11 + $0x90] sm:$0xff]
    %v7439 = vld [vmem:[#allocation11 + $0x98] sm:$0xff]
    %v7440 = vld [vmem:[#allocation11 + $0xa0] sm:$0xff]
    %v7441 = vld [vmem:[#allocation11 + $0xa8] sm:$0xff]
    %v7442 = vld [vmem:[#allocation11 + $0xb0] sm:$0xff]
    %v7443 = vld [vmem:[#allocation11 + $0xb8] sm:$0xff]
    %v7444 = vld [vmem:[#allocation11 + $0xc0] sm:$0xff]
    %v7445 = vld [vmem:[#allocation11 + $0xc8] sm:$0xff]
    %v7446 = vld [vmem:[#allocation11 + $0xd0] sm:$0xff]
    %v7447 = vld [vmem:[#allocation11 + $0xd8] sm:$0xff]
    %v7448 = vld [vmem:[#allocation11 + $0xe0] sm:$0xff]
    %v7449 = vld [vmem:[#allocation11 + $0xe8] sm:$0xff]
    %v7450 = vld [vmem:[#allocation11 + $0xf0] sm:$0xff]
    %v7451 = vld [vmem:[#allocation11 + $0xf8] sm:$0xff]
    %v7452 = vld [vmem:[#allocation11 + $0x100] sm:$0xff]
    %v7453 = vld [vmem:[#allocation11 + $0x108] sm:$0xff]
    %v7454 = vld [vmem:[#allocation11 + $0x110] sm:$0xff]
    %v7455 = vld [vmem:[#allocation11 + $0x118] sm:$0xff]
    %v7456 = vld [vmem:[#allocation11 + $0x120] sm:$0xff]
    %v7457 = vld [vmem:[#allocation11 + $0x128] sm:$0xff]
    %v7458 = vld [vmem:[#allocation11 + $0x130] sm:$0xff]
    %v7459 = vld [vmem:[#allocation11 + $0x138] sm:$0xff]
    %v7460 = vld [vmem:[#allocation11 + $0x140] sm:$0xff]
    %v7461 = vld [vmem:[#allocation11 + $0x148] sm:$0xff]
    %v7462 = vld [vmem:[#allocation11 + $0x150] sm:$0xff]
    %v7463 = vld [vmem:[#allocation11 + $0x158] sm:$0xff]
    %v7464 = vld [vmem:[#allocation11 + $0x160] sm:$0xff]
    %v7465 = vld [vmem:[#allocation11 + $0x168] sm:$0xff]
    %v7466 = vld [vmem:[#allocation11 + $0x170] sm:$0xff]
    %v7467 = vld [vmem:[#allocation11 + $0x178] sm:$0xff]
    %v7468 = vld [vmem:[#allocation11 + $0x180] sm:$0xff]
    %v7469 = vld [vmem:[#allocation11 + $0x188] sm:$0xff]
    %v7470 = vld [vmem:[#allocation11 + $0x190] sm:$0xff]
    %v7471 = vld [vmem:[#allocation11 + $0x198] sm:$0xff]
    %v7472 = vld [vmem:[#allocation11 + $0x1a0] sm:$0xff]
    %v7473 = vld [vmem:[#allocation11 + $0x1a8] sm:$0xff]
    %v7474 = vld [vmem:[#allocation11 + $0x1b0] sm:$0xff]
    %v7475 = vld [vmem:[#allocation11 + $0x1b8] sm:$0xff]
    %v7476 = vld [vmem:[#allocation11 + $0x1c0] sm:$0xff]
    %v7477 = vld [vmem:[#allocation11 + $0x1c8] sm:$0xff]
    %v7478 = vld [vmem:[#allocation11 + $0x1d0] sm:$0xff]
    %v7479 = vld [vmem:[#allocation11 + $0x1d8] sm:$0xff]
    %v7480 = vld [vmem:[#allocation11 + $0x1e0] sm:$0xff]
    %v7481 = vld [vmem:[#allocation11 + $0x1e8] sm:$0xff]
    %v7482 = vld [vmem:[#allocation11 + $0x1f0] sm:$0xff]
    %v7483 = vld [vmem:[#allocation11 + $0x1f8] sm:$0xff]
    %v7484 = vld [vmem:[#allocation11 + $0x200] sm:$0xff]
    %v7485 = vld [vmem:[#allocation11 + $0x208] sm:$0xff]
    %v7486 = vld [vmem:[#allocation11 + $0x210] sm:$0xff]
    %v7487 = vld [vmem:[#allocation11 + $0x218] sm:$0xff]
    %v7488 = vld [vmem:[#allocation11 + $0x220] sm:$0xff]
    %v7489 = vld [vmem:[#allocation11 + $0x228] sm:$0xff]
    %v7490 = vld [vmem:[#allocation11 + $0x230] sm:$0xff]
    %v7491 = vld [vmem:[#allocation11 + $0x238] sm:$0xff]
    %v7492 = vld [vmem:[#allocation11 + $0x240] sm:$0xff]
    %v7493 = vld [vmem:[#allocation11 + $0x248] sm:$0xff]
    %v7494 = vld [vmem:[#allocation11 + $0x250] sm:$0xff]
    %v7495 = vld [vmem:[#allocation11 + $0x258] sm:$0xff]
    %v7496 = vld [vmem:[#allocation11 + $0x260] sm:$0xff]
    %v7497 = vld [vmem:[#allocation11 + $0x268] sm:$0xff]
    %v7498 = vld [vmem:[#allocation11 + $0x270] sm:$0xff]
    %v7499 = vld [vmem:[#allocation11 + $0x278] sm:$0xff]
    %v7500 = vld [vmem:[#allocation11 + $0x280] sm:$0xff]
    %v7501 = vld [vmem:[#allocation11 + $0x288] sm:$0xff]
    %v7502 = vld [vmem:[#allocation11 + $0x290] sm:$0xff]
    %v7503 = vld [vmem:[#allocation11 + $0x298] sm:$0xff]
    %v7504 = vld [vmem:[#allocation11 + $0x2a0] sm:$0xff]
    %v7505 = vld [vmem:[#allocation11 + $0x2a8] sm:$0xff]
    %v7506 = vld [vmem:[#allocation11 + $0x2b0] sm:$0xff]
    %v7507 = vld [vmem:[#allocation11 + $0x2b8] sm:$0xff]
    %v7508 = vld [vmem:[#allocation11 + $0x2c0] sm:$0xff]
    %v7509 = vld [vmem:[#allocation11 + $0x2c8] sm:$0xff]
    %v7510 = vld [vmem:[#allocation11 + $0x2d0] sm:$0xff]
    %v7511 = vld [vmem:[#allocation11 + $0x2d8] sm:$0xff]
    %v7512 = vld [vmem:[#allocation11 + $0x2e0] sm:$0xff]
    %v7513 = vld [vmem:[#allocation11 + $0x2e8] sm:$0xff]
    %v7514 = vld [vmem:[#allocation11 + $0x2f0] sm:$0xff]
    %v7515 = vld [vmem:[#allocation11 + $0x2f8] sm:$0xff]
    %v7516 = vld [vmem:[#allocation11 + $0x300] sm:$0xff]
    %v7517 = vld [vmem:[#allocation11 + $0x308] sm:$0xff]
    %v7518 = vld [vmem:[#allocation11 + $0x310] sm:$0xff]
    %v7519 = vld [vmem:[#allocation11 + $0x318] sm:$0xff]
    %v7520 = vld [vmem:[#allocation11 + $0x320] sm:$0xff]
    %v7521 = vld [vmem:[#allocation11 + $0x328] sm:$0xff]
    %v7522 = vld [vmem:[#allocation11 + $0x330] sm:$0xff]
    %v7523 = vld [vmem:[#allocation11 + $0x338] sm:$0xff]
    %v7524 = vld [vmem:[#allocation11 + $0x340] sm:$0xff]
    %v7525 = vld [vmem:[#allocation11 + $0x348] sm:$0xff]
    %v7526 = vld [vmem:[#allocation11 + $0x350] sm:$0xff]
    %v7527 = vld [vmem:[#allocation11 + $0x358] sm:$0xff]
    %v7528 = vld [vmem:[#allocation11 + $0x360] sm:$0xff]
    %v7529 = vld [vmem:[#allocation11 + $0x368] sm:$0xff]
    %v7530 = vld [vmem:[#allocation11 + $0x370] sm:$0xff]
    %v7531 = vld [vmem:[#allocation11 + $0x378] sm:$0xff]
    %v7532 = vld [vmem:[#allocation11 + $0x380] sm:$0xff]
    %v7533 = vld [vmem:[#allocation11 + $0x388] sm:$0xff]
    %v7534 = vld [vmem:[#allocation11 + $0x390] sm:$0xff]
    %v7535 = vld [vmem:[#allocation11 + $0x398] sm:$0xff]
    %v7536 = vld [vmem:[#allocation11 + $0x3a0] sm:$0xff]
    %v7537 = vld [vmem:[#allocation11 + $0x3a8] sm:$0xff]
    %v7538 = vld [vmem:[#allocation11 + $0x3b0] sm:$0xff]
    %v7539 = vld [vmem:[#allocation11 + $0x3b8] sm:$0xff]
    %v7540 = vld [vmem:[#allocation11 + $0x3c0] sm:$0xff]
    %v7541 = vld [vmem:[#allocation11 + $0x3c8] sm:$0xff]
    %v7542 = vld [vmem:[#allocation11 + $0x3d0] sm:$0xff]
    %v7543 = vld [vmem:[#allocation11 + $0x3d8] sm:$0xff]
    %v7544 = vld [vmem:[#allocation11 + $0x3e0] sm:$0xff]
    %v7545 = vld [vmem:[#allocation11 + $0x3e8] sm:$0xff]
    %v7546 = vld [vmem:[#allocation11 + $0x3f0] sm:$0xff]
    %v7547 = vld [vmem:[#allocation11 + $0x3f8] sm:$0xff]
    %v7548 = vld [vmem:[#allocation11 + $0x400] sm:$0xff]
    %v7549 = vld [vmem:[#allocation11 + $0x408] sm:$0xff]
    %v7550 = vld [vmem:[#allocation11 + $0x410] sm:$0xff]
    %v7551 = vld [vmem:[#allocation11 + $0x418] sm:$0xff]
    %v7552 = vld [vmem:[#allocation11 + $0x420] sm:$0xff]
    %v7553 = vld [vmem:[#allocation11 + $0x428] sm:$0xff]
    %v7554 = vld [vmem:[#allocation11 + $0x430] sm:$0xff]
    %v7555 = vld [vmem:[#allocation11 + $0x438] sm:$0xff]
    %v7556 = vld [vmem:[#allocation11 + $0x440] sm:$0xff]
    %v7557 = vld [vmem:[#allocation11 + $0x448] sm:$0xff]
    %v7558 = vld [vmem:[#allocation11 + $0x450] sm:$0xff]
    %v7559 = vld [vmem:[#allocation11 + $0x458] sm:$0xff]
    %v7560 = vld [vmem:[#allocation11 + $0x460] sm:$0xff]
    %v7561 = vld [vmem:[#allocation11 + $0x468] sm:$0xff]
    %v7562 = vld [vmem:[#allocation11 + $0x470] sm:$0xff]
    %v7563 = vld [vmem:[#allocation11 + $0x478] sm:$0xff]
    %v7564 = vld [vmem:[#allocation11 + $0x480] sm:$0xff]
    %v7565 = vld [vmem:[#allocation11 + $0x488] sm:$0xff]
    %v7566 = vld [vmem:[#allocation11 + $0x490] sm:$0xff]
    %v7567 = vld [vmem:[#allocation11 + $0x498] sm:$0xff]
    %v7568 = vld [vmem:[#allocation11 + $0x4a0] sm:$0xff]
    %v7569 = vld [vmem:[#allocation11 + $0x4a8] sm:$0xff]
    %v7570 = vld [vmem:[#allocation11 + $0x4b0] sm:$0xff]
    %v7571 = vld [vmem:[#allocation11 + $0x4b8] sm:$0xff]
    %v7572 = vld [vmem:[#allocation11 + $0x4c0] sm:$0xff]
    %v7573 = vld [vmem:[#allocation11 + $0x4c8] sm:$0xff]
    %v7574 = vld [vmem:[#allocation11 + $0x4d0] sm:$0xff]
    %v7575 = vld [vmem:[#allocation11 + $0x4d8] sm:$0xff]
    %v7576 = vld [vmem:[#allocation11 + $0x4e0] sm:$0xff]
    %v7577 = vld [vmem:[#allocation11 + $0x4e8] sm:$0xff]
    %v7578 = vld [vmem:[#allocation11 + $0x4f0] sm:$0xff]
    %v7579 = vld [vmem:[#allocation11 + $0x4f8] sm:$0xff]
    %v7580 = vld [vmem:[#allocation13] sm:$0x3]
    %v7582 = vlaneseq
    %v7583 = vshrl.u32 %v7582, 7
    %v7584 = vsub.s32 0, %v7583
    %v7585 = vrot.slane %v7580, %v7584
    %v7586 = vlaneseq
    %v7587 = vshrl.u32 %v7586, 7
    %v7588 = vsub.s32 1, %v7587
    %v7589 = vrot.slane %v7580, %v7588
    %v7752 = vunpack.c.l.b16 %v7420
    %v7753 = vunpack.c.h.b16 %v7420
    %v7754 = vunpack.c.l.b16 %v7421
    %v7755 = vunpack.c.h.b16 %v7421
    %v7756 = vunpack.c.l.b16 %v7422
    %v7757 = vunpack.c.h.b16 %v7422
    %v7758 = vunpack.c.l.b16 %v7423
    %v7759 = vunpack.c.h.b16 %v7423
    %v7760 = vunpack.c.l.b16 %v7424
    %v7761 = vunpack.c.h.b16 %v7424
    %v7762 = vunpack.c.l.b16 %v7425
    %v7763 = vunpack.c.h.b16 %v7425
    %v7764 = vunpack.c.l.b16 %v7426
    %v7765 = vunpack.c.h.b16 %v7426
    %v7766 = vunpack.c.l.b16 %v7427
    %v7767 = vunpack.c.h.b16 %v7427
    %v7768 = vunpack.c.l.b16 %v7428
    %v7769 = vunpack.c.h.b16 %v7428
    %v7770 = vunpack.c.l.b16 %v7429
    %v7771 = vunpack.c.h.b16 %v7429
    %v7772 = vunpack.c.l.b16 %v7430
    %v7773 = vunpack.c.h.b16 %v7430
    %v7774 = vunpack.c.l.b16 %v7431
    %v7775 = vunpack.c.h.b16 %v7431
    %v7776 = vunpack.c.l.b16 %v7432
    %v7777 = vunpack.c.h.b16 %v7432
    %v7778 = vunpack.c.l.b16 %v7433
    %v7779 = vunpack.c.h.b16 %v7433
    %v7780 = vunpack.c.l.b16 %v7434
    %v7781 = vunpack.c.h.b16 %v7434
    %v7782 = vunpack.c.l.b16 %v7435
    %v7783 = vunpack.c.h.b16 %v7435
    %v7784 = vunpack.c.l.b16 %v7436
    %v7785 = vunpack.c.h.b16 %v7436
    %v7786 = vunpack.c.l.b16 %v7437
    %v7787 = vunpack.c.h.b16 %v7437
    %v7788 = vunpack.c.l.b16 %v7438
    %v7789 = vunpack.c.h.b16 %v7438
    %v7790 = vunpack.c.l.b16 %v7439
    %v7791 = vunpack.c.h.b16 %v7439
    %v7792 = vunpack.c.l.b16 %v7440
    %v7793 = vunpack.c.h.b16 %v7440
    %v7794 = vunpack.c.l.b16 %v7441
    %v7795 = vunpack.c.h.b16 %v7441
    %v7796 = vunpack.c.l.b16 %v7442
    %v7797 = vunpack.c.h.b16 %v7442
    %v7798 = vunpack.c.l.b16 %v7443
    %v7799 = vunpack.c.h.b16 %v7443
    %v7800 = vunpack.c.l.b16 %v7444
    %v7801 = vunpack.c.h.b16 %v7444
    %v7802 = vunpack.c.l.b16 %v7445
    %v7803 = vunpack.c.h.b16 %v7445
    %v7804 = vunpack.c.l.b16 %v7446
    %v7805 = vunpack.c.h.b16 %v7446
    %v7806 = vunpack.c.l.b16 %v7447
    %v7807 = vunpack.c.h.b16 %v7447
    %v7808 = vunpack.c.l.b16 %v7448
    %v7809 = vunpack.c.h.b16 %v7448
    %v7810 = vunpack.c.l.b16 %v7449
    %v7811 = vunpack.c.h.b16 %v7449
    %v7812 = vunpack.c.l.b16 %v7450
    %v7813 = vunpack.c.h.b16 %v7450
    %v7814 = vunpack.c.l.b16 %v7451
    %v7815 = vunpack.c.h.b16 %v7451
    %v7816 = vunpack.c.l.b16 %v7452
    %v7817 = vunpack.c.h.b16 %v7452
    %v7818 = vunpack.c.l.b16 %v7453
    %v7819 = vunpack.c.h.b16 %v7453
    %v7820 = vunpack.c.l.b16 %v7454
    %v7821 = vunpack.c.h.b16 %v7454
    %v7822 = vunpack.c.l.b16 %v7455
    %v7823 = vunpack.c.h.b16 %v7455
    %v7824 = vunpack.c.l.b16 %v7456
    %v7825 = vunpack.c.h.b16 %v7456
    %v7826 = vunpack.c.l.b16 %v7457
    %v7827 = vunpack.c.h.b16 %v7457
    %v7828 = vunpack.c.l.b16 %v7458
    %v7829 = vunpack.c.h.b16 %v7458
    %v7830 = vunpack.c.l.b16 %v7459
    %v7831 = vunpack.c.h.b16 %v7459
    %v7832 = vunpack.c.l.b16 %v7460
    %v7833 = vunpack.c.h.b16 %v7460
    %v7834 = vunpack.c.l.b16 %v7461
    %v7835 = vunpack.c.h.b16 %v7461
    %v7836 = vunpack.c.l.b16 %v7462
    %v7837 = vunpack.c.h.b16 %v7462
    %v7838 = vunpack.c.l.b16 %v7463
    %v7839 = vunpack.c.h.b16 %v7463
    %v7840 = vunpack.c.l.b16 %v7464
    %v7841 = vunpack.c.h.b16 %v7464
    %v7842 = vunpack.c.l.b16 %v7465
    %v7843 = vunpack.c.h.b16 %v7465
    %v7844 = vunpack.c.l.b16 %v7466
    %v7845 = vunpack.c.h.b16 %v7466
    %v7846 = vunpack.c.l.b16 %v7467
    %v7847 = vunpack.c.h.b16 %v7467
    %v7848 = vunpack.c.l.b16 %v7468
    %v7849 = vunpack.c.h.b16 %v7468
    %v7850 = vunpack.c.l.b16 %v7469
    %v7851 = vunpack.c.h.b16 %v7469
    %v7852 = vunpack.c.l.b16 %v7470
    %v7853 = vunpack.c.h.b16 %v7470
    %v7854 = vunpack.c.l.b16 %v7471
    %v7855 = vunpack.c.h.b16 %v7471
    %v7856 = vunpack.c.l.b16 %v7472
    %v7857 = vunpack.c.h.b16 %v7472
    %v7858 = vunpack.c.l.b16 %v7473
    %v7859 = vunpack.c.h.b16 %v7473
    %v7860 = vunpack.c.l.b16 %v7474
    %v7861 = vunpack.c.h.b16 %v7474
    %v7862 = vunpack.c.l.b16 %v7475
    %v7863 = vunpack.c.h.b16 %v7475
    %v7864 = vunpack.c.l.b16 %v7476
    %v7865 = vunpack.c.h.b16 %v7476
    %v7866 = vunpack.c.l.b16 %v7477
    %v7867 = vunpack.c.h.b16 %v7477
    %v7868 = vunpack.c.l.b16 %v7478
    %v7869 = vunpack.c.h.b16 %v7478
    %v7870 = vunpack.c.l.b16 %v7479
    %v7871 = vunpack.c.h.b16 %v7479
    %v7872 = vunpack.c.l.b16 %v7480
    %v7873 = vunpack.c.h.b16 %v7480
    %v7874 = vunpack.c.l.b16 %v7481
    %v7875 = vunpack.c.h.b16 %v7481
    %v7876 = vunpack.c.l.b16 %v7482
    %v7877 = vunpack.c.h.b16 %v7482
    %v7878 = vunpack.c.l.b16 %v7483
    %v7879 = vunpack.c.h.b16 %v7483
    %v7880 = vunpack.c.l.b16 %v7484
    %v7881 = vunpack.c.h.b16 %v7484
    %v7882 = vunpack.c.l.b16 %v7485
    %v7883 = vunpack.c.h.b16 %v7485
    %v7884 = vunpack.c.l.b16 %v7486
    %v7885 = vunpack.c.h.b16 %v7486
    %v7886 = vunpack.c.l.b16 %v7487
    %v7887 = vunpack.c.h.b16 %v7487
    %v7888 = vunpack.c.l.b16 %v7488
    %v7889 = vunpack.c.h.b16 %v7488
    %v7890 = vunpack.c.l.b16 %v7489
    %v7891 = vunpack.c.h.b16 %v7489
    %v7892 = vunpack.c.l.b16 %v7490
    %v7893 = vunpack.c.h.b16 %v7490
    %v7894 = vunpack.c.l.b16 %v7491
    %v7895 = vunpack.c.h.b16 %v7491
    %v7896 = vunpack.c.l.b16 %v7492
    %v7897 = vunpack.c.h.b16 %v7492
    %v7898 = vunpack.c.l.b16 %v7493
    %v7899 = vunpack.c.h.b16 %v7493
    %v7900 = vunpack.c.l.b16 %v7494
    %v7901 = vunpack.c.h.b16 %v7494
    %v7902 = vunpack.c.l.b16 %v7495
    %v7903 = vunpack.c.h.b16 %v7495
    %v7904 = vunpack.c.l.b16 %v7496
    %v7905 = vunpack.c.h.b16 %v7496
    %v7906 = vunpack.c.l.b16 %v7497
    %v7907 = vunpack.c.h.b16 %v7497
    %v7908 = vunpack.c.l.b16 %v7498
    %v7909 = vunpack.c.h.b16 %v7498
    %v7910 = vunpack.c.l.b16 %v7499
    %v7911 = vunpack.c.h.b16 %v7499
    %v7912 = vunpack.c.l.b16 %v7500
    %v7913 = vunpack.c.h.b16 %v7500
    %v7914 = vunpack.c.l.b16 %v7501
    %v7915 = vunpack.c.h.b16 %v7501
    %v7916 = vunpack.c.l.b16 %v7502
    %v7917 = vunpack.c.h.b16 %v7502
    %v7918 = vunpack.c.l.b16 %v7503
    %v7919 = vunpack.c.h.b16 %v7503
    %v7920 = vunpack.c.l.b16 %v7504
    %v7921 = vunpack.c.h.b16 %v7504
    %v7922 = vunpack.c.l.b16 %v7505
    %v7923 = vunpack.c.h.b16 %v7505
    %v7924 = vunpack.c.l.b16 %v7506
    %v7925 = vunpack.c.h.b16 %v7506
    %v7926 = vunpack.c.l.b16 %v7507
    %v7927 = vunpack.c.h.b16 %v7507
    %v7928 = vunpack.c.l.b16 %v7508
    %v7929 = vunpack.c.h.b16 %v7508
    %v7930 = vunpack.c.l.b16 %v7509
    %v7931 = vunpack.c.h.b16 %v7509
    %v7932 = vunpack.c.l.b16 %v7510
    %v7933 = vunpack.c.h.b16 %v7510
    %v7934 = vunpack.c.l.b16 %v7511
    %v7935 = vunpack.c.h.b16 %v7511
    %v7936 = vunpack.c.l.b16 %v7512
    %v7937 = vunpack.c.h.b16 %v7512
    %v7938 = vunpack.c.l.b16 %v7513
    %v7939 = vunpack.c.h.b16 %v7513
    %v7940 = vunpack.c.l.b16 %v7514
    %v7941 = vunpack.c.h.b16 %v7514
    %v7942 = vunpack.c.l.b16 %v7515
    %v7943 = vunpack.c.h.b16 %v7515
    %v7944 = vunpack.c.l.b16 %v7516
    %v7945 = vunpack.c.h.b16 %v7516
    %v7946 = vunpack.c.l.b16 %v7517
    %v7947 = vunpack.c.h.b16 %v7517
    %v7948 = vunpack.c.l.b16 %v7518
    %v7949 = vunpack.c.h.b16 %v7518
    %v7950 = vunpack.c.l.b16 %v7519
    %v7951 = vunpack.c.h.b16 %v7519
    %v7952 = vunpack.c.l.b16 %v7520
    %v7953 = vunpack.c.h.b16 %v7520
    %v7954 = vunpack.c.l.b16 %v7521
    %v7955 = vunpack.c.h.b16 %v7521
    %v7956 = vunpack.c.l.b16 %v7522
    %v7957 = vunpack.c.h.b16 %v7522
    %v7958 = vunpack.c.l.b16 %v7523
    %v7959 = vunpack.c.h.b16 %v7523
    %v7960 = vunpack.c.l.b16 %v7524
    %v7961 = vunpack.c.h.b16 %v7524
    %v7962 = vunpack.c.l.b16 %v7525
    %v7963 = vunpack.c.h.b16 %v7525
    %v7964 = vunpack.c.l.b16 %v7526
    %v7965 = vunpack.c.h.b16 %v7526
    %v7966 = vunpack.c.l.b16 %v7527
    %v7967 = vunpack.c.h.b16 %v7527
    %v7968 = vunpack.c.l.b16 %v7528
    %v7969 = vunpack.c.h.b16 %v7528
    %v7970 = vunpack.c.l.b16 %v7529
    %v7971 = vunpack.c.h.b16 %v7529
    %v7972 = vunpack.c.l.b16 %v7530
    %v7973 = vunpack.c.h.b16 %v7530
    %v7974 = vunpack.c.l.b16 %v7531
    %v7975 = vunpack.c.h.b16 %v7531
    %v7976 = vunpack.c.l.b16 %v7532
    %v7977 = vunpack.c.h.b16 %v7532
    %v7978 = vunpack.c.l.b16 %v7533
    %v7979 = vunpack.c.h.b16 %v7533
    %v7980 = vunpack.c.l.b16 %v7534
    %v7981 = vunpack.c.h.b16 %v7534
    %v7982 = vunpack.c.l.b16 %v7535
    %v7983 = vunpack.c.h.b16 %v7535
    %v7984 = vunpack.c.l.b16 %v7536
    %v7985 = vunpack.c.h.b16 %v7536
    %v7986 = vunpack.c.l.b16 %v7537
    %v7987 = vunpack.c.h.b16 %v7537
    %v7988 = vunpack.c.l.b16 %v7538
    %v7989 = vunpack.c.h.b16 %v7538
    %v7990 = vunpack.c.l.b16 %v7539
    %v7991 = vunpack.c.h.b16 %v7539
    %v7992 = vunpack.c.l.b16 %v7540
    %v7993 = vunpack.c.h.b16 %v7540
    %v7994 = vunpack.c.l.b16 %v7541
    %v7995 = vunpack.c.h.b16 %v7541
    %v7996 = vunpack.c.l.b16 %v7542
    %v7997 = vunpack.c.h.b16 %v7542
    %v7998 = vunpack.c.l.b16 %v7543
    %v7999 = vunpack.c.h.b16 %v7543
    %v8000 = vunpack.c.l.b16 %v7544
    %v8001 = vunpack.c.h.b16 %v7544
    %v8002 = vunpack.c.l.b16 %v7545
    %v8003 = vunpack.c.h.b16 %v7545
    %v8004 = vunpack.c.l.b16 %v7546
    %v8005 = vunpack.c.h.b16 %v7546
    %v8006 = vunpack.c.l.b16 %v7547
    %v8007 = vunpack.c.h.b16 %v7547
    %v8008 = vunpack.c.l.b16 %v7548
    %v8009 = vunpack.c.h.b16 %v7548
    %v8010 = vunpack.c.l.b16 %v7549
    %v8011 = vunpack.c.h.b16 %v7549
    %v8012 = vunpack.c.l.b16 %v7550
    %v8013 = vunpack.c.h.b16 %v7550
    %v8014 = vunpack.c.l.b16 %v7551
    %v8015 = vunpack.c.h.b16 %v7551
    %v8016 = vunpack.c.l.b16 %v7552
    %v8017 = vunpack.c.h.b16 %v7552
    %v8018 = vunpack.c.l.b16 %v7553
    %v8019 = vunpack.c.h.b16 %v7553
    %v8020 = vunpack.c.l.b16 %v7554
    %v8021 = vunpack.c.h.b16 %v7554
    %v8022 = vunpack.c.l.b16 %v7555
    %v8023 = vunpack.c.h.b16 %v7555
    %v8024 = vunpack.c.l.b16 %v7556
    %v8025 = vunpack.c.h.b16 %v7556
    %v8026 = vunpack.c.l.b16 %v7557
    %v8027 = vunpack.c.h.b16 %v7557
    %v8028 = vunpack.c.l.b16 %v7558
    %v8029 = vunpack.c.h.b16 %v7558
    %v8030 = vunpack.c.l.b16 %v7559
    %v8031 = vunpack.c.h.b16 %v7559
    %v8032 = vunpack.c.l.b16 %v7560
    %v8033 = vunpack.c.h.b16 %v7560
    %v8034 = vunpack.c.l.b16 %v7561
    %v8035 = vunpack.c.h.b16 %v7561
    %v8036 = vunpack.c.l.b16 %v7562
    %v8037 = vunpack.c.h.b16 %v7562
    %v8038 = vunpack.c.l.b16 %v7563
    %v8039 = vunpack.c.h.b16 %v7563
    %v8040 = vunpack.c.l.b16 %v7564
    %v8041 = vunpack.c.h.b16 %v7564
    %v8042 = vunpack.c.l.b16 %v7565
    %v8043 = vunpack.c.h.b16 %v7565
    %v8044 = vunpack.c.l.b16 %v7566
    %v8045 = vunpack.c.h.b16 %v7566
    %v8046 = vunpack.c.l.b16 %v7567
    %v8047 = vunpack.c.h.b16 %v7567
    %v8048 = vunpack.c.l.b16 %v7568
    %v8049 = vunpack.c.h.b16 %v7568
    %v8050 = vunpack.c.l.b16 %v7569
    %v8051 = vunpack.c.h.b16 %v7569
    %v8052 = vunpack.c.l.b16 %v7570
    %v8053 = vunpack.c.h.b16 %v7570
    %v8054 = vunpack.c.l.b16 %v7571
    %v8055 = vunpack.c.h.b16 %v7571
    %v8056 = vunpack.c.l.b16 %v7572
    %v8057 = vunpack.c.h.b16 %v7572
    %v8058 = vunpack.c.l.b16 %v7573
    %v8059 = vunpack.c.h.b16 %v7573
    %v8060 = vunpack.c.l.b16 %v7574
    %v8061 = vunpack.c.h.b16 %v7574
    %v8062 = vunpack.c.l.b16 %v7575
    %v8063 = vunpack.c.h.b16 %v7575
    %v8064 = vunpack.c.l.b16 %v7576
    %v8065 = vunpack.c.h.b16 %v7576
    %v8066 = vunpack.c.l.b16 %v7577
    %v8067 = vunpack.c.h.b16 %v7577
    %v8068 = vunpack.c.l.b16 %v7578
    %v8069 = vunpack.c.h.b16 %v7578
    %v8070 = vunpack.c.l.b16 %v7579
    %v8071 = vunpack.c.h.b16 %v7579
    %v8072 = vpack.c.b16 %v7754, %v7752
    %v8073 = vpack.c.b16 %v7755, %v7753
    %v8074 = vpack.c.b16 %v7758, %v7756
    %v8075 = vpack.c.b16 %v7759, %v7757
    %v8076 = vpack.c.b16 %v7762, %v7760
    %v8077 = vpack.c.b16 %v7763, %v7761
    %v8078 = vpack.c.b16 %v7766, %v7764
    %v8079 = vpack.c.b16 %v7767, %v7765
    %v8080 = vpack.c.b16 %v7770, %v7768
    %v8081 = vpack.c.b16 %v7771, %v7769
    %v8082 = vpack.c.b16 %v7774, %v7772
    %v8083 = vpack.c.b16 %v7775, %v7773
    %v8084 = vpack.c.b16 %v7778, %v7776
    %v8085 = vpack.c.b16 %v7779, %v7777
    %v8086 = vpack.c.b16 %v7782, %v7780
    %v8087 = vpack.c.b16 %v7783, %v7781
    %v8088 = vpack.c.b16 %v7786, %v7784
    %v8089 = vpack.c.b16 %v7787, %v7785
    %v8090 = vpack.c.b16 %v7790, %v7788
    %v8091 = vpack.c.b16 %v7791, %v7789
    %v8092 = vpack.c.b16 %v7794, %v7792
    %v8093 = vpack.c.b16 %v7795, %v7793
    %v8094 = vpack.c.b16 %v7798, %v7796
    %v8095 = vpack.c.b16 %v7799, %v7797
    %v8096 = vpack.c.b16 %v7802, %v7800
    %v8097 = vpack.c.b16 %v7803, %v7801
    %v8098 = vpack.c.b16 %v7806, %v7804
    %v8099 = vpack.c.b16 %v7807, %v7805
    %v8100 = vpack.c.b16 %v7810, %v7808
    %v8101 = vpack.c.b16 %v7811, %v7809
    %v8102 = vpack.c.b16 %v7814, %v7812
    %v8103 = vpack.c.b16 %v7815, %v7813
    %v8104 = vpack.c.b16 %v7818, %v7816
    %v8105 = vpack.c.b16 %v7819, %v7817
    %v8106 = vpack.c.b16 %v7822, %v7820
    %v8107 = vpack.c.b16 %v7823, %v7821
    %v8108 = vpack.c.b16 %v7826, %v7824
    %v8109 = vpack.c.b16 %v7827, %v7825
    %v8110 = vpack.c.b16 %v7830, %v7828
    %v8111 = vpack.c.b16 %v7831, %v7829
    %v8112 = vpack.c.b16 %v7834, %v7832
    %v8113 = vpack.c.b16 %v7835, %v7833
    %v8114 = vpack.c.b16 %v7838, %v7836
    %v8115 = vpack.c.b16 %v7839, %v7837
    %v8116 = vpack.c.b16 %v7842, %v7840
    %v8117 = vpack.c.b16 %v7843, %v7841
    %v8118 = vpack.c.b16 %v7846, %v7844
    %v8119 = vpack.c.b16 %v7847, %v7845
    %v8120 = vpack.c.b16 %v7850, %v7848
    %v8121 = vpack.c.b16 %v7851, %v7849
    %v8122 = vpack.c.b16 %v7854, %v7852
    %v8123 = vpack.c.b16 %v7855, %v7853
    %v8124 = vpack.c.b16 %v7858, %v7856
    %v8125 = vpack.c.b16 %v7859, %v7857
    %v8126 = vpack.c.b16 %v7862, %v7860
    %v8127 = vpack.c.b16 %v7863, %v7861
    %v8128 = vpack.c.b16 %v7866, %v7864
    %v8129 = vpack.c.b16 %v7867, %v7865
    %v8130 = vpack.c.b16 %v7870, %v7868
    %v8131 = vpack.c.b16 %v7871, %v7869
    %v8132 = vpack.c.b16 %v7874, %v7872
    %v8133 = vpack.c.b16 %v7875, %v7873
    %v8134 = vpack.c.b16 %v7878, %v7876
    %v8135 = vpack.c.b16 %v7879, %v7877
    %v8136 = vpack.c.b16 %v7882, %v7880
    %v8137 = vpack.c.b16 %v7883, %v7881
    %v8138 = vpack.c.b16 %v7886, %v7884
    %v8139 = vpack.c.b16 %v7887, %v7885
    %v8140 = vpack.c.b16 %v7890, %v7888
    %v8141 = vpack.c.b16 %v7891, %v7889
    %v8142 = vpack.c.b16 %v7894, %v7892
    %v8143 = vpack.c.b16 %v7895, %v7893
    %v8144 = vpack.c.b16 %v7898, %v7896
    %v8145 = vpack.c.b16 %v7899, %v7897
    %v8146 = vpack.c.b16 %v7902, %v7900
    %v8147 = vpack.c.b16 %v7903, %v7901
    %v8148 = vpack.c.b16 %v7906, %v7904
    %v8149 = vpack.c.b16 %v7907, %v7905
    %v8150 = vpack.c.b16 %v7910, %v7908
    %v8151 = vpack.c.b16 %v7911, %v7909
    %v8152 = vpack.c.b16 %v7914, %v7912
    %v8153 = vpack.c.b16 %v7915, %v7913
    %v8154 = vpack.c.b16 %v7918, %v7916
    %v8155 = vpack.c.b16 %v7919, %v7917
    %v8156 = vpack.c.b16 %v7922, %v7920
    %v8157 = vpack.c.b16 %v7923, %v7921
    %v8158 = vpack.c.b16 %v7926, %v7924
    %v8159 = vpack.c.b16 %v7927, %v7925
    %v8160 = vpack.c.b16 %v7930, %v7928
    %v8161 = vpack.c.b16 %v7931, %v7929
    %v8162 = vpack.c.b16 %v7934, %v7932
    %v8163 = vpack.c.b16 %v7935, %v7933
    %v8164 = vpack.c.b16 %v7938, %v7936
    %v8165 = vpack.c.b16 %v7939, %v7937
    %v8166 = vpack.c.b16 %v7942, %v7940
    %v8167 = vpack.c.b16 %v7943, %v7941
    %v8168 = vpack.c.b16 %v7946, %v7944
    %v8169 = vpack.c.b16 %v7947, %v7945
    %v8170 = vpack.c.b16 %v7950, %v7948
    %v8171 = vpack.c.b16 %v7951, %v7949
    %v8172 = vpack.c.b16 %v7954, %v7952
    %v8173 = vpack.c.b16 %v7955, %v7953
    %v8174 = vpack.c.b16 %v7958, %v7956
    %v8175 = vpack.c.b16 %v7959, %v7957
    %v8176 = vpack.c.b16 %v7962, %v7960
    %v8177 = vpack.c.b16 %v7963, %v7961
    %v8178 = vpack.c.b16 %v7966, %v7964
    %v8179 = vpack.c.b16 %v7967, %v7965
    %v8180 = vpack.c.b16 %v7970, %v7968
    %v8181 = vpack.c.b16 %v7971, %v7969
    %v8182 = vpack.c.b16 %v7974, %v7972
    %v8183 = vpack.c.b16 %v7975, %v7973
    %v8184 = vpack.c.b16 %v7978, %v7976
    %v8185 = vpack.c.b16 %v7979, %v7977
    %v8186 = vpack.c.b16 %v7982, %v7980
    %v8187 = vpack.c.b16 %v7983, %v7981
    %v8188 = vpack.c.b16 %v7986, %v7984
    %v8189 = vpack.c.b16 %v7987, %v7985
    %v8190 = vpack.c.b16 %v7990, %v7988
    %v8191 = vpack.c.b16 %v7991, %v7989
    %v8192 = vpack.c.b16 %v7994, %v7992
    %v8193 = vpack.c.b16 %v7995, %v7993
    %v8194 = vpack.c.b16 %v7998, %v7996
    %v8195 = vpack.c.b16 %v7999, %v7997
    %v8196 = vpack.c.b16 %v8002, %v8000
    %v8197 = vpack.c.b16 %v8003, %v8001
    %v8198 = vpack.c.b16 %v8006, %v8004
    %v8199 = vpack.c.b16 %v8007, %v8005
    %v8200 = vpack.c.b16 %v8010, %v8008
    %v8201 = vpack.c.b16 %v8011, %v8009
    %v8202 = vpack.c.b16 %v8014, %v8012
    %v8203 = vpack.c.b16 %v8015, %v8013
    %v8204 = vpack.c.b16 %v8018, %v8016
    %v8205 = vpack.c.b16 %v8019, %v8017
    %v8206 = vpack.c.b16 %v8022, %v8020
    %v8207 = vpack.c.b16 %v8023, %v8021
    %v8208 = vpack.c.b16 %v8026, %v8024
    %v8209 = vpack.c.b16 %v8027, %v8025
    %v8210 = vpack.c.b16 %v8030, %v8028
    %v8211 = vpack.c.b16 %v8031, %v8029
    %v8212 = vpack.c.b16 %v8034, %v8032
    %v8213 = vpack.c.b16 %v8035, %v8033
    %v8214 = vpack.c.b16 %v8038, %v8036
    %v8215 = vpack.c.b16 %v8039, %v8037
    %v8216 = vpack.c.b16 %v8042, %v8040
    %v8217 = vpack.c.b16 %v8043, %v8041
    %v8218 = vpack.c.b16 %v8046, %v8044
    %v8219 = vpack.c.b16 %v8047, %v8045
    %v8220 = vpack.c.b16 %v8050, %v8048
    %v8221 = vpack.c.b16 %v8051, %v8049
    %v8222 = vpack.c.b16 %v8054, %v8052
    %v8223 = vpack.c.b16 %v8055, %v8053
    %v8224 = vpack.c.b16 %v8058, %v8056
    %v8225 = vpack.c.b16 %v8059, %v8057
    %v8226 = vpack.c.b16 %v8062, %v8060
    %v8227 = vpack.c.b16 %v8063, %v8061
    %v8228 = vpack.c.b16 %v8066, %v8064
    %v8229 = vpack.c.b16 %v8067, %v8065
    %v8230 = vpack.c.b16 %v8070, %v8068
    %v8231 = vpack.c.b16 %v8071, %v8069
    %8392 = vmatprep.subr.bf16.mxu0 %v8073
    %8393 = vmatpush1.bf16.msra.mxu0 %v8072
    %8394 = vmatprep.subr.bf16.mxu0 %v8075
    %8395 = vmatpush1.bf16.msra.mxu0 %v8074
    %8396 = vmatprep.subr.bf16.mxu0 %v8077
    %8397 = vmatpush1.bf16.msra.mxu0 %v8076
    %8398 = vmatprep.subr.bf16.mxu0 %v8079
    %8399 = vmatpush1.bf16.msra.mxu0 %v8078
    %8400 = vmatprep.subr.bf16.mxu0 %v8081
    %8401 = vmatpush1.bf16.msra.mxu0 %v8080
    %8402 = vmatprep.subr.bf16.mxu0 %v8083
    %8403 = vmatpush1.bf16.msra.mxu0 %v8082
    %8404 = vmatprep.subr.bf16.mxu0 %v8085
    %8405 = vmatpush1.bf16.msra.mxu0 %v8084
    %8406 = vmatprep.subr.bf16.mxu0 %v8087
    %8407 = vmatpush1.bf16.msra.mxu0 %v8086
    %8408 = vmatprep.subr.bf16.mxu0 %v8089
    %8409 = vmatpush1.bf16.msra.mxu0 %v8088
    %8410 = vmatprep.subr.bf16.mxu0 %v8091
    %8411 = vmatpush1.bf16.msra.mxu0 %v8090
    %8412 = vmatprep.subr.bf16.mxu0 %v8093
    %8413 = vmatpush1.bf16.msra.mxu0 %v8092
    %8414 = vmatprep.subr.bf16.mxu0 %v8095
    %8415 = vmatpush1.bf16.msra.mxu0 %v8094
    %8416 = vmatprep.subr.bf16.mxu0 %v8097
    %8417 = vmatpush1.bf16.msra.mxu0 %v8096
    %8418 = vmatprep.subr.bf16.mxu0 %v8099
    %8419 = vmatpush1.bf16.msra.mxu0 %v8098
    %8420 = vmatprep.subr.bf16.mxu0 %v8101
    %8421 = vmatpush1.bf16.msra.mxu0 %v8100
    %8422 = vmatprep.subr.bf16.mxu0 %v8103
    %8423 = vmatpush1.bf16.msra.mxu0 %v8102
    %8424 = vmatprep.mubr.bf16.mxu0 %v7411
    %8425 = vmatmul.mubr.bf16.gmra.mrb[0].mxu0 %v7410
    %v8426 = vpop.f32.mrb[0].mxu0
    %v8427 = vadd.f32 %v7585, %v8426
    %v8428 = vpop.f32.mrb[0].mxu0
    %v8429 = vadd.f32 %v7589, %v8428
    %v8430 = vpop.f32.mrb[0].mxu0
    %v8431 = vadd.f32 %v7585, %v8430
    %v8432 = vpop.f32.mrb[0].mxu0
    %v8433 = vadd.f32 %v7589, %v8432
    %8434 = vdwg.mxu0
    %8435 = vmatprep.subr.bf16.mxu0 %v8105
    %8436 = vmatpush1.bf16.msra.mxu0 %v8104
    %8437 = vmatprep.subr.bf16.mxu0 %v8107
    %8438 = vmatpush1.bf16.msra.mxu0 %v8106
    %8439 = vmatprep.subr.bf16.mxu0 %v8109
    %8440 = vmatpush1.bf16.msra.mxu0 %v8108
    %8441 = vmatprep.subr.bf16.mxu0 %v8111
    %8442 = vmatpush1.bf16.msra.mxu0 %v8110
    %8443 = vmatprep.subr.bf16.mxu0 %v8113
    %8444 = vmatpush1.bf16.msra.mxu0 %v8112
    %8445 = vmatprep.subr.bf16.mxu0 %v8115
    %8446 = vmatpush1.bf16.msra.mxu0 %v8114
    %8447 = vmatprep.subr.bf16.mxu0 %v8117
    %8448 = vmatpush1.bf16.msra.mxu0 %v8116
    %8449 = vmatprep.subr.bf16.mxu0 %v8119
    %8450 = vmatpush1.bf16.msra.mxu0 %v8118
    %8451 = vmatprep.subr.bf16.mxu0 %v8121
    %8452 = vmatpush1.bf16.msra.mxu0 %v8120
    %8453 = vmatprep.subr.bf16.mxu0 %v8123
    %8454 = vmatpush1.bf16.msra.mxu0 %v8122
    %8455 = vmatprep.subr.bf16.mxu0 %v8125
    %8456 = vmatpush1.bf16.msra.mxu0 %v8124
    %8457 = vmatprep.subr.bf16.mxu0 %v8127
    %8458 = vmatpush1.bf16.msra.mxu0 %v8126
    %8459 = vmatprep.subr.bf16.mxu0 %v8129
    %8460 = vmatpush1.bf16.msra.mxu0 %v8128
    %8461 = vmatprep.subr.bf16.mxu0 %v8131
    %8462 = vmatpush1.bf16.msra.mxu0 %v8130
    %8463 = vmatprep.subr.bf16.mxu0 %v8133
    %8464 = vmatpush1.bf16.msra.mxu0 %v8132
    %8465 = vmatprep.subr.bf16.mxu0 %v8135
    %8466 = vmatpush1.bf16.msra.mxu0 %v8134
    %8467 = vmatprep.mubr.bf16.mxu0 %v7413
    %8468 = vmatmul.mubr.bf16.gmra.mrb[0].mxu0 %v7412
    %v8469 = vpop.f32.mrb[0].mxu0
    %v8470 = vadd.f32 %v8427, %v8469
    %v8471 = vpop.f32.mrb[0].mxu0
    %v8472 = vadd.f32 %v8429, %v8471
    %v8473 = vpop.f32.mrb[0].mxu0
    %v8474 = vadd.f32 %v8431, %v8473
    %v8475 = vpop.f32.mrb[0].mxu0
    %v8476 = vadd.f32 %v8433, %v8475
    %8477 = vdwg.mxu0
    %8478 = vmatprep.subr.bf16.mxu0 %v8137
    %8479 = vmatpush1.bf16.msra.mxu0 %v8136
    %8480 = vmatprep.subr.bf16.mxu0 %v8139
    %8481 = vmatpush1.bf16.msra.mxu0 %v8138
    %8482 = vmatprep.subr.bf16.mxu0 %v8141
    %8483 = vmatpush1.bf16.msra.mxu0 %v8140
    %8484 = vmatprep.subr.bf16.mxu0 %v8143
    %8485 = vmatpush1.bf16.msra.mxu0 %v8142
    %8486 = vmatprep.subr.bf16.mxu0 %v8145
    %8487 = vmatpush1.bf16.msra.mxu0 %v8144
    %8488 = vmatprep.subr.bf16.mxu0 %v8147
    %8489 = vmatpush1.bf16.msra.mxu0 %v8146
    %8490 = vmatprep.subr.bf16.mxu0 %v8149
    %8491 = vmatpush1.bf16.msra.mxu0 %v8148
    %8492 = vmatprep.subr.bf16.mxu0 %v8151
    %8493 = vmatpush1.bf16.msra.mxu0 %v8150
    %8494 = vmatprep.subr.bf16.mxu0 %v8153
    %8495 = vmatpush1.bf16.msra.mxu0 %v8152
    %8496 = vmatprep.subr.bf16.mxu0 %v8155
    %8497 = vmatpush1.bf16.msra.mxu0 %v8154
    %8498 = vmatprep.subr.bf16.mxu0 %v8157
    %8499 = vmatpush1.bf16.msra.mxu0 %v8156
    %8500 = vmatprep.subr.bf16.mxu0 %v8159
    %8501 = vmatpush1.bf16.msra.mxu0 %v8158
    %8502 = vmatprep.subr.bf16.mxu0 %v8161
    %8503 = vmatpush1.bf16.msra.mxu0 %v8160
    %8504 = vmatprep.subr.bf16.mxu0 %v8163
    %8505 = vmatpush1.bf16.msra.mxu0 %v8162
    %8506 = vmatprep.subr.bf16.mxu0 %v8165
    %8507 = vmatpush1.bf16.msra.mxu0 %v8164
    %8508 = vmatprep.subr.bf16.mxu0 %v8167
    %8509 = vmatpush1.bf16.msra.mxu0 %v8166
    %8510 = vmatprep.mubr.bf16.mxu0 %v7415
    %8511 = vmatmul.mubr.bf16.gmra.mrb[0].mxu0 %v7414
    %v8512 = vpop.f32.mrb[0].mxu0
    %v8513 = vadd.f32 %v8470, %v8512
    %v8514 = vpop.f32.mrb[0].mxu0
    %v8515 = vadd.f32 %v8472, %v8514
    %v8516 = vpop.f32.mrb[0].mxu0
    %v8517 = vadd.f32 %v8474, %v8516
    %v8518 = vpop.f32.mrb[0].mxu0
    %v8519 = vadd.f32 %v8476, %v8518
    %8520 = vdwg.mxu0
    %8521 = vmatprep.subr.bf16.mxu0 %v8169
    %8522 = vmatpush1.bf16.msra.mxu0 %v8168
    %8523 = vmatprep.subr.bf16.mxu0 %v8171
    %8524 = vmatpush1.bf16.msra.mxu0 %v8170
    %8525 = vmatprep.subr.bf16.mxu0 %v8173
    %8526 = vmatpush1.bf16.msra.mxu0 %v8172
    %8527 = vmatprep.subr.bf16.mxu0 %v8175
    %8528 = vmatpush1.bf16.msra.mxu0 %v8174
    %8529 = vmatprep.subr.bf16.mxu0 %v8177
    %8530 = vmatpush1.bf16.msra.mxu0 %v8176
    %8531 = vmatprep.subr.bf16.mxu0 %v8179
    %8532 = vmatpush1.bf16.msra.mxu0 %v8178
    %8533 = vmatprep.subr.bf16.mxu0 %v8181
    %8534 = vmatpush1.bf16.msra.mxu0 %v8180
    %8535 = vmatprep.subr.bf16.mxu0 %v8183
    %8536 = vmatpush1.bf16.msra.mxu0 %v8182
    %8537 = vmatprep.subr.bf16.mxu0 %v8185
    %8538 = vmatpush1.bf16.msra.mxu0 %v8184
    %8539 = vmatprep.subr.bf16.mxu0 %v8187
    %8540 = vmatpush1.bf16.msra.mxu0 %v8186
    %8541 = vmatprep.subr.bf16.mxu0 %v8189
    %8542 = vmatpush1.bf16.msra.mxu0 %v8188
    %8543 = vmatprep.subr.bf16.mxu0 %v8191
    %8544 = vmatpush1.bf16.msra.mxu0 %v8190
    %8545 = vmatprep.subr.bf16.mxu0 %v8193
    %8546 = vmatpush1.bf16.msra.mxu0 %v8192
    %8547 = vmatprep.subr.bf16.mxu0 %v8195
    %8548 = vmatpush1.bf16.msra.mxu0 %v8194
    %8549 = vmatprep.subr.bf16.mxu0 %v8197
    %8550 = vmatpush1.bf16.msra.mxu0 %v8196
    %8551 = vmatprep.subr.bf16.mxu0 %v8199
    %8552 = vmatpush1.bf16.msra.mxu0 %v8198
    %8553 = vmatprep.mubr.bf16.mxu0 %v7417
    %8554 = vmatmul.mubr.bf16.gmra.mrb[0].mxu0 %v7416
    %v8555 = vpop.f32.mrb[0].mxu0
    %v8556 = vadd.f32 %v8513, %v8555
    %v8557 = vpop.f32.mrb[0].mxu0
    %v8558 = vadd.f32 %v8515, %v8557
    %v8559 = vpop.f32.mrb[0].mxu0
    %v8560 = vadd.f32 %v8517, %v8559
    %v8561 = vpop.f32.mrb[0].mxu0
    %v8562 = vadd.f32 %v8519, %v8561
    %8563 = vdwg.mxu0
    %8564 = vmatprep.subr.bf16.mxu0 %v8201
    %8565 = vmatpush1.bf16.msra.mxu0 %v8200
    %8566 = vmatprep.subr.bf16.mxu0 %v8203
    %8567 = vmatpush1.bf16.msra.mxu0 %v8202
    %8568 = vmatprep.subr.bf16.mxu0 %v8205
    %8569 = vmatpush1.bf16.msra.mxu0 %v8204
    %8570 = vmatprep.subr.bf16.mxu0 %v8207
    %8571 = vmatpush1.bf16.msra.mxu0 %v8206
    %8572 = vmatprep.subr.bf16.mxu0 %v8209
    %8573 = vmatpush1.bf16.msra.mxu0 %v8208
    %8574 = vmatprep.subr.bf16.mxu0 %v8211
    %8575 = vmatpush1.bf16.msra.mxu0 %v8210
    %8576 = vmatprep.subr.bf16.mxu0 %v8213
    %8577 = vmatpush1.bf16.msra.mxu0 %v8212
    %8578 = vmatprep.subr.bf16.mxu0 %v8215
    %8579 = vmatpush1.bf16.msra.mxu0 %v8214
    %8580 = vmatprep.subr.bf16.mxu0 %v8217
    %8581 = vmatpush1.bf16.msra.mxu0 %v8216
    %8582 = vmatprep.subr.bf16.mxu0 %v8219
    %8583 = vmatpush1.bf16.msra.mxu0 %v8218
    %8584 = vmatprep.subr.bf16.mxu0 %v8221
    %8585 = vmatpush1.bf16.msra.mxu0 %v8220
    %8586 = vmatprep.subr.bf16.mxu0 %v8223
    %8587 = vmatpush1.bf16.msra.mxu0 %v8222
    %8588 = vmatprep.subr.bf16.mxu0 %v8225
    %8589 = vmatpush1.bf16.msra.mxu0 %v8224
    %8590 = vmatprep.subr.bf16.mxu0 %v8227
    %8591 = vmatpush1.bf16.msra.mxu0 %v8226
    %8592 = vmatprep.subr.bf16.mxu0 %v8229
    %8593 = vmatpush1.bf16.msra.mxu0 %v8228
    %8594 = vmatprep.subr.bf16.mxu0 %v8231
    %8595 = vmatpush1.bf16.msra.mxu0 %v8230
    %8596 = vmatprep.mubr.bf16.mxu0 %v7419
    %8597 = vmatmul.mubr.bf16.gmra.mrb[0].mxu0 %v7418
    %v8598 = vpop.f32.mrb[0].mxu0
    %v8599 = vadd.f32 %v8556, %v8598
    %v8600 = vpop.f32.mrb[0].mxu0
    %v8601 = vadd.f32 %v8558, %v8600
    %v8602 = vpop.f32.mrb[0].mxu0
    %v8603 = vadd.f32 %v8560, %v8602
    %v8604 = vpop.f32.mrb[0].mxu0
    %v8605 = vadd.f32 %v8562, %v8604
    %8606 = vdwg.mxu0
    %8607 = vst [vmem:[#allocation14] sm:$0xff] %v8599
    %8608 = vst [vmem:[#allocation14 + $0x8] sm:$0xff] %v8601
    %8609 = vst [vmem:[#allocation14 + $0x10] sm:$0xff] %v8603
    %8610 = vst [vmem:[#allocation14 + $0x18] sm:$0xff] %v8605
    // Predicated region
    $region58: #{tpu_custom_call.1} parent=1 // pred_check
      _
    $region59: #{tpu_custom_call.1} parent=1 // pred_check_branch
      %8612 = sbr.rel (0) target = $region61
    $region60: #{tpu_custom_call.1} parent=1 // pred_region
      %s8614 = ssub.s32 512, 512
      %8615 = vsyncadd [#allocation4], %s8614
      %s8616 = sshll.u32 [#allocation14], 4
      %s8617 = int_to_ptr.vmem [resolvable:$true] %s8616
      %8622 = dma.vmem_to_hbm [thread:$0]  %s8617, 512, %s7, [#allocation4], 256, 256, 16
    $region61: #{tpu_custom_call.1} parent=1 // pred_fallthru
      _
    // Predicated region
    $region62: #{tpu_custom_call.1} parent=1 // pred_check
      _
    $region63: #{tpu_custom_call.1} parent=1 // pred_check_branch
      %8624 = sbr.rel (0) target = $region65
    $region64: #{tpu_custom_call.1} parent=1 // pred_region
      %8625 = dma.done [#allocation4], 512
    $region65: #{tpu_custom_call.1} parent=1 // pred_fallthru
      _
    %8626 = vsyncpa [#allocation3], 1
    %8627 = vsyncpa [#allocation6], 1
    %8628 = vsyncpa [#allocation9], 1
    %8629 = vsyncpa [#allocation12], 1
    %8630 = vsyncpa [#allocation4], 1

</llo_original>
